<compile_context>
chip_gen: v7x
topology: tpu7x:2x2x1
jax: 0.10.0
libtpu: 0.0.40
codegen_flags: <defaults>
</compile_context>

<pallas_src>
import functools
import math

import jax
import jax.numpy as jnp
from jax.experimental import pallas as pl
from jax.experimental.pallas import tpu as pltpu


def _round_up(x, m):
    return ((x + m - 1) // m) * m


def _pick_tile(m):
    """Row tile: multiple of 8, capped at 512 (>=85% of HBM roofline)."""
    return min(_round_up(m, 8), 512)


# ---------------------------------------------------------------------------
# Fused matmul kernel:  y = relu?( x@w  [+ x2@w2]  + shift  [+ post] )
#   (conv bias and eval-mode BN are pre-folded into w / shift at init)
# ---------------------------------------------------------------------------
def _fused_mm_kernel(*refs, has_x2, has_post, do_relu):
    x_ref, w_ref, t_ref = refs[0], refs[1], refs[2]
    idx = 3
    x2_ref = w2_ref = post_ref = None
    if has_x2:
        x2_ref, w2_ref = refs[idx], refs[idx + 1]
        idx += 2
    if has_post:
        post_ref = refs[idx]
        idx += 1
    o_ref = refs[idx]

    acc = jnp.dot(x_ref[...], w_ref[...], preferred_element_type=jnp.float32)
    if has_x2:
        acc = acc + jnp.dot(x2_ref[...], w2_ref[...],
                            preferred_element_type=jnp.float32)
    y = acc + t_ref[...]
    if has_post:
        y = y + post_ref[...].astype(jnp.float32)
    if do_relu:
        y = jnp.maximum(y, 0.0)
    o_ref[...] = y.astype(o_ref.dtype)


@functools.lru_cache(maxsize=None)
def _fused_mm_call(m, k, n, k2, has_post, do_relu, out_dtype):
    tm = _pick_tile(m)
    grid = pl.cdiv(m, tm)
    in_specs = [
        pl.BlockSpec((tm, k), lambda i: (i, 0)),      # activation cols (bf16)
        pl.BlockSpec((k, n), lambda i: (0, 0)),       # weights (resident, bf16)
        pl.BlockSpec((1, n), lambda i: (0, 0)),       # shift (f32)
    ]
    if k2:
        in_specs += [
            pl.BlockSpec((tm, k2), lambda i: (i, 0)),  # second operand (bf16)
            pl.BlockSpec((k2, n), lambda i: (0, 0)),   # its weights (bf16)
        ]
    if has_post:
        in_specs.append(pl.BlockSpec((tm, n), lambda i: (i, 0)))  # residual (bf16)
    kernel = functools.partial(_fused_mm_kernel, has_x2=bool(k2),
                               has_post=has_post, do_relu=do_relu)
    return pl.pallas_call(
        kernel,
        out_shape=jax.ShapeDtypeStruct((m, n), out_dtype),
        grid=(grid,),
        in_specs=in_specs,
        out_specs=pl.BlockSpec((tm, n), lambda i: (i, 0)),
        compiler_params=pltpu.CompilerParams(dimension_semantics=("parallel",)),
    )


def fused_matmul(x2d, w, shift, x2=None, w2=None, post=None, do_relu=True,
                 out_dtype=jnp.bfloat16):
    m, k = x2d.shape
    n = w.shape[1]
    k2 = 0 if x2 is None else x2.shape[1]
    args = [x2d, w, shift]
    if x2 is not None:
        args += [x2, w2]
    if post is not None:
        args.append(post)
    return _fused_mm_call(m, k, n, k2, post is not None, bool(do_relu),
                          out_dtype)(*args)


# ---------------------------------------------------------------------------
# Fused DownsamplerBlock kernel: conv3x3/s2 + maxpool2x2 + BN + ReLU + concat.
# The 4 pool taps live inside the stride-2 im2col slab (taps (1,1),(1,2),(2,1),(2,2)),
# so they are sliced out of the already-resident VMEM block; the max is placed into
# the pool output lanes via a tiny selector matmul (no in-kernel concat needed).
# ---------------------------------------------------------------------------
def _down_kernel(x_ref, w_ref, s_ref, t_ref, o_ref, *, cin):
    xv = x_ref[...]                                             # (tm, 9*cin) bf16
    acc = jnp.dot(xv, w_ref[...], preferred_element_type=jnp.float32)
    b0 = 4 * cin   # taps (1,1),(1,2)
    b1 = 7 * cin   # taps (2,1),(2,2)
    mx = jnp.maximum(
        jnp.maximum(xv[:, b0:b0 + cin], xv[:, b0 + cin:b0 + 2 * cin]),
        jnp.maximum(xv[:, b1:b1 + cin], xv[:, b1 + cin:b1 + 2 * cin]))
    acc = acc + jnp.dot(mx, s_ref[...], preferred_element_type=jnp.float32)
    o_ref[...] = jnp.maximum(acc + t_ref[...], 0.0).astype(o_ref.dtype)


@functools.lru_cache(maxsize=None)
def _down_call(m, cin, cout):
    k = 9 * cin
    tm = _pick_tile(m)
    grid = pl.cdiv(m, tm)
    kernel = functools.partial(_down_kernel, cin=cin)
    return pl.pallas_call(
        kernel,
        out_shape=jax.ShapeDtypeStruct((m, cout), jnp.bfloat16),
        grid=(grid,),
        in_specs=[
            pl.BlockSpec((tm, k), lambda i: (i, 0)),       # im2col slab (bf16)
            pl.BlockSpec((k, cout), lambda i: (0, 0)),     # conv weights, zero pool cols
            pl.BlockSpec((cin, cout), lambda i: (0, 0)),   # pool selector (scale folded)
            pl.BlockSpec((1, cout), lambda i: (0, 0)),     # shift (f32)
        ],
        out_specs=pl.BlockSpec((tm, cout), lambda i: (i, 0)),
        compiler_params=pltpu.CompilerParams(dimension_semantics=("parallel",)),
    )


# ---------------------------------------------------------------------------
# Conv / ConvTranspose built on the fused matmul (glue: pad / slice / reshape only)
# ---------------------------------------------------------------------------
def _im2col(x, kh, kw, stride, padding, dilation):
    n, h, w, cin = x.shape
    sh, sw = stride
    ph, pw = padding
    dh, dw = dilation
    ho = (h + 2 * ph - dh * (kh - 1) - 1) // sh + 1
    wo = (w + 2 * pw - dw * (kw - 1) - 1) // sw + 1
    if kh == 1 and kw == 1 and stride == (1, 1) and padding == (0, 0):
        return x.reshape(n * h * w, cin), ho, wo
    xp = jnp.pad(x, ((0, 0), (ph, ph), (pw, pw), (0, 0)))
    cols = []
    for i in range(kh):
        for j in range(kw):
            cols.append(
                xp[:, i * dh: i * dh + (ho - 1) * sh + 1: sh,
                      j * dw: j * dw + (wo - 1) * sw + 1: sw, :])
    return jnp.concatenate(cols, axis=-1).reshape(n * ho * wo, kh * kw * cin), ho, wo


def conv2d_fused(x, op, kh, kw, stride=(1, 1), padding=(0, 0), dilation=(1, 1),
                 x2=None, post=None, do_relu=True, out_dtype=jnp.bfloat16):
    """x: NHWC bf16.  op['w']: (kh*kw*Cin, Cout) bf16 (BN scale folded);
    op['shift']: (1, Cout) f32.  Optional second matmul operand x2 (1x1 conv path,
    weights op['w2']) and post-BN residual `post`."""
    n = x.shape[0]
    x2d, ho, wo = _im2col(x, kh, kw, stride, padding, dilation)
    cout = op["w"].shape[1]
    m = n * ho * wo
    x2_2d = x2.reshape(m, x2.shape[-1]) if x2 is not None else None
    w2 = op.get("w2") if x2 is not None else None
    post_2d = post.reshape(m, cout) if post is not None else None
    y = fused_matmul(x2d, op["w"], op["shift"], x2=x2_2d, w2=w2, post=post_2d,
                     do_relu=do_relu, out_dtype=out_dtype)
    return y.reshape(n, ho, wo, cout)


def _pixel_shuffle2(y2d, n, h, w, cout):
    y = y2d.reshape(n, h, w, 2, 2, cout)
    y = jnp.transpose(y, (0, 1, 3, 2, 4, 5))
    return y.reshape(n, 2 * h, 2 * w, cout)


def downsampler_fwd(p, x):
    n, h, w, cin = x.shape
    ho, wo = h // 2, w // 2
    x2d, _, _ = _im2col(x, 3, 3, stride=(2, 2), padding=(1, 1), dilation=(1, 1))
    cout = p["w"].shape[1]
    y = _down_call(n * ho * wo, cin, cout)(x2d, p["w"], p["sel"], p["shift"])
    return y.reshape(n, ho, wo, cout)


def upsampler_fwd(p, x):
    # ConvTranspose2d(k=3, s=2, p=1, op=1) + BN + ReLU via subpixel matmul.
    n, h, w, cin = x.shape
    cout = p["w"].shape[1] // 4
    xp = jnp.pad(x, ((0, 0), (0, 1), (0, 1), (0, 0)))
    cols = [xp[:, dy:dy + h, dx:dx + w, :] for dy in (0, 1) for dx in (0, 1)]
    x2d = jnp.concatenate(cols, axis=-1).reshape(n * h * w, 4 * cin)
    y2d = fused_matmul(x2d, p["w"], p["shift"], do_relu=True)        # bf16
    return _pixel_shuffle2(y2d, n, h, w, cout)


def output_convT_fwd(p, x):
    # ConvTranspose2d(k=2, s=2): pure pixel-shuffle matmul + bias, f32 logits.
    n, h, w, cin = x.shape
    cout = p["w"].shape[1] // 4
    y2d = fused_matmul(x.reshape(n * h * w, cin), p["w"], p["shift"],
                       do_relu=False, out_dtype=jnp.float32)
    return _pixel_shuffle2(y2d, n, h, w, cout)


# ---------------------------------------------------------------------------
# Block forwards
# ---------------------------------------------------------------------------
def rap_fwd(p, x, d):
    t1 = conv2d_fused(x, p["c31_1"], 3, 1, padding=(1, 0))
    # relu(bn1(conv1x3(t1) + pc1(x))) in one kernel (pc fused as second matmul).
    out_ = conv2d_fused(t1, p["c13_1"], 1, 3, padding=(0, 1), x2=x)
    t2 = conv2d_fused(out_, p["c31_2"], 3, 1, padding=(d, 0), dilation=(d, 1))
    # Dropout2d is identity in eval mode.
    return conv2d_fused(t2, p["c13_2"], 1, 3, padding=(0, d), dilation=(1, d),
                        x2=out_, post=x)


def nb1d_fwd(p, x, d):
    t1 = conv2d_fused(x, p["c31_1"], 3, 1, padding=(1, 0))
    t2 = conv2d_fused(t1, p["c13_1"], 1, 3, padding=(0, 1))
    t3 = conv2d_fused(t2, p["c31_2"], 3, 1, padding=(d, 0), dilation=(d, 1))
    return conv2d_fused(t3, p["c13_2"], 1, 3, padding=(0, d), dilation=(1, d),
                        post=x)


_ENC_LAYOUT = (
    (("down", 16, 64),)
    + tuple(("rap", 64, 1) for _ in range(5))
    + (("down", 64, 128),)
    + tuple(("rap", 128, d) for _ in range(2) for d in (2, 4, 8, 16))
)
_DEC_LAYOUT = (
    ("up", 128, 64), ("nb", 64, 1), ("nb", 64, 1),
    ("up", 64, 16), ("nb", 16, 1), ("nb", 16, 1),
)


def encoder_fwd(p, x):
    out = downsampler_fwd(p["initial"], x)
    for (kind, _, d), lp in zip(_ENC_LAYOUT, p["layers"]):
        out = downsampler_fwd(lp, out) if kind == "down" else rap_fwd(lp, out, d)
    return out


def decoder_fwd(p, x):
    out = x
    for (kind, _, d), lp in zip(_DEC_LAYOUT, p["layers"]):
        out = upsampler_fwd(lp, out) if kind == "up" else nb1d_fwd(lp, out, d)
    return output_convT_fwd(p["out"], out)


@functools.partial(jax.jit, static_argnames=("task",))
def net_fwd(params, x_nchw, task=0):
    x = jnp.transpose(x_nchw, (0, 2, 3, 1)).astype(jnp.bfloat16)   # NCHW -> NHWC bf16
    out = encoder_fwd(params["encoder"], x)
    out = decoder_fwd(params["decoders"][task], out)
    return jnp.transpose(out, (0, 3, 1, 2))                        # NHWC -> NCHW f32


# ---------------------------------------------------------------------------
# Deterministic synthetic parameter init (PyTorch-like fan-in scale) with one-time
# folding of conv bias + eval-mode BN into the fused-kernel weight/shift layout.
# ---------------------------------------------------------------------------
class _KeyGen:
    def __init__(self, seed):
        self._key = jax.random.PRNGKey(seed)

    def __call__(self):
        self._key, sub = jax.random.split(self._key)
        return sub


def _make_bn(c):
    # eval-mode BN: gamma=1, beta=0, running_mean=0, running_var=1, eps=1e-3
    return {
        "gamma": jnp.ones((c,), jnp.float32),
        "beta": jnp.zeros((c,), jnp.float32),
        "mean": jnp.zeros((c,), jnp.float32),
        "var": jnp.ones((c,), jnp.float32),
        "eps": 1e-3,
    }


def _bn_scale_shift(bn, lo=None, hi=None):
    sl = slice(lo, hi)
    s = bn["gamma"][sl] / jnp.sqrt(bn["var"][sl] + bn["eps"])
    return s, bn["beta"][sl] - bn["mean"][sl] * s


def _make_conv(kg, cin, cout, kh, kw, bn=None):
    bound = 1.0 / math.sqrt(cin * kh * kw)
    w = jax.random.uniform(kg(), (cout, cin, kh, kw), jnp.float32, -bound, bound)
    b = jax.random.uniform(kg(), (cout,), jnp.float32, -bound, bound)
    if bn is None:
        s = jnp.ones((cout,), jnp.float32)
        t = jnp.zeros((cout,), jnp.float32)
    else:
        s, t = _bn_scale_shift(bn)
    w2d = jnp.transpose(w, (2, 3, 1, 0)).reshape(kh * kw * cin, cout) * s[None, :]
    return {"w": w2d.astype(jnp.bfloat16),
            "shift": (b * s + t).reshape(1, cout)}


def _make_conv_pc(kg, ch, kh, kw, bn):
    # 1x3 conv + parallel 1x1 conv sharing one BN: both folded for the dual-matmul kernel.
    s, t = _bn_scale_shift(bn)
    bound = 1.0 / math.sqrt(ch * kh * kw)
    w = jax.random.uniform(kg(), (ch, ch, kh, kw), jnp.float32, -bound, bound)
    b = jax.random.uniform(kg(), (ch,), jnp.float32, -bound, bound)
    bp = 1.0 / math.sqrt(ch)
    wp = jax.random.uniform(kg(), (ch, ch, 1, 1), jnp.float32, -bp, bp)
    bpc = jax.random.uniform(kg(), (ch,), jnp.float32, -bp, bp)
    w2d = jnp.transpose(w, (2, 3, 1, 0)).reshape(kh * kw * ch, ch) * s[None, :]
    wpc = wp[:, :, 0, 0].T * s[None, :]
    return {"w": w2d.astype(jnp.bfloat16),
            "w2": wpc.astype(jnp.bfloat16),
            "shift": ((b + bpc) * s + t).reshape(1, ch)}


def _make_down(kg, nin, nout):
    bn = _make_bn(nout)
    ncv = nout - nin
    s_c, t_c = _bn_scale_shift(bn, 0, ncv)      # conv-branch BN slice
    s_p, t_p = _bn_scale_shift(bn, ncv, None)   # pool-branch BN slice
    bound = 1.0 / math.sqrt(nin * 9)
    w = jax.random.uniform(kg(), (ncv, nin, 3, 3), jnp.float32, -bound, bound)
    b = jax.random.uniform(kg(), (ncv,), jnp.float32, -bound, bound)
    w2d = jnp.transpose(w, (2, 3, 1, 0)).reshape(9 * nin, ncv) * s_c[None, :]
    w_ext = jnp.pad(w2d, ((0, 0), (0, nin)))        # zero columns for pool lanes
    sel = jnp.zeros((nin, nout), jnp.float32)
    sel = sel.at[jnp.arange(nin), ncv + jnp.arange(nin)].set(s_p)
    shift = jnp.concatenate([b * s_c + t_c, t_p]).reshape(1, nout)
    return {"w": w_ext.astype(jnp.bfloat16),
            "sel": sel.astype(jnp.bfloat16),
            "shift": shift}


def _make_rap(kg, ch):
    bn1, bn2 = _make_bn(ch), _make_bn(ch)
    return {
        "c31_1": _make_conv(kg, ch, ch, 3, 1),
        "c13_1": _make_conv_pc(kg, ch, 1, 3, bn1),
        "c31_2": _make_conv(kg, ch, ch, 3, 1),
        "c13_2": _make_conv_pc(kg, ch, 1, 3, bn2),
    }


def _make_nb(kg, ch):
    bn1, bn2 = _make_bn(ch), _make_bn(ch)
    return {
        "c31_1": _make_conv(kg, ch, ch, 3, 1),
        "c13_1": _make_conv(kg, ch, ch, 1, 3, bn=bn1),
        "c31_2": _make_conv(kg, ch, ch, 3, 1),
        "c13_2": _make_conv(kg, ch, ch, 1, 3, bn=bn2),
    }


def _make_up(kg, nin, nout):
    # ConvTranspose2d(3, s=2, p=1, op=1) folded into a subpixel matrix (4*Cin, 4*Cout),
    # BN scale folded into the weights, bias+BN shift into a single shift vector.
    bound = 1.0 / math.sqrt(nout * 3 * 3)
    w = jax.random.uniform(kg(), (nin, nout, 3, 3), jnp.float32, -bound, bound)
    b = jax.random.uniform(kg(), (nout,), jnp.float32, -bound, bound)
    bn = _make_bn(nout)
    s, t = _bn_scale_shift(bn)
    w_s = w * s[None, :, None, None]

    row_blocks = []
    for dy in (0, 1):
        for dx in (0, 1):
            col_blocks = []
            for ry in (0, 1):
                for rx in (0, 1):
                    kh = ry + 1 - 2 * dy
                    kw = rx + 1 - 2 * dx
                    if 0 <= kh <= 2 and 0 <= kw <= 2:
                        col_blocks.append(w_s[:, :, kh, kw])
                    else:
                        col_blocks.append(jnp.zeros((nin, nout), jnp.float32))
            row_blocks.append(jnp.concatenate(col_blocks, axis=1))
    wc = jnp.concatenate(row_blocks, axis=0)  # (4*Cin, 4*Cout)

    shift4 = jnp.tile(b * s + t, 4)
    return {"w": wc.astype(jnp.bfloat16),
            "shift": shift4.reshape(1, 4 * nout)}


def _make_out_conv(kg, cin, ncls):
    # ConvTranspose2d(16, ncls, 2, stride=2): pure pixel-shuffle matmul (Cin, 4*ncls).
    bound = 1.0 / math.sqrt(ncls * 2 * 2)
    w = jax.random.uniform(kg(), (cin, ncls, 2, 2), jnp.float32, -bound, bound)
    b = jax.random.uniform(kg(), (ncls,), jnp.float32, -bound, bound)
    wc = jnp.concatenate([w[:, :, ry, rx] for ry in (0, 1) for rx in (0, 1)], axis=1)
    return {"w": wc.astype(jnp.bfloat16),
            "shift": jnp.tile(b, 4).reshape(1, 4 * ncls)}


def init_encoder(kg):
    layers = []
    for kind, a, b_ in _ENC_LAYOUT:
        layers.append(_make_down(kg, a, b_) if kind == "down" else _make_rap(kg, a))
    return {"initial": _make_down(kg, 3, 16), "layers": layers}


def init_decoder(kg, num_classes):
    layers = []
    for kind, a, b_ in _DEC_LAYOUT:
        layers.append(_make_up(kg, a, b_) if kind == "up" else _make_nb(kg, a))
    return {"layers": layers, "out": _make_out_conv(kg, 16, num_classes)}


def init_net(seed=0, num_classes=(13,), nb_tasks=1):
    kg = _KeyGen(seed)
    return {
        "encoder": init_encoder(kg),
        "decoders": [init_decoder(kg, num_classes[i]) for i in range(nb_tasks)],
    }


# ---------------------------------------------------------------------------
if __name__ == "__main__":
    params = init_net(seed=0, num_classes=(13,), nb_tasks=1)
    x = jax.random.normal(jax.random.PRNGKey(0), (2, 3, 32, 32), jnp.float32)  # NCHW
    out = jax.block_until_ready(net_fwd(params, x, task=0))
    assert out.shape == (2, 13, 32, 32), out.shape
    assert bool(jnp.all(jnp.isfinite(out)))
    print("KERNEL_OK")
</pallas_src>

<mosaic_0001>
module attributes {stable_mosaic.version = 11 : i64} {
  func.func @_down_kernel(%arg0: i32, %arg1: memref<512x27xbf16, #tpu.memory_space<vmem>>, %arg2: memref<27x16xbf16, #tpu.memory_space<vmem>>, %arg3: memref<3x16xbf16, #tpu.memory_space<vmem>>, %arg4: memref<1x16xf32, #tpu.memory_space<vmem>>, %arg5: memref<512x16xbf16, #tpu.memory_space<vmem>>) attributes {dimension_semantics = [#tpu.dimension_semantics<parallel>], iteration_bounds = array<i64: 1>, scalar_prefetch = 0 : i64, scratch_operands = 0 : i64, tpu.core_type = #tpu.core_type<tc>, window_params = [{transform_indices = @transform_0, window_bounds = array<i64: 512, 27>}, {pipeline_mode = #tpu.pipeline_mode<synchronous>, transform_indices = @transform_1, window_bounds = array<i64: 27, 16>}, {pipeline_mode = #tpu.pipeline_mode<synchronous>, transform_indices = @transform_2, window_bounds = array<i64: 3, 16>}, {pipeline_mode = #tpu.pipeline_mode<synchronous>, transform_indices = @transform_3, window_bounds = array<i64: 1, 16>}, {transform_indices = @transform_4, window_bounds = array<i64: 512, 16>}]} {
    %c0 = arith.constant 0 : index
    %c0_0 = arith.constant 0 : index
    %0 = vector.load %arg1[%c0, %c0_0] : memref<512x27xbf16, #tpu.memory_space<vmem>>, vector<512x27xbf16>
    %c0_1 = arith.constant 0 : index
    %c0_2 = arith.constant 0 : index
    %1 = vector.load %arg2[%c0_1, %c0_2] : memref<27x16xbf16, #tpu.memory_space<vmem>>, vector<27x16xbf16>
    %cst = arith.constant dense<0.000000e+00> : vector<512x16xf32>
    %2 = tpu.matmul %0, %1, %cst {dimension_numbers = #tpu.dot_dimension_numbers<[1], [0], [0], [1], [0, 0, 1, 1], [], []>} : vector<512x27xbf16>, vector<27x16xbf16>, vector<512x16xf32> -> vector<512x16xf32>
    %3 = vector.extract_strided_slice %0 {offsets = [0, 12], sizes = [512, 3], strides = [1, 1]} : vector<512x27xbf16> to vector<512x3xbf16>
    %4 = vector.extract_strided_slice %0 {offsets = [0, 15], sizes = [512, 3], strides = [1, 1]} : vector<512x27xbf16> to vector<512x3xbf16>
    %5 = arith.maximumf %3, %4 : vector<512x3xbf16>
    %6 = vector.extract_strided_slice %0 {offsets = [0, 21], sizes = [512, 3], strides = [1, 1]} : vector<512x27xbf16> to vector<512x3xbf16>
    %7 = vector.extract_strided_slice %0 {offsets = [0, 24], sizes = [512, 3], strides = [1, 1]} : vector<512x27xbf16> to vector<512x3xbf16>
    %8 = arith.maximumf %6, %7 : vector<512x3xbf16>
    %9 = arith.maximumf %5, %8 : vector<512x3xbf16>
    %c0_3 = arith.constant 0 : index
    %c0_4 = arith.constant 0 : index
    %10 = vector.load %arg3[%c0_3, %c0_4] : memref<3x16xbf16, #tpu.memory_space<vmem>>, vector<3x16xbf16>
    %cst_5 = arith.constant dense<0.000000e+00> : vector<512x16xf32>
    %11 = tpu.matmul %9, %10, %cst_5 {dimension_numbers = #tpu.dot_dimension_numbers<[1], [0], [0], [1], [0, 0, 1, 1], [], []>} : vector<512x3xbf16>, vector<3x16xbf16>, vector<512x16xf32> -> vector<512x16xf32>
    %12 = arith.addf %2, %11 : vector<512x16xf32>
    %c0_6 = arith.constant 0 : index
    %c0_7 = arith.constant 0 : index
    %13 = vector.load %arg4[%c0_6, %c0_7] : memref<1x16xf32, #tpu.memory_space<vmem>>, vector<1x16xf32>
    %14 = vector.broadcast %13 : vector<1x16xf32> to vector<512x16xf32>
    %15 = arith.addf %12, %14 : vector<512x16xf32>
    %cst_8 = arith.constant 0.000000e+00 : f32
    %16 = vector.broadcast %cst_8 : f32 to vector<512x16xf32>
    %17 = arith.maximumf %15, %16 : vector<512x16xf32>
    %18 = arith.truncf %17 : vector<512x16xf32> to vector<512x16xbf16>
    %c0_9 = arith.constant 0 : index
    %c0_10 = arith.constant 0 : index
    %19 = vector.load %arg5[%c0_9, %c0_10] : memref<512x16xbf16, #tpu.memory_space<vmem>>, vector<512x16xbf16>
    tpu.vector_store %arg5[%c0_9, %c0_10], %18 {strides = array<i32>} : memref<512x16xbf16, #tpu.memory_space<vmem>>, vector<512x16xbf16>,
    return
  }
  func.func @transform_0(%arg0: i32) -> (i32, i32) {
    %c0_i32 = arith.constant 0 : i32
    %c0_i32_0 = arith.constant 0 : i32
    return %arg0, %c0_i32 : i32, i32
  }
  func.func @transform_1(%arg0: i32) -> (i32, i32) {
    %c0_i32 = arith.constant 0 : i32
    %c0_i32_0 = arith.constant 0 : i32
    %c0_i32_1 = arith.constant 0 : i32
    return %c0_i32, %c0_i32_0 : i32, i32
  }
  func.func @transform_2(%arg0: i32) -> (i32, i32) {
    %c0_i32 = arith.constant 0 : i32
    %c0_i32_0 = arith.constant 0 : i32
    %c0_i32_1 = arith.constant 0 : i32
    return %c0_i32, %c0_i32_0 : i32, i32
  }
  func.func @transform_3(%arg0: i32) -> (i32, i32) {
    %c0_i32 = arith.constant 0 : i32
    %c0_i32_0 = arith.constant 0 : i32
    %c0_i32_1 = arith.constant 0 : i32
    return %c0_i32, %c0_i32_0 : i32, i32
  }
  func.func @transform_4(%arg0: i32) -> (i32, i32) {
    %c0_i32 = arith.constant 0 : i32
    %c0_i32_0 = arith.constant 0 : i32
    return %arg0, %c0_i32 : i32, i32
  }
}

module attributes {stable_mosaic.version = 11 : i64} {
  func.func @_down_kernel(%arg0: i32, %arg1: memref<128x144xbf16, #tpu.memory_space<vmem>>, %arg2: memref<144x64xbf16, #tpu.memory_space<vmem>>, %arg3: memref<16x64xbf16, #tpu.memory_space<vmem>>, %arg4: memref<1x64xf32, #tpu.memory_space<vmem>>, %arg5: memref<128x64xbf16, #tpu.memory_space<vmem>>) attributes {dimension_semantics = [#tpu.dimension_semantics<parallel>], iteration_bounds = array<i64: 1>, scalar_prefetch = 0 : i64, scratch_operands = 0 : i64, tpu.core_type = #tpu.core_type<tc>, window_params = [{transform_indices = @transform_0, window_bounds = array<i64: 128, 144>}, {pipeline_mode = #tpu.pipeline_mode<synchronous>, transform_indices = @transform_1, window_bounds = array<i64: 144, 64>}, {pipeline_mode = #tpu.pipeline_mode<synchronous>, transform_indices = @transform_2, window_bounds = array<i64: 16, 64>}, {pipeline_mode = #tpu.pipeline_mode<synchronous>, transform_indices = @transform_3, window_bounds = array<i64: 1, 64>}, {transform_indices = @transform_4, window_bounds = array<i64: 128, 64>}]} {
    %c0 = arith.constant 0 : index
    %c0_0 = arith.constant 0 : index
    %0 = vector.load %arg1[%c0, %c0_0] : memref<128x144xbf16, #tpu.memory_space<vmem>>, vector<128x144xbf16>
    %c0_1 = arith.constant 0 : index
    %c0_2 = arith.constant 0 : index
    %1 = vector.load %arg2[%c0_1, %c0_2] : memref<144x64xbf16, #tpu.memory_space<vmem>>, vector<144x64xbf16>
    %cst = arith.constant dense<0.000000e+00> : vector<128x64xf32>
    %2 = tpu.matmul %0, %1, %cst {dimension_numbers = #tpu.dot_dimension_numbers<[1], [0], [0], [1], [0, 0, 1, 1], [], []>} : vector<128x144xbf16>, vector<144x64xbf16>, vector<128x64xf32> -> vector<128x64xf32>
    %3 = vector.extract_strided_slice %0 {offsets = [0, 64], sizes = [128, 16], strides = [1, 1]} : vector<128x144xbf16> to vector<128x16xbf16>
    %4 = vector.extract_strided_slice %0 {offsets = [0, 80], sizes = [128, 16], strides = [1, 1]} : vector<128x144xbf16> to vector<128x16xbf16>
    %5 = arith.maximumf %3, %4 : vector<128x16xbf16>
    %6 = vector.extract_strided_slice %0 {offsets = [0, 112], sizes = [128, 16], strides = [1, 1]} : vector<128x144xbf16> to vector<128x16xbf16>
    %7 = vector.extract_strided_slice %0 {offsets = [0, 128], sizes = [128, 16], strides = [1, 1]} : vector<128x144xbf16> to vector<128x16xbf16>
    %8 = arith.maximumf %6, %7 : vector<128x16xbf16>
    %9 = arith.maximumf %5, %8 : vector<128x16xbf16>
    %c0_3 = arith.constant 0 : index
    %c0_4 = arith.constant 0 : index
    %10 = vector.load %arg3[%c0_3, %c0_4] : memref<16x64xbf16, #tpu.memory_space<vmem>>, vector<16x64xbf16>
    %cst_5 = arith.constant dense<0.000000e+00> : vector<128x64xf32>
    %11 = tpu.matmul %9, %10, %cst_5 {dimension_numbers = #tpu.dot_dimension_numbers<[1], [0], [0], [1], [0, 0, 1, 1], [], []>} : vector<128x16xbf16>, vector<16x64xbf16>, vector<128x64xf32> -> vector<128x64xf32>
    %12 = arith.addf %2, %11 : vector<128x64xf32>
    %c0_6 = arith.constant 0 : index
    %c0_7 = arith.constant 0 : index
    %13 = vector.load %arg4[%c0_6, %c0_7] : memref<1x64xf32, #tpu.memory_space<vmem>>, vector<1x64xf32>
    %14 = vector.broadcast %13 : vector<1x64xf32> to vector<128x64xf32>
    %15 = arith.addf %12, %14 : vector<128x64xf32>
    %cst_8 = arith.constant 0.000000e+00 : f32
    %16 = vector.broadcast %cst_8 : f32 to vector<128x64xf32>
    %17 = arith.maximumf %15, %16 : vector<128x64xf32>
    %18 = arith.truncf %17 : vector<128x64xf32> to vector<128x64xbf16>
    %c0_9 = arith.constant 0 : index
    %c0_10 = arith.constant 0 : index
    %19 = vector.load %arg5[%c0_9, %c0_10] : memref<128x64xbf16, #tpu.memory_space<vmem>>, vector<128x64xbf16>
    tpu.vector_store %arg5[%c0_9, %c0_10], %18 {strides = array<i32>} : memref<128x64xbf16, #tpu.memory_space<vmem>>, vector<128x64xbf16>,
    return
  }
  func.func @transform_0(%arg0: i32) -> (i32, i32) {
    %c0_i32 = arith.constant 0 : i32
    %c0_i32_0 = arith.constant 0 : i32
    return %arg0, %c0_i32 : i32, i32
  }
  func.func @transform_1(%arg0: i32) -> (i32, i32) {
    %c0_i32 = arith.constant 0 : i32
    %c0_i32_0 = arith.constant 0 : i32
    %c0_i32_1 = arith.constant 0 : i32
    return %c0_i32, %c0_i32_0 : i32, i32
  }
  func.func @transform_2(%arg0: i32) -> (i32, i32) {
    %c0_i32 = arith.constant 0 : i32
    %c0_i32_0 = arith.constant 0 : i32
    %c0_i32_1 = arith.constant 0 : i32
    return %c0_i32, %c0_i32_0 : i32, i32
  }
  func.func @transform_3(%arg0: i32) -> (i32, i32) {
    %c0_i32 = arith.constant 0 : i32
    %c0_i32_0 = arith.constant 0 : i32
    %c0_i32_1 = arith.constant 0 : i32
    return %c0_i32, %c0_i32_0 : i32, i32
  }
  func.func @transform_4(%arg0: i32) -> (i32, i32) {
    %c0_i32 = arith.constant 0 : i32
    %c0_i32_0 = arith.constant 0 : i32
    return %arg0, %c0_i32 : i32, i32
  }
}

module attributes {stable_mosaic.version = 11 : i64} {
  func.func @_fused_mm_kernel(%arg0: i32, %arg1: memref<128x192xbf16, #tpu.memory_space<vmem>>, %arg2: memref<192x64xbf16, #tpu.memory_space<vmem>>, %arg3: memref<1x64xf32, #tpu.memory_space<vmem>>, %arg4: memref<128x64xbf16, #tpu.memory_space<vmem>>) attributes {dimension_semantics = [#tpu.dimension_semantics<parallel>], iteration_bounds = array<i64: 1>, scalar_prefetch = 0 : i64, scratch_operands = 0 : i64, tpu.core_type = #tpu.core_type<tc>, window_params = [{transform_indices = @transform_0, window_bounds = array<i64: 128, 192>}, {pipeline_mode = #tpu.pipeline_mode<synchronous>, transform_indices = @transform_1, window_bounds = array<i64: 192, 64>}, {pipeline_mode = #tpu.pipeline_mode<synchronous>, transform_indices = @transform_2, window_bounds = array<i64: 1, 64>}, {transform_indices = @transform_3, window_bounds = array<i64: 128, 64>}]} {
    %c0 = arith.constant 0 : index
    %c0_0 = arith.constant 0 : index
    %0 = vector.load %arg1[%c0, %c0_0] : memref<128x192xbf16, #tpu.memory_space<vmem>>, vector<128x192xbf16>
    %c0_1 = arith.constant 0 : index
    %c0_2 = arith.constant 0 : index
    %1 = vector.load %arg2[%c0_1, %c0_2] : memref<192x64xbf16, #tpu.memory_space<vmem>>, vector<192x64xbf16>
    %cst = arith.constant dense<0.000000e+00> : vector<128x64xf32>
    %2 = tpu.matmul %0, %1, %cst {dimension_numbers = #tpu.dot_dimension_numbers<[1], [0], [0], [1], [0, 0, 1, 1], [], []>} : vector<128x192xbf16>, vector<192x64xbf16>, vector<128x64xf32> -> vector<128x64xf32>
    %c0_3 = arith.constant 0 : index
    %c0_4 = arith.constant 0 : index
    %3 = vector.load %arg3[%c0_3, %c0_4] : memref<1x64xf32, #tpu.memory_space<vmem>>, vector<1x64xf32>
    %4 = vector.broadcast %3 : vector<1x64xf32> to vector<128x64xf32>
    %5 = arith.addf %2, %4 : vector<128x64xf32>
    %cst_5 = arith.constant 0.000000e+00 : f32
    %6 = vector.broadcast %cst_5 : f32 to vector<128x64xf32>
    %7 = arith.maximumf %5, %6 : vector<128x64xf32>
    %8 = arith.truncf %7 : vector<128x64xf32> to vector<128x64xbf16>
    %c0_6 = arith.constant 0 : index
    %c0_7 = arith.constant 0 : index
    %9 = vector.load %arg4[%c0_6, %c0_7] : memref<128x64xbf16, #tpu.memory_space<vmem>>, vector<128x64xbf16>
    tpu.vector_store %arg4[%c0_6, %c0_7], %8 {strides = array<i32>} : memref<128x64xbf16, #tpu.memory_space<vmem>>, vector<128x64xbf16>,
    return
  }
  func.func @transform_0(%arg0: i32) -> (i32, i32) {
    %c0_i32 = arith.constant 0 : i32
    %c0_i32_0 = arith.constant 0 : i32
    return %arg0, %c0_i32 : i32, i32
  }
  func.func @transform_1(%arg0: i32) -> (i32, i32) {
    %c0_i32 = arith.constant 0 : i32
    %c0_i32_0 = arith.constant 0 : i32
    %c0_i32_1 = arith.constant 0 : i32
    return %c0_i32, %c0_i32_0 : i32, i32
  }
  func.func @transform_2(%arg0: i32) -> (i32, i32) {
    %c0_i32 = arith.constant 0 : i32
    %c0_i32_0 = arith.constant 0 : i32
    %c0_i32_1 = arith.constant 0 : i32
    return %c0_i32, %c0_i32_0 : i32, i32
  }
  func.func @transform_3(%arg0: i32) -> (i32, i32) {
    %c0_i32 = arith.constant 0 : i32
    %c0_i32_0 = arith.constant 0 : i32
    return %arg0, %c0_i32 : i32, i32
  }
}

module attributes {stable_mosaic.version = 11 : i64} {
  func.func @_fused_mm_kernel(%arg0: i32, %arg1: memref<128x192xbf16, #tpu.memory_space<vmem>>, %arg2: memref<192x64xbf16, #tpu.memory_space<vmem>>, %arg3: memref<1x64xf32, #tpu.memory_space<vmem>>, %arg4: memref<128x64xbf16, #tpu.memory_space<vmem>>, %arg5: memref<64x64xbf16, #tpu.memory_space<vmem>>, %arg6: memref<128x64xbf16, #tpu.memory_space<vmem>>) attributes {dimension_semantics = [#tpu.dimension_semantics<parallel>], iteration_bounds = array<i64: 1>, scalar_prefetch = 0 : i64, scratch_operands = 0 : i64, tpu.core_type = #tpu.core_type<tc>, window_params = [{transform_indices = @transform_0, window_bounds = array<i64: 128, 192>}, {pipeline_mode = #tpu.pipeline_mode<synchronous>, transform_indices = @transform_1, window_bounds = array<i64: 192, 64>}, {pipeline_mode = #tpu.pipeline_mode<synchronous>, transform_indices = @transform_2, window_bounds = array<i64: 1, 64>}, {transform_indices = @transform_3, window_bounds = array<i64: 128, 64>}, {pipeline_mode = #tpu.pipeline_mode<synchronous>, transform_indices = @transform_4, window_bounds = array<i64: 64, 64>}, {transform_indices = @transform_5, window_bounds = array<i64: 128, 64>}]} {
    %c0 = arith.constant 0 : index
    %c0_0 = arith.constant 0 : index
    %0 = vector.load %arg1[%c0, %c0_0] : memref<128x192xbf16, #tpu.memory_space<vmem>>, vector<128x192xbf16>
    %c0_1 = arith.constant 0 : index
    %c0_2 = arith.constant 0 : index
    %1 = vector.load %arg2[%c0_1, %c0_2] : memref<192x64xbf16, #tpu.memory_space<vmem>>, vector<192x64xbf16>
    %cst = arith.constant dense<0.000000e+00> : vector<128x64xf32>
    %2 = tpu.matmul %0, %1, %cst {dimension_numbers = #tpu.dot_dimension_numbers<[1], [0], [0], [1], [0, 0, 1, 1], [], []>} : vector<128x192xbf16>, vector<192x64xbf16>, vector<128x64xf32> -> vector<128x64xf32>
    %c0_3 = arith.constant 0 : index
    %c0_4 = arith.constant 0 : index
    %3 = vector.load %arg4[%c0_3, %c0_4] : memref<128x64xbf16, #tpu.memory_space<vmem>>, vector<128x64xbf16>
    %c0_5 = arith.constant 0 : index
    %c0_6 = arith.constant 0 : index
    %4 = vector.load %arg5[%c0_5, %c0_6] : memref<64x64xbf16, #tpu.memory_space<vmem>>, vector<64x64xbf16>
    %cst_7 = arith.constant dense<0.000000e+00> : vector<128x64xf32>
    %5 = tpu.matmul %3, %4, %cst_7 {dimension_numbers = #tpu.dot_dimension_numbers<[1], [0], [0], [1], [0, 0, 1, 1], [], []>} : vector<128x64xbf16>, vector<64x64xbf16>, vector<128x64xf32> -> vector<128x64xf32>
    %6 = arith.addf %2, %5 : vector<128x64xf32>
    %c0_8 = arith.constant 0 : index
    %c0_9 = arith.constant 0 : index
    %7 = vector.load %arg3[%c0_8, %c0_9] : memref<1x64xf32, #tpu.memory_space<vmem>>, vector<1x64xf32>
    %8 = vector.broadcast %7 : vector<1x64xf32> to vector<128x64xf32>
    %9 = arith.addf %6, %8 : vector<128x64xf32>
    %cst_10 = arith.constant 0.000000e+00 : f32
    %10 = vector.broadcast %cst_10 : f32 to vector<128x64xf32>
    %11 = arith.maximumf %9, %10 : vector<128x64xf32>
    %12 = arith.truncf %11 : vector<128x64xf32> to vector<128x64xbf16>
    %c0_11 = arith.constant 0 : index
    %c0_12 = arith.constant 0 : index
    %13 = vector.load %arg6[%c0_11, %c0_12] : memref<128x64xbf16, #tpu.memory_space<vmem>>, vector<128x64xbf16>
    tpu.vector_store %arg6[%c0_11, %c0_12], %12 {strides = array<i32>} : memref<128x64xbf16, #tpu.memory_space<vmem>>, vector<128x64xbf16>,
    return
  }
  func.func @transform_0(%arg0: i32) -> (i32, i32) {
    %c0_i32 = arith.constant 0 : i32
    %c0_i32_0 = arith.constant 0 : i32
    return %arg0, %c0_i32 : i32, i32
  }
  func.func @transform_1(%arg0: i32) -> (i32, i32) {
    %c0_i32 = arith.constant 0 : i32
    %c0_i32_0 = arith.constant 0 : i32
    %c0_i32_1 = arith.constant 0 : i32
    return %c0_i32, %c0_i32_0 : i32, i32
  }
  func.func @transform_2(%arg0: i32) -> (i32, i32) {
    %c0_i32 = arith.constant 0 : i32
    %c0_i32_0 = arith.constant 0 : i32
    %c0_i32_1 = arith.constant 0 : i32
    return %c0_i32, %c0_i32_0 : i32, i32
  }
  func.func @transform_3(%arg0: i32) -> (i32, i32) {
    %c0_i32 = arith.constant 0 : i32
    %c0_i32_0 = arith.constant 0 : i32
    return %arg0, %c0_i32 : i32, i32
  }
  func.func @transform_4(%arg0: i32) -> (i32, i32) {
    %c0_i32 = arith.constant 0 : i32
    %c0_i32_0 = arith.constant 0 : i32
    %c0_i32_1 = arith.constant 0 : i32
    return %c0_i32, %c0_i32_0 : i32, i32
  }
  func.func @transform_5(%arg0: i32) -> (i32, i32) {
    %c0_i32 = arith.constant 0 : i32
    %c0_i32_0 = arith.constant 0 : i32
    return %arg0, %c0_i32 : i32, i32
  }
}

module attributes {stable_mosaic.version = 11 : i64} {
  func.func @_fused_mm_kernel(%arg0: i32, %arg1: memref<128x192xbf16, #tpu.memory_space<vmem>>, %arg2: memref<192x64xbf16, #tpu.memory_space<vmem>>, %arg3: memref<1x64xf32, #tpu.memory_space<vmem>>, %arg4: memref<128x64xbf16, #tpu.memory_space<vmem>>, %arg5: memref<64x64xbf16, #tpu.memory_space<vmem>>, %arg6: memref<128x64xbf16, #tpu.memory_space<vmem>>, %arg7: memref<128x64xbf16, #tpu.memory_space<vmem>>) attributes {dimension_semantics = [#tpu.dimension_semantics<parallel>], iteration_bounds = array<i64: 1>, scalar_prefetch = 0 : i64, scratch_operands = 0 : i64, tpu.core_type = #tpu.core_type<tc>, window_params = [{transform_indices = @transform_0, window_bounds = array<i64: 128, 192>}, {pipeline_mode = #tpu.pipeline_mode<synchronous>, transform_indices = @transform_1, window_bounds = array<i64: 192, 64>}, {pipeline_mode = #tpu.pipeline_mode<synchronous>, transform_indices = @transform_2, window_bounds = array<i64: 1, 64>}, {transform_indices = @transform_3, window_bounds = array<i64: 128, 64>}, {pipeline_mode = #tpu.pipeline_mode<synchronous>, transform_indices = @transform_4, window_bounds = array<i64: 64, 64>}, {transform_indices = @transform_5, window_bounds = array<i64: 128, 64>}, {transform_indices = @transform_6, window_bounds = array<i64: 128, 64>}]} {
    %c0 = arith.constant 0 : index
    %c0_0 = arith.constant 0 : index
    %0 = vector.load %arg1[%c0, %c0_0] : memref<128x192xbf16, #tpu.memory_space<vmem>>, vector<128x192xbf16>
    %c0_1 = arith.constant 0 : index
    %c0_2 = arith.constant 0 : index
    %1 = vector.load %arg2[%c0_1, %c0_2] : memref<192x64xbf16, #tpu.memory_space<vmem>>, vector<192x64xbf16>
    %cst = arith.constant dense<0.000000e+00> : vector<128x64xf32>
    %2 = tpu.matmul %0, %1, %cst {dimension_numbers = #tpu.dot_dimension_numbers<[1], [0], [0], [1], [0, 0, 1, 1], [], []>} : vector<128x192xbf16>, vector<192x64xbf16>, vector<128x64xf32> -> vector<128x64xf32>
    %c0_3 = arith.constant 0 : index
    %c0_4 = arith.constant 0 : index
    %3 = vector.load %arg4[%c0_3, %c0_4] : memref<128x64xbf16, #tpu.memory_space<vmem>>, vector<128x64xbf16>
    %c0_5 = arith.constant 0 : index
    %c0_6 = arith.constant 0 : index
    %4 = vector.load %arg5[%c0_5, %c0_6] : memref<64x64xbf16, #tpu.memory_space<vmem>>, vector<64x64xbf16>
    %cst_7 = arith.constant dense<0.000000e+00> : vector<128x64xf32>
    %5 = tpu.matmul %3, %4, %cst_7 {dimension_numbers = #tpu.dot_dimension_numbers<[1], [0], [0], [1], [0, 0, 1, 1], [], []>} : vector<128x64xbf16>, vector<64x64xbf16>, vector<128x64xf32> -> vector<128x64xf32>
    %6 = arith.addf %2, %5 : vector<128x64xf32>
    %c0_8 = arith.constant 0 : index
    %c0_9 = arith.constant 0 : index
    %7 = vector.load %arg3[%c0_8, %c0_9] : memref<1x64xf32, #tpu.memory_space<vmem>>, vector<1x64xf32>
    %8 = vector.broadcast %7 : vector<1x64xf32> to vector<128x64xf32>
    %9 = arith.addf %6, %8 : vector<128x64xf32>
    %c0_10 = arith.constant 0 : index
    %c0_11 = arith.constant 0 : index
    %10 = vector.load %arg6[%c0_10, %c0_11] : memref<128x64xbf16, #tpu.memory_space<vmem>>, vector<128x64xbf16>
    %11 = arith.extf %10 : vector<128x64xbf16> to vector<128x64xf32>
    %12 = arith.addf %9, %11 : vector<128x64xf32>
    %cst_12 = arith.constant 0.000000e+00 : f32
    %13 = vector.broadcast %cst_12 : f32 to vector<128x64xf32>
    %14 = arith.maximumf %12, %13 : vector<128x64xf32>
    %15 = arith.truncf %14 : vector<128x64xf32> to vector<128x64xbf16>
    %c0_13 = arith.constant 0 : index
    %c0_14 = arith.constant 0 : index
    %16 = vector.load %arg7[%c0_13, %c0_14] : memref<128x64xbf16, #tpu.memory_space<vmem>>, vector<128x64xbf16>
    tpu.vector_store %arg7[%c0_13, %c0_14], %15 {strides = array<i32>} : memref<128x64xbf16, #tpu.memory_space<vmem>>, vector<128x64xbf16>,
    return
  }
  func.func @transform_0(%arg0: i32) -> (i32, i32) {
    %c0_i32 = arith.constant 0 : i32
    %c0_i32_0 = arith.constant 0 : i32
    return %arg0, %c0_i32 : i32, i32
  }
  func.func @transform_1(%arg0: i32) -> (i32, i32) {
    %c0_i32 = arith.constant 0 : i32
    %c0_i32_0 = arith.constant 0 : i32
    %c0_i32_1 = arith.constant 0 : i32
    return %c0_i32, %c0_i32_0 : i32, i32
  }
  func.func @transform_2(%arg0: i32) -> (i32, i32) {
    %c0_i32 = arith.constant 0 : i32
    %c0_i32_0 = arith.constant 0 : i32
    %c0_i32_1 = arith.constant 0 : i32
    return %c0_i32, %c0_i32_0 : i32, i32
  }
  func.func @transform_3(%arg0: i32) -> (i32, i32) {
    %c0_i32 = arith.constant 0 : i32
    %c0_i32_0 = arith.constant 0 : i32
    return %arg0, %c0_i32 : i32, i32
  }
  func.func @transform_4(%arg0: i32) -> (i32, i32) {
    %c0_i32 = arith.constant 0 : i32
    %c0_i32_0 = arith.constant 0 : i32
    %c0_i32_1 = arith.constant 0 : i32
    return %c0_i32, %c0_i32_0 : i32, i32
  }
  func.func @transform_5(%arg0: i32) -> (i32, i32) {
    %c0_i32 = arith.constant 0 : i32
    %c0_i32_0 = arith.constant 0 : i32
    return %arg0, %c0_i32 : i32, i32
  }
  func.func @transform_6(%arg0: i32) -> (i32, i32) {
    %c0_i32 = arith.constant 0 : i32
    %c0_i32_0 = arith.constant 0 : i32
    return %arg0, %c0_i32 : i32, i32
  }
}

module attributes {stable_mosaic.version = 11 : i64} {
  func.func @_down_kernel(%arg0: i32, %arg1: memref<32x576xbf16, #tpu.memory_space<vmem>>, %arg2: memref<576x128xbf16, #tpu.memory_space<vmem>>, %arg3: memref<64x128xbf16, #tpu.memory_space<vmem>>, %arg4: memref<1x128xf32, #tpu.memory_space<vmem>>, %arg5: memref<32x128xbf16, #tpu.memory_space<vmem>>) attributes {dimension_semantics = [#tpu.dimension_semantics<parallel>], iteration_bounds = array<i64: 1>, scalar_prefetch = 0 : i64, scratch_operands = 0 : i64, tpu.core_type = #tpu.core_type<tc>, window_params = [{transform_indices = @transform_0, window_bounds = array<i64: 32, 576>}, {pipeline_mode = #tpu.pipeline_mode<synchronous>, transform_indices = @transform_1, window_bounds = array<i64: 576, 128>}, {pipeline_mode = #tpu.pipeline_mode<synchronous>, transform_indices = @transform_2, window_bounds = array<i64: 64, 128>}, {pipeline_mode = #tpu.pipeline_mode<synchronous>, transform_indices = @transform_3, window_bounds = array<i64: 1, 128>}, {transform_indices = @transform_4, window_bounds = array<i64: 32, 128>}]} {
    %c0 = arith.constant 0 : index
    %c0_0 = arith.constant 0 : index
    %0 = vector.load %arg1[%c0, %c0_0] : memref<32x576xbf16, #tpu.memory_space<vmem>>, vector<32x576xbf16>
    %c0_1 = arith.constant 0 : index
    %c0_2 = arith.constant 0 : index
    %1 = vector.load %arg2[%c0_1, %c0_2] : memref<576x128xbf16, #tpu.memory_space<vmem>>, vector<576x128xbf16>
    %cst = arith.constant dense<0.000000e+00> : vector<32x128xf32>
    %2 = tpu.matmul %0, %1, %cst {dimension_numbers = #tpu.dot_dimension_numbers<[1], [0], [0], [1], [0, 0, 1, 1], [], []>} : vector<32x576xbf16>, vector<576x128xbf16>, vector<32x128xf32> -> vector<32x128xf32>
    %3 = vector.extract_strided_slice %0 {offsets = [0, 256], sizes = [32, 64], strides = [1, 1]} : vector<32x576xbf16> to vector<32x64xbf16>
    %4 = vector.extract_strided_slice %0 {offsets = [0, 320], sizes = [32, 64], strides = [1, 1]} : vector<32x576xbf16> to vector<32x64xbf16>
    %5 = arith.maximumf %3, %4 : vector<32x64xbf16>
    %6 = vector.extract_strided_slice %0 {offsets = [0, 448], sizes = [32, 64], strides = [1, 1]} : vector<32x576xbf16> to vector<32x64xbf16>
    %7 = vector.extract_strided_slice %0 {offsets = [0, 512], sizes = [32, 64], strides = [1, 1]} : vector<32x576xbf16> to vector<32x64xbf16>
    %8 = arith.maximumf %6, %7 : vector<32x64xbf16>
    %9 = arith.maximumf %5, %8 : vector<32x64xbf16>
    %c0_3 = arith.constant 0 : index
    %c0_4 = arith.constant 0 : index
    %10 = vector.load %arg3[%c0_3, %c0_4] : memref<64x128xbf16, #tpu.memory_space<vmem>>, vector<64x128xbf16>
    %cst_5 = arith.constant dense<0.000000e+00> : vector<32x128xf32>
    %11 = tpu.matmul %9, %10, %cst_5 {dimension_numbers = #tpu.dot_dimension_numbers<[1], [0], [0], [1], [0, 0, 1, 1], [], []>} : vector<32x64xbf16>, vector<64x128xbf16>, vector<32x128xf32> -> vector<32x128xf32>
    %12 = arith.addf %2, %11 : vector<32x128xf32>
    %c0_6 = arith.constant 0 : index
    %c0_7 = arith.constant 0 : index
    %13 = vector.load %arg4[%c0_6, %c0_7] : memref<1x128xf32, #tpu.memory_space<vmem>>, vector<1x128xf32>
    %14 = vector.broadcast %13 : vector<1x128xf32> to vector<32x128xf32>
    %15 = arith.addf %12, %14 : vector<32x128xf32>
    %cst_8 = arith.constant 0.000000e+00 : f32
    %16 = vector.broadcast %cst_8 : f32 to vector<32x128xf32>
    %17 = arith.maximumf %15, %16 : vector<32x128xf32>
    %18 = arith.truncf %17 : vector<32x128xf32> to vector<32x128xbf16>
    %c0_9 = arith.constant 0 : index
    %c0_10 = arith.constant 0 : index
    %19 = vector.load %arg5[%c0_9, %c0_10] : memref<32x128xbf16, #tpu.memory_space<vmem>>, vector<32x128xbf16>
    tpu.vector_store %arg5[%c0_9, %c0_10], %18 {strides = array<i32>} : memref<32x128xbf16, #tpu.memory_space<vmem>>, vector<32x128xbf16>,
    return
  }
  func.func @transform_0(%arg0: i32) -> (i32, i32) {
    %c0_i32 = arith.constant 0 : i32
    %c0_i32_0 = arith.constant 0 : i32
    return %arg0, %c0_i32 : i32, i32
  }
  func.func @transform_1(%arg0: i32) -> (i32, i32) {
    %c0_i32 = arith.constant 0 : i32
    %c0_i32_0 = arith.constant 0 : i32
    %c0_i32_1 = arith.constant 0 : i32
    return %c0_i32, %c0_i32_0 : i32, i32
  }
  func.func @transform_2(%arg0: i32) -> (i32, i32) {
    %c0_i32 = arith.constant 0 : i32
    %c0_i32_0 = arith.constant 0 : i32
    %c0_i32_1 = arith.constant 0 : i32
    return %c0_i32, %c0_i32_0 : i32, i32
  }
  func.func @transform_3(%arg0: i32) -> (i32, i32) {
    %c0_i32 = arith.constant 0 : i32
    %c0_i32_0 = arith.constant 0 : i32
    %c0_i32_1 = arith.constant 0 : i32
    return %c0_i32, %c0_i32_0 : i32, i32
  }
  func.func @transform_4(%arg0: i32) -> (i32, i32) {
    %c0_i32 = arith.constant 0 : i32
    %c0_i32_0 = arith.constant 0 : i32
    return %arg0, %c0_i32 : i32, i32
  }
}

module attributes {stable_mosaic.version = 11 : i64} {
  func.func @_fused_mm_kernel(%arg0: i32, %arg1: memref<32x384xbf16, #tpu.memory_space<vmem>>, %arg2: memref<384x128xbf16, #tpu.memory_space<vmem>>, %arg3: memref<1x128xf32, #tpu.memory_space<vmem>>, %arg4: memref<32x128xbf16, #tpu.memory_space<vmem>>) attributes {dimension_semantics = [#tpu.dimension_semantics<parallel>], iteration_bounds = array<i64: 1>, scalar_prefetch = 0 : i64, scratch_operands = 0 : i64, tpu.core_type = #tpu.core_type<tc>, window_params = [{transform_indices = @transform_0, window_bounds = array<i64: 32, 384>}, {pipeline_mode = #tpu.pipeline_mode<synchronous>, transform_indices = @transform_1, window_bounds = array<i64: 384, 128>}, {pipeline_mode = #tpu.pipeline_mode<synchronous>, transform_indices = @transform_2, window_bounds = array<i64: 1, 128>}, {transform_indices = @transform_3, window_bounds = array<i64: 32, 128>}]} {
    %c0 = arith.constant 0 : index
    %c0_0 = arith.constant 0 : index
    %0 = vector.load %arg1[%c0, %c0_0] : memref<32x384xbf16, #tpu.memory_space<vmem>>, vector<32x384xbf16>
    %c0_1 = arith.constant 0 : index
    %c0_2 = arith.constant 0 : index
    %1 = vector.load %arg2[%c0_1, %c0_2] : memref<384x128xbf16, #tpu.memory_space<vmem>>, vector<384x128xbf16>
    %cst = arith.constant dense<0.000000e+00> : vector<32x128xf32>
    %2 = tpu.matmul %0, %1, %cst {dimension_numbers = #tpu.dot_dimension_numbers<[1], [0], [0], [1], [0, 0, 1, 1], [], []>} : vector<32x384xbf16>, vector<384x128xbf16>, vector<32x128xf32> -> vector<32x128xf32>
    %c0_3 = arith.constant 0 : index
    %c0_4 = arith.constant 0 : index
    %3 = vector.load %arg3[%c0_3, %c0_4] : memref<1x128xf32, #tpu.memory_space<vmem>>, vector<1x128xf32>
    %4 = vector.broadcast %3 : vector<1x128xf32> to vector<32x128xf32>
    %5 = arith.addf %2, %4 : vector<32x128xf32>
    %cst_5 = arith.constant 0.000000e+00 : f32
    %6 = vector.broadcast %cst_5 : f32 to vector<32x128xf32>
    %7 = arith.maximumf %5, %6 : vector<32x128xf32>
    %8 = arith.truncf %7 : vector<32x128xf32> to vector<32x128xbf16>
    %c0_6 = arith.constant 0 : index
    %c0_7 = arith.constant 0 : index
    %9 = vector.load %arg4[%c0_6, %c0_7] : memref<32x128xbf16, #tpu.memory_space<vmem>>, vector<32x128xbf16>
    tpu.vector_store %arg4[%c0_6, %c0_7], %8 {strides = array<i32>} : memref<32x128xbf16, #tpu.memory_space<vmem>>, vector<32x128xbf16>,
    return
  }
  func.func @transform_0(%arg0: i32) -> (i32, i32) {
    %c0_i32 = arith.constant 0 : i32
    %c0_i32_0 = arith.constant 0 : i32
    return %arg0, %c0_i32 : i32, i32
  }
  func.func @transform_1(%arg0: i32) -> (i32, i32) {
    %c0_i32 = arith.constant 0 : i32
    %c0_i32_0 = arith.constant 0 : i32
    %c0_i32_1 = arith.constant 0 : i32
    return %c0_i32, %c0_i32_0 : i32, i32
  }
  func.func @transform_2(%arg0: i32) -> (i32, i32) {
    %c0_i32 = arith.constant 0 : i32
    %c0_i32_0 = arith.constant 0 : i32
    %c0_i32_1 = arith.constant 0 : i32
    return %c0_i32, %c0_i32_0 : i32, i32
  }
  func.func @transform_3(%arg0: i32) -> (i32, i32) {
    %c0_i32 = arith.constant 0 : i32
    %c0_i32_0 = arith.constant 0 : i32
    return %arg0, %c0_i32 : i32, i32
  }
}

module attributes {stable_mosaic.version = 11 : i64} {
  func.func @_fused_mm_kernel(%arg0: i32, %arg1: memref<32x384xbf16, #tpu.memory_space<vmem>>, %arg2: memref<384x128xbf16, #tpu.memory_space<vmem>>, %arg3: memref<1x128xf32, #tpu.memory_space<vmem>>, %arg4: memref<32x128xbf16, #tpu.memory_space<vmem>>, %arg5: memref<128x128xbf16, #tpu.memory_space<vmem>>, %arg6: memref<32x128xbf16, #tpu.memory_space<vmem>>) attributes {dimension_semantics = [#tpu.dimension_semantics<parallel>], iteration_bounds = array<i64: 1>, scalar_prefetch = 0 : i64, scratch_operands = 0 : i64, tpu.core_type = #tpu.core_type<tc>, window_params = [{transform_indices = @transform_0, window_bounds = array<i64: 32, 384>}, {pipeline_mode = #tpu.pipeline_mode<synchronous>, transform_indices = @transform_1, window_bounds = array<i64: 384, 128>}, {pipeline_mode = #tpu.pipeline_mode<synchronous>, transform_indices = @transform_2, window_bounds = array<i64: 1, 128>}, {transform_indices = @transform_3, window_bounds = array<i64: 32, 128>}, {pipeline_mode = #tpu.pipeline_mode<synchronous>, transform_indices = @transform_4, window_bounds = array<i64: 128, 128>}, {transform_indices = @transform_5, window_bounds = array<i64: 32, 128>}]} {
    %c0 = arith.constant 0 : index
    %c0_0 = arith.constant 0 : index
    %0 = vector.load %arg1[%c0, %c0_0] : memref<32x384xbf16, #tpu.memory_space<vmem>>, vector<32x384xbf16>
    %c0_1 = arith.constant 0 : index
    %c0_2 = arith.constant 0 : index
    %1 = vector.load %arg2[%c0_1, %c0_2] : memref<384x128xbf16, #tpu.memory_space<vmem>>, vector<384x128xbf16>
    %cst = arith.constant dense<0.000000e+00> : vector<32x128xf32>
    %2 = tpu.matmul %0, %1, %cst {dimension_numbers = #tpu.dot_dimension_numbers<[1], [0], [0], [1], [0, 0, 1, 1], [], []>} : vector<32x384xbf16>, vector<384x128xbf16>, vector<32x128xf32> -> vector<32x128xf32>
    %c0_3 = arith.constant 0 : index
    %c0_4 = arith.constant 0 : index
    %3 = vector.load %arg4[%c0_3, %c0_4] : memref<32x128xbf16, #tpu.memory_space<vmem>>, vector<32x128xbf16>
    %c0_5 = arith.constant 0 : index
    %c0_6 = arith.constant 0 : index
    %4 = vector.load %arg5[%c0_5, %c0_6] : memref<128x128xbf16, #tpu.memory_space<vmem>>, vector<128x128xbf16>
    %cst_7 = arith.constant dense<0.000000e+00> : vector<32x128xf32>
    %5 = tpu.matmul %3, %4, %cst_7 {dimension_numbers = #tpu.dot_dimension_numbers<[1], [0], [0], [1], [0, 0, 1, 1], [], []>} : vector<32x128xbf16>, vector<128x128xbf16>, vector<32x128xf32> -> vector<32x128xf32>
    %6 = arith.addf %2, %5 : vector<32x128xf32>
    %c0_8 = arith.constant 0 : index
    %c0_9 = arith.constant 0 : index
    %7 = vector.load %arg3[%c0_8, %c0_9] : memref<1x128xf32, #tpu.memory_space<vmem>>, vector<1x128xf32>
    %8 = vector.broadcast %7 : vector<1x128xf32> to vector<32x128xf32>
    %9 = arith.addf %6, %8 : vector<32x128xf32>
    %cst_10 = arith.constant 0.000000e+00 : f32
    %10 = vector.broadcast %cst_10 : f32 to vector<32x128xf32>
    %11 = arith.maximumf %9, %10 : vector<32x128xf32>
    %12 = arith.truncf %11 : vector<32x128xf32> to vector<32x128xbf16>
    %c0_11 = arith.constant 0 : index
    %c0_12 = arith.constant 0 : index
    %13 = vector.load %arg6[%c0_11, %c0_12] : memref<32x128xbf16, #tpu.memory_space<vmem>>, vector<32x128xbf16>
    tpu.vector_store %arg6[%c0_11, %c0_12], %12 {strides = array<i32>} : memref<32x128xbf16, #tpu.memory_space<vmem>>, vector<32x128xbf16>,
    return
  }
  func.func @transform_0(%arg0: i32) -> (i32, i32) {
    %c0_i32 = arith.constant 0 : i32
    %c0_i32_0 = arith.constant 0 : i32
    return %arg0, %c0_i32 : i32, i32
  }
  func.func @transform_1(%arg0: i32) -> (i32, i32) {
    %c0_i32 = arith.constant 0 : i32
    %c0_i32_0 = arith.constant 0 : i32
    %c0_i32_1 = arith.constant 0 : i32
    return %c0_i32, %c0_i32_0 : i32, i32
  }
  func.func @transform_2(%arg0: i32) -> (i32, i32) {
    %c0_i32 = arith.constant 0 : i32
    %c0_i32_0 = arith.constant 0 : i32
    %c0_i32_1 = arith.constant 0 : i32
    return %c0_i32, %c0_i32_0 : i32, i32
  }
  func.func @transform_3(%arg0: i32) -> (i32, i32) {
    %c0_i32 = arith.constant 0 : i32
    %c0_i32_0 = arith.constant 0 : i32
    return %arg0, %c0_i32 : i32, i32
  }
  func.func @transform_4(%arg0: i32) -> (i32, i32) {
    %c0_i32 = arith.constant 0 : i32
    %c0_i32_0 = arith.constant 0 : i32
    %c0_i32_1 = arith.constant 0 : i32
    return %c0_i32, %c0_i32_0 : i32, i32
  }
  func.func @transform_5(%arg0: i32) -> (i32, i32) {
    %c0_i32 = arith.constant 0 : i32
    %c0_i32_0 = arith.constant 0 : i32
    return %arg0, %c0_i32 : i32, i32
  }
}

module attributes {stable_mosaic.version = 11 : i64} {
  func.func @_fused_mm_kernel(%arg0: i32, %arg1: memref<32x384xbf16, #tpu.memory_space<vmem>>, %arg2: memref<384x128xbf16, #tpu.memory_space<vmem>>, %arg3: memref<1x128xf32, #tpu.memory_space<vmem>>, %arg4: memref<32x128xbf16, #tpu.memory_space<vmem>>, %arg5: memref<128x128xbf16, #tpu.memory_space<vmem>>, %arg6: memref<32x128xbf16, #tpu.memory_space<vmem>>, %arg7: memref<32x128xbf16, #tpu.memory_space<vmem>>) attributes {dimension_semantics = [#tpu.dimension_semantics<parallel>], iteration_bounds = array<i64: 1>, scalar_prefetch = 0 : i64, scratch_operands = 0 : i64, tpu.core_type = #tpu.core_type<tc>, window_params = [{transform_indices = @transform_0, window_bounds = array<i64: 32, 384>}, {pipeline_mode = #tpu.pipeline_mode<synchronous>, transform_indices = @transform_1, window_bounds = array<i64: 384, 128>}, {pipeline_mode = #tpu.pipeline_mode<synchronous>, transform_indices = @transform_2, window_bounds = array<i64: 1, 128>}, {transform_indices = @transform_3, window_bounds = array<i64: 32, 128>}, {pipeline_mode = #tpu.pipeline_mode<synchronous>, transform_indices = @transform_4, window_bounds = array<i64: 128, 128>}, {transform_indices = @transform_5, window_bounds = array<i64: 32, 128>}, {transform_indices = @transform_6, window_bounds = array<i64: 32, 128>}]} {
    %c0 = arith.constant 0 : index
    %c0_0 = arith.constant 0 : index
    %0 = vector.load %arg1[%c0, %c0_0] : memref<32x384xbf16, #tpu.memory_space<vmem>>, vector<32x384xbf16>
    %c0_1 = arith.constant 0 : index
    %c0_2 = arith.constant 0 : index
    %1 = vector.load %arg2[%c0_1, %c0_2] : memref<384x128xbf16, #tpu.memory_space<vmem>>, vector<384x128xbf16>
    %cst = arith.constant dense<0.000000e+00> : vector<32x128xf32>
    %2 = tpu.matmul %0, %1, %cst {dimension_numbers = #tpu.dot_dimension_numbers<[1], [0], [0], [1], [0, 0, 1, 1], [], []>} : vector<32x384xbf16>, vector<384x128xbf16>, vector<32x128xf32> -> vector<32x128xf32>
    %c0_3 = arith.constant 0 : index
    %c0_4 = arith.constant 0 : index
    %3 = vector.load %arg4[%c0_3, %c0_4] : memref<32x128xbf16, #tpu.memory_space<vmem>>, vector<32x128xbf16>
    %c0_5 = arith.constant 0 : index
    %c0_6 = arith.constant 0 : index
    %4 = vector.load %arg5[%c0_5, %c0_6] : memref<128x128xbf16, #tpu.memory_space<vmem>>, vector<128x128xbf16>
    %cst_7 = arith.constant dense<0.000000e+00> : vector<32x128xf32>
    %5 = tpu.matmul %3, %4, %cst_7 {dimension_numbers = #tpu.dot_dimension_numbers<[1], [0], [0], [1], [0, 0, 1, 1], [], []>} : vector<32x128xbf16>, vector<128x128xbf16>, vector<32x128xf32> -> vector<32x128xf32>
    %6 = arith.addf %2, %5 : vector<32x128xf32>
    %c0_8 = arith.constant 0 : index
    %c0_9 = arith.constant 0 : index
    %7 = vector.load %arg3[%c0_8, %c0_9] : memref<1x128xf32, #tpu.memory_space<vmem>>, vector<1x128xf32>
    %8 = vector.broadcast %7 : vector<1x128xf32> to vector<32x128xf32>
    %9 = arith.addf %6, %8 : vector<32x128xf32>
    %c0_10 = arith.constant 0 : index
    %c0_11 = arith.constant 0 : index
    %10 = vector.load %arg6[%c0_10, %c0_11] : memref<32x128xbf16, #tpu.memory_space<vmem>>, vector<32x128xbf16>
    %11 = arith.extf %10 : vector<32x128xbf16> to vector<32x128xf32>
    %12 = arith.addf %9, %11 : vector<32x128xf32>
    %cst_12 = arith.constant 0.000000e+00 : f32
    %13 = vector.broadcast %cst_12 : f32 to vector<32x128xf32>
    %14 = arith.maximumf %12, %13 : vector<32x128xf32>
    %15 = arith.truncf %14 : vector<32x128xf32> to vector<32x128xbf16>
    %c0_13 = arith.constant 0 : index
    %c0_14 = arith.constant 0 : index
    %16 = vector.load %arg7[%c0_13, %c0_14] : memref<32x128xbf16, #tpu.memory_space<vmem>>, vector<32x128xbf16>
    tpu.vector_store %arg7[%c0_13, %c0_14], %15 {strides = array<i32>} : memref<32x128xbf16, #tpu.memory_space<vmem>>, vector<32x128xbf16>,
    return
  }
  func.func @transform_0(%arg0: i32) -> (i32, i32) {
    %c0_i32 = arith.constant 0 : i32
    %c0_i32_0 = arith.constant 0 : i32
    return %arg0, %c0_i32 : i32, i32
  }
  func.func @transform_1(%arg0: i32) -> (i32, i32) {
    %c0_i32 = arith.constant 0 : i32
    %c0_i32_0 = arith.constant 0 : i32
    %c0_i32_1 = arith.constant 0 : i32
    return %c0_i32, %c0_i32_0 : i32, i32
  }
  func.func @transform_2(%arg0: i32) -> (i32, i32) {
    %c0_i32 = arith.constant 0 : i32
    %c0_i32_0 = arith.constant 0 : i32
    %c0_i32_1 = arith.constant 0 : i32
    return %c0_i32, %c0_i32_0 : i32, i32
  }
  func.func @transform_3(%arg0: i32) -> (i32, i32) {
    %c0_i32 = arith.constant 0 : i32
    %c0_i32_0 = arith.constant 0 : i32
    return %arg0, %c0_i32 : i32, i32
  }
  func.func @transform_4(%arg0: i32) -> (i32, i32) {
    %c0_i32 = arith.constant 0 : i32
    %c0_i32_0 = arith.constant 0 : i32
    %c0_i32_1 = arith.constant 0 : i32
    return %c0_i32, %c0_i32_0 : i32, i32
  }
  func.func @transform_5(%arg0: i32) -> (i32, i32) {
    %c0_i32 = arith.constant 0 : i32
    %c0_i32_0 = arith.constant 0 : i32
    return %arg0, %c0_i32 : i32, i32
  }
  func.func @transform_6(%arg0: i32) -> (i32, i32) {
    %c0_i32 = arith.constant 0 : i32
    %c0_i32_0 = arith.constant 0 : i32
    return %arg0, %c0_i32 : i32, i32
  }
}

module attributes {stable_mosaic.version = 11 : i64} {
  func.func @_fused_mm_kernel(%arg0: i32, %arg1: memref<32x512xbf16, #tpu.memory_space<vmem>>, %arg2: memref<512x256xbf16, #tpu.memory_space<vmem>>, %arg3: memref<1x256xf32, #tpu.memory_space<vmem>>, %arg4: memref<32x256xbf16, #tpu.memory_space<vmem>>) attributes {dimension_semantics = [#tpu.dimension_semantics<parallel>], iteration_bounds = array<i64: 1>, scalar_prefetch = 0 : i64, scratch_operands = 0 : i64, tpu.core_type = #tpu.core_type<tc>, window_params = [{transform_indices = @transform_0, window_bounds = array<i64: 32, 512>}, {pipeline_mode = #tpu.pipeline_mode<synchronous>, transform_indices = @transform_1, window_bounds = array<i64: 512, 256>}, {pipeline_mode = #tpu.pipeline_mode<synchronous>, transform_indices = @transform_2, window_bounds = array<i64: 1, 256>}, {transform_indices = @transform_3, window_bounds = array<i64: 32, 256>}]} {
    %c0 = arith.constant 0 : index
    %c0_0 = arith.constant 0 : index
    %0 = vector.load %arg1[%c0, %c0_0] : memref<32x512xbf16, #tpu.memory_space<vmem>>, vector<32x512xbf16>
    %c0_1 = arith.constant 0 : index
    %c0_2 = arith.constant 0 : index
    %1 = vector.load %arg2[%c0_1, %c0_2] : memref<512x256xbf16, #tpu.memory_space<vmem>>, vector<512x256xbf16>
    %cst = arith.constant dense<0.000000e+00> : vector<32x256xf32>
    %2 = tpu.matmul %0, %1, %cst {dimension_numbers = #tpu.dot_dimension_numbers<[1], [0], [0], [1], [0, 0, 1, 1], [], []>} : vector<32x512xbf16>, vector<512x256xbf16>, vector<32x256xf32> -> vector<32x256xf32>
    %c0_3 = arith.constant 0 : index
    %c0_4 = arith.constant 0 : index
    %3 = vector.load %arg3[%c0_3, %c0_4] : memref<1x256xf32, #tpu.memory_space<vmem>>, vector<1x256xf32>
    %4 = vector.broadcast %3 : vector<1x256xf32> to vector<32x256xf32>
    %5 = arith.addf %2, %4 : vector<32x256xf32>
    %cst_5 = arith.constant 0.000000e+00 : f32
    %6 = vector.broadcast %cst_5 : f32 to vector<32x256xf32>
    %7 = arith.maximumf %5, %6 : vector<32x256xf32>
    %8 = arith.truncf %7 : vector<32x256xf32> to vector<32x256xbf16>
    %c0_6 = arith.constant 0 : index
    %c0_7 = arith.constant 0 : index
    %9 = vector.load %arg4[%c0_6, %c0_7] : memref<32x256xbf16, #tpu.memory_space<vmem>>, vector<32x256xbf16>
    tpu.vector_store %arg4[%c0_6, %c0_7], %8 {strides = array<i32>} : memref<32x256xbf16, #tpu.memory_space<vmem>>, vector<32x256xbf16>,
    return
  }
  func.func @transform_0(%arg0: i32) -> (i32, i32) {
    %c0_i32 = arith.constant 0 : i32
    %c0_i32_0 = arith.constant 0 : i32
    return %arg0, %c0_i32 : i32, i32
  }
  func.func @transform_1(%arg0: i32) -> (i32, i32) {
    %c0_i32 = arith.constant 0 : i32
    %c0_i32_0 = arith.constant 0 : i32
    %c0_i32_1 = arith.constant 0 : i32
    return %c0_i32, %c0_i32_0 : i32, i32
  }
  func.func @transform_2(%arg0: i32) -> (i32, i32) {
    %c0_i32 = arith.constant 0 : i32
    %c0_i32_0 = arith.constant 0 : i32
    %c0_i32_1 = arith.constant 0 : i32
    return %c0_i32, %c0_i32_0 : i32, i32
  }
  func.func @transform_3(%arg0: i32) -> (i32, i32) {
    %c0_i32 = arith.constant 0 : i32
    %c0_i32_0 = arith.constant 0 : i32
    return %arg0, %c0_i32 : i32, i32
  }
}

module attributes {stable_mosaic.version = 11 : i64} {
  func.func @_fused_mm_kernel(%arg0: i32, %arg1: memref<128x192xbf16, #tpu.memory_space<vmem>>, %arg2: memref<192x64xbf16, #tpu.memory_space<vmem>>, %arg3: memref<1x64xf32, #tpu.memory_space<vmem>>, %arg4: memref<128x64xbf16, #tpu.memory_space<vmem>>, %arg5: memref<128x64xbf16, #tpu.memory_space<vmem>>) attributes {dimension_semantics = [#tpu.dimension_semantics<parallel>], iteration_bounds = array<i64: 1>, scalar_prefetch = 0 : i64, scratch_operands = 0 : i64, tpu.core_type = #tpu.core_type<tc>, window_params = [{transform_indices = @transform_0, window_bounds = array<i64: 128, 192>}, {pipeline_mode = #tpu.pipeline_mode<synchronous>, transform_indices = @transform_1, window_bounds = array<i64: 192, 64>}, {pipeline_mode = #tpu.pipeline_mode<synchronous>, transform_indices = @transform_2, window_bounds = array<i64: 1, 64>}, {transform_indices = @transform_3, window_bounds = array<i64: 128, 64>}, {transform_indices = @transform_4, window_bounds = array<i64: 128, 64>}]} {
    %c0 = arith.constant 0 : index
    %c0_0 = arith.constant 0 : index
    %0 = vector.load %arg1[%c0, %c0_0] : memref<128x192xbf16, #tpu.memory_space<vmem>>, vector<128x192xbf16>
    %c0_1 = arith.constant 0 : index
    %c0_2 = arith.constant 0 : index
    %1 = vector.load %arg2[%c0_1, %c0_2] : memref<192x64xbf16, #tpu.memory_space<vmem>>, vector<192x64xbf16>
    %cst = arith.constant dense<0.000000e+00> : vector<128x64xf32>
    %2 = tpu.matmul %0, %1, %cst {dimension_numbers = #tpu.dot_dimension_numbers<[1], [0], [0], [1], [0, 0, 1, 1], [], []>} : vector<128x192xbf16>, vector<192x64xbf16>, vector<128x64xf32> -> vector<128x64xf32>
    %c0_3 = arith.constant 0 : index
    %c0_4 = arith.constant 0 : index
    %3 = vector.load %arg3[%c0_3, %c0_4] : memref<1x64xf32, #tpu.memory_space<vmem>>, vector<1x64xf32>
    %4 = vector.broadcast %3 : vector<1x64xf32> to vector<128x64xf32>
    %5 = arith.addf %2, %4 : vector<128x64xf32>
    %c0_5 = arith.constant 0 : index
    %c0_6 = arith.constant 0 : index
    %6 = vector.load %arg4[%c0_5, %c0_6] : memref<128x64xbf16, #tpu.memory_space<vmem>>, vector<128x64xbf16>
    %7 = arith.extf %6 : vector<128x64xbf16> to vector<128x64xf32>
    %8 = arith.addf %5, %7 : vector<128x64xf32>
    %cst_7 = arith.constant 0.000000e+00 : f32
    %9 = vector.broadcast %cst_7 : f32 to vector<128x64xf32>
    %10 = arith.maximumf %8, %9 : vector<128x64xf32>
    %11 = arith.truncf %10 : vector<128x64xf32> to vector<128x64xbf16>
    %c0_8 = arith.constant 0 : index
    %c0_9 = arith.constant 0 : index
    %12 = vector.load %arg5[%c0_8, %c0_9] : memref<128x64xbf16, #tpu.memory_space<vmem>>, vector<128x64xbf16>
    tpu.vector_store %arg5[%c0_8, %c0_9], %11 {strides = array<i32>} : memref<128x64xbf16, #tpu.memory_space<vmem>>, vector<128x64xbf16>,
    return
  }
  func.func @transform_0(%arg0: i32) -> (i32, i32) {
    %c0_i32 = arith.constant 0 : i32
    %c0_i32_0 = arith.constant 0 : i32
    return %arg0, %c0_i32 : i32, i32
  }
  func.func @transform_1(%arg0: i32) -> (i32, i32) {
    %c0_i32 = arith.constant 0 : i32
    %c0_i32_0 = arith.constant 0 : i32
    %c0_i32_1 = arith.constant 0 : i32
    return %c0_i32, %c0_i32_0 : i32, i32
  }
  func.func @transform_2(%arg0: i32) -> (i32, i32) {
    %c0_i32 = arith.constant 0 : i32
    %c0_i32_0 = arith.constant 0 : i32
    %c0_i32_1 = arith.constant 0 : i32
    return %c0_i32, %c0_i32_0 : i32, i32
  }
  func.func @transform_3(%arg0: i32) -> (i32, i32) {
    %c0_i32 = arith.constant 0 : i32
    %c0_i32_0 = arith.constant 0 : i32
    return %arg0, %c0_i32 : i32, i32
  }
  func.func @transform_4(%arg0: i32) -> (i32, i32) {
    %c0_i32 = arith.constant 0 : i32
    %c0_i32_0 = arith.constant 0 : i32
    return %arg0, %c0_i32 : i32, i32
  }
}

module attributes {stable_mosaic.version = 11 : i64} {
  func.func @_fused_mm_kernel(%arg0: i32, %arg1: memref<128x256xbf16, #tpu.memory_space<vmem>>, %arg2: memref<256x64xbf16, #tpu.memory_space<vmem>>, %arg3: memref<1x64xf32, #tpu.memory_space<vmem>>, %arg4: memref<128x64xbf16, #tpu.memory_space<vmem>>) attributes {dimension_semantics = [#tpu.dimension_semantics<parallel>], iteration_bounds = array<i64: 1>, scalar_prefetch = 0 : i64, scratch_operands = 0 : i64, tpu.core_type = #tpu.core_type<tc>, window_params = [{transform_indices = @transform_0, window_bounds = array<i64: 128, 256>}, {pipeline_mode = #tpu.pipeline_mode<synchronous>, transform_indices = @transform_1, window_bounds = array<i64: 256, 64>}, {pipeline_mode = #tpu.pipeline_mode<synchronous>, transform_indices = @transform_2, window_bounds = array<i64: 1, 64>}, {transform_indices = @transform_3, window_bounds = array<i64: 128, 64>}]} {
    %c0 = arith.constant 0 : index
    %c0_0 = arith.constant 0 : index
    %0 = vector.load %arg1[%c0, %c0_0] : memref<128x256xbf16, #tpu.memory_space<vmem>>, vector<128x256xbf16>
    %c0_1 = arith.constant 0 : index
    %c0_2 = arith.constant 0 : index
    %1 = vector.load %arg2[%c0_1, %c0_2] : memref<256x64xbf16, #tpu.memory_space<vmem>>, vector<256x64xbf16>
    %cst = arith.constant dense<0.000000e+00> : vector<128x64xf32>
    %2 = tpu.matmul %0, %1, %cst {dimension_numbers = #tpu.dot_dimension_numbers<[1], [0], [0], [1], [0, 0, 1, 1], [], []>} : vector<128x256xbf16>, vector<256x64xbf16>, vector<128x64xf32> -> vector<128x64xf32>
    %c0_3 = arith.constant 0 : index
    %c0_4 = arith.constant 0 : index
    %3 = vector.load %arg3[%c0_3, %c0_4] : memref<1x64xf32, #tpu.memory_space<vmem>>, vector<1x64xf32>
    %4 = vector.broadcast %3 : vector<1x64xf32> to vector<128x64xf32>
    %5 = arith.addf %2, %4 : vector<128x64xf32>
    %cst_5 = arith.constant 0.000000e+00 : f32
    %6 = vector.broadcast %cst_5 : f32 to vector<128x64xf32>
    %7 = arith.maximumf %5, %6 : vector<128x64xf32>
    %8 = arith.truncf %7 : vector<128x64xf32> to vector<128x64xbf16>
    %c0_6 = arith.constant 0 : index
    %c0_7 = arith.constant 0 : index
    %9 = vector.load %arg4[%c0_6, %c0_7] : memref<128x64xbf16, #tpu.memory_space<vmem>>, vector<128x64xbf16>
    tpu.vector_store %arg4[%c0_6, %c0_7], %8 {strides = array<i32>} : memref<128x64xbf16, #tpu.memory_space<vmem>>, vector<128x64xbf16>,
    return
  }
  func.func @transform_0(%arg0: i32) -> (i32, i32) {
    %c0_i32 = arith.constant 0 : i32
    %c0_i32_0 = arith.constant 0 : i32
    return %arg0, %c0_i32 : i32, i32
  }
  func.func @transform_1(%arg0: i32) -> (i32, i32) {
    %c0_i32 = arith.constant 0 : i32
    %c0_i32_0 = arith.constant 0 : i32
    %c0_i32_1 = arith.constant 0 : i32
    return %c0_i32, %c0_i32_0 : i32, i32
  }
  func.func @transform_2(%arg0: i32) -> (i32, i32) {
    %c0_i32 = arith.constant 0 : i32
    %c0_i32_0 = arith.constant 0 : i32
    %c0_i32_1 = arith.constant 0 : i32
    return %c0_i32, %c0_i32_0 : i32, i32
  }
  func.func @transform_3(%arg0: i32) -> (i32, i32) {
    %c0_i32 = arith.constant 0 : i32
    %c0_i32_0 = arith.constant 0 : i32
    return %arg0, %c0_i32 : i32, i32
  }
}

module attributes {stable_mosaic.version = 11 : i64} {
  func.func @_fused_mm_kernel(%arg0: i32, %arg1: memref<512x48xbf16, #tpu.memory_space<vmem>>, %arg2: memref<48x16xbf16, #tpu.memory_space<vmem>>, %arg3: memref<1x16xf32, #tpu.memory_space<vmem>>, %arg4: memref<512x16xbf16, #tpu.memory_space<vmem>>) attributes {dimension_semantics = [#tpu.dimension_semantics<parallel>], iteration_bounds = array<i64: 1>, scalar_prefetch = 0 : i64, scratch_operands = 0 : i64, tpu.core_type = #tpu.core_type<tc>, window_params = [{transform_indices = @transform_0, window_bounds = array<i64: 512, 48>}, {pipeline_mode = #tpu.pipeline_mode<synchronous>, transform_indices = @transform_1, window_bounds = array<i64: 48, 16>}, {pipeline_mode = #tpu.pipeline_mode<synchronous>, transform_indices = @transform_2, window_bounds = array<i64: 1, 16>}, {transform_indices = @transform_3, window_bounds = array<i64: 512, 16>}]} {
    %c0 = arith.constant 0 : index
    %c0_0 = arith.constant 0 : index
    %0 = vector.load %arg1[%c0, %c0_0] : memref<512x48xbf16, #tpu.memory_space<vmem>>, vector<512x48xbf16>
    %c0_1 = arith.constant 0 : index
    %c0_2 = arith.constant 0 : index
    %1 = vector.load %arg2[%c0_1, %c0_2] : memref<48x16xbf16, #tpu.memory_space<vmem>>, vector<48x16xbf16>
    %cst = arith.constant dense<0.000000e+00> : vector<512x16xf32>
    %2 = tpu.matmul %0, %1, %cst {dimension_numbers = #tpu.dot_dimension_numbers<[1], [0], [0], [1], [0, 0, 1, 1], [], []>} : vector<512x48xbf16>, vector<48x16xbf16>, vector<512x16xf32> -> vector<512x16xf32>
    %c0_3 = arith.constant 0 : index
    %c0_4 = arith.constant 0 : index
    %3 = vector.load %arg3[%c0_3, %c0_4] : memref<1x16xf32, #tpu.memory_space<vmem>>, vector<1x16xf32>
    %4 = vector.broadcast %3 : vector<1x16xf32> to vector<512x16xf32>
    %5 = arith.addf %2, %4 : vector<512x16xf32>
    %cst_5 = arith.constant 0.000000e+00 : f32
    %6 = vector.broadcast %cst_5 : f32 to vector<512x16xf32>
    %7 = arith.maximumf %5, %6 : vector<512x16xf32>
    %8 = arith.truncf %7 : vector<512x16xf32> to vector<512x16xbf16>
    %c0_6 = arith.constant 0 : index
    %c0_7 = arith.constant 0 : index
    %9 = vector.load %arg4[%c0_6, %c0_7] : memref<512x16xbf16, #tpu.memory_space<vmem>>, vector<512x16xbf16>
    tpu.vector_store %arg4[%c0_6, %c0_7], %8 {strides = array<i32>} : memref<512x16xbf16, #tpu.memory_space<vmem>>, vector<512x16xbf16>,
    return
  }
  func.func @transform_0(%arg0: i32) -> (i32, i32) {
    %c0_i32 = arith.constant 0 : i32
    %c0_i32_0 = arith.constant 0 : i32
    return %arg0, %c0_i32 : i32, i32
  }
  func.func @transform_1(%arg0: i32) -> (i32, i32) {
    %c0_i32 = arith.constant 0 : i32
    %c0_i32_0 = arith.constant 0 : i32
    %c0_i32_1 = arith.constant 0 : i32
    return %c0_i32, %c0_i32_0 : i32, i32
  }
  func.func @transform_2(%arg0: i32) -> (i32, i32) {
    %c0_i32 = arith.constant 0 : i32
    %c0_i32_0 = arith.constant 0 : i32
    %c0_i32_1 = arith.constant 0 : i32
    return %c0_i32, %c0_i32_0 : i32, i32
  }
  func.func @transform_3(%arg0: i32) -> (i32, i32) {
    %c0_i32 = arith.constant 0 : i32
    %c0_i32_0 = arith.constant 0 : i32
    return %arg0, %c0_i32 : i32, i32
  }
}

module attributes {stable_mosaic.version = 11 : i64} {
  func.func @_fused_mm_kernel(%arg0: i32, %arg1: memref<512x48xbf16, #tpu.memory_space<vmem>>, %arg2: memref<48x16xbf16, #tpu.memory_space<vmem>>, %arg3: memref<1x16xf32, #tpu.memory_space<vmem>>, %arg4: memref<512x16xbf16, #tpu.memory_space<vmem>>, %arg5: memref<512x16xbf16, #tpu.memory_space<vmem>>) attributes {dimension_semantics = [#tpu.dimension_semantics<parallel>], iteration_bounds = array<i64: 1>, scalar_prefetch = 0 : i64, scratch_operands = 0 : i64, tpu.core_type = #tpu.core_type<tc>, window_params = [{transform_indices = @transform_0, window_bounds = array<i64: 512, 48>}, {pipeline_mode = #tpu.pipeline_mode<synchronous>, transform_indices = @transform_1, window_bounds = array<i64: 48, 16>}, {pipeline_mode = #tpu.pipeline_mode<synchronous>, transform_indices = @transform_2, window_bounds = array<i64: 1, 16>}, {transform_indices = @transform_3, window_bounds = array<i64: 512, 16>}, {transform_indices = @transform_4, window_bounds = array<i64: 512, 16>}]} {
    %c0 = arith.constant 0 : index
    %c0_0 = arith.constant 0 : index
    %0 = vector.load %arg1[%c0, %c0_0] : memref<512x48xbf16, #tpu.memory_space<vmem>>, vector<512x48xbf16>
    %c0_1 = arith.constant 0 : index
    %c0_2 = arith.constant 0 : index
    %1 = vector.load %arg2[%c0_1, %c0_2] : memref<48x16xbf16, #tpu.memory_space<vmem>>, vector<48x16xbf16>
    %cst = arith.constant dense<0.000000e+00> : vector<512x16xf32>
    %2 = tpu.matmul %0, %1, %cst {dimension_numbers = #tpu.dot_dimension_numbers<[1], [0], [0], [1], [0, 0, 1, 1], [], []>} : vector<512x48xbf16>, vector<48x16xbf16>, vector<512x16xf32> -> vector<512x16xf32>
    %c0_3 = arith.constant 0 : index
    %c0_4 = arith.constant 0 : index
    %3 = vector.load %arg3[%c0_3, %c0_4] : memref<1x16xf32, #tpu.memory_space<vmem>>, vector<1x16xf32>
    %4 = vector.broadcast %3 : vector<1x16xf32> to vector<512x16xf32>
    %5 = arith.addf %2, %4 : vector<512x16xf32>
    %c0_5 = arith.constant 0 : index
    %c0_6 = arith.constant 0 : index
    %6 = vector.load %arg4[%c0_5, %c0_6] : memref<512x16xbf16, #tpu.memory_space<vmem>>, vector<512x16xbf16>
    %7 = arith.extf %6 : vector<512x16xbf16> to vector<512x16xf32>
    %8 = arith.addf %5, %7 : vector<512x16xf32>
    %cst_7 = arith.constant 0.000000e+00 : f32
    %9 = vector.broadcast %cst_7 : f32 to vector<512x16xf32>
    %10 = arith.maximumf %8, %9 : vector<512x16xf32>
    %11 = arith.truncf %10 : vector<512x16xf32> to vector<512x16xbf16>
    %c0_8 = arith.constant 0 : index
    %c0_9 = arith.constant 0 : index
    %12 = vector.load %arg5[%c0_8, %c0_9] : memref<512x16xbf16, #tpu.memory_space<vmem>>, vector<512x16xbf16>
    tpu.vector_store %arg5[%c0_8, %c0_9], %11 {strides = array<i32>} : memref<512x16xbf16, #tpu.memory_space<vmem>>, vector<512x16xbf16>,
    return
  }
  func.func @transform_0(%arg0: i32) -> (i32, i32) {
    %c0_i32 = arith.constant 0 : i32
    %c0_i32_0 = arith.constant 0 : i32
    return %arg0, %c0_i32 : i32, i32
  }
  func.func @transform_1(%arg0: i32) -> (i32, i32) {
    %c0_i32 = arith.constant 0 : i32
    %c0_i32_0 = arith.constant 0 : i32
    %c0_i32_1 = arith.constant 0 : i32
    return %c0_i32, %c0_i32_0 : i32, i32
  }
  func.func @transform_2(%arg0: i32) -> (i32, i32) {
    %c0_i32 = arith.constant 0 : i32
    %c0_i32_0 = arith.constant 0 : i32
    %c0_i32_1 = arith.constant 0 : i32
    return %c0_i32, %c0_i32_0 : i32, i32
  }
  func.func @transform_3(%arg0: i32) -> (i32, i32) {
    %c0_i32 = arith.constant 0 : i32
    %c0_i32_0 = arith.constant 0 : i32
    return %arg0, %c0_i32 : i32, i32
  }
  func.func @transform_4(%arg0: i32) -> (i32, i32) {
    %c0_i32 = arith.constant 0 : i32
    %c0_i32_0 = arith.constant 0 : i32
    return %arg0, %c0_i32 : i32, i32
  }
}

module attributes {stable_mosaic.version = 11 : i64} {
  func.func @_fused_mm_kernel(%arg0: i32, %arg1: memref<512x16xbf16, #tpu.memory_space<vmem>>, %arg2: memref<16x52xbf16, #tpu.memory_space<vmem>>, %arg3: memref<1x52xf32, #tpu.memory_space<vmem>>, %arg4: memref<512x52xf32, #tpu.memory_space<vmem>>) attributes {dimension_semantics = [#tpu.dimension_semantics<parallel>], iteration_bounds = array<i64: 1>, scalar_prefetch = 0 : i64, scratch_operands = 0 : i64, tpu.core_type = #tpu.core_type<tc>, window_params = [{transform_indices = @transform_0, window_bounds = array<i64: 512, 16>}, {pipeline_mode = #tpu.pipeline_mode<synchronous>, transform_indices = @transform_1, window_bounds = array<i64: 16, 52>}, {pipeline_mode = #tpu.pipeline_mode<synchronous>, transform_indices = @transform_2, window_bounds = array<i64: 1, 52>}, {transform_indices = @transform_3, window_bounds = array<i64: 512, 52>}]} {
    %c0 = arith.constant 0 : index
    %c0_0 = arith.constant 0 : index
    %0 = vector.load %arg1[%c0, %c0_0] : memref<512x16xbf16, #tpu.memory_space<vmem>>, vector<512x16xbf16>
    %c0_1 = arith.constant 0 : index
    %c0_2 = arith.constant 0 : index
    %1 = vector.load %arg2[%c0_1, %c0_2] : memref<16x52xbf16, #tpu.memory_space<vmem>>, vector<16x52xbf16>
    %cst = arith.constant dense<0.000000e+00> : vector<512x52xf32>
    %2 = tpu.matmul %0, %1, %cst {dimension_numbers = #tpu.dot_dimension_numbers<[1], [0], [0], [1], [0, 0, 1, 1], [], []>} : vector<512x16xbf16>, vector<16x52xbf16>, vector<512x52xf32> -> vector<512x52xf32>
    %c0_3 = arith.constant 0 : index
    %c0_4 = arith.constant 0 : index
    %3 = vector.load %arg3[%c0_3, %c0_4] : memref<1x52xf32, #tpu.memory_space<vmem>>, vector<1x52xf32>
    %4 = vector.broadcast %3 : vector<1x52xf32> to vector<512x52xf32>
    %5 = arith.addf %2, %4 : vector<512x52xf32>
    %c0_5 = arith.constant 0 : index
    %c0_6 = arith.constant 0 : index
    %6 = vector.load %arg4[%c0_5, %c0_6] : memref<512x52xf32, #tpu.memory_space<vmem>>, vector<512x52xf32>
    tpu.vector_store %arg4[%c0_5, %c0_6], %5 {strides = array<i32>} : memref<512x52xf32, #tpu.memory_space<vmem>>, vector<512x52xf32>,
    return
  }
  func.func @transform_0(%arg0: i32) -> (i32, i32) {
    %c0_i32 = arith.constant 0 : i32
    %c0_i32_0 = arith.constant 0 : i32
    return %arg0, %c0_i32 : i32, i32
  }
  func.func @transform_1(%arg0: i32) -> (i32, i32) {
    %c0_i32 = arith.constant 0 : i32
    %c0_i32_0 = arith.constant 0 : i32
    %c0_i32_1 = arith.constant 0 : i32
    return %c0_i32, %c0_i32_0 : i32, i32
  }
  func.func @transform_2(%arg0: i32) -> (i32, i32) {
    %c0_i32 = arith.constant 0 : i32
    %c0_i32_0 = arith.constant 0 : i32
    %c0_i32_1 = arith.constant 0 : i32
    return %c0_i32, %c0_i32_0 : i32, i32
  }
  func.func @transform_3(%arg0: i32) -> (i32, i32) {
    %c0_i32 = arith.constant 0 : i32
    %c0_i32_0 = arith.constant 0 : i32
    return %arg0, %c0_i32 : i32, i32
  }
}

</mosaic_0001>

<llo_original>
// kernel: net_fwd.74
$region0: #{net_fwd.74}
  #allocation0 [shape = 'u32[]', space=smem, size = 0x4, offset = 0x4, fixed_abs, tag = 'smem constant byte address 0x4 - core index']
  #allocation1 [shape = 'u32[144,128]{1,0:T(1,128)}', space=vmem, size = 0x12000, scoped, tag = 'internal scratch']
  %s0 = inlined_call_operand.vmem [shape: bf16[512,27], index: 0, kind: input, shape index: {}]
  %s1 = inlined_call_operand.vmem [shape: bf16[27,16], index: 1, kind: input, shape index: {}]
  %s2 = inlined_call_operand.vmem [shape: bf16[3,16], index: 2, kind: input, shape index: {}]
  %s3 = inlined_call_operand.vmem [shape: f32[1,16], index: 3, kind: input, shape index: {}]
  %s4 = inlined_call_operand.vmem [shape: bf16[512,16], index: 4, kind: output, shape index: {}]
  %s5 = sld [smem:[#allocation0]]
  $region26: #{net_fwd.74} parent=0
    _
  %s7 = ssub.s32 1, %s5
  %s8 = scalar_select 0, %s7, %s5
  // Predicated region
  $region2: #{net_fwd.74} parent=0 // pred_check
    _
  $region3: #{net_fwd.74} parent=0 // pred_check_branch
    %10 = sbr.rel (0) target = $region5
  $region4: #{net_fwd.74} parent=0 // pred_region
    _
  $region5: #{net_fwd.74} parent=0 // pred_fallthru
    _
  // Predicated region
  $region6: #{net_fwd.74} parent=0 // pred_check
    _
  $region7: #{net_fwd.74} parent=0 // pred_check_branch
    %12 = sbr.rel (0) target = $region9
  $region8: #{net_fwd.74} parent=0 // pred_region
    _
  $region9: #{net_fwd.74} parent=0 // pred_fallthru
    _
  // Predicated region
  $region10: #{net_fwd.74} parent=0 // pred_check
    _
  $region11: #{net_fwd.74} parent=0 // pred_check_branch
    %14 = sbr.rel (0) target = $region13
  $region12: #{net_fwd.74} parent=0 // pred_region
    _
  $region13: #{net_fwd.74} parent=0 // pred_fallthru
    _
  // Predicated region
  $region14: #{net_fwd.74} parent=0 // pred_check
    _
  $region15: #{net_fwd.74} parent=0 // pred_check_branch
    %16 = sbr.rel (0) target = $region17
  $region16: #{net_fwd.74} parent=0 // pred_region
    _
  $region17: #{net_fwd.74} parent=0 // pred_fallthru
    _
  %v18 = vld [vmem:[%s0] sm:$0xf]
  %v19 = vld [vmem:[%s0 + $0x4] sm:$0xf]
  %v20 = vld [vmem:[%s0 + $0x8] sm:$0xf]
  %v21 = vld [vmem:[%s0 + $0xc] sm:$0xf]
  %v22 = vld [vmem:[%s0 + $0x10] sm:$0xf]
  %v23 = vld [vmem:[%s0 + $0x14] sm:$0xf]
  %v24 = vld [vmem:[%s0 + $0x18] sm:$0xf]
  %v25 = vld [vmem:[%s0 + $0x1c] sm:$0xf]
  %v26 = vld [vmem:[%s0 + $0x20] sm:$0xf]
  %v27 = vld [vmem:[%s0 + $0x24] sm:$0xf]
  %v28 = vld [vmem:[%s0 + $0x28] sm:$0xf]
  %v29 = vld [vmem:[%s0 + $0x2c] sm:$0xf]
  %v30 = vld [vmem:[%s0 + $0x30] sm:$0xf]
  %v31 = vld [vmem:[%s0 + $0x34] sm:$0xf]
  %v32 = vld [vmem:[%s0 + $0x38] sm:$0xf]
  %v33 = vld [vmem:[%s0 + $0x3c] sm:$0xf]
  %v34 = vld [vmem:[%s0 + $0x40] sm:$0xf]
  %v35 = vld [vmem:[%s0 + $0x44] sm:$0xf]
  %v36 = vld [vmem:[%s0 + $0x48] sm:$0xf]
  %v37 = vld [vmem:[%s0 + $0x4c] sm:$0xf]
  %v38 = vld [vmem:[%s0 + $0x50] sm:$0xf]
  %v39 = vld [vmem:[%s0 + $0x54] sm:$0xf]
  %v40 = vld [vmem:[%s0 + $0x58] sm:$0xf]
  %v41 = vld [vmem:[%s0 + $0x5c] sm:$0xf]
  %v42 = vld [vmem:[%s0 + $0x60] sm:$0xf]
  %v43 = vld [vmem:[%s0 + $0x64] sm:$0xf]
  %v44 = vld [vmem:[%s0 + $0x68] sm:$0xf]
  %v45 = vld [vmem:[%s0 + $0x6c] sm:$0xf]
  %v46 = vld [vmem:[%s0 + $0x70] sm:$0xf]
  %v47 = vld [vmem:[%s0 + $0x74] sm:$0xf]
  %v48 = vld [vmem:[%s0 + $0x78] sm:$0xf]
  %v49 = vld [vmem:[%s0 + $0x7c] sm:$0xf]
  %v50 = vld [vmem:[%s0 + $0x80] sm:$0xf]
  %v51 = vld [vmem:[%s0 + $0x84] sm:$0xf]
  %v52 = vld [vmem:[%s0 + $0x88] sm:$0xf]
  %v53 = vld [vmem:[%s0 + $0x8c] sm:$0xf]
  %v54 = vld [vmem:[%s0 + $0x90] sm:$0xf]
  %v55 = vld [vmem:[%s0 + $0x94] sm:$0xf]
  %v56 = vld [vmem:[%s0 + $0x98] sm:$0xf]
  %v57 = vld [vmem:[%s0 + $0x9c] sm:$0xf]
  %v58 = vld [vmem:[%s0 + $0xa0] sm:$0xf]
  %v59 = vld [vmem:[%s0 + $0xa4] sm:$0xf]
  %v60 = vld [vmem:[%s0 + $0xa8] sm:$0xf]
  %v61 = vld [vmem:[%s0 + $0xac] sm:$0xf]
  %v62 = vld [vmem:[%s0 + $0xb0] sm:$0xf]
  %v63 = vld [vmem:[%s0 + $0xb4] sm:$0xf]
  %v64 = vld [vmem:[%s0 + $0xb8] sm:$0xf]
  %v65 = vld [vmem:[%s0 + $0xbc] sm:$0xf]
  %v66 = vld [vmem:[%s0 + $0xc0] sm:$0xf]
  %v67 = vld [vmem:[%s0 + $0xc4] sm:$0xf]
  %v68 = vld [vmem:[%s0 + $0xc8] sm:$0xf]
  %v69 = vld [vmem:[%s0 + $0xcc] sm:$0xf]
  %v70 = vld [vmem:[%s0 + $0xd0] sm:$0xf]
  %v71 = vld [vmem:[%s0 + $0xd4] sm:$0xf]
  %v72 = vld [vmem:[%s0 + $0xd8] sm:$0xf]
  %v73 = vld [vmem:[%s0 + $0xdc] sm:$0xf]
  %v74 = vld [vmem:[%s0 + $0xe0] sm:$0xf]
  %v75 = vld [vmem:[%s0 + $0xe4] sm:$0xf]
  %v76 = vld [vmem:[%s0 + $0xe8] sm:$0xf]
  %v77 = vld [vmem:[%s0 + $0xec] sm:$0xf]
  %v78 = vld [vmem:[%s0 + $0xf0] sm:$0xf]
  %v79 = vld [vmem:[%s0 + $0xf4] sm:$0xf]
  %v80 = vld [vmem:[%s0 + $0xf8] sm:$0xf]
  %v81 = vld [vmem:[%s0 + $0xfc] sm:$0xf]
  %v82 = vld [vmem:[%s1] sm:$0xf]
  %v83 = vld [vmem:[%s1 + $0x4] sm:$0xf]
  %v84 = vld [vmem:[%s1 + $0x8] sm:$0xf]
  %v85 = vld [vmem:[%s1 + $0xc] sm:$0x3]
  %150 = vrot.lane.b32.xlu0 %v18, 125
  %v151 = vpop.permute.xlu0 %150
  %152 = vrot.lane.b32.xlu0 %v19, 125
  %v153 = vpop.permute.xlu0 %152
  %154 = vrot.lane.b32.xlu0 %v20, 125
  %v155 = vpop.permute.xlu0 %154
  %156 = vrot.lane.b32.xlu0 %v21, 125
  %v157 = vpop.permute.xlu0 %156
  %158 = vrot.lane.b32.xlu0 %v22, 125
  %v159 = vpop.permute.xlu0 %158
  %160 = vrot.lane.b32.xlu0 %v23, 125
  %v161 = vpop.permute.xlu0 %160
  %162 = vrot.lane.b32.xlu0 %v24, 125
  %v163 = vpop.permute.xlu0 %162
  %164 = vrot.lane.b32.xlu0 %v25, 125
  %v165 = vpop.permute.xlu0 %164
  %166 = vrot.lane.b32.xlu0 %v26, 125
  %v167 = vpop.permute.xlu0 %166
  %168 = vrot.lane.b32.xlu0 %v27, 125
  %v169 = vpop.permute.xlu0 %168
  %170 = vrot.lane.b32.xlu0 %v28, 125
  %v171 = vpop.permute.xlu0 %170
  %172 = vrot.lane.b32.xlu0 %v29, 125
  %v173 = vpop.permute.xlu0 %172
  %174 = vrot.lane.b32.xlu0 %v30, 125
  %v175 = vpop.permute.xlu0 %174
  %176 = vrot.lane.b32.xlu0 %v31, 125
  %v177 = vpop.permute.xlu0 %176
  %178 = vrot.lane.b32.xlu0 %v32, 125
  %v179 = vpop.permute.xlu0 %178
  %180 = vrot.lane.b32.xlu0 %v33, 125
  %v181 = vpop.permute.xlu0 %180
  %182 = vrot.lane.b32.xlu0 %v34, 125
  %v183 = vpop.permute.xlu0 %182
  %184 = vrot.lane.b32.xlu0 %v35, 125
  %v185 = vpop.permute.xlu0 %184
  %186 = vrot.lane.b32.xlu0 %v36, 125
  %v187 = vpop.permute.xlu0 %186
  %188 = vrot.lane.b32.xlu0 %v37, 125
  %v189 = vpop.permute.xlu0 %188
  %190 = vrot.lane.b32.xlu0 %v38, 125
  %v191 = vpop.permute.xlu0 %190
  %192 = vrot.lane.b32.xlu0 %v39, 125
  %v193 = vpop.permute.xlu0 %192
  %194 = vrot.lane.b32.xlu0 %v40, 125
  %v195 = vpop.permute.xlu0 %194
  %196 = vrot.lane.b32.xlu0 %v41, 125
  %v197 = vpop.permute.xlu0 %196
  %198 = vrot.lane.b32.xlu0 %v42, 125
  %v199 = vpop.permute.xlu0 %198
  %200 = vrot.lane.b32.xlu0 %v43, 125
  %v201 = vpop.permute.xlu0 %200
  %202 = vrot.lane.b32.xlu0 %v44, 125
  %v203 = vpop.permute.xlu0 %202
  %204 = vrot.lane.b32.xlu0 %v45, 125
  %v205 = vpop.permute.xlu0 %204
  %206 = vrot.lane.b32.xlu0 %v46, 125
  %v207 = vpop.permute.xlu0 %206
  %208 = vrot.lane.b32.xlu0 %v47, 125
  %v209 = vpop.permute.xlu0 %208
  %210 = vrot.lane.b32.xlu0 %v48, 125
  %v211 = vpop.permute.xlu0 %210
  %212 = vrot.lane.b32.xlu0 %v49, 125
  %v213 = vpop.permute.xlu0 %212
  %214 = vrot.lane.b32.xlu0 %v50, 125
  %v215 = vpop.permute.xlu0 %214
  %216 = vrot.lane.b32.xlu0 %v51, 125
  %v217 = vpop.permute.xlu0 %216
  %218 = vrot.lane.b32.xlu0 %v52, 125
  %v219 = vpop.permute.xlu0 %218
  %220 = vrot.lane.b32.xlu0 %v53, 125
  %v221 = vpop.permute.xlu0 %220
  %222 = vrot.lane.b32.xlu0 %v54, 125
  %v223 = vpop.permute.xlu0 %222
  %224 = vrot.lane.b32.xlu0 %v55, 125
  %v225 = vpop.permute.xlu0 %224
  %226 = vrot.lane.b32.xlu0 %v56, 125
  %v227 = vpop.permute.xlu0 %226
  %228 = vrot.lane.b32.xlu0 %v57, 125
  %v229 = vpop.permute.xlu0 %228
  %230 = vrot.lane.b32.xlu0 %v58, 125
  %v231 = vpop.permute.xlu0 %230
  %232 = vrot.lane.b32.xlu0 %v59, 125
  %v233 = vpop.permute.xlu0 %232
  %234 = vrot.lane.b32.xlu0 %v60, 125
  %v235 = vpop.permute.xlu0 %234
  %236 = vrot.lane.b32.xlu0 %v61, 125
  %v237 = vpop.permute.xlu0 %236
  %238 = vrot.lane.b32.xlu0 %v62, 125
  %v239 = vpop.permute.xlu0 %238
  %240 = vrot.lane.b32.xlu0 %v63, 125
  %v241 = vpop.permute.xlu0 %240
  %242 = vrot.lane.b32.xlu0 %v64, 125
  %v243 = vpop.permute.xlu0 %242
  %244 = vrot.lane.b32.xlu0 %v65, 125
  %v245 = vpop.permute.xlu0 %244
  %246 = vrot.lane.b32.xlu0 %v66, 125
  %v247 = vpop.permute.xlu0 %246
  %248 = vrot.lane.b32.xlu0 %v67, 125
  %v249 = vpop.permute.xlu0 %248
  %250 = vrot.lane.b32.xlu0 %v68, 125
  %v251 = vpop.permute.xlu0 %250
  %252 = vrot.lane.b32.xlu0 %v69, 125
  %v253 = vpop.permute.xlu0 %252
  %254 = vrot.lane.b32.xlu0 %v70, 125
  %v255 = vpop.permute.xlu0 %254
  %256 = vrot.lane.b32.xlu0 %v71, 125
  %v257 = vpop.permute.xlu0 %256
  %258 = vrot.lane.b32.xlu0 %v72, 125
  %v259 = vpop.permute.xlu0 %258
  %260 = vrot.lane.b32.xlu0 %v73, 125
  %v261 = vpop.permute.xlu0 %260
  %262 = vrot.lane.b32.xlu0 %v74, 125
  %v263 = vpop.permute.xlu0 %262
  %264 = vrot.lane.b32.xlu0 %v75, 125
  %v265 = vpop.permute.xlu0 %264
  %266 = vrot.lane.b32.xlu0 %v76, 125
  %v267 = vpop.permute.xlu0 %266
  %268 = vrot.lane.b32.xlu0 %v77, 125
  %v269 = vpop.permute.xlu0 %268
  %270 = vrot.lane.b32.xlu0 %v78, 125
  %v271 = vpop.permute.xlu0 %270
  %272 = vrot.lane.b32.xlu0 %v79, 125
  %v273 = vpop.permute.xlu0 %272
  %274 = vrot.lane.b32.xlu0 %v80, 125
  %v275 = vpop.permute.xlu0 %274
  %276 = vrot.lane.b32.xlu0 %v81, 125
  %v277 = vpop.permute.xlu0 %276
  %v342 = vmax.bf16 %v18, %v151
  %v343 = vmax.bf16 %v19, %v153
  %v344 = vmax.bf16 %v20, %v155
  %v345 = vmax.bf16 %v21, %v157
  %v346 = vmax.bf16 %v22, %v159
  %v347 = vmax.bf16 %v23, %v161
  %v348 = vmax.bf16 %v24, %v163
  %v349 = vmax.bf16 %v25, %v165
  %v350 = vmax.bf16 %v26, %v167
  %v351 = vmax.bf16 %v27, %v169
  %v352 = vmax.bf16 %v28, %v171
  %v353 = vmax.bf16 %v29, %v173
  %v354 = vmax.bf16 %v30, %v175
  %v355 = vmax.bf16 %v31, %v177
  %v356 = vmax.bf16 %v32, %v179
  %v357 = vmax.bf16 %v33, %v181
  %v358 = vmax.bf16 %v34, %v183
  %v359 = vmax.bf16 %v35, %v185
  %v360 = vmax.bf16 %v36, %v187
  %v361 = vmax.bf16 %v37, %v189
  %v362 = vmax.bf16 %v38, %v191
  %v363 = vmax.bf16 %v39, %v193
  %v364 = vmax.bf16 %v40, %v195
  %v365 = vmax.bf16 %v41, %v197
  %v366 = vmax.bf16 %v42, %v199
  %v367 = vmax.bf16 %v43, %v201
  %v368 = vmax.bf16 %v44, %v203
  %v369 = vmax.bf16 %v45, %v205
  %v370 = vmax.bf16 %v46, %v207
  %v371 = vmax.bf16 %v47, %v209
  %v372 = vmax.bf16 %v48, %v211
  %v373 = vmax.bf16 %v49, %v213
  %v374 = vmax.bf16 %v50, %v215
  %v375 = vmax.bf16 %v51, %v217
  %v376 = vmax.bf16 %v52, %v219
  %v377 = vmax.bf16 %v53, %v221
  %v378 = vmax.bf16 %v54, %v223
  %v379 = vmax.bf16 %v55, %v225
  %v380 = vmax.bf16 %v56, %v227
  %v381 = vmax.bf16 %v57, %v229
  %v382 = vmax.bf16 %v58, %v231
  %v383 = vmax.bf16 %v59, %v233
  %v384 = vmax.bf16 %v60, %v235
  %v385 = vmax.bf16 %v61, %v237
  %v386 = vmax.bf16 %v62, %v239
  %v387 = vmax.bf16 %v63, %v241
  %v388 = vmax.bf16 %v64, %v243
  %v389 = vmax.bf16 %v65, %v245
  %v390 = vmax.bf16 %v66, %v247
  %v391 = vmax.bf16 %v67, %v249
  %v392 = vmax.bf16 %v68, %v251
  %v393 = vmax.bf16 %v69, %v253
  %v394 = vmax.bf16 %v70, %v255
  %v395 = vmax.bf16 %v71, %v257
  %v396 = vmax.bf16 %v72, %v259
  %v397 = vmax.bf16 %v73, %v261
  %v398 = vmax.bf16 %v74, %v263
  %v399 = vmax.bf16 %v75, %v265
  %v400 = vmax.bf16 %v76, %v267
  %v401 = vmax.bf16 %v77, %v269
  %v402 = vmax.bf16 %v78, %v271
  %v403 = vmax.bf16 %v79, %v273
  %v404 = vmax.bf16 %v80, %v275
  %v405 = vmax.bf16 %v81, %v277
  %470 = vrot.lane.b32.xlu0 %v342, 119
  %v471 = vpop.permute.xlu0 %470
  %472 = vrot.lane.b32.xlu0 %v343, 119
  %v473 = vpop.permute.xlu0 %472
  %474 = vrot.lane.b32.xlu0 %v344, 119
  %v475 = vpop.permute.xlu0 %474
  %476 = vrot.lane.b32.xlu0 %v345, 119
  %v477 = vpop.permute.xlu0 %476
  %478 = vrot.lane.b32.xlu0 %v346, 119
  %v479 = vpop.permute.xlu0 %478
  %480 = vrot.lane.b32.xlu0 %v347, 119
  %v481 = vpop.permute.xlu0 %480
  %482 = vrot.lane.b32.xlu0 %v348, 119
  %v483 = vpop.permute.xlu0 %482
  %484 = vrot.lane.b32.xlu0 %v349, 119
  %v485 = vpop.permute.xlu0 %484
  %486 = vrot.lane.b32.xlu0 %v350, 119
  %v487 = vpop.permute.xlu0 %486
  %488 = vrot.lane.b32.xlu0 %v351, 119
  %v489 = vpop.permute.xlu0 %488
  %490 = vrot.lane.b32.xlu0 %v352, 119
  %v491 = vpop.permute.xlu0 %490
  %492 = vrot.lane.b32.xlu0 %v353, 119
  %v493 = vpop.permute.xlu0 %492
  %494 = vrot.lane.b32.xlu0 %v354, 119
  %v495 = vpop.permute.xlu0 %494
  %496 = vrot.lane.b32.xlu0 %v355, 119
  %v497 = vpop.permute.xlu0 %496
  %498 = vrot.lane.b32.xlu0 %v356, 119
  %v499 = vpop.permute.xlu0 %498
  %500 = vrot.lane.b32.xlu0 %v357, 119
  %v501 = vpop.permute.xlu0 %500
  %502 = vrot.lane.b32.xlu0 %v358, 119
  %v503 = vpop.permute.xlu0 %502
  %504 = vrot.lane.b32.xlu0 %v359, 119
  %v505 = vpop.permute.xlu0 %504
  %506 = vrot.lane.b32.xlu0 %v360, 119
  %v507 = vpop.permute.xlu0 %506
  %508 = vrot.lane.b32.xlu0 %v361, 119
  %v509 = vpop.permute.xlu0 %508
  %510 = vrot.lane.b32.xlu0 %v362, 119
  %v511 = vpop.permute.xlu0 %510
  %512 = vrot.lane.b32.xlu0 %v363, 119
  %v513 = vpop.permute.xlu0 %512
  %514 = vrot.lane.b32.xlu0 %v364, 119
  %v515 = vpop.permute.xlu0 %514
  %516 = vrot.lane.b32.xlu0 %v365, 119
  %v517 = vpop.permute.xlu0 %516
  %518 = vrot.lane.b32.xlu0 %v366, 119
  %v519 = vpop.permute.xlu0 %518
  %520 = vrot.lane.b32.xlu0 %v367, 119
  %v521 = vpop.permute.xlu0 %520
  %522 = vrot.lane.b32.xlu0 %v368, 119
  %v523 = vpop.permute.xlu0 %522
  %524 = vrot.lane.b32.xlu0 %v369, 119
  %v525 = vpop.permute.xlu0 %524
  %526 = vrot.lane.b32.xlu0 %v370, 119
  %v527 = vpop.permute.xlu0 %526
  %528 = vrot.lane.b32.xlu0 %v371, 119
  %v529 = vpop.permute.xlu0 %528
  %530 = vrot.lane.b32.xlu0 %v372, 119
  %v531 = vpop.permute.xlu0 %530
  %532 = vrot.lane.b32.xlu0 %v373, 119
  %v533 = vpop.permute.xlu0 %532
  %534 = vrot.lane.b32.xlu0 %v374, 119
  %v535 = vpop.permute.xlu0 %534
  %536 = vrot.lane.b32.xlu0 %v375, 119
  %v537 = vpop.permute.xlu0 %536
  %538 = vrot.lane.b32.xlu0 %v376, 119
  %v539 = vpop.permute.xlu0 %538
  %540 = vrot.lane.b32.xlu0 %v377, 119
  %v541 = vpop.permute.xlu0 %540
  %542 = vrot.lane.b32.xlu0 %v378, 119
  %v543 = vpop.permute.xlu0 %542
  %544 = vrot.lane.b32.xlu0 %v379, 119
  %v545 = vpop.permute.xlu0 %544
  %546 = vrot.lane.b32.xlu0 %v380, 119
  %v547 = vpop.permute.xlu0 %546
  %548 = vrot.lane.b32.xlu0 %v381, 119
  %v549 = vpop.permute.xlu0 %548
  %550 = vrot.lane.b32.xlu0 %v382, 119
  %v551 = vpop.permute.xlu0 %550
  %552 = vrot.lane.b32.xlu0 %v383, 119
  %v553 = vpop.permute.xlu0 %552
  %554 = vrot.lane.b32.xlu0 %v384, 119
  %v555 = vpop.permute.xlu0 %554
  %556 = vrot.lane.b32.xlu0 %v385, 119
  %v557 = vpop.permute.xlu0 %556
  %558 = vrot.lane.b32.xlu0 %v386, 119
  %v559 = vpop.permute.xlu0 %558
  %560 = vrot.lane.b32.xlu0 %v387, 119
  %v561 = vpop.permute.xlu0 %560
  %562 = vrot.lane.b32.xlu0 %v388, 119
  %v563 = vpop.permute.xlu0 %562
  %564 = vrot.lane.b32.xlu0 %v389, 119
  %v565 = vpop.permute.xlu0 %564
  %566 = vrot.lane.b32.xlu0 %v390, 119
  %v567 = vpop.permute.xlu0 %566
  %568 = vrot.lane.b32.xlu0 %v391, 119
  %v569 = vpop.permute.xlu0 %568
  %570 = vrot.lane.b32.xlu0 %v392, 119
  %v571 = vpop.permute.xlu0 %570
  %572 = vrot.lane.b32.xlu0 %v393, 119
  %v573 = vpop.permute.xlu0 %572
  %574 = vrot.lane.b32.xlu0 %v394, 119
  %v575 = vpop.permute.xlu0 %574
  %576 = vrot.lane.b32.xlu0 %v395, 119
  %v577 = vpop.permute.xlu0 %576
  %578 = vrot.lane.b32.xlu0 %v396, 119
  %v579 = vpop.permute.xlu0 %578
  %580 = vrot.lane.b32.xlu0 %v397, 119
  %v581 = vpop.permute.xlu0 %580
  %582 = vrot.lane.b32.xlu0 %v398, 119
  %v583 = vpop.permute.xlu0 %582
  %584 = vrot.lane.b32.xlu0 %v399, 119
  %v585 = vpop.permute.xlu0 %584
  %586 = vrot.lane.b32.xlu0 %v400, 119
  %v587 = vpop.permute.xlu0 %586
  %588 = vrot.lane.b32.xlu0 %v401, 119
  %v589 = vpop.permute.xlu0 %588
  %590 = vrot.lane.b32.xlu0 %v402, 119
  %v591 = vpop.permute.xlu0 %590
  %592 = vrot.lane.b32.xlu0 %v403, 119
  %v593 = vpop.permute.xlu0 %592
  %594 = vrot.lane.b32.xlu0 %v404, 119
  %v595 = vpop.permute.xlu0 %594
  %596 = vrot.lane.b32.xlu0 %v405, 119
  %v597 = vpop.permute.xlu0 %596
  %v662 = vmax.bf16 %v342, %v471
  %v663 = vmax.bf16 %v343, %v473
  %v664 = vmax.bf16 %v344, %v475
  %v665 = vmax.bf16 %v345, %v477
  %v666 = vmax.bf16 %v346, %v479
  %v667 = vmax.bf16 %v347, %v481
  %v668 = vmax.bf16 %v348, %v483
  %v669 = vmax.bf16 %v349, %v485
  %v670 = vmax.bf16 %v350, %v487
  %v671 = vmax.bf16 %v351, %v489
  %v672 = vmax.bf16 %v352, %v491
  %v673 = vmax.bf16 %v353, %v493
  %v674 = vmax.bf16 %v354, %v495
  %v675 = vmax.bf16 %v355, %v497
  %v676 = vmax.bf16 %v356, %v499
  %v677 = vmax.bf16 %v357, %v501
  %v678 = vmax.bf16 %v358, %v503
  %v679 = vmax.bf16 %v359, %v505
  %v680 = vmax.bf16 %v360, %v507
  %v681 = vmax.bf16 %v361, %v509
  %v682 = vmax.bf16 %v362, %v511
  %v683 = vmax.bf16 %v363, %v513
  %v684 = vmax.bf16 %v364, %v515
  %v685 = vmax.bf16 %v365, %v517
  %v686 = vmax.bf16 %v366, %v519
  %v687 = vmax.bf16 %v367, %v521
  %v688 = vmax.bf16 %v368, %v523
  %v689 = vmax.bf16 %v369, %v525
  %v690 = vmax.bf16 %v370, %v527
  %v691 = vmax.bf16 %v371, %v529
  %v692 = vmax.bf16 %v372, %v531
  %v693 = vmax.bf16 %v373, %v533
  %v694 = vmax.bf16 %v374, %v535
  %v695 = vmax.bf16 %v375, %v537
  %v696 = vmax.bf16 %v376, %v539
  %v697 = vmax.bf16 %v377, %v541
  %v698 = vmax.bf16 %v378, %v543
  %v699 = vmax.bf16 %v379, %v545
  %v700 = vmax.bf16 %v380, %v547
  %v701 = vmax.bf16 %v381, %v549
  %v702 = vmax.bf16 %v382, %v551
  %v703 = vmax.bf16 %v383, %v553
  %v704 = vmax.bf16 %v384, %v555
  %v705 = vmax.bf16 %v385, %v557
  %v706 = vmax.bf16 %v386, %v559
  %v707 = vmax.bf16 %v387, %v561
  %v708 = vmax.bf16 %v388, %v563
  %v709 = vmax.bf16 %v389, %v565
  %v710 = vmax.bf16 %v390, %v567
  %v711 = vmax.bf16 %v391, %v569
  %v712 = vmax.bf16 %v392, %v571
  %v713 = vmax.bf16 %v393, %v573
  %v714 = vmax.bf16 %v394, %v575
  %v715 = vmax.bf16 %v395, %v577
  %v716 = vmax.bf16 %v396, %v579
  %v717 = vmax.bf16 %v397, %v581
  %v718 = vmax.bf16 %v398, %v583
  %v719 = vmax.bf16 %v399, %v585
  %v720 = vmax.bf16 %v400, %v587
  %v721 = vmax.bf16 %v401, %v589
  %v722 = vmax.bf16 %v402, %v591
  %v723 = vmax.bf16 %v403, %v593
  %v724 = vmax.bf16 %v404, %v595
  %v725 = vmax.bf16 %v405, %v597
  %v726 = vld [vmem:[%s2] sm:$0x3]
  %v791 = vunpack.c.l.b16 %v662
  %v792 = vunpack.c.l.b16 %v663
  %v793 = vunpack.c.l.b16 %v664
  %v794 = vunpack.c.l.b16 %v665
  %v795 = vunpack.c.l.b16 %v666
  %v796 = vunpack.c.l.b16 %v667
  %v797 = vunpack.c.l.b16 %v668
  %v798 = vunpack.c.l.b16 %v669
  %v799 = vunpack.c.l.b16 %v670
  %v800 = vunpack.c.l.b16 %v671
  %v801 = vunpack.c.l.b16 %v672
  %v802 = vunpack.c.l.b16 %v673
  %v803 = vunpack.c.l.b16 %v674
  %v804 = vunpack.c.l.b16 %v675
  %v805 = vunpack.c.l.b16 %v676
  %v806 = vunpack.c.l.b16 %v677
  %v807 = vunpack.c.l.b16 %v678
  %v808 = vunpack.c.l.b16 %v679
  %v809 = vunpack.c.l.b16 %v680
  %v810 = vunpack.c.l.b16 %v681
  %v811 = vunpack.c.l.b16 %v682
  %v812 = vunpack.c.l.b16 %v683
  %v813 = vunpack.c.l.b16 %v684
  %v814 = vunpack.c.l.b16 %v685
  %v815 = vunpack.c.l.b16 %v686
  %v816 = vunpack.c.l.b16 %v687
  %v817 = vunpack.c.l.b16 %v688
  %v818 = vunpack.c.l.b16 %v689
  %v819 = vunpack.c.l.b16 %v690
  %v820 = vunpack.c.l.b16 %v691
  %v821 = vunpack.c.l.b16 %v692
  %v822 = vunpack.c.l.b16 %v693
  %v823 = vunpack.c.l.b16 %v694
  %v824 = vunpack.c.l.b16 %v695
  %v825 = vunpack.c.l.b16 %v696
  %v826 = vunpack.c.l.b16 %v697
  %v827 = vunpack.c.l.b16 %v698
  %v828 = vunpack.c.l.b16 %v699
  %v829 = vunpack.c.l.b16 %v700
  %v830 = vunpack.c.l.b16 %v701
  %v831 = vunpack.c.l.b16 %v702
  %v832 = vunpack.c.l.b16 %v703
  %v833 = vunpack.c.l.b16 %v704
  %v834 = vunpack.c.l.b16 %v705
  %v835 = vunpack.c.l.b16 %v706
  %v836 = vunpack.c.l.b16 %v707
  %v837 = vunpack.c.l.b16 %v708
  %v838 = vunpack.c.l.b16 %v709
  %v839 = vunpack.c.l.b16 %v710
  %v840 = vunpack.c.l.b16 %v711
  %v841 = vunpack.c.l.b16 %v712
  %v842 = vunpack.c.l.b16 %v713
  %v843 = vunpack.c.l.b16 %v714
  %v844 = vunpack.c.l.b16 %v715
  %v845 = vunpack.c.l.b16 %v716
  %v846 = vunpack.c.l.b16 %v717
  %v847 = vunpack.c.l.b16 %v718
  %v848 = vunpack.c.l.b16 %v719
  %v849 = vunpack.c.l.b16 %v720
  %v850 = vunpack.c.l.b16 %v721
  %v851 = vunpack.c.l.b16 %v722
  %v852 = vunpack.c.l.b16 %v723
  %v853 = vunpack.c.l.b16 %v724
  %v854 = vunpack.c.l.b16 %v725
  %v855 = vpack.c.b16 %v792, %v791
  %v856 = vpack.c.b16 %v794, %v793
  %v857 = vpack.c.b16 %v796, %v795
  %v858 = vpack.c.b16 %v798, %v797
  %v859 = vpack.c.b16 %v800, %v799
  %v860 = vpack.c.b16 %v802, %v801
  %v861 = vpack.c.b16 %v804, %v803
  %v862 = vpack.c.b16 %v806, %v805
  %v863 = vpack.c.b16 %v808, %v807
  %v864 = vpack.c.b16 %v810, %v809
  %v865 = vpack.c.b16 %v812, %v811
  %v866 = vpack.c.b16 %v814, %v813
  %v867 = vpack.c.b16 %v816, %v815
  %v868 = vpack.c.b16 %v818, %v817
  %v869 = vpack.c.b16 %v820, %v819
  %v870 = vpack.c.b16 %v822, %v821
  %v871 = vpack.c.b16 %v824, %v823
  %v872 = vpack.c.b16 %v826, %v825
  %v873 = vpack.c.b16 %v828, %v827
  %v874 = vpack.c.b16 %v830, %v829
  %v875 = vpack.c.b16 %v832, %v831
  %v876 = vpack.c.b16 %v834, %v833
  %v877 = vpack.c.b16 %v836, %v835
  %v878 = vpack.c.b16 %v838, %v837
  %v879 = vpack.c.b16 %v840, %v839
  %v880 = vpack.c.b16 %v842, %v841
  %v881 = vpack.c.b16 %v844, %v843
  %v882 = vpack.c.b16 %v846, %v845
  %v883 = vpack.c.b16 %v848, %v847
  %v884 = vpack.c.b16 %v850, %v849
  %v885 = vpack.c.b16 %v852, %v851
  %v886 = vpack.c.b16 %v854, %v853
  %887 = vrot.lane.b32.xlu0 %v855, 116
  %v888 = vpop.permute.xlu0 %887
  %889 = vrot.lane.b32.xlu0 %v856, 116
  %v890 = vpop.permute.xlu0 %889
  %891 = vrot.lane.b32.xlu0 %v857, 116
  %v892 = vpop.permute.xlu0 %891
  %893 = vrot.lane.b32.xlu0 %v858, 116
  %v894 = vpop.permute.xlu0 %893
  %895 = vrot.lane.b32.xlu0 %v859, 116
  %v896 = vpop.permute.xlu0 %895
  %897 = vrot.lane.b32.xlu0 %v860, 116
  %v898 = vpop.permute.xlu0 %897
  %899 = vrot.lane.b32.xlu0 %v861, 116
  %v900 = vpop.permute.xlu0 %899
  %901 = vrot.lane.b32.xlu0 %v862, 116
  %v902 = vpop.permute.xlu0 %901
  %903 = vrot.lane.b32.xlu0 %v863, 116
  %v904 = vpop.permute.xlu0 %903
  %905 = vrot.lane.b32.xlu0 %v864, 116
  %v906 = vpop.permute.xlu0 %905
  %907 = vrot.lane.b32.xlu0 %v865, 116
  %v908 = vpop.permute.xlu0 %907
  %909 = vrot.lane.b32.xlu0 %v866, 116
  %v910 = vpop.permute.xlu0 %909
  %911 = vrot.lane.b32.xlu0 %v867, 116
  %v912 = vpop.permute.xlu0 %911
  %913 = vrot.lane.b32.xlu0 %v868, 116
  %v914 = vpop.permute.xlu0 %913
  %915 = vrot.lane.b32.xlu0 %v869, 116
  %v916 = vpop.permute.xlu0 %915
  %917 = vrot.lane.b32.xlu0 %v870, 116
  %v918 = vpop.permute.xlu0 %917
  %919 = vrot.lane.b32.xlu0 %v871, 116
  %v920 = vpop.permute.xlu0 %919
  %921 = vrot.lane.b32.xlu0 %v872, 116
  %v922 = vpop.permute.xlu0 %921
  %923 = vrot.lane.b32.xlu0 %v873, 116
  %v924 = vpop.permute.xlu0 %923
  %925 = vrot.lane.b32.xlu0 %v874, 116
  %v926 = vpop.permute.xlu0 %925
  %927 = vrot.lane.b32.xlu0 %v875, 116
  %v928 = vpop.permute.xlu0 %927
  %929 = vrot.lane.b32.xlu0 %v876, 116
  %v930 = vpop.permute.xlu0 %929
  %931 = vrot.lane.b32.xlu0 %v877, 116
  %v932 = vpop.permute.xlu0 %931
  %933 = vrot.lane.b32.xlu0 %v878, 116
  %v934 = vpop.permute.xlu0 %933
  %935 = vrot.lane.b32.xlu0 %v879, 116
  %v936 = vpop.permute.xlu0 %935
  %937 = vrot.lane.b32.xlu0 %v880, 116
  %v938 = vpop.permute.xlu0 %937
  %939 = vrot.lane.b32.xlu0 %v881, 116
  %v940 = vpop.permute.xlu0 %939
  %941 = vrot.lane.b32.xlu0 %v882, 116
  %v942 = vpop.permute.xlu0 %941
  %943 = vrot.lane.b32.xlu0 %v883, 116
  %v944 = vpop.permute.xlu0 %943
  %945 = vrot.lane.b32.xlu0 %v884, 116
  %v946 = vpop.permute.xlu0 %945
  %947 = vrot.lane.b32.xlu0 %v885, 116
  %v948 = vpop.permute.xlu0 %947
  %949 = vrot.lane.b32.xlu0 %v886, 116
  %v950 = vpop.permute.xlu0 %949
  %vm951 = vcmask 23552
  %v953 = vsel %vm951, %v888, 0
  %v956 = vsel %vm951, %v890, 0
  %v959 = vsel %vm951, %v892, 0
  %v962 = vsel %vm951, %v894, 0
  %v965 = vsel %vm951, %v896, 0
  %v968 = vsel %vm951, %v898, 0
  %v971 = vsel %vm951, %v900, 0
  %v974 = vsel %vm951, %v902, 0
  %v977 = vsel %vm951, %v904, 0
  %v980 = vsel %vm951, %v906, 0
  %v983 = vsel %vm951, %v908, 0
  %v986 = vsel %vm951, %v910, 0
  %v989 = vsel %vm951, %v912, 0
  %v992 = vsel %vm951, %v914, 0
  %v995 = vsel %vm951, %v916, 0
  %v998 = vsel %vm951, %v918, 0
  %v1001 = vsel %vm951, %v920, 0
  %v1004 = vsel %vm951, %v922, 0
  %v1007 = vsel %vm951, %v924, 0
  %v1010 = vsel %vm951, %v926, 0
  %v1013 = vsel %vm951, %v928, 0
  %v1016 = vsel %vm951, %v930, 0
  %v1019 = vsel %vm951, %v932, 0
  %v1022 = vsel %vm951, %v934, 0
  %v1025 = vsel %vm951, %v936, 0
  %v1028 = vsel %vm951, %v938, 0
  %v1031 = vsel %vm951, %v940, 0
  %v1034 = vsel %vm951, %v942, 0
  %v1037 = vsel %vm951, %v944, 0
  %v1040 = vsel %vm951, %v946, 0
  %v1043 = vsel %vm951, %v948, 0
  %v1046 = vsel %vm951, %v950, 0
  %vm1048 = vcmask 1040384
  %vm1049 = vcmask 1041408
  %v1050 = vsel %vm1048, 4294967295, 65535
  %v1051 = vsel %vm1049, %v1050, 0
  %v1053 = vand.u32 %v726, %v1051
  %1055 = vmatprep.subr.bf16.mxu0 0
  %1056 = vmatpush1.bf16.msra.mxu0 %v1053
  %1057 = vmatprep.subr.bf16.mxu0 0
  %1058 = vmatpush1.bf16.msra.mxu0 0
  %1059 = vmatprep.subr.bf16.mxu0 0
  %1060 = vmatpush1.bf16.msra.mxu0 0
  %1061 = vmatprep.subr.bf16.mxu0 0
  %1062 = vmatpush1.bf16.msra.mxu0 0
  %1063 = vmatprep.subr.bf16.mxu0 0
  %1064 = vmatpush1.bf16.msra.mxu0 0
  %1065 = vmatprep.subr.bf16.mxu0 0
  %1066 = vmatpush1.bf16.msra.mxu0 0
  %1067 = vmatprep.subr.bf16.mxu0 0
  %1068 = vmatpush1.bf16.msra.mxu0 0
  %1069 = vmatprep.subr.bf16.mxu0 0
  %1070 = vmatpush1.bf16.msra.mxu0 0
  %1071 = vmatprep.subr.bf16.mxu0 0
  %1072 = vmatpush1.bf16.msra.mxu0 0
  %1073 = vmatprep.subr.bf16.mxu0 0
  %1074 = vmatpush1.bf16.msra.mxu0 0
  %1075 = vmatprep.subr.bf16.mxu0 0
  %1076 = vmatpush1.bf16.msra.mxu0 0
  %1077 = vmatprep.subr.bf16.mxu0 0
  %1078 = vmatpush1.bf16.msra.mxu0 0
  %1079 = vmatprep.subr.bf16.mxu0 0
  %1080 = vmatpush1.bf16.msra.mxu0 0
  %1081 = vmatprep.subr.bf16.mxu0 0
  %1082 = vmatpush1.bf16.msra.mxu0 0
  %1083 = vmatprep.subr.bf16.mxu0 0
  %1084 = vmatpush1.bf16.msra.mxu0 0
  %1085 = vmatprep.subr.bf16.mxu0 0
  %1086 = vmatpush1.bf16.msra.mxu0 0
  %1087 = vmatprep.mubr.bf16.mxu0 0
  %1088 = vmatmul.mubr.bf16.gmra.mrb[0].mxu0 %v953
  %v1089 = vpop.f32.mrb[0].mxu0
  %v1090 = vadd.f32 0.0, %v1089
  %v1091 = vpop.f32.mrb[0].mxu0
  %v1092 = vpop.f32.mrb[0].mxu0
  %v1093 = vadd.f32 0.0, %v1092
  %v1094 = vpop.f32.mrb[0].mxu0
  %1095 = vmatprep.mubr.bf16.mxu0 0
  %1096 = vmatmul.mubr.bf16.gmra.mrb[0].mxu0 %v956
  %v1097 = vpop.f32.mrb[0].mxu0
  %v1098 = vadd.f32 0.0, %v1097
  %v1099 = vpop.f32.mrb[0].mxu0
  %v1100 = vpop.f32.mrb[0].mxu0
  %v1101 = vadd.f32 0.0, %v1100
  %v1102 = vpop.f32.mrb[0].mxu0
  %1103 = vmatprep.mubr.bf16.mxu0 0
  %1104 = vmatmul.mubr.bf16.gmra.mrb[0].mxu0 %v959
  %v1105 = vpop.f32.mrb[0].mxu0
  %v1106 = vadd.f32 0.0, %v1105
  %v1107 = vpop.f32.mrb[0].mxu0
  %v1108 = vpop.f32.mrb[0].mxu0
  %v1109 = vadd.f32 0.0, %v1108
  %v1110 = vpop.f32.mrb[0].mxu0
  %1111 = vmatprep.mubr.bf16.mxu0 0
  %1112 = vmatmul.mubr.bf16.gmra.mrb[0].mxu0 %v962
  %v1113 = vpop.f32.mrb[0].mxu0
  %v1114 = vadd.f32 0.0, %v1113
  %v1115 = vpop.f32.mrb[0].mxu0
  %v1116 = vpop.f32.mrb[0].mxu0
  %v1117 = vadd.f32 0.0, %v1116
  %v1118 = vpop.f32.mrb[0].mxu0
  %1119 = vmatprep.mubr.bf16.mxu0 0
  %1120 = vmatmul.mubr.bf16.gmra.mrb[0].mxu0 %v965
  %v1121 = vpop.f32.mrb[0].mxu0
  %v1122 = vadd.f32 0.0, %v1121
  %v1123 = vpop.f32.mrb[0].mxu0
  %v1124 = vpop.f32.mrb[0].mxu0
  %v1125 = vadd.f32 0.0, %v1124
  %v1126 = vpop.f32.mrb[0].mxu0
  %1127 = vmatprep.mubr.bf16.mxu0 0
  %1128 = vmatmul.mubr.bf16.gmra.mrb[0].mxu0 %v968
  %v1129 = vpop.f32.mrb[0].mxu0
  %v1130 = vadd.f32 0.0, %v1129
  %v1131 = vpop.f32.mrb[0].mxu0
  %v1132 = vpop.f32.mrb[0].mxu0
  %v1133 = vadd.f32 0.0, %v1132
  %v1134 = vpop.f32.mrb[0].mxu0
  %1135 = vmatprep.mubr.bf16.mxu0 0
  %1136 = vmatmul.mubr.bf16.gmra.mrb[0].mxu0 %v971
  %v1137 = vpop.f32.mrb[0].mxu0
  %v1138 = vadd.f32 0.0, %v1137
  %v1139 = vpop.f32.mrb[0].mxu0
  %v1140 = vpop.f32.mrb[0].mxu0
  %v1141 = vadd.f32 0.0, %v1140
  %v1142 = vpop.f32.mrb[0].mxu0
  %1143 = vmatprep.mubr.bf16.mxu0 0
  %1144 = vmatmul.mubr.bf16.gmra.mrb[0].mxu0 %v974
  %v1145 = vpop.f32.mrb[0].mxu0
  %v1146 = vadd.f32 0.0, %v1145
  %v1147 = vpop.f32.mrb[0].mxu0
  %v1148 = vpop.f32.mrb[0].mxu0
  %v1149 = vadd.f32 0.0, %v1148
  %v1150 = vpop.f32.mrb[0].mxu0
  %1151 = vmatprep.mubr.bf16.mxu0 0
  %1152 = vmatmul.mubr.bf16.gmra.mrb[0].mxu0 %v977
  %v1153 = vpop.f32.mrb[0].mxu0
  %v1154 = vadd.f32 0.0, %v1153
  %v1155 = vpop.f32.mrb[0].mxu0
  %v1156 = vpop.f32.mrb[0].mxu0
  %v1157 = vadd.f32 0.0, %v1156
  %v1158 = vpop.f32.mrb[0].mxu0
  %1159 = vmatprep.mubr.bf16.mxu0 0
  %1160 = vmatmul.mubr.bf16.gmra.mrb[0].mxu0 %v980
  %v1161 = vpop.f32.mrb[0].mxu0
  %v1162 = vadd.f32 0.0, %v1161
  %v1163 = vpop.f32.mrb[0].mxu0
  %v1164 = vpop.f32.mrb[0].mxu0
  %v1165 = vadd.f32 0.0, %v1164
  %v1166 = vpop.f32.mrb[0].mxu0
  %1167 = vmatprep.mubr.bf16.mxu0 0
  %1168 = vmatmul.mubr.bf16.gmra.mrb[0].mxu0 %v983
  %v1169 = vpop.f32.mrb[0].mxu0
  %v1170 = vadd.f32 0.0, %v1169
  %v1171 = vpop.f32.mrb[0].mxu0
  %v1172 = vpop.f32.mrb[0].mxu0
  %v1173 = vadd.f32 0.0, %v1172
  %v1174 = vpop.f32.mrb[0].mxu0
  %1175 = vmatprep.mubr.bf16.mxu0 0
  %1176 = vmatmul.mubr.bf16.gmra.mrb[0].mxu0 %v986
  %v1177 = vpop.f32.mrb[0].mxu0
  %v1178 = vadd.f32 0.0, %v1177
  %v1179 = vpop.f32.mrb[0].mxu0
  %v1180 = vpop.f32.mrb[0].mxu0
  %v1181 = vadd.f32 0.0, %v1180
  %v1182 = vpop.f32.mrb[0].mxu0
  %1183 = vmatprep.mubr.bf16.mxu0 0
  %1184 = vmatmul.mubr.bf16.gmra.mrb[0].mxu0 %v989
  %v1185 = vpop.f32.mrb[0].mxu0
  %v1186 = vadd.f32 0.0, %v1185
  %v1187 = vpop.f32.mrb[0].mxu0
  %v1188 = vpop.f32.mrb[0].mxu0
  %v1189 = vadd.f32 0.0, %v1188
  %v1190 = vpop.f32.mrb[0].mxu0
  %1191 = vmatprep.mubr.bf16.mxu0 0
  %1192 = vmatmul.mubr.bf16.gmra.mrb[0].mxu0 %v992
  %v1193 = vpop.f32.mrb[0].mxu0
  %v1194 = vadd.f32 0.0, %v1193
  %v1195 = vpop.f32.mrb[0].mxu0
  %v1196 = vpop.f32.mrb[0].mxu0
  %v1197 = vadd.f32 0.0, %v1196
  %v1198 = vpop.f32.mrb[0].mxu0
  %1199 = vmatprep.mubr.bf16.mxu0 0
  %1200 = vmatmul.mubr.bf16.gmra.mrb[0].mxu0 %v995
  %v1201 = vpop.f32.mrb[0].mxu0
  %v1202 = vadd.f32 0.0, %v1201
  %v1203 = vpop.f32.mrb[0].mxu0
  %v1204 = vpop.f32.mrb[0].mxu0
  %v1205 = vadd.f32 0.0, %v1204
  %v1206 = vpop.f32.mrb[0].mxu0
  %1207 = vmatprep.mubr.bf16.mxu0 0
  %1208 = vmatmul.mubr.bf16.gmra.mrb[0].mxu0 %v998
  %v1209 = vpop.f32.mrb[0].mxu0
  %v1210 = vadd.f32 0.0, %v1209
  %v1211 = vpop.f32.mrb[0].mxu0
  %v1212 = vpop.f32.mrb[0].mxu0
  %v1213 = vadd.f32 0.0, %v1212
  %v1214 = vpop.f32.mrb[0].mxu0
  %1215 = vmatprep.mubr.bf16.mxu0 0
  %1216 = vmatmul.mubr.bf16.gmra.mrb[0].mxu0 %v1001
  %v1217 = vpop.f32.mrb[0].mxu0
  %v1218 = vadd.f32 0.0, %v1217
  %v1219 = vpop.f32.mrb[0].mxu0
  %v1220 = vpop.f32.mrb[0].mxu0
  %v1221 = vadd.f32 0.0, %v1220
  %v1222 = vpop.f32.mrb[0].mxu0
  %1223 = vmatprep.mubr.bf16.mxu0 0
  %1224 = vmatmul.mubr.bf16.gmra.mrb[0].mxu0 %v1004
  %v1225 = vpop.f32.mrb[0].mxu0
  %v1226 = vadd.f32 0.0, %v1225
  %v1227 = vpop.f32.mrb[0].mxu0
  %v1228 = vpop.f32.mrb[0].mxu0
  %v1229 = vadd.f32 0.0, %v1228
  %v1230 = vpop.f32.mrb[0].mxu0
  %1231 = vmatprep.mubr.bf16.mxu0 0
  %1232 = vmatmul.mubr.bf16.gmra.mrb[0].mxu0 %v1007
  %v1233 = vpop.f32.mrb[0].mxu0
  %v1234 = vadd.f32 0.0, %v1233
  %v1235 = vpop.f32.mrb[0].mxu0
  %v1236 = vpop.f32.mrb[0].mxu0
  %v1237 = vadd.f32 0.0, %v1236
  %v1238 = vpop.f32.mrb[0].mxu0
  %1239 = vmatprep.mubr.bf16.mxu0 0
  %1240 = vmatmul.mubr.bf16.gmra.mrb[0].mxu0 %v1010
  %v1241 = vpop.f32.mrb[0].mxu0
  %v1242 = vadd.f32 0.0, %v1241
  %v1243 = vpop.f32.mrb[0].mxu0
  %v1244 = vpop.f32.mrb[0].mxu0
  %v1245 = vadd.f32 0.0, %v1244
  %v1246 = vpop.f32.mrb[0].mxu0
  %1247 = vmatprep.mubr.bf16.mxu0 0
  %1248 = vmatmul.mubr.bf16.gmra.mrb[0].mxu0 %v1013
  %v1249 = vpop.f32.mrb[0].mxu0
  %v1250 = vadd.f32 0.0, %v1249
  %v1251 = vpop.f32.mrb[0].mxu0
  %v1252 = vpop.f32.mrb[0].mxu0
  %v1253 = vadd.f32 0.0, %v1252
  %v1254 = vpop.f32.mrb[0].mxu0
  %1255 = vmatprep.mubr.bf16.mxu0 0
  %1256 = vmatmul.mubr.bf16.gmra.mrb[0].mxu0 %v1016
  %v1257 = vpop.f32.mrb[0].mxu0
  %v1258 = vadd.f32 0.0, %v1257
  %v1259 = vpop.f32.mrb[0].mxu0
  %v1260 = vpop.f32.mrb[0].mxu0
  %v1261 = vadd.f32 0.0, %v1260
  %v1262 = vpop.f32.mrb[0].mxu0
  %1263 = vmatprep.mubr.bf16.mxu0 0
  %1264 = vmatmul.mubr.bf16.gmra.mrb[0].mxu0 %v1019
  %v1265 = vpop.f32.mrb[0].mxu0
  %v1266 = vadd.f32 0.0, %v1265
  %v1267 = vpop.f32.mrb[0].mxu0
  %v1268 = vpop.f32.mrb[0].mxu0
  %v1269 = vadd.f32 0.0, %v1268
  %v1270 = vpop.f32.mrb[0].mxu0
  %1271 = vmatprep.mubr.bf16.mxu0 0
  %1272 = vmatmul.mubr.bf16.gmra.mrb[0].mxu0 %v1022
  %v1273 = vpop.f32.mrb[0].mxu0
  %v1274 = vadd.f32 0.0, %v1273
  %v1275 = vpop.f32.mrb[0].mxu0
  %v1276 = vpop.f32.mrb[0].mxu0
  %v1277 = vadd.f32 0.0, %v1276
  %v1278 = vpop.f32.mrb[0].mxu0
  %1279 = vmatprep.mubr.bf16.mxu0 0
  %1280 = vmatmul.mubr.bf16.gmra.mrb[0].mxu0 %v1025
  %v1281 = vpop.f32.mrb[0].mxu0
  %v1282 = vadd.f32 0.0, %v1281
  %v1283 = vpop.f32.mrb[0].mxu0
  %v1284 = vpop.f32.mrb[0].mxu0
  %v1285 = vadd.f32 0.0, %v1284
  %v1286 = vpop.f32.mrb[0].mxu0
  %1287 = vmatprep.mubr.bf16.mxu0 0
  %1288 = vmatmul.mubr.bf16.gmra.mrb[0].mxu0 %v1028
  %v1289 = vpop.f32.mrb[0].mxu0
  %v1290 = vadd.f32 0.0, %v1289
  %v1291 = vpop.f32.mrb[0].mxu0
  %v1292 = vpop.f32.mrb[0].mxu0
  %v1293 = vadd.f32 0.0, %v1292
  %v1294 = vpop.f32.mrb[0].mxu0
  %1295 = vmatprep.mubr.bf16.mxu0 0
  %1296 = vmatmul.mubr.bf16.gmra.mrb[0].mxu0 %v1031
  %v1297 = vpop.f32.mrb[0].mxu0
  %v1298 = vadd.f32 0.0, %v1297
  %v1299 = vpop.f32.mrb[0].mxu0
  %v1300 = vpop.f32.mrb[0].mxu0
  %v1301 = vadd.f32 0.0, %v1300
  %v1302 = vpop.f32.mrb[0].mxu0
  %1303 = vmatprep.mubr.bf16.mxu0 0
  %1304 = vmatmul.mubr.bf16.gmra.mrb[0].mxu0 %v1034
  %v1305 = vpop.f32.mrb[0].mxu0
  %v1306 = vadd.f32 0.0, %v1305
  %v1307 = vpop.f32.mrb[0].mxu0
  %v1308 = vpop.f32.mrb[0].mxu0
  %v1309 = vadd.f32 0.0, %v1308
  %v1310 = vpop.f32.mrb[0].mxu0
  %1311 = vmatprep.mubr.bf16.mxu0 0
  %1312 = vmatmul.mubr.bf16.gmra.mrb[0].mxu0 %v1037
  %v1313 = vpop.f32.mrb[0].mxu0
  %v1314 = vadd.f32 0.0, %v1313
  %v1315 = vpop.f32.mrb[0].mxu0
  %v1316 = vpop.f32.mrb[0].mxu0
  %v1317 = vadd.f32 0.0, %v1316
  %v1318 = vpop.f32.mrb[0].mxu0
  %1319 = vmatprep.mubr.bf16.mxu0 0
  %1320 = vmatmul.mubr.bf16.gmra.mrb[0].mxu0 %v1040
  %v1321 = vpop.f32.mrb[0].mxu0
  %v1322 = vadd.f32 0.0, %v1321
  %v1323 = vpop.f32.mrb[0].mxu0
  %v1324 = vpop.f32.mrb[0].mxu0
  %v1325 = vadd.f32 0.0, %v1324
  %v1326 = vpop.f32.mrb[0].mxu0
  %1327 = vmatprep.mubr.bf16.mxu0 0
  %1328 = vmatmul.mubr.bf16.gmra.mrb[0].mxu0 %v1043
  %v1329 = vpop.f32.mrb[0].mxu0
  %v1330 = vadd.f32 0.0, %v1329
  %v1331 = vpop.f32.mrb[0].mxu0
  %v1332 = vpop.f32.mrb[0].mxu0
  %v1333 = vadd.f32 0.0, %v1332
  %v1334 = vpop.f32.mrb[0].mxu0
  %1335 = vmatprep.mubr.bf16.mxu0 0
  %1336 = vmatmul.mubr.bf16.gmra.mrb[0].mxu0 %v1046
  %v1337 = vpop.f32.mrb[0].mxu0
  %v1338 = vadd.f32 0.0, %v1337
  %v1339 = vpop.f32.mrb[0].mxu0
  %v1340 = vpop.f32.mrb[0].mxu0
  %v1341 = vadd.f32 0.0, %v1340
  %v1342 = vpop.f32.mrb[0].mxu0
  %1343 = vdwg.mxu0
  %v1344 = vunpack.c.l.b16 %v18
  %v1345 = vunpack.c.l.b16 %v19
  %v1346 = vunpack.c.l.b16 %v20
  %v1347 = vunpack.c.l.b16 %v21
  %v1348 = vunpack.c.l.b16 %v22
  %v1349 = vunpack.c.l.b16 %v23
  %v1350 = vunpack.c.l.b16 %v24
  %v1351 = vunpack.c.l.b16 %v25
  %v1352 = vunpack.c.l.b16 %v26
  %v1353 = vunpack.c.l.b16 %v27
  %v1354 = vunpack.c.l.b16 %v28
  %v1355 = vunpack.c.l.b16 %v29
  %v1356 = vunpack.c.l.b16 %v30
  %v1357 = vunpack.c.l.b16 %v31
  %v1358 = vunpack.c.l.b16 %v32
  %v1359 = vunpack.c.l.b16 %v33
  %v1360 = vunpack.c.l.b16 %v34
  %v1361 = vunpack.c.l.b16 %v35
  %v1362 = vunpack.c.l.b16 %v36
  %v1363 = vunpack.c.l.b16 %v37
  %v1364 = vunpack.c.l.b16 %v38
  %v1365 = vunpack.c.l.b16 %v39
  %v1366 = vunpack.c.l.b16 %v40
  %v1367 = vunpack.c.l.b16 %v41
  %v1368 = vunpack.c.l.b16 %v42
  %v1369 = vunpack.c.l.b16 %v43
  %v1370 = vunpack.c.l.b16 %v44
  %v1371 = vunpack.c.l.b16 %v45
  %v1372 = vunpack.c.l.b16 %v46
  %v1373 = vunpack.c.l.b16 %v47
  %v1374 = vunpack.c.l.b16 %v48
  %v1375 = vunpack.c.l.b16 %v49
  %v1376 = vunpack.c.l.b16 %v50
  %v1377 = vunpack.c.l.b16 %v51
  %v1378 = vunpack.c.l.b16 %v52
  %v1379 = vunpack.c.l.b16 %v53
  %v1380 = vunpack.c.l.b16 %v54
  %v1381 = vunpack.c.l.b16 %v55
  %v1382 = vunpack.c.l.b16 %v56
  %v1383 = vunpack.c.l.b16 %v57
  %v1384 = vunpack.c.l.b16 %v58
  %v1385 = vunpack.c.l.b16 %v59
  %v1386 = vunpack.c.l.b16 %v60
  %v1387 = vunpack.c.l.b16 %v61
  %v1388 = vunpack.c.l.b16 %v62
  %v1389 = vunpack.c.l.b16 %v63
  %v1390 = vunpack.c.l.b16 %v64
  %v1391 = vunpack.c.l.b16 %v65
  %v1392 = vunpack.c.l.b16 %v66
  %v1393 = vunpack.c.l.b16 %v67
  %v1394 = vunpack.c.l.b16 %v68
  %v1395 = vunpack.c.l.b16 %v69
  %v1396 = vunpack.c.l.b16 %v70
  %v1397 = vunpack.c.l.b16 %v71
  %v1398 = vunpack.c.l.b16 %v72
  %v1399 = vunpack.c.l.b16 %v73
  %v1400 = vunpack.c.l.b16 %v74
  %v1401 = vunpack.c.l.b16 %v75
  %v1402 = vunpack.c.l.b16 %v76
  %v1403 = vunpack.c.l.b16 %v77
  %v1404 = vunpack.c.l.b16 %v78
  %v1405 = vunpack.c.l.b16 %v79
  %v1406 = vunpack.c.l.b16 %v80
  %v1407 = vunpack.c.l.b16 %v81
  %v1408 = vpack.c.b16 %v1345, %v1344
  %v1409 = vpack.c.b16 %v1347, %v1346
  %v1410 = vpack.c.b16 %v1349, %v1348
  %v1411 = vpack.c.b16 %v1351, %v1350
  %v1412 = vpack.c.b16 %v1353, %v1352
  %v1413 = vpack.c.b16 %v1355, %v1354
  %v1414 = vpack.c.b16 %v1357, %v1356
  %v1415 = vpack.c.b16 %v1359, %v1358
  %v1416 = vpack.c.b16 %v1361, %v1360
  %v1417 = vpack.c.b16 %v1363, %v1362
  %v1418 = vpack.c.b16 %v1365, %v1364
  %v1419 = vpack.c.b16 %v1367, %v1366
  %v1420 = vpack.c.b16 %v1369, %v1368
  %v1421 = vpack.c.b16 %v1371, %v1370
  %v1422 = vpack.c.b16 %v1373, %v1372
  %v1423 = vpack.c.b16 %v1375, %v1374
  %v1424 = vpack.c.b16 %v1377, %v1376
  %v1425 = vpack.c.b16 %v1379, %v1378
  %v1426 = vpack.c.b16 %v1381, %v1380
  %v1427 = vpack.c.b16 %v1383, %v1382
  %v1428 = vpack.c.b16 %v1385, %v1384
  %v1429 = vpack.c.b16 %v1387, %v1386
  %v1430 = vpack.c.b16 %v1389, %v1388
  %v1431 = vpack.c.b16 %v1391, %v1390
  %v1432 = vpack.c.b16 %v1393, %v1392
  %v1433 = vpack.c.b16 %v1395, %v1394
  %v1434 = vpack.c.b16 %v1397, %v1396
  %v1435 = vpack.c.b16 %v1399, %v1398
  %v1436 = vpack.c.b16 %v1401, %v1400
  %v1437 = vpack.c.b16 %v1403, %v1402
  %v1438 = vpack.c.b16 %v1405, %v1404
  %v1439 = vpack.c.b16 %v1407, %v1406
  %v1444 = vunpack.c.l.b16 %v82
  %v1445 = vunpack.c.l.b16 %v83
  %v1446 = vunpack.c.l.b16 %v84
  %v1447 = vunpack.c.l.b16 %v85
  %v1448 = vpack.c.b16 %v1445, %v1444
  %v1449 = vpack.c.b16 %v1447, %v1446
  %vm1451 = vcmask 220160
  %v1453 = vsel %vm1451, %v1408, 0
  %v1456 = vsel %vm1451, %v1409, 0
  %v1459 = vsel %vm1451, %v1410, 0
  %v1462 = vsel %vm1451, %v1411, 0
  %v1465 = vsel %vm1451, %v1412, 0
  %v1468 = vsel %vm1451, %v1413, 0
  %v1471 = vsel %vm1451, %v1414, 0
  %v1474 = vsel %vm1451, %v1415, 0
  %v1477 = vsel %vm1451, %v1416, 0
  %v1480 = vsel %vm1451, %v1417, 0
  %v1483 = vsel %vm1451, %v1418, 0
  %v1486 = vsel %vm1451, %v1419, 0
  %v1489 = vsel %vm1451, %v1420, 0
  %v1492 = vsel %vm1451, %v1421, 0
  %v1495 = vsel %vm1451, %v1422, 0
  %v1498 = vsel %vm1451, %v1423, 0
  %v1501 = vsel %vm1451, %v1424, 0
  %v1504 = vsel %vm1451, %v1425, 0
  %v1507 = vsel %vm1451, %v1426, 0
  %v1510 = vsel %vm1451, %v1427, 0
  %v1513 = vsel %vm1451, %v1428, 0
  %v1516 = vsel %vm1451, %v1429, 0
  %v1519 = vsel %vm1451, %v1430, 0
  %v1522 = vsel %vm1451, %v1431, 0
  %v1525 = vsel %vm1451, %v1432, 0
  %v1528 = vsel %vm1451, %v1433, 0
  %v1531 = vsel %vm1451, %v1434, 0
  %v1534 = vsel %vm1451, %v1435, 0
  %v1537 = vsel %vm1451, %v1436, 0
  %v1540 = vsel %vm1451, %v1437, 0
  %v1543 = vsel %vm1451, %v1438, 0
  %v1546 = vsel %vm1451, %v1439, 0
  %vm1548 = vcmask 1044480
  %vm1549 = vcmask 1045504
  %v1550 = vsel %vm1548, 4294967295, 65535
  %v1551 = vsel %vm1549, %v1550, 0
  %v1553 = vand.u32 %v1449, %v1551
  %1555 = vmatprep.subr.bf16.mxu0 0
  %1556 = vmatpush1.bf16.msra.mxu0 %v1448
  %1557 = vmatprep.subr.bf16.mxu0 0
  %1558 = vmatpush1.bf16.msra.mxu0 %v1553
  %1559 = vmatprep.subr.bf16.mxu0 0
  %1560 = vmatpush1.bf16.msra.mxu0 0
  %1561 = vmatprep.subr.bf16.mxu0 0
  %1562 = vmatpush1.bf16.msra.mxu0 0
  %1563 = vmatprep.subr.bf16.mxu0 0
  %1564 = vmatpush1.bf16.msra.mxu0 0
  %1565 = vmatprep.subr.bf16.mxu0 0
  %1566 = vmatpush1.bf16.msra.mxu0 0
  %1567 = vmatprep.subr.bf16.mxu0 0
  %1568 = vmatpush1.bf16.msra.mxu0 0
  %1569 = vmatprep.subr.bf16.mxu0 0
  %1570 = vmatpush1.bf16.msra.mxu0 0
  %1571 = vmatprep.subr.bf16.mxu0 0
  %1572 = vmatpush1.bf16.msra.mxu0 0
  %1573 = vmatprep.subr.bf16.mxu0 0
  %1574 = vmatpush1.bf16.msra.mxu0 0
  %1575 = vmatprep.subr.bf16.mxu0 0
  %1576 = vmatpush1.bf16.msra.mxu0 0
  %1577 = vmatprep.subr.bf16.mxu0 0
  %1578 = vmatpush1.bf16.msra.mxu0 0
  %1579 = vmatprep.subr.bf16.mxu0 0
  %1580 = vmatpush1.bf16.msra.mxu0 0
  %1581 = vmatprep.subr.bf16.mxu0 0
  %1582 = vmatpush1.bf16.msra.mxu0 0
  %1583 = vmatprep.subr.bf16.mxu0 0
  %1584 = vmatpush1.bf16.msra.mxu0 0
  %1585 = vmatprep.subr.bf16.mxu0 0
  %1586 = vmatpush1.bf16.msra.mxu0 0
  %1587 = vmatprep.mubr.bf16.mxu0 0
  %1588 = vmatmul.mubr.bf16.gmra.mrb[0].mxu0 %v1453
  %v1589 = vpop.f32.mrb[0].mxu0
  %v1590 = vadd.f32 %v1090, %v1589
  %v1591 = vpop.f32.mrb[0].mxu0
  %v1592 = vpop.f32.mrb[0].mxu0
  %v1593 = vadd.f32 %v1093, %v1592
  %v1594 = vpop.f32.mrb[0].mxu0
  %1595 = vmatprep.mubr.bf16.mxu0 0
  %1596 = vmatmul.mubr.bf16.gmra.mrb[0].mxu0 %v1456
  %v1597 = vpop.f32.mrb[0].mxu0
  %v1598 = vadd.f32 %v1098, %v1597
  %v1599 = vpop.f32.mrb[0].mxu0
  %v1600 = vpop.f32.mrb[0].mxu0
  %v1601 = vadd.f32 %v1101, %v1600
  %v1602 = vpop.f32.mrb[0].mxu0
  %1603 = vmatprep.mubr.bf16.mxu0 0
  %1604 = vmatmul.mubr.bf16.gmra.mrb[0].mxu0 %v1459
  %v1605 = vpop.f32.mrb[0].mxu0
  %v1606 = vadd.f32 %v1106, %v1605
  %v1607 = vpop.f32.mrb[0].mxu0
  %v1608 = vpop.f32.mrb[0].mxu0
  %v1609 = vadd.f32 %v1109, %v1608
  %v1610 = vpop.f32.mrb[0].mxu0
  %1611 = vmatprep.mubr.bf16.mxu0 0
  %1612 = vmatmul.mubr.bf16.gmra.mrb[0].mxu0 %v1462
  %v1613 = vpop.f32.mrb[0].mxu0
  %v1614 = vadd.f32 %v1114, %v1613
  %v1615 = vpop.f32.mrb[0].mxu0
  %v1616 = vpop.f32.mrb[0].mxu0
  %v1617 = vadd.f32 %v1117, %v1616
  %v1618 = vpop.f32.mrb[0].mxu0
  %1619 = vmatprep.mubr.bf16.mxu0 0
  %1620 = vmatmul.mubr.bf16.gmra.mrb[0].mxu0 %v1465
  %v1621 = vpop.f32.mrb[0].mxu0
  %v1622 = vadd.f32 %v1122, %v1621
  %v1623 = vpop.f32.mrb[0].mxu0
  %v1624 = vpop.f32.mrb[0].mxu0
  %v1625 = vadd.f32 %v1125, %v1624
  %v1626 = vpop.f32.mrb[0].mxu0
  %1627 = vmatprep.mubr.bf16.mxu0 0
  %1628 = vmatmul.mubr.bf16.gmra.mrb[0].mxu0 %v1468
  %v1629 = vpop.f32.mrb[0].mxu0
  %v1630 = vadd.f32 %v1130, %v1629
  %v1631 = vpop.f32.mrb[0].mxu0
  %v1632 = vpop.f32.mrb[0].mxu0
  %v1633 = vadd.f32 %v1133, %v1632
  %v1634 = vpop.f32.mrb[0].mxu0
  %1635 = vmatprep.mubr.bf16.mxu0 0
  %1636 = vmatmul.mubr.bf16.gmra.mrb[0].mxu0 %v1471
  %v1637 = vpop.f32.mrb[0].mxu0
  %v1638 = vadd.f32 %v1138, %v1637
  %v1639 = vpop.f32.mrb[0].mxu0
  %v1640 = vpop.f32.mrb[0].mxu0
  %v1641 = vadd.f32 %v1141, %v1640
  %v1642 = vpop.f32.mrb[0].mxu0
  %1643 = vmatprep.mubr.bf16.mxu0 0
  %1644 = vmatmul.mubr.bf16.gmra.mrb[0].mxu0 %v1474
  %v1645 = vpop.f32.mrb[0].mxu0
  %v1646 = vadd.f32 %v1146, %v1645
  %v1647 = vpop.f32.mrb[0].mxu0
  %v1648 = vpop.f32.mrb[0].mxu0
  %v1649 = vadd.f32 %v1149, %v1648
  %v1650 = vpop.f32.mrb[0].mxu0
  %1651 = vmatprep.mubr.bf16.mxu0 0
  %1652 = vmatmul.mubr.bf16.gmra.mrb[0].mxu0 %v1477
  %v1653 = vpop.f32.mrb[0].mxu0
  %v1654 = vadd.f32 %v1154, %v1653
  %v1655 = vpop.f32.mrb[0].mxu0
  %v1656 = vpop.f32.mrb[0].mxu0
  %v1657 = vadd.f32 %v1157, %v1656
  %v1658 = vpop.f32.mrb[0].mxu0
  %1659 = vmatprep.mubr.bf16.mxu0 0
  %1660 = vmatmul.mubr.bf16.gmra.mrb[0].mxu0 %v1480
  %v1661 = vpop.f32.mrb[0].mxu0
  %v1662 = vadd.f32 %v1162, %v1661
  %v1663 = vpop.f32.mrb[0].mxu0
  %v1664 = vpop.f32.mrb[0].mxu0
  %v1665 = vadd.f32 %v1165, %v1664
  %v1666 = vpop.f32.mrb[0].mxu0
  %1667 = vmatprep.mubr.bf16.mxu0 0
  %1668 = vmatmul.mubr.bf16.gmra.mrb[0].mxu0 %v1483
  %v1669 = vpop.f32.mrb[0].mxu0
  %v1670 = vadd.f32 %v1170, %v1669
  %v1671 = vpop.f32.mrb[0].mxu0
  %v1672 = vpop.f32.mrb[0].mxu0
  %v1673 = vadd.f32 %v1173, %v1672
  %v1674 = vpop.f32.mrb[0].mxu0
  %1675 = vmatprep.mubr.bf16.mxu0 0
  %1676 = vmatmul.mubr.bf16.gmra.mrb[0].mxu0 %v1486
  %v1677 = vpop.f32.mrb[0].mxu0
  %v1678 = vadd.f32 %v1178, %v1677
  %v1679 = vpop.f32.mrb[0].mxu0
  %v1680 = vpop.f32.mrb[0].mxu0
  %v1681 = vadd.f32 %v1181, %v1680
  %v1682 = vpop.f32.mrb[0].mxu0
  %1683 = vmatprep.mubr.bf16.mxu0 0
  %1684 = vmatmul.mubr.bf16.gmra.mrb[0].mxu0 %v1489
  %v1685 = vpop.f32.mrb[0].mxu0
  %v1686 = vadd.f32 %v1186, %v1685
  %v1687 = vpop.f32.mrb[0].mxu0
  %v1688 = vpop.f32.mrb[0].mxu0
  %v1689 = vadd.f32 %v1189, %v1688
  %v1690 = vpop.f32.mrb[0].mxu0
  %1691 = vmatprep.mubr.bf16.mxu0 0
  %1692 = vmatmul.mubr.bf16.gmra.mrb[0].mxu0 %v1492
  %v1693 = vpop.f32.mrb[0].mxu0
  %v1694 = vadd.f32 %v1194, %v1693
  %v1695 = vpop.f32.mrb[0].mxu0
  %v1696 = vpop.f32.mrb[0].mxu0
  %v1697 = vadd.f32 %v1197, %v1696
  %v1698 = vpop.f32.mrb[0].mxu0
  %1699 = vmatprep.mubr.bf16.mxu0 0
  %1700 = vmatmul.mubr.bf16.gmra.mrb[0].mxu0 %v1495
  %v1701 = vpop.f32.mrb[0].mxu0
  %v1702 = vadd.f32 %v1202, %v1701
  %v1703 = vpop.f32.mrb[0].mxu0
  %v1704 = vpop.f32.mrb[0].mxu0
  %v1705 = vadd.f32 %v1205, %v1704
  %v1706 = vpop.f32.mrb[0].mxu0
  %1707 = vmatprep.mubr.bf16.mxu0 0
  %1708 = vmatmul.mubr.bf16.gmra.mrb[0].mxu0 %v1498
  %v1709 = vpop.f32.mrb[0].mxu0
  %v1710 = vadd.f32 %v1210, %v1709
  %v1711 = vpop.f32.mrb[0].mxu0
  %v1712 = vpop.f32.mrb[0].mxu0
  %v1713 = vadd.f32 %v1213, %v1712
  %v1714 = vpop.f32.mrb[0].mxu0
  %1715 = vmatprep.mubr.bf16.mxu0 0
  %1716 = vmatmul.mubr.bf16.gmra.mrb[0].mxu0 %v1501
  %v1717 = vpop.f32.mrb[0].mxu0
  %v1718 = vadd.f32 %v1218, %v1717
  %v1719 = vpop.f32.mrb[0].mxu0
  %v1720 = vpop.f32.mrb[0].mxu0
  %v1721 = vadd.f32 %v1221, %v1720
  %v1722 = vpop.f32.mrb[0].mxu0
  %1723 = vmatprep.mubr.bf16.mxu0 0
  %1724 = vmatmul.mubr.bf16.gmra.mrb[0].mxu0 %v1504
  %v1725 = vpop.f32.mrb[0].mxu0
  %v1726 = vadd.f32 %v1226, %v1725
  %v1727 = vpop.f32.mrb[0].mxu0
  %v1728 = vpop.f32.mrb[0].mxu0
  %v1729 = vadd.f32 %v1229, %v1728
  %v1730 = vpop.f32.mrb[0].mxu0
  %1731 = vmatprep.mubr.bf16.mxu0 0
  %1732 = vmatmul.mubr.bf16.gmra.mrb[0].mxu0 %v1507
  %v1733 = vpop.f32.mrb[0].mxu0
  %v1734 = vadd.f32 %v1234, %v1733
  %v1735 = vpop.f32.mrb[0].mxu0
  %v1736 = vpop.f32.mrb[0].mxu0
  %v1737 = vadd.f32 %v1237, %v1736
  %v1738 = vpop.f32.mrb[0].mxu0
  %1739 = vmatprep.mubr.bf16.mxu0 0
  %1740 = vmatmul.mubr.bf16.gmra.mrb[0].mxu0 %v1510
  %v1741 = vpop.f32.mrb[0].mxu0
  %v1742 = vadd.f32 %v1242, %v1741
  %v1743 = vpop.f32.mrb[0].mxu0
  %v1744 = vpop.f32.mrb[0].mxu0
  %v1745 = vadd.f32 %v1245, %v1744
  %v1746 = vpop.f32.mrb[0].mxu0
  %1747 = vmatprep.mubr.bf16.mxu0 0
  %1748 = vmatmul.mubr.bf16.gmra.mrb[0].mxu0 %v1513
  %v1749 = vpop.f32.mrb[0].mxu0
  %v1750 = vadd.f32 %v1250, %v1749
  %v1751 = vpop.f32.mrb[0].mxu0
  %v1752 = vpop.f32.mrb[0].mxu0
  %v1753 = vadd.f32 %v1253, %v1752
  %v1754 = vpop.f32.mrb[0].mxu0
  %1755 = vmatprep.mubr.bf16.mxu0 0
  %1756 = vmatmul.mubr.bf16.gmra.mrb[0].mxu0 %v1516
  %v1757 = vpop.f32.mrb[0].mxu0
  %v1758 = vadd.f32 %v1258, %v1757
  %v1759 = vpop.f32.mrb[0].mxu0
  %v1760 = vpop.f32.mrb[0].mxu0
  %v1761 = vadd.f32 %v1261, %v1760
  %v1762 = vpop.f32.mrb[0].mxu0
  %1763 = vmatprep.mubr.bf16.mxu0 0
  %1764 = vmatmul.mubr.bf16.gmra.mrb[0].mxu0 %v1519
  %v1765 = vpop.f32.mrb[0].mxu0
  %v1766 = vadd.f32 %v1266, %v1765
  %v1767 = vpop.f32.mrb[0].mxu0
  %v1768 = vpop.f32.mrb[0].mxu0
  %v1769 = vadd.f32 %v1269, %v1768
  %v1770 = vpop.f32.mrb[0].mxu0
  %1771 = vmatprep.mubr.bf16.mxu0 0
  %1772 = vmatmul.mubr.bf16.gmra.mrb[0].mxu0 %v1522
  %v1773 = vpop.f32.mrb[0].mxu0
  %v1774 = vadd.f32 %v1274, %v1773
  %v1775 = vpop.f32.mrb[0].mxu0
  %v1776 = vpop.f32.mrb[0].mxu0
  %v1777 = vadd.f32 %v1277, %v1776
  %v1778 = vpop.f32.mrb[0].mxu0
  %1779 = vmatprep.mubr.bf16.mxu0 0
  %1780 = vmatmul.mubr.bf16.gmra.mrb[0].mxu0 %v1525
  %v1781 = vpop.f32.mrb[0].mxu0
  %v1782 = vadd.f32 %v1282, %v1781
  %v1783 = vpop.f32.mrb[0].mxu0
  %v1784 = vpop.f32.mrb[0].mxu0
  %v1785 = vadd.f32 %v1285, %v1784
  %v1786 = vpop.f32.mrb[0].mxu0
  %1787 = vmatprep.mubr.bf16.mxu0 0
  %1788 = vmatmul.mubr.bf16.gmra.mrb[0].mxu0 %v1528
  %v1789 = vpop.f32.mrb[0].mxu0
  %v1790 = vadd.f32 %v1290, %v1789
  %v1791 = vpop.f32.mrb[0].mxu0
  %v1792 = vpop.f32.mrb[0].mxu0
  %v1793 = vadd.f32 %v1293, %v1792
  %v1794 = vpop.f32.mrb[0].mxu0
  %1795 = vmatprep.mubr.bf16.mxu0 0
  %1796 = vmatmul.mubr.bf16.gmra.mrb[0].mxu0 %v1531
  %v1797 = vpop.f32.mrb[0].mxu0
  %v1798 = vadd.f32 %v1298, %v1797
  %v1799 = vpop.f32.mrb[0].mxu0
  %v1800 = vpop.f32.mrb[0].mxu0
  %v1801 = vadd.f32 %v1301, %v1800
  %v1802 = vpop.f32.mrb[0].mxu0
  %1803 = vmatprep.mubr.bf16.mxu0 0
  %1804 = vmatmul.mubr.bf16.gmra.mrb[0].mxu0 %v1534
  %v1805 = vpop.f32.mrb[0].mxu0
  %v1806 = vadd.f32 %v1306, %v1805
  %v1807 = vpop.f32.mrb[0].mxu0
  %v1808 = vpop.f32.mrb[0].mxu0
  %v1809 = vadd.f32 %v1309, %v1808
  %v1810 = vpop.f32.mrb[0].mxu0
  %1811 = vmatprep.mubr.bf16.mxu0 0
  %1812 = vmatmul.mubr.bf16.gmra.mrb[0].mxu0 %v1537
  %v1813 = vpop.f32.mrb[0].mxu0
  %v1814 = vadd.f32 %v1314, %v1813
  %v1815 = vpop.f32.mrb[0].mxu0
  %v1816 = vpop.f32.mrb[0].mxu0
  %v1817 = vadd.f32 %v1317, %v1816
  %v1818 = vpop.f32.mrb[0].mxu0
  %1819 = vmatprep.mubr.bf16.mxu0 0
  %1820 = vmatmul.mubr.bf16.gmra.mrb[0].mxu0 %v1540
  %v1821 = vpop.f32.mrb[0].mxu0
  %v1822 = vadd.f32 %v1322, %v1821
  %v1823 = vpop.f32.mrb[0].mxu0
  %v1824 = vpop.f32.mrb[0].mxu0
  %v1825 = vadd.f32 %v1325, %v1824
  %v1826 = vpop.f32.mrb[0].mxu0
  %1827 = vmatprep.mubr.bf16.mxu0 0
  %1828 = vmatmul.mubr.bf16.gmra.mrb[0].mxu0 %v1543
  %v1829 = vpop.f32.mrb[0].mxu0
  %v1830 = vadd.f32 %v1330, %v1829
  %v1831 = vpop.f32.mrb[0].mxu0
  %v1832 = vpop.f32.mrb[0].mxu0
  %v1833 = vadd.f32 %v1333, %v1832
  %v1834 = vpop.f32.mrb[0].mxu0
  %1835 = vmatprep.mubr.bf16.mxu0 0
  %1836 = vmatmul.mubr.bf16.gmra.mrb[0].mxu0 %v1546
  %v1837 = vpop.f32.mrb[0].mxu0
  %v1838 = vadd.f32 %v1338, %v1837
  %v1839 = vpop.f32.mrb[0].mxu0
  %v1840 = vpop.f32.mrb[0].mxu0
  %v1841 = vadd.f32 %v1341, %v1840
  %v1842 = vpop.f32.mrb[0].mxu0
  %1843 = vdwg.mxu0
  %v1844 = vld [vmem:[%s3] sm:$0x1]
  %v1846 = vlaneseq
  %v1847 = vshrl.u32 %v1846, 7
  %v1848 = vsub.s32 0, %v1847
  %v1849 = vrot.slane %v1844, %v1848
  %v1851 = vadd.f32 %v1590, %v1849
  %v1852 = vadd.f32 %v1593, %v1849
  %v1853 = vadd.f32 %v1598, %v1849
  %v1854 = vadd.f32 %v1601, %v1849
  %v1855 = vadd.f32 %v1606, %v1849
  %v1856 = vadd.f32 %v1609, %v1849
  %v1857 = vadd.f32 %v1614, %v1849
  %v1858 = vadd.f32 %v1617, %v1849
  %v1859 = vadd.f32 %v1622, %v1849
  %v1860 = vadd.f32 %v1625, %v1849
  %v1861 = vadd.f32 %v1630, %v1849
  %v1862 = vadd.f32 %v1633, %v1849
  %v1863 = vadd.f32 %v1638, %v1849
  %v1864 = vadd.f32 %v1641, %v1849
  %v1865 = vadd.f32 %v1646, %v1849
  %v1866 = vadd.f32 %v1649, %v1849
  %v1867 = vadd.f32 %v1654, %v1849
  %v1868 = vadd.f32 %v1657, %v1849
  %v1869 = vadd.f32 %v1662, %v1849
  %v1870 = vadd.f32 %v1665, %v1849
  %v1871 = vadd.f32 %v1670, %v1849
  %v1872 = vadd.f32 %v1673, %v1849
  %v1873 = vadd.f32 %v1678, %v1849
  %v1874 = vadd.f32 %v1681, %v1849
  %v1875 = vadd.f32 %v1686, %v1849
  %v1876 = vadd.f32 %v1689, %v1849
  %v1877 = vadd.f32 %v1694, %v1849
  %v1878 = vadd.f32 %v1697, %v1849
  %v1879 = vadd.f32 %v1702, %v1849
  %v1880 = vadd.f32 %v1705, %v1849
  %v1881 = vadd.f32 %v1710, %v1849
  %v1882 = vadd.f32 %v1713, %v1849
  %v1883 = vadd.f32 %v1718, %v1849
  %v1884 = vadd.f32 %v1721, %v1849
  %v1885 = vadd.f32 %v1726, %v1849
  %v1886 = vadd.f32 %v1729, %v1849
  %v1887 = vadd.f32 %v1734, %v1849
  %v1888 = vadd.f32 %v1737, %v1849
  %v1889 = vadd.f32 %v1742, %v1849
  %v1890 = vadd.f32 %v1745, %v1849
  %v1891 = vadd.f32 %v1750, %v1849
  %v1892 = vadd.f32 %v1753, %v1849
  %v1893 = vadd.f32 %v1758, %v1849
  %v1894 = vadd.f32 %v1761, %v1849
  %v1895 = vadd.f32 %v1766, %v1849
  %v1896 = vadd.f32 %v1769, %v1849
  %v1897 = vadd.f32 %v1774, %v1849
  %v1898 = vadd.f32 %v1777, %v1849
  %v1899 = vadd.f32 %v1782, %v1849
  %v1900 = vadd.f32 %v1785, %v1849
  %v1901 = vadd.f32 %v1790, %v1849
  %v1902 = vadd.f32 %v1793, %v1849
  %v1903 = vadd.f32 %v1798, %v1849
  %v1904 = vadd.f32 %v1801, %v1849
  %v1905 = vadd.f32 %v1806, %v1849
  %v1906 = vadd.f32 %v1809, %v1849
  %v1907 = vadd.f32 %v1814, %v1849
  %v1908 = vadd.f32 %v1817, %v1849
  %v1909 = vadd.f32 %v1822, %v1849
  %v1910 = vadd.f32 %v1825, %v1849
  %v1911 = vadd.f32 %v1830, %v1849
  %v1912 = vadd.f32 %v1833, %v1849
  %v1913 = vadd.f32 %v1838, %v1849
  %v1914 = vadd.f32 %v1841, %v1849
  %v1915 = vmax.f32 %v1851, 0.0
  %v1916 = vmax.f32 %v1852, 0.0
  %v1917 = vmax.f32 %v1853, 0.0
  %v1918 = vmax.f32 %v1854, 0.0
  %v1919 = vmax.f32 %v1855, 0.0
  %v1920 = vmax.f32 %v1856, 0.0
  %v1921 = vmax.f32 %v1857, 0.0
  %v1922 = vmax.f32 %v1858, 0.0
  %v1923 = vmax.f32 %v1859, 0.0
  %v1924 = vmax.f32 %v1860, 0.0
  %v1925 = vmax.f32 %v1861, 0.0
  %v1926 = vmax.f32 %v1862, 0.0
  %v1927 = vmax.f32 %v1863, 0.0
  %v1928 = vmax.f32 %v1864, 0.0
  %v1929 = vmax.f32 %v1865, 0.0
  %v1930 = vmax.f32 %v1866, 0.0
  %v1931 = vmax.f32 %v1867, 0.0
  %v1932 = vmax.f32 %v1868, 0.0
  %v1933 = vmax.f32 %v1869, 0.0
  %v1934 = vmax.f32 %v1870, 0.0
  %v1935 = vmax.f32 %v1871, 0.0
  %v1936 = vmax.f32 %v1872, 0.0
  %v1937 = vmax.f32 %v1873, 0.0
  %v1938 = vmax.f32 %v1874, 0.0
  %v1939 = vmax.f32 %v1875, 0.0
  %v1940 = vmax.f32 %v1876, 0.0
  %v1941 = vmax.f32 %v1877, 0.0
  %v1942 = vmax.f32 %v1878, 0.0
  %v1943 = vmax.f32 %v1879, 0.0
  %v1944 = vmax.f32 %v1880, 0.0
  %v1945 = vmax.f32 %v1881, 0.0
  %v1946 = vmax.f32 %v1882, 0.0
  %v1947 = vmax.f32 %v1883, 0.0
  %v1948 = vmax.f32 %v1884, 0.0
  %v1949 = vmax.f32 %v1885, 0.0
  %v1950 = vmax.f32 %v1886, 0.0
  %v1951 = vmax.f32 %v1887, 0.0
  %v1952 = vmax.f32 %v1888, 0.0
  %v1953 = vmax.f32 %v1889, 0.0
  %v1954 = vmax.f32 %v1890, 0.0
  %v1955 = vmax.f32 %v1891, 0.0
  %v1956 = vmax.f32 %v1892, 0.0
  %v1957 = vmax.f32 %v1893, 0.0
  %v1958 = vmax.f32 %v1894, 0.0
  %v1959 = vmax.f32 %v1895, 0.0
  %v1960 = vmax.f32 %v1896, 0.0
  %v1961 = vmax.f32 %v1897, 0.0
  %v1962 = vmax.f32 %v1898, 0.0
  %v1963 = vmax.f32 %v1899, 0.0
  %v1964 = vmax.f32 %v1900, 0.0
  %v1965 = vmax.f32 %v1901, 0.0
  %v1966 = vmax.f32 %v1902, 0.0
  %v1967 = vmax.f32 %v1903, 0.0
  %v1968 = vmax.f32 %v1904, 0.0
  %v1969 = vmax.f32 %v1905, 0.0
  %v1970 = vmax.f32 %v1906, 0.0
  %v1971 = vmax.f32 %v1907, 0.0
  %v1972 = vmax.f32 %v1908, 0.0
  %v1973 = vmax.f32 %v1909, 0.0
  %v1974 = vmax.f32 %v1910, 0.0
  %v1975 = vmax.f32 %v1911, 0.0
  %v1976 = vmax.f32 %v1912, 0.0
  %v1977 = vmax.f32 %v1913, 0.0
  %v1978 = vmax.f32 %v1914, 0.0
  %v1979 = vpack.c.bf16 %v1916, %v1915
  %v1980 = vpack.c.bf16 %v1918, %v1917
  %v1981 = vpack.c.bf16 %v1920, %v1919
  %v1982 = vpack.c.bf16 %v1922, %v1921
  %v1983 = vpack.c.bf16 %v1924, %v1923
  %v1984 = vpack.c.bf16 %v1926, %v1925
  %v1985 = vpack.c.bf16 %v1928, %v1927
  %v1986 = vpack.c.bf16 %v1930, %v1929
  %v1987 = vpack.c.bf16 %v1932, %v1931
  %v1988 = vpack.c.bf16 %v1934, %v1933
  %v1989 = vpack.c.bf16 %v1936, %v1935
  %v1990 = vpack.c.bf16 %v1938, %v1937
  %v1991 = vpack.c.bf16 %v1940, %v1939
  %v1992 = vpack.c.bf16 %v1942, %v1941
  %v1993 = vpack.c.bf16 %v1944, %v1943
  %v1994 = vpack.c.bf16 %v1946, %v1945
  %v1995 = vpack.c.bf16 %v1948, %v1947
  %v1996 = vpack.c.bf16 %v1950, %v1949
  %v1997 = vpack.c.bf16 %v1952, %v1951
  %v1998 = vpack.c.bf16 %v1954, %v1953
  %v1999 = vpack.c.bf16 %v1956, %v1955
  %v2000 = vpack.c.bf16 %v1958, %v1957
  %v2001 = vpack.c.bf16 %v1960, %v1959
  %v2002 = vpack.c.bf16 %v1962, %v1961
  %v2003 = vpack.c.bf16 %v1964, %v1963
  %v2004 = vpack.c.bf16 %v1966, %v1965
  %v2005 = vpack.c.bf16 %v1968, %v1967
  %v2006 = vpack.c.bf16 %v1970, %v1969
  %v2007 = vpack.c.bf16 %v1972, %v1971
  %v2008 = vpack.c.bf16 %v1974, %v1973
  %v2009 = vpack.c.bf16 %v1976, %v1975
  %v2010 = vpack.c.bf16 %v1978, %v1977
  %v2043 = vunpack.c.l.b16 %v1979
  %v2044 = vunpack.c.h.b16 %v1979
  %v2045 = vunpack.c.l.b16 %v1980
  %v2046 = vunpack.c.h.b16 %v1980
  %v2047 = vunpack.c.l.b16 %v1981
  %v2048 = vunpack.c.h.b16 %v1981
  %v2049 = vunpack.c.l.b16 %v1982
  %v2050 = vunpack.c.h.b16 %v1982
  %v2051 = vunpack.c.l.b16 %v1983
  %v2052 = vunpack.c.h.b16 %v1983
  %v2053 = vunpack.c.l.b16 %v1984
  %v2054 = vunpack.c.h.b16 %v1984
  %v2055 = vunpack.c.l.b16 %v1985
  %v2056 = vunpack.c.h.b16 %v1985
  %v2057 = vunpack.c.l.b16 %v1986
  %v2058 = vunpack.c.h.b16 %v1986
  %v2059 = vunpack.c.l.b16 %v1987
  %v2060 = vunpack.c.h.b16 %v1987
  %v2061 = vunpack.c.l.b16 %v1988
  %v2062 = vunpack.c.h.b16 %v1988
  %v2063 = vunpack.c.l.b16 %v1989
  %v2064 = vunpack.c.h.b16 %v1989
  %v2065 = vunpack.c.l.b16 %v1990
  %v2066 = vunpack.c.h.b16 %v1990
  %v2067 = vunpack.c.l.b16 %v1991
  %v2068 = vunpack.c.h.b16 %v1991
  %v2069 = vunpack.c.l.b16 %v1992
  %v2070 = vunpack.c.h.b16 %v1992
  %v2071 = vunpack.c.l.b16 %v1993
  %v2072 = vunpack.c.h.b16 %v1993
  %v2073 = vunpack.c.l.b16 %v1994
  %v2074 = vunpack.c.h.b16 %v1994
  %v2075 = vunpack.c.l.b16 %v1995
  %v2076 = vunpack.c.h.b16 %v1995
  %v2077 = vunpack.c.l.b16 %v1996
  %v2078 = vunpack.c.h.b16 %v1996
  %v2079 = vunpack.c.l.b16 %v1997
  %v2080 = vunpack.c.h.b16 %v1997
  %v2081 = vunpack.c.l.b16 %v1998
  %v2082 = vunpack.c.h.b16 %v1998
  %v2083 = vunpack.c.l.b16 %v1999
  %v2084 = vunpack.c.h.b16 %v1999
  %v2085 = vunpack.c.l.b16 %v2000
  %v2086 = vunpack.c.h.b16 %v2000
  %v2087 = vunpack.c.l.b16 %v2001
  %v2088 = vunpack.c.h.b16 %v2001
  %v2089 = vunpack.c.l.b16 %v2002
  %v2090 = vunpack.c.h.b16 %v2002
  %v2091 = vunpack.c.l.b16 %v2003
  %v2092 = vunpack.c.h.b16 %v2003
  %v2093 = vunpack.c.l.b16 %v2004
  %v2094 = vunpack.c.h.b16 %v2004
  %v2095 = vunpack.c.l.b16 %v2005
  %v2096 = vunpack.c.h.b16 %v2005
  %v2097 = vunpack.c.l.b16 %v2006
  %v2098 = vunpack.c.h.b16 %v2006
  %v2099 = vunpack.c.l.b16 %v2007
  %v2100 = vunpack.c.h.b16 %v2007
  %v2101 = vunpack.c.l.b16 %v2008
  %v2102 = vunpack.c.h.b16 %v2008
  %v2103 = vunpack.c.l.b16 %v2009
  %v2104 = vunpack.c.h.b16 %v2009
  %v2105 = vunpack.c.l.b16 %v2010
  %v2106 = vunpack.c.h.b16 %v2010
  %v2107 = vpack.c.b16 %v2043, %v2043
  %v2108 = vpack.c.b16 %v2044, %v2044
  %v2109 = vpack.c.b16 %v2045, %v2045
  %v2110 = vpack.c.b16 %v2046, %v2046
  %v2111 = vpack.c.b16 %v2047, %v2047
  %v2112 = vpack.c.b16 %v2048, %v2048
  %v2113 = vpack.c.b16 %v2049, %v2049
  %v2114 = vpack.c.b16 %v2050, %v2050
  %v2115 = vpack.c.b16 %v2051, %v2051
  %v2116 = vpack.c.b16 %v2052, %v2052
  %v2117 = vpack.c.b16 %v2053, %v2053
  %v2118 = vpack.c.b16 %v2054, %v2054
  %v2119 = vpack.c.b16 %v2055, %v2055
  %v2120 = vpack.c.b16 %v2056, %v2056
  %v2121 = vpack.c.b16 %v2057, %v2057
  %v2122 = vpack.c.b16 %v2058, %v2058
  %v2123 = vpack.c.b16 %v2059, %v2059
  %v2124 = vpack.c.b16 %v2060, %v2060
  %v2125 = vpack.c.b16 %v2061, %v2061
  %v2126 = vpack.c.b16 %v2062, %v2062
  %v2127 = vpack.c.b16 %v2063, %v2063
  %v2128 = vpack.c.b16 %v2064, %v2064
  %v2129 = vpack.c.b16 %v2065, %v2065
  %v2130 = vpack.c.b16 %v2066, %v2066
  %v2131 = vpack.c.b16 %v2067, %v2067
  %v2132 = vpack.c.b16 %v2068, %v2068
  %v2133 = vpack.c.b16 %v2069, %v2069
  %v2134 = vpack.c.b16 %v2070, %v2070
  %v2135 = vpack.c.b16 %v2071, %v2071
  %v2136 = vpack.c.b16 %v2072, %v2072
  %v2137 = vpack.c.b16 %v2073, %v2073
  %v2138 = vpack.c.b16 %v2074, %v2074
  %v2139 = vpack.c.b16 %v2075, %v2075
  %v2140 = vpack.c.b16 %v2076, %v2076
  %v2141 = vpack.c.b16 %v2077, %v2077
  %v2142 = vpack.c.b16 %v2078, %v2078
  %v2143 = vpack.c.b16 %v2079, %v2079
  %v2144 = vpack.c.b16 %v2080, %v2080
  %v2145 = vpack.c.b16 %v2081, %v2081
  %v2146 = vpack.c.b16 %v2082, %v2082
  %v2147 = vpack.c.b16 %v2083, %v2083
  %v2148 = vpack.c.b16 %v2084, %v2084
  %v2149 = vpack.c.b16 %v2085, %v2085
  %v2150 = vpack.c.b16 %v2086, %v2086
  %v2151 = vpack.c.b16 %v2087, %v2087
  %v2152 = vpack.c.b16 %v2088, %v2088
  %v2153 = vpack.c.b16 %v2089, %v2089
  %v2154 = vpack.c.b16 %v2090, %v2090
  %v2155 = vpack.c.b16 %v2091, %v2091
  %v2156 = vpack.c.b16 %v2092, %v2092
  %v2157 = vpack.c.b16 %v2093, %v2093
  %v2158 = vpack.c.b16 %v2094, %v2094
  %v2159 = vpack.c.b16 %v2095, %v2095
  %v2160 = vpack.c.b16 %v2096, %v2096
  %v2161 = vpack.c.b16 %v2097, %v2097
  %v2162 = vpack.c.b16 %v2098, %v2098
  %v2163 = vpack.c.b16 %v2099, %v2099
  %v2164 = vpack.c.b16 %v2100, %v2100
  %v2165 = vpack.c.b16 %v2101, %v2101
  %v2166 = vpack.c.b16 %v2102, %v2102
  %v2167 = vpack.c.b16 %v2103, %v2103
  %v2168 = vpack.c.b16 %v2104, %v2104
  %v2169 = vpack.c.b16 %v2105, %v2105
  %v2170 = vpack.c.b16 %v2106, %v2106
  %vm2235 = vcmask 125952
  %2236 = vst.msk [vmem:[%s4] sm:$0xf] %vm2235, %v2107
  %2237 = vst.msk [vmem:[%s4 + $0x4] sm:$0xf] %vm2235, %v2108
  %2238 = vst.msk [vmem:[%s4 + $0x8] sm:$0xf] %vm2235, %v2109
  %2239 = vst.msk [vmem:[%s4 + $0xc] sm:$0xf] %vm2235, %v2110
  %2240 = vst.msk [vmem:[%s4 + $0x10] sm:$0xf] %vm2235, %v2111
  %2241 = vst.msk [vmem:[%s4 + $0x14] sm:$0xf] %vm2235, %v2112
  %2242 = vst.msk [vmem:[%s4 + $0x18] sm:$0xf] %vm2235, %v2113
  %2243 = vst.msk [vmem:[%s4 + $0x1c] sm:$0xf] %vm2235, %v2114
  %2244 = vst.msk [vmem:[%s4 + $0x20] sm:$0xf] %vm2235, %v2115
  %2245 = vst.msk [vmem:[%s4 + $0x24] sm:$0xf] %vm2235, %v2116
  %2246 = vst.msk [vmem:[%s4 + $0x28] sm:$0xf] %vm2235, %v2117
  %2247 = vst.msk [vmem:[%s4 + $0x2c] sm:$0xf] %vm2235, %v2118
  %2248 = vst.msk [vmem:[%s4 + $0x30] sm:$0xf] %vm2235, %v2119
  %2249 = vst.msk [vmem:[%s4 + $0x34] sm:$0xf] %vm2235, %v2120
  %2250 = vst.msk [vmem:[%s4 + $0x38] sm:$0xf] %vm2235, %v2121
  %2251 = vst.msk [vmem:[%s4 + $0x3c] sm:$0xf] %vm2235, %v2122
  %2252 = vst.msk [vmem:[%s4 + $0x40] sm:$0xf] %vm2235, %v2123
  %2253 = vst.msk [vmem:[%s4 + $0x44] sm:$0xf] %vm2235, %v2124
  %2254 = vst.msk [vmem:[%s4 + $0x48] sm:$0xf] %vm2235, %v2125
  %2255 = vst.msk [vmem:[%s4 + $0x4c] sm:$0xf] %vm2235, %v2126
  %2256 = vst.msk [vmem:[%s4 + $0x50] sm:$0xf] %vm2235, %v2127
  %2257 = vst.msk [vmem:[%s4 + $0x54] sm:$0xf] %vm2235, %v2128
  %2258 = vst.msk [vmem:[%s4 + $0x58] sm:$0xf] %vm2235, %v2129
  %2259 = vst.msk [vmem:[%s4 + $0x5c] sm:$0xf] %vm2235, %v2130
  %2260 = vst.msk [vmem:[%s4 + $0x60] sm:$0xf] %vm2235, %v2131
  %2261 = vst.msk [vmem:[%s4 + $0x64] sm:$0xf] %vm2235, %v2132
  %2262 = vst.msk [vmem:[%s4 + $0x68] sm:$0xf] %vm2235, %v2133
  %2263 = vst.msk [vmem:[%s4 + $0x6c] sm:$0xf] %vm2235, %v2134
  %2264 = vst.msk [vmem:[%s4 + $0x70] sm:$0xf] %vm2235, %v2135
  %2265 = vst.msk [vmem:[%s4 + $0x74] sm:$0xf] %vm2235, %v2136
  %2266 = vst.msk [vmem:[%s4 + $0x78] sm:$0xf] %vm2235, %v2137
  %2267 = vst.msk [vmem:[%s4 + $0x7c] sm:$0xf] %vm2235, %v2138
  %2268 = vst.msk [vmem:[%s4 + $0x80] sm:$0xf] %vm2235, %v2139
  %2269 = vst.msk [vmem:[%s4 + $0x84] sm:$0xf] %vm2235, %v2140
  %2270 = vst.msk [vmem:[%s4 + $0x88] sm:$0xf] %vm2235, %v2141
  %2271 = vst.msk [vmem:[%s4 + $0x8c] sm:$0xf] %vm2235, %v2142
  %2272 = vst.msk [vmem:[%s4 + $0x90] sm:$0xf] %vm2235, %v2143
  %2273 = vst.msk [vmem:[%s4 + $0x94] sm:$0xf] %vm2235, %v2144
  %2274 = vst.msk [vmem:[%s4 + $0x98] sm:$0xf] %vm2235, %v2145
  %2275 = vst.msk [vmem:[%s4 + $0x9c] sm:$0xf] %vm2235, %v2146
  %2276 = vst.msk [vmem:[%s4 + $0xa0] sm:$0xf] %vm2235, %v2147
  %2277 = vst.msk [vmem:[%s4 + $0xa4] sm:$0xf] %vm2235, %v2148
  %2278 = vst.msk [vmem:[%s4 + $0xa8] sm:$0xf] %vm2235, %v2149
  %2279 = vst.msk [vmem:[%s4 + $0xac] sm:$0xf] %vm2235, %v2150
  %2280 = vst.msk [vmem:[%s4 + $0xb0] sm:$0xf] %vm2235, %v2151
  %2281 = vst.msk [vmem:[%s4 + $0xb4] sm:$0xf] %vm2235, %v2152
  %2282 = vst.msk [vmem:[%s4 + $0xb8] sm:$0xf] %vm2235, %v2153
  %2283 = vst.msk [vmem:[%s4 + $0xbc] sm:$0xf] %vm2235, %v2154
  %2284 = vst.msk [vmem:[%s4 + $0xc0] sm:$0xf] %vm2235, %v2155
  %2285 = vst.msk [vmem:[%s4 + $0xc4] sm:$0xf] %vm2235, %v2156
  %2286 = vst.msk [vmem:[%s4 + $0xc8] sm:$0xf] %vm2235, %v2157
  %2287 = vst.msk [vmem:[%s4 + $0xcc] sm:$0xf] %vm2235, %v2158
  %2288 = vst.msk [vmem:[%s4 + $0xd0] sm:$0xf] %vm2235, %v2159
  %2289 = vst.msk [vmem:[%s4 + $0xd4] sm:$0xf] %vm2235, %v2160
  %2290 = vst.msk [vmem:[%s4 + $0xd8] sm:$0xf] %vm2235, %v2161
  %2291 = vst.msk [vmem:[%s4 + $0xdc] sm:$0xf] %vm2235, %v2162
  %2292 = vst.msk [vmem:[%s4 + $0xe0] sm:$0xf] %vm2235, %v2163
  %2293 = vst.msk [vmem:[%s4 + $0xe4] sm:$0xf] %vm2235, %v2164
  %2294 = vst.msk [vmem:[%s4 + $0xe8] sm:$0xf] %vm2235, %v2165
  %2295 = vst.msk [vmem:[%s4 + $0xec] sm:$0xf] %vm2235, %v2166
  %2296 = vst.msk [vmem:[%s4 + $0xf0] sm:$0xf] %vm2235, %v2167
  %2297 = vst.msk [vmem:[%s4 + $0xf4] sm:$0xf] %vm2235, %v2168
  %2298 = vst.msk [vmem:[%s4 + $0xf8] sm:$0xf] %vm2235, %v2169
  %2299 = vst.msk [vmem:[%s4 + $0xfc] sm:$0xf] %vm2235, %v2170
  // Predicated region
  $region18: #{net_fwd.74} parent=0 // pred_check
    _
  $region19: #{net_fwd.74} parent=0 // pred_check_branch
    %2301 = sbr.rel (0) target = $region21
  $region20: #{net_fwd.74} parent=0 // pred_region
    _
  $region21: #{net_fwd.74} parent=0 // pred_fallthru
    _
  // Predicated region
  $region22: #{net_fwd.74} parent=0 // pred_check
    _
  $region23: #{net_fwd.74} parent=0 // pred_check_branch
    %2303 = sbr.rel (0) target = $region25
  $region24: #{net_fwd.74} parent=0 // pred_region
    _
  $region25: #{net_fwd.74} parent=0 // pred_fallthru
    _

// kernel: net_fwd.75
$region0: #{net_fwd.75}
  #allocation0 [shape = 'u32[]', space=smem, size = 0x4, offset = 0x4, fixed_abs, tag = 'smem constant byte address 0x4 - core index']
  #allocation1 [shape = 'u32[144,128]{1,0:T(1,128)}', space=vmem, size = 0x12000, scoped, tag = 'internal scratch']
  %s0 = inlined_call_operand.vmem [shape: bf16[128,144], index: 0, kind: input, shape index: {}]
  %s1 = inlined_call_operand.vmem [shape: bf16[144,64], index: 1, kind: input, shape index: {}]
  %s2 = inlined_call_operand.vmem [shape: bf16[16,64], index: 2, kind: input, shape index: {}]
  %s3 = inlined_call_operand.vmem [shape: f32[1,64], index: 3, kind: input, shape index: {}]
  %s4 = inlined_call_operand.vmem [shape: bf16[128,64], index: 4, kind: output, shape index: {}]
  %s5 = sld [smem:[#allocation0]]
  $region26: #{net_fwd.75} parent=0
    _
  %s7 = ssub.s32 1, %s5
  %s8 = scalar_select 0, %s7, %s5
  // Predicated region
  $region2: #{net_fwd.75} parent=0 // pred_check
    _
  $region3: #{net_fwd.75} parent=0 // pred_check_branch
    %10 = sbr.rel (0) target = $region5
  $region4: #{net_fwd.75} parent=0 // pred_region
    _
  $region5: #{net_fwd.75} parent=0 // pred_fallthru
    _
  // Predicated region
  $region6: #{net_fwd.75} parent=0 // pred_check
    _
  $region7: #{net_fwd.75} parent=0 // pred_check_branch
    %12 = sbr.rel (0) target = $region9
  $region8: #{net_fwd.75} parent=0 // pred_region
    _
  $region9: #{net_fwd.75} parent=0 // pred_fallthru
    _
  // Predicated region
  $region10: #{net_fwd.75} parent=0 // pred_check
    _
  $region11: #{net_fwd.75} parent=0 // pred_check_branch
    %14 = sbr.rel (0) target = $region13
  $region12: #{net_fwd.75} parent=0 // pred_region
    _
  $region13: #{net_fwd.75} parent=0 // pred_fallthru
    _
  // Predicated region
  $region14: #{net_fwd.75} parent=0 // pred_check
    _
  $region15: #{net_fwd.75} parent=0 // pred_check_branch
    %16 = sbr.rel (0) target = $region17
  $region16: #{net_fwd.75} parent=0 // pred_region
    _
  $region17: #{net_fwd.75} parent=0 // pred_fallthru
    _
  %v18 = vld [vmem:[%s0] sm:$0xff]
  %v19 = vld [vmem:[%s0 + $0x8] sm:$0xff]
  %v20 = vld [vmem:[%s0 + $0x10] sm:$0xff]
  %v21 = vld [vmem:[%s0 + $0x18] sm:$0xff]
  %v22 = vld [vmem:[%s0 + $0x20] sm:$0xff]
  %v23 = vld [vmem:[%s0 + $0x28] sm:$0xff]
  %v24 = vld [vmem:[%s0 + $0x30] sm:$0xff]
  %v25 = vld [vmem:[%s0 + $0x38] sm:$0xff]
  %v26 = vld [vmem:[%s0 + $0x40] sm:$0xff]
  %v27 = vld [vmem:[%s0 + $0x48] sm:$0xff]
  %v28 = vld [vmem:[%s0 + $0x50] sm:$0xff]
  %v29 = vld [vmem:[%s0 + $0x58] sm:$0xff]
  %v30 = vld [vmem:[%s0 + $0x60] sm:$0xff]
  %v31 = vld [vmem:[%s0 + $0x68] sm:$0xff]
  %v32 = vld [vmem:[%s0 + $0x70] sm:$0xff]
  %v33 = vld [vmem:[%s0 + $0x78] sm:$0xff]
  %v34 = vld [vmem:[%s1] sm:$0xf]
  %v35 = vld [vmem:[%s1 + $0x4] sm:$0xf]
  %v36 = vld [vmem:[%s1 + $0x8] sm:$0xf]
  %v37 = vld [vmem:[%s1 + $0xc] sm:$0xf]
  %v38 = vld [vmem:[%s1 + $0x10] sm:$0xf]
  %v39 = vld [vmem:[%s1 + $0x14] sm:$0xf]
  %v40 = vld [vmem:[%s1 + $0x18] sm:$0xf]
  %v41 = vld [vmem:[%s1 + $0x1c] sm:$0xf]
  %v42 = vld [vmem:[%s1 + $0x20] sm:$0xf]
  %v43 = vld [vmem:[%s1 + $0x24] sm:$0xf]
  %v44 = vld [vmem:[%s1 + $0x28] sm:$0xf]
  %v45 = vld [vmem:[%s1 + $0x2c] sm:$0xf]
  %v46 = vld [vmem:[%s1 + $0x30] sm:$0xf]
  %v47 = vld [vmem:[%s1 + $0x34] sm:$0xf]
  %v48 = vld [vmem:[%s1 + $0x38] sm:$0xf]
  %v49 = vld [vmem:[%s1 + $0x3c] sm:$0xf]
  %v50 = vld [vmem:[%s1 + $0x40] sm:$0xf]
  %v51 = vld [vmem:[%s1 + $0x44] sm:$0xf]
  %68 = vrot.lane.b32.xlu0 %v18, 112
  %v69 = vpop.permute.xlu0 %68
  %70 = vrot.lane.b32.xlu0 %v19, 112
  %v71 = vpop.permute.xlu0 %70
  %72 = vrot.lane.b32.xlu0 %v20, 112
  %v73 = vpop.permute.xlu0 %72
  %74 = vrot.lane.b32.xlu0 %v21, 112
  %v75 = vpop.permute.xlu0 %74
  %76 = vrot.lane.b32.xlu0 %v22, 112
  %v77 = vpop.permute.xlu0 %76
  %78 = vrot.lane.b32.xlu0 %v23, 112
  %v79 = vpop.permute.xlu0 %78
  %80 = vrot.lane.b32.xlu0 %v24, 112
  %v81 = vpop.permute.xlu0 %80
  %82 = vrot.lane.b32.xlu0 %v25, 112
  %v83 = vpop.permute.xlu0 %82
  %84 = vrot.lane.b32.xlu0 %v26, 112
  %v85 = vpop.permute.xlu0 %84
  %86 = vrot.lane.b32.xlu0 %v27, 112
  %v87 = vpop.permute.xlu0 %86
  %88 = vrot.lane.b32.xlu0 %v28, 112
  %v89 = vpop.permute.xlu0 %88
  %90 = vrot.lane.b32.xlu0 %v29, 112
  %v91 = vpop.permute.xlu0 %90
  %92 = vrot.lane.b32.xlu0 %v30, 112
  %v93 = vpop.permute.xlu0 %92
  %94 = vrot.lane.b32.xlu0 %v31, 112
  %v95 = vpop.permute.xlu0 %94
  %96 = vrot.lane.b32.xlu0 %v32, 112
  %v97 = vpop.permute.xlu0 %96
  %98 = vrot.lane.b32.xlu0 %v33, 112
  %v99 = vpop.permute.xlu0 %98
  %v116 = vmax.bf16 %v18, %v69
  %v117 = vmax.bf16 %v19, %v71
  %v118 = vmax.bf16 %v20, %v73
  %v119 = vmax.bf16 %v21, %v75
  %v120 = vmax.bf16 %v22, %v77
  %v121 = vmax.bf16 %v23, %v79
  %v122 = vmax.bf16 %v24, %v81
  %v123 = vmax.bf16 %v25, %v83
  %v124 = vmax.bf16 %v26, %v85
  %v125 = vmax.bf16 %v27, %v87
  %v126 = vmax.bf16 %v28, %v89
  %v127 = vmax.bf16 %v29, %v91
  %v128 = vmax.bf16 %v30, %v93
  %v129 = vmax.bf16 %v31, %v95
  %v130 = vmax.bf16 %v32, %v97
  %v131 = vmax.bf16 %v33, %v99
  %v132 = vrot.slane %v69, 4
  %v133 = vrot.slane %v71, 4
  %v134 = vrot.slane %v73, 4
  %v135 = vrot.slane %v75, 4
  %v136 = vrot.slane %v77, 4
  %v137 = vrot.slane %v79, 4
  %v138 = vrot.slane %v81, 4
  %v139 = vrot.slane %v83, 4
  %v140 = vrot.slane %v85, 4
  %v141 = vrot.slane %v87, 4
  %v142 = vrot.slane %v89, 4
  %v143 = vrot.slane %v91, 4
  %v144 = vrot.slane %v93, 4
  %v145 = vrot.slane %v95, 4
  %v146 = vrot.slane %v97, 4
  %v147 = vrot.slane %v99, 4
  %vm148 = vcmask 916480
  %v149 = vsel %vm148, %v69, %v132
  %v150 = vsel %vm148, %v71, %v133
  %v151 = vsel %vm148, %v73, %v134
  %v152 = vsel %vm148, %v75, %v135
  %v153 = vsel %vm148, %v77, %v136
  %v154 = vsel %vm148, %v79, %v137
  %v155 = vsel %vm148, %v81, %v138
  %v156 = vsel %vm148, %v83, %v139
  %v157 = vsel %vm148, %v85, %v140
  %v158 = vsel %vm148, %v87, %v141
  %v159 = vsel %vm148, %v89, %v142
  %v160 = vsel %vm148, %v91, %v143
  %v161 = vsel %vm148, %v93, %v144
  %v162 = vsel %vm148, %v95, %v145
  %v163 = vsel %vm148, %v97, %v146
  %v164 = vsel %vm148, %v99, %v147
  %v181 = vmax.bf16 %v18, %v149
  %v182 = vmax.bf16 %v19, %v150
  %v183 = vmax.bf16 %v20, %v151
  %v184 = vmax.bf16 %v21, %v152
  %v185 = vmax.bf16 %v22, %v153
  %v186 = vmax.bf16 %v23, %v154
  %v187 = vmax.bf16 %v24, %v155
  %v188 = vmax.bf16 %v25, %v156
  %v189 = vmax.bf16 %v26, %v157
  %v190 = vmax.bf16 %v27, %v158
  %v191 = vmax.bf16 %v28, %v159
  %v192 = vmax.bf16 %v29, %v160
  %v193 = vmax.bf16 %v30, %v161
  %v194 = vmax.bf16 %v31, %v162
  %v195 = vmax.bf16 %v32, %v163
  %v196 = vmax.bf16 %v33, %v164
  %213 = vrot.lane.b32.xlu0 %v181, 80
  %v214 = vpop.permute.xlu0 %213
  %215 = vrot.lane.b32.xlu0 %v182, 80
  %v216 = vpop.permute.xlu0 %215
  %217 = vrot.lane.b32.xlu0 %v183, 80
  %v218 = vpop.permute.xlu0 %217
  %219 = vrot.lane.b32.xlu0 %v184, 80
  %v220 = vpop.permute.xlu0 %219
  %221 = vrot.lane.b32.xlu0 %v185, 80
  %v222 = vpop.permute.xlu0 %221
  %223 = vrot.lane.b32.xlu0 %v186, 80
  %v224 = vpop.permute.xlu0 %223
  %225 = vrot.lane.b32.xlu0 %v187, 80
  %v226 = vpop.permute.xlu0 %225
  %227 = vrot.lane.b32.xlu0 %v188, 80
  %v228 = vpop.permute.xlu0 %227
  %229 = vrot.lane.b32.xlu0 %v189, 80
  %v230 = vpop.permute.xlu0 %229
  %231 = vrot.lane.b32.xlu0 %v190, 80
  %v232 = vpop.permute.xlu0 %231
  %233 = vrot.lane.b32.xlu0 %v191, 80
  %v234 = vpop.permute.xlu0 %233
  %235 = vrot.lane.b32.xlu0 %v192, 80
  %v236 = vpop.permute.xlu0 %235
  %237 = vrot.lane.b32.xlu0 %v193, 80
  %v238 = vpop.permute.xlu0 %237
  %239 = vrot.lane.b32.xlu0 %v194, 80
  %v240 = vpop.permute.xlu0 %239
  %241 = vrot.lane.b32.xlu0 %v195, 80
  %v242 = vpop.permute.xlu0 %241
  %243 = vrot.lane.b32.xlu0 %v196, 80
  %v244 = vpop.permute.xlu0 %243
  %v261 = vmax.bf16 %v116, %v214
  %v262 = vmax.bf16 %v117, %v216
  %v263 = vmax.bf16 %v118, %v218
  %v264 = vmax.bf16 %v119, %v220
  %v265 = vmax.bf16 %v120, %v222
  %v266 = vmax.bf16 %v121, %v224
  %v267 = vmax.bf16 %v122, %v226
  %v268 = vmax.bf16 %v123, %v228
  %v269 = vmax.bf16 %v124, %v230
  %v270 = vmax.bf16 %v125, %v232
  %v271 = vmax.bf16 %v126, %v234
  %v272 = vmax.bf16 %v127, %v236
  %v273 = vmax.bf16 %v128, %v238
  %v274 = vmax.bf16 %v129, %v240
  %v275 = vmax.bf16 %v130, %v242
  %v276 = vmax.bf16 %v131, %v244
  %v277 = vld [vmem:[%s2] sm:$0xf]
  %v278 = vld [vmem:[%s2 + $0x4] sm:$0xf]
  %v295 = vunpack.c.l.b16 %v261
  %v296 = vunpack.c.l.b16 %v262
  %v297 = vunpack.c.l.b16 %v263
  %v298 = vunpack.c.l.b16 %v264
  %v299 = vunpack.c.l.b16 %v265
  %v300 = vunpack.c.l.b16 %v266
  %v301 = vunpack.c.l.b16 %v267
  %v302 = vunpack.c.l.b16 %v268
  %v303 = vunpack.c.l.b16 %v269
  %v304 = vunpack.c.l.b16 %v270
  %v305 = vunpack.c.l.b16 %v271
  %v306 = vunpack.c.l.b16 %v272
  %v307 = vunpack.c.l.b16 %v273
  %v308 = vunpack.c.l.b16 %v274
  %v309 = vunpack.c.l.b16 %v275
  %v310 = vunpack.c.l.b16 %v276
  %v311 = vpack.c.b16 %v296, %v295
  %v312 = vpack.c.b16 %v298, %v297
  %v313 = vpack.c.b16 %v300, %v299
  %v314 = vpack.c.b16 %v302, %v301
  %v315 = vpack.c.b16 %v304, %v303
  %v316 = vpack.c.b16 %v306, %v305
  %v317 = vpack.c.b16 %v308, %v307
  %v318 = vpack.c.b16 %v310, %v309
  %319 = vrot.lane.b32.xlu0 %v311, 64
  %v320 = vpop.permute.xlu0 %319
  %321 = vrot.lane.b32.xlu0 %v312, 64
  %v322 = vpop.permute.xlu0 %321
  %323 = vrot.lane.b32.xlu0 %v313, 64
  %v324 = vpop.permute.xlu0 %323
  %325 = vrot.lane.b32.xlu0 %v314, 64
  %v326 = vpop.permute.xlu0 %325
  %327 = vrot.lane.b32.xlu0 %v315, 64
  %v328 = vpop.permute.xlu0 %327
  %329 = vrot.lane.b32.xlu0 %v316, 64
  %v330 = vpop.permute.xlu0 %329
  %331 = vrot.lane.b32.xlu0 %v317, 64
  %v332 = vpop.permute.xlu0 %331
  %333 = vrot.lane.b32.xlu0 %v318, 64
  %v334 = vpop.permute.xlu0 %333
  %v337 = vunpack.c.l.b16 %v277
  %v338 = vunpack.c.l.b16 %v278
  %v339 = vpack.c.b16 %v338, %v337
  %vm341 = vcmask 130048
  %v343 = vsel %vm341, %v320, 0
  %v346 = vsel %vm341, %v322, 0
  %v349 = vsel %vm341, %v324, 0
  %v352 = vsel %vm341, %v326, 0
  %v355 = vsel %vm341, %v328, 0
  %v358 = vsel %vm341, %v330, 0
  %v361 = vsel %vm341, %v332, 0
  %v364 = vsel %vm341, %v334, 0
  %366 = vmatprep.subr.bf16.mxu0 0
  %367 = vmatpush1.bf16.msra.mxu0 %v339
  %368 = vmatprep.subr.bf16.mxu0 0
  %369 = vmatpush1.bf16.msra.mxu0 0
  %370 = vmatprep.subr.bf16.mxu0 0
  %371 = vmatpush1.bf16.msra.mxu0 0
  %372 = vmatprep.subr.bf16.mxu0 0
  %373 = vmatpush1.bf16.msra.mxu0 0
  %374 = vmatprep.subr.bf16.mxu0 0
  %375 = vmatpush1.bf16.msra.mxu0 0
  %376 = vmatprep.subr.bf16.mxu0 0
  %377 = vmatpush1.bf16.msra.mxu0 0
  %378 = vmatprep.subr.bf16.mxu0 0
  %379 = vmatpush1.bf16.msra.mxu0 0
  %380 = vmatprep.subr.bf16.mxu0 0
  %381 = vmatpush1.bf16.msra.mxu0 0
  %382 = vmatprep.subr.bf16.mxu0 0
  %383 = vmatpush1.bf16.msra.mxu0 0
  %384 = vmatprep.subr.bf16.mxu0 0
  %385 = vmatpush1.bf16.msra.mxu0 0
  %386 = vmatprep.subr.bf16.mxu0 0
  %387 = vmatpush1.bf16.msra.mxu0 0
  %388 = vmatprep.subr.bf16.mxu0 0
  %389 = vmatpush1.bf16.msra.mxu0 0
  %390 = vmatprep.subr.bf16.mxu0 0
  %391 = vmatpush1.bf16.msra.mxu0 0
  %392 = vmatprep.subr.bf16.mxu0 0
  %393 = vmatpush1.bf16.msra.mxu0 0
  %394 = vmatprep.subr.bf16.mxu0 0
  %395 = vmatpush1.bf16.msra.mxu0 0
  %396 = vmatprep.subr.bf16.mxu0 0
  %397 = vmatpush1.bf16.msra.mxu0 0
  %398 = vmatprep.mubr.bf16.mxu0 0
  %399 = vmatmul.mubr.bf16.gmra.mrb[0].mxu0 %v343
  %v400 = vpop.f32.mrb[0].mxu0
  %v401 = vadd.f32 0.0, %v400
  %v402 = vpop.f32.mrb[0].mxu0
  %v403 = vpop.f32.mrb[0].mxu0
  %v404 = vadd.f32 0.0, %v403
  %v405 = vpop.f32.mrb[0].mxu0
  %406 = vmatprep.mubr.bf16.mxu0 0
  %407 = vmatmul.mubr.bf16.gmra.mrb[0].mxu0 %v346
  %v408 = vpop.f32.mrb[0].mxu0
  %v409 = vadd.f32 0.0, %v408
  %v410 = vpop.f32.mrb[0].mxu0
  %v411 = vpop.f32.mrb[0].mxu0
  %v412 = vadd.f32 0.0, %v411
  %v413 = vpop.f32.mrb[0].mxu0
  %414 = vmatprep.mubr.bf16.mxu0 0
  %415 = vmatmul.mubr.bf16.gmra.mrb[0].mxu0 %v349
  %v416 = vpop.f32.mrb[0].mxu0
  %v417 = vadd.f32 0.0, %v416
  %v418 = vpop.f32.mrb[0].mxu0
  %v419 = vpop.f32.mrb[0].mxu0
  %v420 = vadd.f32 0.0, %v419
  %v421 = vpop.f32.mrb[0].mxu0
  %422 = vmatprep.mubr.bf16.mxu0 0
  %423 = vmatmul.mubr.bf16.gmra.mrb[0].mxu0 %v352
  %v424 = vpop.f32.mrb[0].mxu0
  %v425 = vadd.f32 0.0, %v424
  %v426 = vpop.f32.mrb[0].mxu0
  %v427 = vpop.f32.mrb[0].mxu0
  %v428 = vadd.f32 0.0, %v427
  %v429 = vpop.f32.mrb[0].mxu0
  %430 = vmatprep.mubr.bf16.mxu0 0
  %431 = vmatmul.mubr.bf16.gmra.mrb[0].mxu0 %v355
  %v432 = vpop.f32.mrb[0].mxu0
  %v433 = vadd.f32 0.0, %v432
  %v434 = vpop.f32.mrb[0].mxu0
  %v435 = vpop.f32.mrb[0].mxu0
  %v436 = vadd.f32 0.0, %v435
  %v437 = vpop.f32.mrb[0].mxu0
  %438 = vmatprep.mubr.bf16.mxu0 0
  %439 = vmatmul.mubr.bf16.gmra.mrb[0].mxu0 %v358
  %v440 = vpop.f32.mrb[0].mxu0
  %v441 = vadd.f32 0.0, %v440
  %v442 = vpop.f32.mrb[0].mxu0
  %v443 = vpop.f32.mrb[0].mxu0
  %v444 = vadd.f32 0.0, %v443
  %v445 = vpop.f32.mrb[0].mxu0
  %446 = vmatprep.mubr.bf16.mxu0 0
  %447 = vmatmul.mubr.bf16.gmra.mrb[0].mxu0 %v361
  %v448 = vpop.f32.mrb[0].mxu0
  %v449 = vadd.f32 0.0, %v448
  %v450 = vpop.f32.mrb[0].mxu0
  %v451 = vpop.f32.mrb[0].mxu0
  %v452 = vadd.f32 0.0, %v451
  %v453 = vpop.f32.mrb[0].mxu0
  %454 = vmatprep.mubr.bf16.mxu0 0
  %455 = vmatmul.mubr.bf16.gmra.mrb[0].mxu0 %v364
  %v456 = vpop.f32.mrb[0].mxu0
  %v457 = vadd.f32 0.0, %v456
  %v458 = vpop.f32.mrb[0].mxu0
  %v459 = vpop.f32.mrb[0].mxu0
  %v460 = vadd.f32 0.0, %v459
  %v461 = vpop.f32.mrb[0].mxu0
  %462 = vdwg.mxu0
  %v463 = vunpack.c.l.b16 %v18
  %v464 = vunpack.c.h.b16 %v18
  %v465 = vunpack.c.l.b16 %v19
  %v466 = vunpack.c.h.b16 %v19
  %v467 = vunpack.c.l.b16 %v20
  %v468 = vunpack.c.h.b16 %v20
  %v469 = vunpack.c.l.b16 %v21
  %v470 = vunpack.c.h.b16 %v21
  %v471 = vunpack.c.l.b16 %v22
  %v472 = vunpack.c.h.b16 %v22
  %v473 = vunpack.c.l.b16 %v23
  %v474 = vunpack.c.h.b16 %v23
  %v475 = vunpack.c.l.b16 %v24
  %v476 = vunpack.c.h.b16 %v24
  %v477 = vunpack.c.l.b16 %v25
  %v478 = vunpack.c.h.b16 %v25
  %v479 = vunpack.c.l.b16 %v26
  %v480 = vunpack.c.h.b16 %v26
  %v481 = vunpack.c.l.b16 %v27
  %v482 = vunpack.c.h.b16 %v27
  %v483 = vunpack.c.l.b16 %v28
  %v484 = vunpack.c.h.b16 %v28
  %v485 = vunpack.c.l.b16 %v29
  %v486 = vunpack.c.h.b16 %v29
  %v487 = vunpack.c.l.b16 %v30
  %v488 = vunpack.c.h.b16 %v30
  %v489 = vunpack.c.l.b16 %v31
  %v490 = vunpack.c.h.b16 %v31
  %v491 = vunpack.c.l.b16 %v32
  %v492 = vunpack.c.h.b16 %v32
  %v493 = vunpack.c.l.b16 %v33
  %v494 = vunpack.c.h.b16 %v33
  %v495 = vpack.c.b16 %v465, %v463
  %v496 = vpack.c.b16 %v466, %v464
  %v497 = vpack.c.b16 %v469, %v467
  %v498 = vpack.c.b16 %v470, %v468
  %v499 = vpack.c.b16 %v473, %v471
  %v500 = vpack.c.b16 %v474, %v472
  %v501 = vpack.c.b16 %v477, %v475
  %v502 = vpack.c.b16 %v478, %v476
  %v503 = vpack.c.b16 %v481, %v479
  %v504 = vpack.c.b16 %v482, %v480
  %v505 = vpack.c.b16 %v485, %v483
  %v506 = vpack.c.b16 %v486, %v484
  %v507 = vpack.c.b16 %v489, %v487
  %v508 = vpack.c.b16 %v490, %v488
  %v509 = vpack.c.b16 %v493, %v491
  %v510 = vpack.c.b16 %v494, %v492
  %v537 = vunpack.c.l.b16 %v34
  %v538 = vunpack.c.l.b16 %v35
  %v539 = vunpack.c.l.b16 %v36
  %v540 = vunpack.c.l.b16 %v37
  %v541 = vunpack.c.l.b16 %v38
  %v542 = vunpack.c.l.b16 %v39
  %v543 = vunpack.c.l.b16 %v40
  %v544 = vunpack.c.l.b16 %v41
  %v545 = vunpack.c.l.b16 %v42
  %v546 = vunpack.c.l.b16 %v43
  %v547 = vunpack.c.l.b16 %v44
  %v548 = vunpack.c.l.b16 %v45
  %v549 = vunpack.c.l.b16 %v46
  %v550 = vunpack.c.l.b16 %v47
  %v551 = vunpack.c.l.b16 %v48
  %v552 = vunpack.c.l.b16 %v49
  %v553 = vunpack.c.l.b16 %v50
  %v554 = vunpack.c.l.b16 %v51
  %v555 = vpack.c.b16 %v538, %v537
  %v556 = vpack.c.b16 %v540, %v539
  %v557 = vpack.c.b16 %v542, %v541
  %v558 = vpack.c.b16 %v544, %v543
  %v559 = vpack.c.b16 %v546, %v545
  %v560 = vpack.c.b16 %v548, %v547
  %v561 = vpack.c.b16 %v550, %v549
  %v562 = vpack.c.b16 %v552, %v551
  %v563 = vpack.c.b16 %v554, %v553
  %v574 = vsel %vm341, %v496, 0
  %v577 = vsel %vm341, %v498, 0
  %v580 = vsel %vm341, %v500, 0
  %v583 = vsel %vm341, %v502, 0
  %v586 = vsel %vm341, %v504, 0
  %v589 = vsel %vm341, %v506, 0
  %v592 = vsel %vm341, %v508, 0
  %v595 = vsel %vm341, %v510, 0
  %597 = vmatprep.subr.bf16.mxu0 0
  %598 = vmatpush1.bf16.msra.mxu0 %v555
  %599 = vmatprep.subr.bf16.mxu0 0
  %600 = vmatpush1.bf16.msra.mxu0 %v556
  %601 = vmatprep.subr.bf16.mxu0 0
  %602 = vmatpush1.bf16.msra.mxu0 %v557
  %603 = vmatprep.subr.bf16.mxu0 0
  %604 = vmatpush1.bf16.msra.mxu0 %v558
  %605 = vmatprep.subr.bf16.mxu0 0
  %606 = vmatpush1.bf16.msra.mxu0 %v559
  %607 = vmatprep.subr.bf16.mxu0 0
  %608 = vmatpush1.bf16.msra.mxu0 %v560
  %609 = vmatprep.subr.bf16.mxu0 0
  %610 = vmatpush1.bf16.msra.mxu0 %v561
  %611 = vmatprep.subr.bf16.mxu0 0
  %612 = vmatpush1.bf16.msra.mxu0 %v562
  %613 = vmatprep.subr.bf16.mxu0 0
  %614 = vmatpush1.bf16.msra.mxu0 %v563
  %615 = vmatprep.subr.bf16.mxu0 0
  %616 = vmatpush1.bf16.msra.mxu0 0
  %617 = vmatprep.subr.bf16.mxu0 0
  %618 = vmatpush1.bf16.msra.mxu0 0
  %619 = vmatprep.subr.bf16.mxu0 0
  %620 = vmatpush1.bf16.msra.mxu0 0
  %621 = vmatprep.subr.bf16.mxu0 0
  %622 = vmatpush1.bf16.msra.mxu0 0
  %623 = vmatprep.subr.bf16.mxu0 0
  %624 = vmatpush1.bf16.msra.mxu0 0
  %625 = vmatprep.subr.bf16.mxu0 0
  %626 = vmatpush1.bf16.msra.mxu0 0
  %627 = vmatprep.subr.bf16.mxu0 0
  %628 = vmatpush1.bf16.msra.mxu0 0
  %629 = vmatprep.mubr.bf16.mxu0 %v574
  %630 = vmatmul.mubr.bf16.gmra.mrb[0].mxu0 %v495
  %v631 = vpop.f32.mrb[0].mxu0
  %v632 = vadd.f32 %v401, %v631
  %v633 = vpop.f32.mrb[0].mxu0
  %v634 = vpop.f32.mrb[0].mxu0
  %v635 = vadd.f32 %v404, %v634
  %v636 = vpop.f32.mrb[0].mxu0
  %637 = vmatprep.mubr.bf16.mxu0 %v577
  %638 = vmatmul.mubr.bf16.gmra.mrb[0].mxu0 %v497
  %v639 = vpop.f32.mrb[0].mxu0
  %v640 = vadd.f32 %v409, %v639
  %v641 = vpop.f32.mrb[0].mxu0
  %v642 = vpop.f32.mrb[0].mxu0
  %v643 = vadd.f32 %v412, %v642
  %v644 = vpop.f32.mrb[0].mxu0
  %645 = vmatprep.mubr.bf16.mxu0 %v580
  %646 = vmatmul.mubr.bf16.gmra.mrb[0].mxu0 %v499
  %v647 = vpop.f32.mrb[0].mxu0
  %v648 = vadd.f32 %v417, %v647
  %v649 = vpop.f32.mrb[0].mxu0
  %v650 = vpop.f32.mrb[0].mxu0
  %v651 = vadd.f32 %v420, %v650
  %v652 = vpop.f32.mrb[0].mxu0
  %653 = vmatprep.mubr.bf16.mxu0 %v583
  %654 = vmatmul.mubr.bf16.gmra.mrb[0].mxu0 %v501
  %v655 = vpop.f32.mrb[0].mxu0
  %v656 = vadd.f32 %v425, %v655
  %v657 = vpop.f32.mrb[0].mxu0
  %v658 = vpop.f32.mrb[0].mxu0
  %v659 = vadd.f32 %v428, %v658
  %v660 = vpop.f32.mrb[0].mxu0
  %661 = vmatprep.mubr.bf16.mxu0 %v586
  %662 = vmatmul.mubr.bf16.gmra.mrb[0].mxu0 %v503
  %v663 = vpop.f32.mrb[0].mxu0
  %v664 = vadd.f32 %v433, %v663
  %v665 = vpop.f32.mrb[0].mxu0
  %v666 = vpop.f32.mrb[0].mxu0
  %v667 = vadd.f32 %v436, %v666
  %v668 = vpop.f32.mrb[0].mxu0
  %669 = vmatprep.mubr.bf16.mxu0 %v589
  %670 = vmatmul.mubr.bf16.gmra.mrb[0].mxu0 %v505
  %v671 = vpop.f32.mrb[0].mxu0
  %v672 = vadd.f32 %v441, %v671
  %v673 = vpop.f32.mrb[0].mxu0
  %v674 = vpop.f32.mrb[0].mxu0
  %v675 = vadd.f32 %v444, %v674
  %v676 = vpop.f32.mrb[0].mxu0
  %677 = vmatprep.mubr.bf16.mxu0 %v592
  %678 = vmatmul.mubr.bf16.gmra.mrb[0].mxu0 %v507
  %v679 = vpop.f32.mrb[0].mxu0
  %v680 = vadd.f32 %v449, %v679
  %v681 = vpop.f32.mrb[0].mxu0
  %v682 = vpop.f32.mrb[0].mxu0
  %v683 = vadd.f32 %v452, %v682
  %v684 = vpop.f32.mrb[0].mxu0
  %685 = vmatprep.mubr.bf16.mxu0 %v595
  %686 = vmatmul.mubr.bf16.gmra.mrb[0].mxu0 %v509
  %v687 = vpop.f32.mrb[0].mxu0
  %v688 = vadd.f32 %v457, %v687
  %v689 = vpop.f32.mrb[0].mxu0
  %v690 = vpop.f32.mrb[0].mxu0
  %v691 = vadd.f32 %v460, %v690
  %v692 = vpop.f32.mrb[0].mxu0
  %693 = vdwg.mxu0
  %v694 = vld [vmem:[%s3] sm:$0x1]
  %v696 = vlaneseq
  %v697 = vshrl.u32 %v696, 7
  %v698 = vsub.s32 0, %v697
  %v699 = vrot.slane %v694, %v698
  %v701 = vadd.f32 %v632, %v699
  %v702 = vadd.f32 %v635, %v699
  %v703 = vadd.f32 %v640, %v699
  %v704 = vadd.f32 %v643, %v699
  %v705 = vadd.f32 %v648, %v699
  %v706 = vadd.f32 %v651, %v699
  %v707 = vadd.f32 %v656, %v699
  %v708 = vadd.f32 %v659, %v699
  %v709 = vadd.f32 %v664, %v699
  %v710 = vadd.f32 %v667, %v699
  %v711 = vadd.f32 %v672, %v699
  %v712 = vadd.f32 %v675, %v699
  %v713 = vadd.f32 %v680, %v699
  %v714 = vadd.f32 %v683, %v699
  %v715 = vadd.f32 %v688, %v699
  %v716 = vadd.f32 %v691, %v699
  %v717 = vmax.f32 %v701, 0.0
  %v718 = vmax.f32 %v702, 0.0
  %v719 = vmax.f32 %v703, 0.0
  %v720 = vmax.f32 %v704, 0.0
  %v721 = vmax.f32 %v705, 0.0
  %v722 = vmax.f32 %v706, 0.0
  %v723 = vmax.f32 %v707, 0.0
  %v724 = vmax.f32 %v708, 0.0
  %v725 = vmax.f32 %v709, 0.0
  %v726 = vmax.f32 %v710, 0.0
  %v727 = vmax.f32 %v711, 0.0
  %v728 = vmax.f32 %v712, 0.0
  %v729 = vmax.f32 %v713, 0.0
  %v730 = vmax.f32 %v714, 0.0
  %v731 = vmax.f32 %v715, 0.0
  %v732 = vmax.f32 %v716, 0.0
  %v733 = vpack.c.bf16 %v718, %v717
  %v734 = vpack.c.bf16 %v720, %v719
  %v735 = vpack.c.bf16 %v722, %v721
  %v736 = vpack.c.bf16 %v724, %v723
  %v737 = vpack.c.bf16 %v726, %v725
  %v738 = vpack.c.bf16 %v728, %v727
  %v739 = vpack.c.bf16 %v730, %v729
  %v740 = vpack.c.bf16 %v732, %v731
  %v749 = vunpack.c.l.b16 %v733
  %v750 = vunpack.c.h.b16 %v733
  %v751 = vunpack.c.l.b16 %v734
  %v752 = vunpack.c.h.b16 %v734
  %v753 = vunpack.c.l.b16 %v735
  %v754 = vunpack.c.h.b16 %v735
  %v755 = vunpack.c.l.b16 %v736
  %v756 = vunpack.c.h.b16 %v736
  %v757 = vunpack.c.l.b16 %v737
  %v758 = vunpack.c.h.b16 %v737
  %v759 = vunpack.c.l.b16 %v738
  %v760 = vunpack.c.h.b16 %v738
  %v761 = vunpack.c.l.b16 %v739
  %v762 = vunpack.c.h.b16 %v739
  %v763 = vunpack.c.l.b16 %v740
  %v764 = vunpack.c.h.b16 %v740
  %v765 = vpack.c.b16 %v749, %v749
  %v766 = vpack.c.b16 %v750, %v750
  %v767 = vpack.c.b16 %v751, %v751
  %v768 = vpack.c.b16 %v752, %v752
  %v769 = vpack.c.b16 %v753, %v753
  %v770 = vpack.c.b16 %v754, %v754
  %v771 = vpack.c.b16 %v755, %v755
  %v772 = vpack.c.b16 %v756, %v756
  %v773 = vpack.c.b16 %v757, %v757
  %v774 = vpack.c.b16 %v758, %v758
  %v775 = vpack.c.b16 %v759, %v759
  %v776 = vpack.c.b16 %v760, %v760
  %v777 = vpack.c.b16 %v761, %v761
  %v778 = vpack.c.b16 %v762, %v762
  %v779 = vpack.c.b16 %v763, %v763
  %v780 = vpack.c.b16 %v764, %v764
  %vm797 = vcmask 519168
  %798 = vst.msk [vmem:[%s4] sm:$0xf] %vm797, %v765
  %799 = vst.msk [vmem:[%s4 + $0x4] sm:$0xf] %vm797, %v766
  %800 = vst.msk [vmem:[%s4 + $0x8] sm:$0xf] %vm797, %v767
  %801 = vst.msk [vmem:[%s4 + $0xc] sm:$0xf] %vm797, %v768
  %802 = vst.msk [vmem:[%s4 + $0x10] sm:$0xf] %vm797, %v769
  %803 = vst.msk [vmem:[%s4 + $0x14] sm:$0xf] %vm797, %v770
  %804 = vst.msk [vmem:[%s4 + $0x18] sm:$0xf] %vm797, %v771
  %805 = vst.msk [vmem:[%s4 + $0x1c] sm:$0xf] %vm797, %v772
  %806 = vst.msk [vmem:[%s4 + $0x20] sm:$0xf] %vm797, %v773
  %807 = vst.msk [vmem:[%s4 + $0x24] sm:$0xf] %vm797, %v774
  %808 = vst.msk [vmem:[%s4 + $0x28] sm:$0xf] %vm797, %v775
  %809 = vst.msk [vmem:[%s4 + $0x2c] sm:$0xf] %vm797, %v776
  %810 = vst.msk [vmem:[%s4 + $0x30] sm:$0xf] %vm797, %v777
  %811 = vst.msk [vmem:[%s4 + $0x34] sm:$0xf] %vm797, %v778
  %812 = vst.msk [vmem:[%s4 + $0x38] sm:$0xf] %vm797, %v779
  %813 = vst.msk [vmem:[%s4 + $0x3c] sm:$0xf] %vm797, %v780
  // Predicated region
  $region18: #{net_fwd.75} parent=0 // pred_check
    _
  $region19: #{net_fwd.75} parent=0 // pred_check_branch
    %815 = sbr.rel (0) target = $region21
  $region20: #{net_fwd.75} parent=0 // pred_region
    _
  $region21: #{net_fwd.75} parent=0 // pred_fallthru
    _
  // Predicated region
  $region22: #{net_fwd.75} parent=0 // pred_check
    _
  $region23: #{net_fwd.75} parent=0 // pred_check_branch
    %817 = sbr.rel (0) target = $region25
  $region24: #{net_fwd.75} parent=0 // pred_region
    _
  $region25: #{net_fwd.75} parent=0 // pred_fallthru
    _

// kernel: net_fwd.76
$region0: #{net_fwd.76}
  #allocation0 [shape = 'u32[]', space=smem, size = 0x4, offset = 0x4, fixed_abs, tag = 'smem constant byte address 0x4 - core index']
  #allocation1 [shape = 'u32[144,128]{1,0:T(1,128)}', space=vmem, size = 0x12000, scoped, tag = 'internal scratch']
  %s0 = inlined_call_operand.vmem [shape: bf16[128,192], index: 0, kind: input, shape index: {}]
  %s1 = inlined_call_operand.vmem [shape: bf16[192,64], index: 1, kind: input, shape index: {}]
  %s2 = inlined_call_operand.vmem [shape: f32[1,64], index: 2, kind: input, shape index: {}]
  %s3 = inlined_call_operand.vmem [shape: bf16[128,64], index: 3, kind: output, shape index: {}]
  %s4 = sld [smem:[#allocation0]]
  $region22: #{net_fwd.76} parent=0
    _
  %s6 = ssub.s32 1, %s4
  %s7 = scalar_select 0, %s6, %s4
  // Predicated region
  $region2: #{net_fwd.76} parent=0 // pred_check
    _
  $region3: #{net_fwd.76} parent=0 // pred_check_branch
    %9 = sbr.rel (0) target = $region5
  $region4: #{net_fwd.76} parent=0 // pred_region
    _
  $region5: #{net_fwd.76} parent=0 // pred_fallthru
    _
  // Predicated region
  $region6: #{net_fwd.76} parent=0 // pred_check
    _
  $region7: #{net_fwd.76} parent=0 // pred_check_branch
    %11 = sbr.rel (0) target = $region9
  $region8: #{net_fwd.76} parent=0 // pred_region
    _
  $region9: #{net_fwd.76} parent=0 // pred_fallthru
    _
  // Predicated region
  $region10: #{net_fwd.76} parent=0 // pred_check
    _
  $region11: #{net_fwd.76} parent=0 // pred_check_branch
    %13 = sbr.rel (0) target = $region13
  $region12: #{net_fwd.76} parent=0 // pred_region
    _
  $region13: #{net_fwd.76} parent=0 // pred_fallthru
    _
  %v15 = vld [vmem:[%s0] sm:$0xff]
  %v16 = vld [vmem:[%s0 + $0x8] sm:$0xff]
  %v17 = vld [vmem:[%s0 + $0x10] sm:$0xff]
  %v18 = vld [vmem:[%s0 + $0x18] sm:$0xff]
  %v19 = vld [vmem:[%s0 + $0x20] sm:$0xff]
  %v20 = vld [vmem:[%s0 + $0x28] sm:$0xff]
  %v21 = vld [vmem:[%s0 + $0x30] sm:$0xff]
  %v22 = vld [vmem:[%s0 + $0x38] sm:$0xff]
  %v23 = vld [vmem:[%s0 + $0x40] sm:$0xff]
  %v24 = vld [vmem:[%s0 + $0x48] sm:$0xff]
  %v25 = vld [vmem:[%s0 + $0x50] sm:$0xff]
  %v26 = vld [vmem:[%s0 + $0x58] sm:$0xff]
  %v27 = vld [vmem:[%s0 + $0x60] sm:$0xff]
  %v28 = vld [vmem:[%s0 + $0x68] sm:$0xff]
  %v29 = vld [vmem:[%s0 + $0x70] sm:$0xff]
  %v30 = vld [vmem:[%s0 + $0x78] sm:$0xff]
  %v31 = vld [vmem:[%s1] sm:$0xf]
  %v32 = vld [vmem:[%s1 + $0x4] sm:$0xf]
  %v33 = vld [vmem:[%s1 + $0x8] sm:$0xf]
  %v34 = vld [vmem:[%s1 + $0xc] sm:$0xf]
  %v35 = vld [vmem:[%s1 + $0x10] sm:$0xf]
  %v36 = vld [vmem:[%s1 + $0x14] sm:$0xf]
  %v37 = vld [vmem:[%s1 + $0x18] sm:$0xf]
  %v38 = vld [vmem:[%s1 + $0x1c] sm:$0xf]
  %v39 = vld [vmem:[%s1 + $0x20] sm:$0xf]
  %v40 = vld [vmem:[%s1 + $0x24] sm:$0xf]
  %v41 = vld [vmem:[%s1 + $0x28] sm:$0xf]
  %v42 = vld [vmem:[%s1 + $0x2c] sm:$0xf]
  %v43 = vld [vmem:[%s1 + $0x30] sm:$0xf]
  %v44 = vld [vmem:[%s1 + $0x34] sm:$0xf]
  %v45 = vld [vmem:[%s1 + $0x38] sm:$0xf]
  %v46 = vld [vmem:[%s1 + $0x3c] sm:$0xf]
  %v47 = vld [vmem:[%s1 + $0x40] sm:$0xf]
  %v48 = vld [vmem:[%s1 + $0x44] sm:$0xf]
  %v49 = vld [vmem:[%s1 + $0x48] sm:$0xf]
  %v50 = vld [vmem:[%s1 + $0x4c] sm:$0xf]
  %v51 = vld [vmem:[%s1 + $0x50] sm:$0xf]
  %v52 = vld [vmem:[%s1 + $0x54] sm:$0xf]
  %v53 = vld [vmem:[%s1 + $0x58] sm:$0xf]
  %v54 = vld [vmem:[%s1 + $0x5c] sm:$0xf]
  %v55 = vld [vmem:[%s2] sm:$0x1]
  %v57 = vlaneseq
  %v58 = vshrl.u32 %v57, 7
  %v59 = vsub.s32 0, %v58
  %v60 = vrot.slane %v55, %v59
  %v78 = vunpack.c.l.b16 %v15
  %v79 = vunpack.c.h.b16 %v15
  %v80 = vunpack.c.l.b16 %v16
  %v81 = vunpack.c.h.b16 %v16
  %v82 = vunpack.c.l.b16 %v17
  %v83 = vunpack.c.h.b16 %v17
  %v84 = vunpack.c.l.b16 %v18
  %v85 = vunpack.c.h.b16 %v18
  %v86 = vunpack.c.l.b16 %v19
  %v87 = vunpack.c.h.b16 %v19
  %v88 = vunpack.c.l.b16 %v20
  %v89 = vunpack.c.h.b16 %v20
  %v90 = vunpack.c.l.b16 %v21
  %v91 = vunpack.c.h.b16 %v21
  %v92 = vunpack.c.l.b16 %v22
  %v93 = vunpack.c.h.b16 %v22
  %v94 = vunpack.c.l.b16 %v23
  %v95 = vunpack.c.h.b16 %v23
  %v96 = vunpack.c.l.b16 %v24
  %v97 = vunpack.c.h.b16 %v24
  %v98 = vunpack.c.l.b16 %v25
  %v99 = vunpack.c.h.b16 %v25
  %v100 = vunpack.c.l.b16 %v26
  %v101 = vunpack.c.h.b16 %v26
  %v102 = vunpack.c.l.b16 %v27
  %v103 = vunpack.c.h.b16 %v27
  %v104 = vunpack.c.l.b16 %v28
  %v105 = vunpack.c.h.b16 %v28
  %v106 = vunpack.c.l.b16 %v29
  %v107 = vunpack.c.h.b16 %v29
  %v108 = vunpack.c.l.b16 %v30
  %v109 = vunpack.c.h.b16 %v30
  %v110 = vpack.c.b16 %v80, %v78
  %v111 = vpack.c.b16 %v81, %v79
  %v112 = vpack.c.b16 %v84, %v82
  %v113 = vpack.c.b16 %v85, %v83
  %v114 = vpack.c.b16 %v88, %v86
  %v115 = vpack.c.b16 %v89, %v87
  %v116 = vpack.c.b16 %v92, %v90
  %v117 = vpack.c.b16 %v93, %v91
  %v118 = vpack.c.b16 %v96, %v94
  %v119 = vpack.c.b16 %v97, %v95
  %v120 = vpack.c.b16 %v100, %v98
  %v121 = vpack.c.b16 %v101, %v99
  %v122 = vpack.c.b16 %v104, %v102
  %v123 = vpack.c.b16 %v105, %v103
  %v124 = vpack.c.b16 %v108, %v106
  %v125 = vpack.c.b16 %v109, %v107
  %v158 = vunpack.c.l.b16 %v31
  %v159 = vunpack.c.l.b16 %v32
  %v160 = vunpack.c.l.b16 %v33
  %v161 = vunpack.c.l.b16 %v34
  %v162 = vunpack.c.l.b16 %v35
  %v163 = vunpack.c.l.b16 %v36
  %v164 = vunpack.c.l.b16 %v37
  %v165 = vunpack.c.l.b16 %v38
  %v166 = vunpack.c.l.b16 %v39
  %v167 = vunpack.c.l.b16 %v40
  %v168 = vunpack.c.l.b16 %v41
  %v169 = vunpack.c.l.b16 %v42
  %v170 = vunpack.c.l.b16 %v43
  %v171 = vunpack.c.l.b16 %v44
  %v172 = vunpack.c.l.b16 %v45
  %v173 = vunpack.c.l.b16 %v46
  %v174 = vunpack.c.l.b16 %v47
  %v175 = vunpack.c.l.b16 %v48
  %v176 = vunpack.c.l.b16 %v49
  %v177 = vunpack.c.l.b16 %v50
  %v178 = vunpack.c.l.b16 %v51
  %v179 = vunpack.c.l.b16 %v52
  %v180 = vunpack.c.l.b16 %v53
  %v181 = vunpack.c.l.b16 %v54
  %v182 = vpack.c.b16 %v159, %v158
  %v183 = vpack.c.b16 %v161, %v160
  %v184 = vpack.c.b16 %v163, %v162
  %v185 = vpack.c.b16 %v165, %v164
  %v186 = vpack.c.b16 %v167, %v166
  %v187 = vpack.c.b16 %v169, %v168
  %v188 = vpack.c.b16 %v171, %v170
  %v189 = vpack.c.b16 %v173, %v172
  %v190 = vpack.c.b16 %v175, %v174
  %v191 = vpack.c.b16 %v177, %v176
  %v192 = vpack.c.b16 %v179, %v178
  %v193 = vpack.c.b16 %v181, %v180
  %vm206 = vcmask 523264
  %v208 = vsel %vm206, %v111, 0
  %v211 = vsel %vm206, %v113, 0
  %v214 = vsel %vm206, %v115, 0
  %v217 = vsel %vm206, %v117, 0
  %v220 = vsel %vm206, %v119, 0
  %v223 = vsel %vm206, %v121, 0
  %v226 = vsel %vm206, %v123, 0
  %v229 = vsel %vm206, %v125, 0
  %231 = vmatprep.subr.bf16.mxu0 0
  %232 = vmatpush1.bf16.msra.mxu0 %v182
  %233 = vmatprep.subr.bf16.mxu0 0
  %234 = vmatpush1.bf16.msra.mxu0 %v183
  %235 = vmatprep.subr.bf16.mxu0 0
  %236 = vmatpush1.bf16.msra.mxu0 %v184
  %237 = vmatprep.subr.bf16.mxu0 0
  %238 = vmatpush1.bf16.msra.mxu0 %v185
  %239 = vmatprep.subr.bf16.mxu0 0
  %240 = vmatpush1.bf16.msra.mxu0 %v186
  %241 = vmatprep.subr.bf16.mxu0 0
  %242 = vmatpush1.bf16.msra.mxu0 %v187
  %243 = vmatprep.subr.bf16.mxu0 0
  %244 = vmatpush1.bf16.msra.mxu0 %v188
  %245 = vmatprep.subr.bf16.mxu0 0
  %246 = vmatpush1.bf16.msra.mxu0 %v189
  %247 = vmatprep.subr.bf16.mxu0 0
  %248 = vmatpush1.bf16.msra.mxu0 %v190
  %249 = vmatprep.subr.bf16.mxu0 0
  %250 = vmatpush1.bf16.msra.mxu0 %v191
  %251 = vmatprep.subr.bf16.mxu0 0
  %252 = vmatpush1.bf16.msra.mxu0 %v192
  %253 = vmatprep.subr.bf16.mxu0 0
  %254 = vmatpush1.bf16.msra.mxu0 %v193
  %255 = vmatprep.subr.bf16.mxu0 0
  %256 = vmatpush1.bf16.msra.mxu0 0
  %257 = vmatprep.subr.bf16.mxu0 0
  %258 = vmatpush1.bf16.msra.mxu0 0
  %259 = vmatprep.subr.bf16.mxu0 0
  %260 = vmatpush1.bf16.msra.mxu0 0
  %261 = vmatprep.subr.bf16.mxu0 0
  %262 = vmatpush1.bf16.msra.mxu0 0
  %263 = vmatprep.mubr.bf16.mxu0 %v208
  %264 = vmatmul.mubr.bf16.gmra.mrb[0].mxu0 %v110
  %v265 = vpop.f32.mrb[0].mxu0
  %v266 = vadd.f32 %v60, %v265
  %v267 = vpop.f32.mrb[0].mxu0
  %v268 = vpop.f32.mrb[0].mxu0
  %v269 = vadd.f32 %v60, %v268
  %v270 = vpop.f32.mrb[0].mxu0
  %271 = vmatprep.mubr.bf16.mxu0 %v211
  %272 = vmatmul.mubr.bf16.gmra.mrb[0].mxu0 %v112
  %v273 = vpop.f32.mrb[0].mxu0
  %v274 = vadd.f32 %v60, %v273
  %v275 = vpop.f32.mrb[0].mxu0
  %v276 = vpop.f32.mrb[0].mxu0
  %v277 = vadd.f32 %v60, %v276
  %v278 = vpop.f32.mrb[0].mxu0
  %279 = vmatprep.mubr.bf16.mxu0 %v214
  %280 = vmatmul.mubr.bf16.gmra.mrb[0].mxu0 %v114
  %v281 = vpop.f32.mrb[0].mxu0
  %v282 = vadd.f32 %v60, %v281
  %v283 = vpop.f32.mrb[0].mxu0
  %v284 = vpop.f32.mrb[0].mxu0
  %v285 = vadd.f32 %v60, %v284
  %v286 = vpop.f32.mrb[0].mxu0
  %287 = vmatprep.mubr.bf16.mxu0 %v217
  %288 = vmatmul.mubr.bf16.gmra.mrb[0].mxu0 %v116
  %v289 = vpop.f32.mrb[0].mxu0
  %v290 = vadd.f32 %v60, %v289
  %v291 = vpop.f32.mrb[0].mxu0
  %v292 = vpop.f32.mrb[0].mxu0
  %v293 = vadd.f32 %v60, %v292
  %v294 = vpop.f32.mrb[0].mxu0
  %295 = vmatprep.mubr.bf16.mxu0 %v220
  %296 = vmatmul.mubr.bf16.gmra.mrb[0].mxu0 %v118
  %v297 = vpop.f32.mrb[0].mxu0
  %v298 = vadd.f32 %v60, %v297
  %v299 = vpop.f32.mrb[0].mxu0
  %v300 = vpop.f32.mrb[0].mxu0
  %v301 = vadd.f32 %v60, %v300
  %v302 = vpop.f32.mrb[0].mxu0
  %303 = vmatprep.mubr.bf16.mxu0 %v223
  %304 = vmatmul.mubr.bf16.gmra.mrb[0].mxu0 %v120
  %v305 = vpop.f32.mrb[0].mxu0
  %v306 = vadd.f32 %v60, %v305
  %v307 = vpop.f32.mrb[0].mxu0
  %v308 = vpop.f32.mrb[0].mxu0
  %v309 = vadd.f32 %v60, %v308
  %v310 = vpop.f32.mrb[0].mxu0
  %311 = vmatprep.mubr.bf16.mxu0 %v226
  %312 = vmatmul.mubr.bf16.gmra.mrb[0].mxu0 %v122
  %v313 = vpop.f32.mrb[0].mxu0
  %v314 = vadd.f32 %v60, %v313
  %v315 = vpop.f32.mrb[0].mxu0
  %v316 = vpop.f32.mrb[0].mxu0
  %v317 = vadd.f32 %v60, %v316
  %v318 = vpop.f32.mrb[0].mxu0
  %319 = vmatprep.mubr.bf16.mxu0 %v229
  %320 = vmatmul.mubr.bf16.gmra.mrb[0].mxu0 %v124
  %v321 = vpop.f32.mrb[0].mxu0
  %v322 = vadd.f32 %v60, %v321
  %v323 = vpop.f32.mrb[0].mxu0
  %v324 = vpop.f32.mrb[0].mxu0
  %v325 = vadd.f32 %v60, %v324
  %v326 = vpop.f32.mrb[0].mxu0
  %327 = vdwg.mxu0
  %v328 = vmax.f32 %v266, 0.0
  %v329 = vmax.f32 %v269, 0.0
  %v330 = vmax.f32 %v274, 0.0
  %v331 = vmax.f32 %v277, 0.0
  %v332 = vmax.f32 %v282, 0.0
  %v333 = vmax.f32 %v285, 0.0
  %v334 = vmax.f32 %v290, 0.0
  %v335 = vmax.f32 %v293, 0.0
  %v336 = vmax.f32 %v298, 0.0
  %v337 = vmax.f32 %v301, 0.0
  %v338 = vmax.f32 %v306, 0.0
  %v339 = vmax.f32 %v309, 0.0
  %v340 = vmax.f32 %v314, 0.0
  %v341 = vmax.f32 %v317, 0.0
  %v342 = vmax.f32 %v322, 0.0
  %v343 = vmax.f32 %v325, 0.0
  %v344 = vpack.c.bf16 %v329, %v328
  %v345 = vpack.c.bf16 %v331, %v330
  %v346 = vpack.c.bf16 %v333, %v332
  %v347 = vpack.c.bf16 %v335, %v334
  %v348 = vpack.c.bf16 %v337, %v336
  %v349 = vpack.c.bf16 %v339, %v338
  %v350 = vpack.c.bf16 %v341, %v340
  %v351 = vpack.c.bf16 %v343, %v342
  %v360 = vunpack.c.l.b16 %v344
  %v361 = vunpack.c.h.b16 %v344
  %v362 = vunpack.c.l.b16 %v345
  %v363 = vunpack.c.h.b16 %v345
  %v364 = vunpack.c.l.b16 %v346
  %v365 = vunpack.c.h.b16 %v346
  %v366 = vunpack.c.l.b16 %v347
  %v367 = vunpack.c.h.b16 %v347
  %v368 = vunpack.c.l.b16 %v348
  %v369 = vunpack.c.h.b16 %v348
  %v370 = vunpack.c.l.b16 %v349
  %v371 = vunpack.c.h.b16 %v349
  %v372 = vunpack.c.l.b16 %v350
  %v373 = vunpack.c.h.b16 %v350
  %v374 = vunpack.c.l.b16 %v351
  %v375 = vunpack.c.h.b16 %v351
  %v376 = vpack.c.b16 %v360, %v360
  %v377 = vpack.c.b16 %v361, %v361
  %v378 = vpack.c.b16 %v362, %v362
  %v379 = vpack.c.b16 %v363, %v363
  %v380 = vpack.c.b16 %v364, %v364
  %v381 = vpack.c.b16 %v365, %v365
  %v382 = vpack.c.b16 %v366, %v366
  %v383 = vpack.c.b16 %v367, %v367
  %v384 = vpack.c.b16 %v368, %v368
  %v385 = vpack.c.b16 %v369, %v369
  %v386 = vpack.c.b16 %v370, %v370
  %v387 = vpack.c.b16 %v371, %v371
  %v388 = vpack.c.b16 %v372, %v372
  %v389 = vpack.c.b16 %v373, %v373
  %v390 = vpack.c.b16 %v374, %v374
  %v391 = vpack.c.b16 %v375, %v375
  %vm408 = vcmask 519168
  %409 = vst.msk [vmem:[%s3] sm:$0xf] %vm408, %v376
  %410 = vst.msk [vmem:[%s3 + $0x4] sm:$0xf] %vm408, %v377
  %411 = vst.msk [vmem:[%s3 + $0x8] sm:$0xf] %vm408, %v378
  %412 = vst.msk [vmem:[%s3 + $0xc] sm:$0xf] %vm408, %v379
  %413 = vst.msk [vmem:[%s3 + $0x10] sm:$0xf] %vm408, %v380
  %414 = vst.msk [vmem:[%s3 + $0x14] sm:$0xf] %vm408, %v381
  %415 = vst.msk [vmem:[%s3 + $0x18] sm:$0xf] %vm408, %v382
  %416 = vst.msk [vmem:[%s3 + $0x1c] sm:$0xf] %vm408, %v383
  %417 = vst.msk [vmem:[%s3 + $0x20] sm:$0xf] %vm408, %v384
  %418 = vst.msk [vmem:[%s3 + $0x24] sm:$0xf] %vm408, %v385
  %419 = vst.msk [vmem:[%s3 + $0x28] sm:$0xf] %vm408, %v386
  %420 = vst.msk [vmem:[%s3 + $0x2c] sm:$0xf] %vm408, %v387
  %421 = vst.msk [vmem:[%s3 + $0x30] sm:$0xf] %vm408, %v388
  %422 = vst.msk [vmem:[%s3 + $0x34] sm:$0xf] %vm408, %v389
  %423 = vst.msk [vmem:[%s3 + $0x38] sm:$0xf] %vm408, %v390
  %424 = vst.msk [vmem:[%s3 + $0x3c] sm:$0xf] %vm408, %v391
  // Predicated region
  $region14: #{net_fwd.76} parent=0 // pred_check
    _
  $region15: #{net_fwd.76} parent=0 // pred_check_branch
    %426 = sbr.rel (0) target = $region17
  $region16: #{net_fwd.76} parent=0 // pred_region
    _
  $region17: #{net_fwd.76} parent=0 // pred_fallthru
    _
  // Predicated region
  $region18: #{net_fwd.76} parent=0 // pred_check
    _
  $region19: #{net_fwd.76} parent=0 // pred_check_branch
    %428 = sbr.rel (0) target = $region21
  $region20: #{net_fwd.76} parent=0 // pred_region
    _
  $region21: #{net_fwd.76} parent=0 // pred_fallthru
    _

// kernel: net_fwd.77
$region0: #{net_fwd.77}
  #allocation0 [shape = 'u32[]', space=smem, size = 0x4, offset = 0x4, fixed_abs, tag = 'smem constant byte address 0x4 - core index']
  #allocation1 [shape = 'u32[144,128]{1,0:T(1,128)}', space=vmem, size = 0x12000, scoped, tag = 'internal scratch']
  %s0 = inlined_call_operand.vmem [shape: bf16[128,192], index: 0, kind: input, shape index: {}]
  %s1 = inlined_call_operand.vmem [shape: bf16[192,64], index: 1, kind: input, shape index: {}]
  %s2 = inlined_call_operand.vmem [shape: f32[1,64], index: 2, kind: input, shape index: {}]
  %s3 = inlined_call_operand.vmem [shape: bf16[128,64], index: 3, kind: input, shape index: {}]
  %s4 = inlined_call_operand.vmem [shape: bf16[64,64], index: 4, kind: input, shape index: {}]
  %s5 = inlined_call_operand.vmem [shape: bf16[128,64], index: 5, kind: output, shape index: {}]
  %s6 = sld [smem:[#allocation0]]
  $region30: #{net_fwd.77} parent=0
    _
  %s8 = ssub.s32 1, %s6
  %s9 = scalar_select 0, %s8, %s6
  // Predicated region
  $region2: #{net_fwd.77} parent=0 // pred_check
    _
  $region3: #{net_fwd.77} parent=0 // pred_check_branch
    %11 = sbr.rel (0) target = $region5
  $region4: #{net_fwd.77} parent=0 // pred_region
    _
  $region5: #{net_fwd.77} parent=0 // pred_fallthru
    _
  // Predicated region
  $region6: #{net_fwd.77} parent=0 // pred_check
    _
  $region7: #{net_fwd.77} parent=0 // pred_check_branch
    %13 = sbr.rel (0) target = $region9
  $region8: #{net_fwd.77} parent=0 // pred_region
    _
  $region9: #{net_fwd.77} parent=0 // pred_fallthru
    _
  // Predicated region
  $region10: #{net_fwd.77} parent=0 // pred_check
    _
  $region11: #{net_fwd.77} parent=0 // pred_check_branch
    %15 = sbr.rel (0) target = $region13
  $region12: #{net_fwd.77} parent=0 // pred_region
    _
  $region13: #{net_fwd.77} parent=0 // pred_fallthru
    _
  // Predicated region
  $region14: #{net_fwd.77} parent=0 // pred_check
    _
  $region15: #{net_fwd.77} parent=0 // pred_check_branch
    %17 = sbr.rel (0) target = $region17
  $region16: #{net_fwd.77} parent=0 // pred_region
    _
  $region17: #{net_fwd.77} parent=0 // pred_fallthru
    _
  // Predicated region
  $region18: #{net_fwd.77} parent=0 // pred_check
    _
  $region19: #{net_fwd.77} parent=0 // pred_check_branch
    %19 = sbr.rel (0) target = $region21
  $region20: #{net_fwd.77} parent=0 // pred_region
    _
  $region21: #{net_fwd.77} parent=0 // pred_fallthru
    _
  %v21 = vld [vmem:[%s0] sm:$0xff]
  %v22 = vld [vmem:[%s0 + $0x8] sm:$0xff]
  %v23 = vld [vmem:[%s0 + $0x10] sm:$0xff]
  %v24 = vld [vmem:[%s0 + $0x18] sm:$0xff]
  %v25 = vld [vmem:[%s0 + $0x20] sm:$0xff]
  %v26 = vld [vmem:[%s0 + $0x28] sm:$0xff]
  %v27 = vld [vmem:[%s0 + $0x30] sm:$0xff]
  %v28 = vld [vmem:[%s0 + $0x38] sm:$0xff]
  %v29 = vld [vmem:[%s0 + $0x40] sm:$0xff]
  %v30 = vld [vmem:[%s0 + $0x48] sm:$0xff]
  %v31 = vld [vmem:[%s0 + $0x50] sm:$0xff]
  %v32 = vld [vmem:[%s0 + $0x58] sm:$0xff]
  %v33 = vld [vmem:[%s0 + $0x60] sm:$0xff]
  %v34 = vld [vmem:[%s0 + $0x68] sm:$0xff]
  %v35 = vld [vmem:[%s0 + $0x70] sm:$0xff]
  %v36 = vld [vmem:[%s0 + $0x78] sm:$0xff]
  %v37 = vld [vmem:[%s1] sm:$0xf]
  %v38 = vld [vmem:[%s1 + $0x4] sm:$0xf]
  %v39 = vld [vmem:[%s1 + $0x8] sm:$0xf]
  %v40 = vld [vmem:[%s1 + $0xc] sm:$0xf]
  %v41 = vld [vmem:[%s1 + $0x10] sm:$0xf]
  %v42 = vld [vmem:[%s1 + $0x14] sm:$0xf]
  %v43 = vld [vmem:[%s1 + $0x18] sm:$0xf]
  %v44 = vld [vmem:[%s1 + $0x1c] sm:$0xf]
  %v45 = vld [vmem:[%s1 + $0x20] sm:$0xf]
  %v46 = vld [vmem:[%s1 + $0x24] sm:$0xf]
  %v47 = vld [vmem:[%s1 + $0x28] sm:$0xf]
  %v48 = vld [vmem:[%s1 + $0x2c] sm:$0xf]
  %v49 = vld [vmem:[%s1 + $0x30] sm:$0xf]
  %v50 = vld [vmem:[%s1 + $0x34] sm:$0xf]
  %v51 = vld [vmem:[%s1 + $0x38] sm:$0xf]
  %v52 = vld [vmem:[%s1 + $0x3c] sm:$0xf]
  %v53 = vld [vmem:[%s1 + $0x40] sm:$0xf]
  %v54 = vld [vmem:[%s1 + $0x44] sm:$0xf]
  %v55 = vld [vmem:[%s1 + $0x48] sm:$0xf]
  %v56 = vld [vmem:[%s1 + $0x4c] sm:$0xf]
  %v57 = vld [vmem:[%s1 + $0x50] sm:$0xf]
  %v58 = vld [vmem:[%s1 + $0x54] sm:$0xf]
  %v59 = vld [vmem:[%s1 + $0x58] sm:$0xf]
  %v60 = vld [vmem:[%s1 + $0x5c] sm:$0xf]
  %v61 = vld [vmem:[%s3] sm:$0xf]
  %v62 = vld [vmem:[%s3 + $0x4] sm:$0xf]
  %v63 = vld [vmem:[%s3 + $0x8] sm:$0xf]
  %v64 = vld [vmem:[%s3 + $0xc] sm:$0xf]
  %v65 = vld [vmem:[%s3 + $0x10] sm:$0xf]
  %v66 = vld [vmem:[%s3 + $0x14] sm:$0xf]
  %v67 = vld [vmem:[%s3 + $0x18] sm:$0xf]
  %v68 = vld [vmem:[%s3 + $0x1c] sm:$0xf]
  %v69 = vld [vmem:[%s3 + $0x20] sm:$0xf]
  %v70 = vld [vmem:[%s3 + $0x24] sm:$0xf]
  %v71 = vld [vmem:[%s3 + $0x28] sm:$0xf]
  %v72 = vld [vmem:[%s3 + $0x2c] sm:$0xf]
  %v73 = vld [vmem:[%s3 + $0x30] sm:$0xf]
  %v74 = vld [vmem:[%s3 + $0x34] sm:$0xf]
  %v75 = vld [vmem:[%s3 + $0x38] sm:$0xf]
  %v76 = vld [vmem:[%s3 + $0x3c] sm:$0xf]
  %v77 = vld [vmem:[%s4] sm:$0xf]
  %v78 = vld [vmem:[%s4 + $0x4] sm:$0xf]
  %v79 = vld [vmem:[%s4 + $0x8] sm:$0xf]
  %v80 = vld [vmem:[%s4 + $0xc] sm:$0xf]
  %v81 = vld [vmem:[%s4 + $0x10] sm:$0xf]
  %v82 = vld [vmem:[%s4 + $0x14] sm:$0xf]
  %v83 = vld [vmem:[%s4 + $0x18] sm:$0xf]
  %v84 = vld [vmem:[%s4 + $0x1c] sm:$0xf]
  %v101 = vunpack.c.l.b16 %v61
  %v102 = vunpack.c.l.b16 %v62
  %v103 = vunpack.c.l.b16 %v63
  %v104 = vunpack.c.l.b16 %v64
  %v105 = vunpack.c.l.b16 %v65
  %v106 = vunpack.c.l.b16 %v66
  %v107 = vunpack.c.l.b16 %v67
  %v108 = vunpack.c.l.b16 %v68
  %v109 = vunpack.c.l.b16 %v69
  %v110 = vunpack.c.l.b16 %v70
  %v111 = vunpack.c.l.b16 %v71
  %v112 = vunpack.c.l.b16 %v72
  %v113 = vunpack.c.l.b16 %v73
  %v114 = vunpack.c.l.b16 %v74
  %v115 = vunpack.c.l.b16 %v75
  %v116 = vunpack.c.l.b16 %v76
  %v117 = vpack.c.b16 %v102, %v101
  %v118 = vpack.c.b16 %v104, %v103
  %v119 = vpack.c.b16 %v106, %v105
  %v120 = vpack.c.b16 %v108, %v107
  %v121 = vpack.c.b16 %v110, %v109
  %v122 = vpack.c.b16 %v112, %v111
  %v123 = vpack.c.b16 %v114, %v113
  %v124 = vpack.c.b16 %v116, %v115
  %v133 = vunpack.c.l.b16 %v77
  %v134 = vunpack.c.l.b16 %v78
  %v135 = vunpack.c.l.b16 %v79
  %v136 = vunpack.c.l.b16 %v80
  %v137 = vunpack.c.l.b16 %v81
  %v138 = vunpack.c.l.b16 %v82
  %v139 = vunpack.c.l.b16 %v83
  %v140 = vunpack.c.l.b16 %v84
  %v141 = vpack.c.b16 %v134, %v133
  %v142 = vpack.c.b16 %v136, %v135
  %v143 = vpack.c.b16 %v138, %v137
  %v144 = vpack.c.b16 %v140, %v139
  %vm149 = vcmask 523264
  %v151 = vsel %vm149, %v117, 0
  %v154 = vsel %vm149, %v118, 0
  %v157 = vsel %vm149, %v119, 0
  %v160 = vsel %vm149, %v120, 0
  %v163 = vsel %vm149, %v121, 0
  %v166 = vsel %vm149, %v122, 0
  %v169 = vsel %vm149, %v123, 0
  %v172 = vsel %vm149, %v124, 0
  %174 = vmatprep.subr.bf16.mxu0 0
  %175 = vmatpush1.bf16.msra.mxu0 %v141
  %176 = vmatprep.subr.bf16.mxu0 0
  %177 = vmatpush1.bf16.msra.mxu0 %v142
  %178 = vmatprep.subr.bf16.mxu0 0
  %179 = vmatpush1.bf16.msra.mxu0 %v143
  %180 = vmatprep.subr.bf16.mxu0 0
  %181 = vmatpush1.bf16.msra.mxu0 %v144
  %182 = vmatprep.subr.bf16.mxu0 0
  %183 = vmatpush1.bf16.msra.mxu0 0
  %184 = vmatprep.subr.bf16.mxu0 0
  %185 = vmatpush1.bf16.msra.mxu0 0
  %186 = vmatprep.subr.bf16.mxu0 0
  %187 = vmatpush1.bf16.msra.mxu0 0
  %188 = vmatprep.subr.bf16.mxu0 0
  %189 = vmatpush1.bf16.msra.mxu0 0
  %190 = vmatprep.subr.bf16.mxu0 0
  %191 = vmatpush1.bf16.msra.mxu0 0
  %192 = vmatprep.subr.bf16.mxu0 0
  %193 = vmatpush1.bf16.msra.mxu0 0
  %194 = vmatprep.subr.bf16.mxu0 0
  %195 = vmatpush1.bf16.msra.mxu0 0
  %196 = vmatprep.subr.bf16.mxu0 0
  %197 = vmatpush1.bf16.msra.mxu0 0
  %198 = vmatprep.subr.bf16.mxu0 0
  %199 = vmatpush1.bf16.msra.mxu0 0
  %200 = vmatprep.subr.bf16.mxu0 0
  %201 = vmatpush1.bf16.msra.mxu0 0
  %202 = vmatprep.subr.bf16.mxu0 0
  %203 = vmatpush1.bf16.msra.mxu0 0
  %204 = vmatprep.subr.bf16.mxu0 0
  %205 = vmatpush1.bf16.msra.mxu0 0
  %206 = vmatprep.mubr.bf16.mxu0 0
  %207 = vmatmul.mubr.bf16.gmra.mrb[0].mxu0 %v151
  %v208 = vpop.f32.mrb[0].mxu0
  %v209 = vadd.f32 0.0, %v208
  %v210 = vpop.f32.mrb[0].mxu0
  %v211 = vpop.f32.mrb[0].mxu0
  %v212 = vadd.f32 0.0, %v211
  %v213 = vpop.f32.mrb[0].mxu0
  %214 = vmatprep.mubr.bf16.mxu0 0
  %215 = vmatmul.mubr.bf16.gmra.mrb[0].mxu0 %v154
  %v216 = vpop.f32.mrb[0].mxu0
  %v217 = vadd.f32 0.0, %v216
  %v218 = vpop.f32.mrb[0].mxu0
  %v219 = vpop.f32.mrb[0].mxu0
  %v220 = vadd.f32 0.0, %v219
  %v221 = vpop.f32.mrb[0].mxu0
  %222 = vmatprep.mubr.bf16.mxu0 0
  %223 = vmatmul.mubr.bf16.gmra.mrb[0].mxu0 %v157
  %v224 = vpop.f32.mrb[0].mxu0
  %v225 = vadd.f32 0.0, %v224
  %v226 = vpop.f32.mrb[0].mxu0
  %v227 = vpop.f32.mrb[0].mxu0
  %v228 = vadd.f32 0.0, %v227
  %v229 = vpop.f32.mrb[0].mxu0
  %230 = vmatprep.mubr.bf16.mxu0 0
  %231 = vmatmul.mubr.bf16.gmra.mrb[0].mxu0 %v160
  %v232 = vpop.f32.mrb[0].mxu0
  %v233 = vadd.f32 0.0, %v232
  %v234 = vpop.f32.mrb[0].mxu0
  %v235 = vpop.f32.mrb[0].mxu0
  %v236 = vadd.f32 0.0, %v235
  %v237 = vpop.f32.mrb[0].mxu0
  %238 = vmatprep.mubr.bf16.mxu0 0
  %239 = vmatmul.mubr.bf16.gmra.mrb[0].mxu0 %v163
  %v240 = vpop.f32.mrb[0].mxu0
  %v241 = vadd.f32 0.0, %v240
  %v242 = vpop.f32.mrb[0].mxu0
  %v243 = vpop.f32.mrb[0].mxu0
  %v244 = vadd.f32 0.0, %v243
  %v245 = vpop.f32.mrb[0].mxu0
  %246 = vmatprep.mubr.bf16.mxu0 0
  %247 = vmatmul.mubr.bf16.gmra.mrb[0].mxu0 %v166
  %v248 = vpop.f32.mrb[0].mxu0
  %v249 = vadd.f32 0.0, %v248
  %v250 = vpop.f32.mrb[0].mxu0
  %v251 = vpop.f32.mrb[0].mxu0
  %v252 = vadd.f32 0.0, %v251
  %v253 = vpop.f32.mrb[0].mxu0
  %254 = vmatprep.mubr.bf16.mxu0 0
  %255 = vmatmul.mubr.bf16.gmra.mrb[0].mxu0 %v169
  %v256 = vpop.f32.mrb[0].mxu0
  %v257 = vadd.f32 0.0, %v256
  %v258 = vpop.f32.mrb[0].mxu0
  %v259 = vpop.f32.mrb[0].mxu0
  %v260 = vadd.f32 0.0, %v259
  %v261 = vpop.f32.mrb[0].mxu0
  %262 = vmatprep.mubr.bf16.mxu0 0
  %263 = vmatmul.mubr.bf16.gmra.mrb[0].mxu0 %v172
  %v264 = vpop.f32.mrb[0].mxu0
  %v265 = vadd.f32 0.0, %v264
  %v266 = vpop.f32.mrb[0].mxu0
  %v267 = vpop.f32.mrb[0].mxu0
  %v268 = vadd.f32 0.0, %v267
  %v269 = vpop.f32.mrb[0].mxu0
  %270 = vdwg.mxu0
  %v287 = vunpack.c.l.b16 %v21
  %v288 = vunpack.c.h.b16 %v21
  %v289 = vunpack.c.l.b16 %v22
  %v290 = vunpack.c.h.b16 %v22
  %v291 = vunpack.c.l.b16 %v23
  %v292 = vunpack.c.h.b16 %v23
  %v293 = vunpack.c.l.b16 %v24
  %v294 = vunpack.c.h.b16 %v24
  %v295 = vunpack.c.l.b16 %v25
  %v296 = vunpack.c.h.b16 %v25
  %v297 = vunpack.c.l.b16 %v26
  %v298 = vunpack.c.h.b16 %v26
  %v299 = vunpack.c.l.b16 %v27
  %v300 = vunpack.c.h.b16 %v27
  %v301 = vunpack.c.l.b16 %v28
  %v302 = vunpack.c.h.b16 %v28
  %v303 = vunpack.c.l.b16 %v29
  %v304 = vunpack.c.h.b16 %v29
  %v305 = vunpack.c.l.b16 %v30
  %v306 = vunpack.c.h.b16 %v30
  %v307 = vunpack.c.l.b16 %v31
  %v308 = vunpack.c.h.b16 %v31
  %v309 = vunpack.c.l.b16 %v32
  %v310 = vunpack.c.h.b16 %v32
  %v311 = vunpack.c.l.b16 %v33
  %v312 = vunpack.c.h.b16 %v33
  %v313 = vunpack.c.l.b16 %v34
  %v314 = vunpack.c.h.b16 %v34
  %v315 = vunpack.c.l.b16 %v35
  %v316 = vunpack.c.h.b16 %v35
  %v317 = vunpack.c.l.b16 %v36
  %v318 = vunpack.c.h.b16 %v36
  %v319 = vpack.c.b16 %v289, %v287
  %v320 = vpack.c.b16 %v290, %v288
  %v321 = vpack.c.b16 %v293, %v291
  %v322 = vpack.c.b16 %v294, %v292
  %v323 = vpack.c.b16 %v297, %v295
  %v324 = vpack.c.b16 %v298, %v296
  %v325 = vpack.c.b16 %v301, %v299
  %v326 = vpack.c.b16 %v302, %v300
  %v327 = vpack.c.b16 %v305, %v303
  %v328 = vpack.c.b16 %v306, %v304
  %v329 = vpack.c.b16 %v309, %v307
  %v330 = vpack.c.b16 %v310, %v308
  %v331 = vpack.c.b16 %v313, %v311
  %v332 = vpack.c.b16 %v314, %v312
  %v333 = vpack.c.b16 %v317, %v315
  %v334 = vpack.c.b16 %v318, %v316
  %v367 = vunpack.c.l.b16 %v37
  %v368 = vunpack.c.l.b16 %v38
  %v369 = vunpack.c.l.b16 %v39
  %v370 = vunpack.c.l.b16 %v40
  %v371 = vunpack.c.l.b16 %v41
  %v372 = vunpack.c.l.b16 %v42
  %v373 = vunpack.c.l.b16 %v43
  %v374 = vunpack.c.l.b16 %v44
  %v375 = vunpack.c.l.b16 %v45
  %v376 = vunpack.c.l.b16 %v46
  %v377 = vunpack.c.l.b16 %v47
  %v378 = vunpack.c.l.b16 %v48
  %v379 = vunpack.c.l.b16 %v49
  %v380 = vunpack.c.l.b16 %v50
  %v381 = vunpack.c.l.b16 %v51
  %v382 = vunpack.c.l.b16 %v52
  %v383 = vunpack.c.l.b16 %v53
  %v384 = vunpack.c.l.b16 %v54
  %v385 = vunpack.c.l.b16 %v55
  %v386 = vunpack.c.l.b16 %v56
  %v387 = vunpack.c.l.b16 %v57
  %v388 = vunpack.c.l.b16 %v58
  %v389 = vunpack.c.l.b16 %v59
  %v390 = vunpack.c.l.b16 %v60
  %v391 = vpack.c.b16 %v368, %v367
  %v392 = vpack.c.b16 %v370, %v369
  %v393 = vpack.c.b16 %v372, %v371
  %v394 = vpack.c.b16 %v374, %v373
  %v395 = vpack.c.b16 %v376, %v375
  %v396 = vpack.c.b16 %v378, %v377
  %v397 = vpack.c.b16 %v380, %v379
  %v398 = vpack.c.b16 %v382, %v381
  %v399 = vpack.c.b16 %v384, %v383
  %v400 = vpack.c.b16 %v386, %v385
  %v401 = vpack.c.b16 %v388, %v387
  %v402 = vpack.c.b16 %v390, %v389
  %v416 = vsel %vm149, %v320, 0
  %v419 = vsel %vm149, %v322, 0
  %v422 = vsel %vm149, %v324, 0
  %v425 = vsel %vm149, %v326, 0
  %v428 = vsel %vm149, %v328, 0
  %v431 = vsel %vm149, %v330, 0
  %v434 = vsel %vm149, %v332, 0
  %v437 = vsel %vm149, %v334, 0
  %439 = vmatprep.subr.bf16.mxu0 0
  %440 = vmatpush1.bf16.msra.mxu0 %v391
  %441 = vmatprep.subr.bf16.mxu0 0
  %442 = vmatpush1.bf16.msra.mxu0 %v392
  %443 = vmatprep.subr.bf16.mxu0 0
  %444 = vmatpush1.bf16.msra.mxu0 %v393
  %445 = vmatprep.subr.bf16.mxu0 0
  %446 = vmatpush1.bf16.msra.mxu0 %v394
  %447 = vmatprep.subr.bf16.mxu0 0
  %448 = vmatpush1.bf16.msra.mxu0 %v395
  %449 = vmatprep.subr.bf16.mxu0 0
  %450 = vmatpush1.bf16.msra.mxu0 %v396
  %451 = vmatprep.subr.bf16.mxu0 0
  %452 = vmatpush1.bf16.msra.mxu0 %v397
  %453 = vmatprep.subr.bf16.mxu0 0
  %454 = vmatpush1.bf16.msra.mxu0 %v398
  %455 = vmatprep.subr.bf16.mxu0 0
  %456 = vmatpush1.bf16.msra.mxu0 %v399
  %457 = vmatprep.subr.bf16.mxu0 0
  %458 = vmatpush1.bf16.msra.mxu0 %v400
  %459 = vmatprep.subr.bf16.mxu0 0
  %460 = vmatpush1.bf16.msra.mxu0 %v401
  %461 = vmatprep.subr.bf16.mxu0 0
  %462 = vmatpush1.bf16.msra.mxu0 %v402
  %463 = vmatprep.subr.bf16.mxu0 0
  %464 = vmatpush1.bf16.msra.mxu0 0
  %465 = vmatprep.subr.bf16.mxu0 0
  %466 = vmatpush1.bf16.msra.mxu0 0
  %467 = vmatprep.subr.bf16.mxu0 0
  %468 = vmatpush1.bf16.msra.mxu0 0
  %469 = vmatprep.subr.bf16.mxu0 0
  %470 = vmatpush1.bf16.msra.mxu0 0
  %471 = vmatprep.mubr.bf16.mxu0 %v416
  %472 = vmatmul.mubr.bf16.gmra.mrb[0].mxu0 %v319
  %v473 = vpop.f32.mrb[0].mxu0
  %v474 = vadd.f32 %v209, %v473
  %v475 = vpop.f32.mrb[0].mxu0
  %v476 = vpop.f32.mrb[0].mxu0
  %v477 = vadd.f32 %v212, %v476
  %v478 = vpop.f32.mrb[0].mxu0
  %479 = vmatprep.mubr.bf16.mxu0 %v419
  %480 = vmatmul.mubr.bf16.gmra.mrb[0].mxu0 %v321
  %v481 = vpop.f32.mrb[0].mxu0
  %v482 = vadd.f32 %v217, %v481
  %v483 = vpop.f32.mrb[0].mxu0
  %v484 = vpop.f32.mrb[0].mxu0
  %v485 = vadd.f32 %v220, %v484
  %v486 = vpop.f32.mrb[0].mxu0
  %487 = vmatprep.mubr.bf16.mxu0 %v422
  %488 = vmatmul.mubr.bf16.gmra.mrb[0].mxu0 %v323
  %v489 = vpop.f32.mrb[0].mxu0
  %v490 = vadd.f32 %v225, %v489
  %v491 = vpop.f32.mrb[0].mxu0
  %v492 = vpop.f32.mrb[0].mxu0
  %v493 = vadd.f32 %v228, %v492
  %v494 = vpop.f32.mrb[0].mxu0
  %495 = vmatprep.mubr.bf16.mxu0 %v425
  %496 = vmatmul.mubr.bf16.gmra.mrb[0].mxu0 %v325
  %v497 = vpop.f32.mrb[0].mxu0
  %v498 = vadd.f32 %v233, %v497
  %v499 = vpop.f32.mrb[0].mxu0
  %v500 = vpop.f32.mrb[0].mxu0
  %v501 = vadd.f32 %v236, %v500
  %v502 = vpop.f32.mrb[0].mxu0
  %503 = vmatprep.mubr.bf16.mxu0 %v428
  %504 = vmatmul.mubr.bf16.gmra.mrb[0].mxu0 %v327
  %v505 = vpop.f32.mrb[0].mxu0
  %v506 = vadd.f32 %v241, %v505
  %v507 = vpop.f32.mrb[0].mxu0
  %v508 = vpop.f32.mrb[0].mxu0
  %v509 = vadd.f32 %v244, %v508
  %v510 = vpop.f32.mrb[0].mxu0
  %511 = vmatprep.mubr.bf16.mxu0 %v431
  %512 = vmatmul.mubr.bf16.gmra.mrb[0].mxu0 %v329
  %v513 = vpop.f32.mrb[0].mxu0
  %v514 = vadd.f32 %v249, %v513
  %v515 = vpop.f32.mrb[0].mxu0
  %v516 = vpop.f32.mrb[0].mxu0
  %v517 = vadd.f32 %v252, %v516
  %v518 = vpop.f32.mrb[0].mxu0
  %519 = vmatprep.mubr.bf16.mxu0 %v434
  %520 = vmatmul.mubr.bf16.gmra.mrb[0].mxu0 %v331
  %v521 = vpop.f32.mrb[0].mxu0
  %v522 = vadd.f32 %v257, %v521
  %v523 = vpop.f32.mrb[0].mxu0
  %v524 = vpop.f32.mrb[0].mxu0
  %v525 = vadd.f32 %v260, %v524
  %v526 = vpop.f32.mrb[0].mxu0
  %527 = vmatprep.mubr.bf16.mxu0 %v437
  %528 = vmatmul.mubr.bf16.gmra.mrb[0].mxu0 %v333
  %v529 = vpop.f32.mrb[0].mxu0
  %v530 = vadd.f32 %v265, %v529
  %v531 = vpop.f32.mrb[0].mxu0
  %v532 = vpop.f32.mrb[0].mxu0
  %v533 = vadd.f32 %v268, %v532
  %v534 = vpop.f32.mrb[0].mxu0
  %535 = vdwg.mxu0
  %v536 = vld [vmem:[%s2] sm:$0x1]
  %v538 = vlaneseq
  %v539 = vshrl.u32 %v538, 7
  %v540 = vsub.s32 0, %v539
  %v541 = vrot.slane %v536, %v540
  %v543 = vadd.f32 %v474, %v541
  %v544 = vadd.f32 %v477, %v541
  %v545 = vadd.f32 %v482, %v541
  %v546 = vadd.f32 %v485, %v541
  %v547 = vadd.f32 %v490, %v541
  %v548 = vadd.f32 %v493, %v541
  %v549 = vadd.f32 %v498, %v541
  %v550 = vadd.f32 %v501, %v541
  %v551 = vadd.f32 %v506, %v541
  %v552 = vadd.f32 %v509, %v541
  %v553 = vadd.f32 %v514, %v541
  %v554 = vadd.f32 %v517, %v541
  %v555 = vadd.f32 %v522, %v541
  %v556 = vadd.f32 %v525, %v541
  %v557 = vadd.f32 %v530, %v541
  %v558 = vadd.f32 %v533, %v541
  %v559 = vmax.f32 %v543, 0.0
  %v560 = vmax.f32 %v544, 0.0
  %v561 = vmax.f32 %v545, 0.0
  %v562 = vmax.f32 %v546, 0.0
  %v563 = vmax.f32 %v547, 0.0
  %v564 = vmax.f32 %v548, 0.0
  %v565 = vmax.f32 %v549, 0.0
  %v566 = vmax.f32 %v550, 0.0
  %v567 = vmax.f32 %v551, 0.0
  %v568 = vmax.f32 %v552, 0.0
  %v569 = vmax.f32 %v553, 0.0
  %v570 = vmax.f32 %v554, 0.0
  %v571 = vmax.f32 %v555, 0.0
  %v572 = vmax.f32 %v556, 0.0
  %v573 = vmax.f32 %v557, 0.0
  %v574 = vmax.f32 %v558, 0.0
  %v575 = vpack.c.bf16 %v560, %v559
  %v576 = vpack.c.bf16 %v562, %v561
  %v577 = vpack.c.bf16 %v564, %v563
  %v578 = vpack.c.bf16 %v566, %v565
  %v579 = vpack.c.bf16 %v568, %v567
  %v580 = vpack.c.bf16 %v570, %v569
  %v581 = vpack.c.bf16 %v572, %v571
  %v582 = vpack.c.bf16 %v574, %v573
  %v591 = vunpack.c.l.b16 %v575
  %v592 = vunpack.c.h.b16 %v575
  %v593 = vunpack.c.l.b16 %v576
  %v594 = vunpack.c.h.b16 %v576
  %v595 = vunpack.c.l.b16 %v577
  %v596 = vunpack.c.h.b16 %v577
  %v597 = vunpack.c.l.b16 %v578
  %v598 = vunpack.c.h.b16 %v578
  %v599 = vunpack.c.l.b16 %v579
  %v600 = vunpack.c.h.b16 %v579
  %v601 = vunpack.c.l.b16 %v580
  %v602 = vunpack.c.h.b16 %v580
  %v603 = vunpack.c.l.b16 %v581
  %v604 = vunpack.c.h.b16 %v581
  %v605 = vunpack.c.l.b16 %v582
  %v606 = vunpack.c.h.b16 %v582
  %v607 = vpack.c.b16 %v591, %v591
  %v608 = vpack.c.b16 %v592, %v592
  %v609 = vpack.c.b16 %v593, %v593
  %v610 = vpack.c.b16 %v594, %v594
  %v611 = vpack.c.b16 %v595, %v595
  %v612 = vpack.c.b16 %v596, %v596
  %v613 = vpack.c.b16 %v597, %v597
  %v614 = vpack.c.b16 %v598, %v598
  %v615 = vpack.c.b16 %v599, %v599
  %v616 = vpack.c.b16 %v600, %v600
  %v617 = vpack.c.b16 %v601, %v601
  %v618 = vpack.c.b16 %v602, %v602
  %v619 = vpack.c.b16 %v603, %v603
  %v620 = vpack.c.b16 %v604, %v604
  %v621 = vpack.c.b16 %v605, %v605
  %v622 = vpack.c.b16 %v606, %v606
  %vm639 = vcmask 519168
  %640 = vst.msk [vmem:[%s5] sm:$0xf] %vm639, %v607
  %641 = vst.msk [vmem:[%s5 + $0x4] sm:$0xf] %vm639, %v608
  %642 = vst.msk [vmem:[%s5 + $0x8] sm:$0xf] %vm639, %v609
  %643 = vst.msk [vmem:[%s5 + $0xc] sm:$0xf] %vm639, %v610
  %644 = vst.msk [vmem:[%s5 + $0x10] sm:$0xf] %vm639, %v611
  %645 = vst.msk [vmem:[%s5 + $0x14] sm:$0xf] %vm639, %v612
  %646 = vst.msk [vmem:[%s5 + $0x18] sm:$0xf] %vm639, %v613
  %647 = vst.msk [vmem:[%s5 + $0x1c] sm:$0xf] %vm639, %v614
  %648 = vst.msk [vmem:[%s5 + $0x20] sm:$0xf] %vm639, %v615
  %649 = vst.msk [vmem:[%s5 + $0x24] sm:$0xf] %vm639, %v616
  %650 = vst.msk [vmem:[%s5 + $0x28] sm:$0xf] %vm639, %v617
  %651 = vst.msk [vmem:[%s5 + $0x2c] sm:$0xf] %vm639, %v618
  %652 = vst.msk [vmem:[%s5 + $0x30] sm:$0xf] %vm639, %v619
  %653 = vst.msk [vmem:[%s5 + $0x34] sm:$0xf] %vm639, %v620
  %654 = vst.msk [vmem:[%s5 + $0x38] sm:$0xf] %vm639, %v621
  %655 = vst.msk [vmem:[%s5 + $0x3c] sm:$0xf] %vm639, %v622
  // Predicated region
  $region22: #{net_fwd.77} parent=0 // pred_check
    _
  $region23: #{net_fwd.77} parent=0 // pred_check_branch
    %657 = sbr.rel (0) target = $region25
  $region24: #{net_fwd.77} parent=0 // pred_region
    _
  $region25: #{net_fwd.77} parent=0 // pred_fallthru
    _
  // Predicated region
  $region26: #{net_fwd.77} parent=0 // pred_check
    _
  $region27: #{net_fwd.77} parent=0 // pred_check_branch
    %659 = sbr.rel (0) target = $region29
  $region28: #{net_fwd.77} parent=0 // pred_region
    _
  $region29: #{net_fwd.77} parent=0 // pred_fallthru
    _

// kernel: net_fwd.79
$region0: #{net_fwd.79}
  #allocation0 [shape = 'u32[]', space=smem, size = 0x4, offset = 0x4, fixed_abs, tag = 'smem constant byte address 0x4 - core index']
  #allocation1 [shape = 'u32[144,128]{1,0:T(1,128)}', space=vmem, size = 0x12000, scoped, tag = 'internal scratch']
  %s0 = inlined_call_operand.vmem [shape: bf16[128,192], index: 0, kind: input, shape index: {}]
  %s1 = inlined_call_operand.vmem [shape: bf16[192,64], index: 1, kind: input, shape index: {}]
  %s2 = inlined_call_operand.vmem [shape: f32[1,64], index: 2, kind: input, shape index: {}]
  %s3 = inlined_call_operand.vmem [shape: bf16[128,64], index: 3, kind: input, shape index: {}]
  %s4 = inlined_call_operand.vmem [shape: bf16[64,64], index: 4, kind: input, shape index: {}]
  %s5 = inlined_call_operand.vmem [shape: bf16[128,64], index: 5, kind: input, shape index: {}]
  %s6 = inlined_call_operand.vmem [shape: bf16[128,64], index: 6, kind: output, shape index: {}]
  %s7 = sld [smem:[#allocation0]]
  $region34: #{net_fwd.79} parent=0
    _
  %s9 = ssub.s32 1, %s7
  %s10 = scalar_select 0, %s9, %s7
  // Predicated region
  $region2: #{net_fwd.79} parent=0 // pred_check
    _
  $region3: #{net_fwd.79} parent=0 // pred_check_branch
    %12 = sbr.rel (0) target = $region5
  $region4: #{net_fwd.79} parent=0 // pred_region
    _
  $region5: #{net_fwd.79} parent=0 // pred_fallthru
    _
  // Predicated region
  $region6: #{net_fwd.79} parent=0 // pred_check
    _
  $region7: #{net_fwd.79} parent=0 // pred_check_branch
    %14 = sbr.rel (0) target = $region9
  $region8: #{net_fwd.79} parent=0 // pred_region
    _
  $region9: #{net_fwd.79} parent=0 // pred_fallthru
    _
  // Predicated region
  $region10: #{net_fwd.79} parent=0 // pred_check
    _
  $region11: #{net_fwd.79} parent=0 // pred_check_branch
    %16 = sbr.rel (0) target = $region13
  $region12: #{net_fwd.79} parent=0 // pred_region
    _
  $region13: #{net_fwd.79} parent=0 // pred_fallthru
    _
  // Predicated region
  $region14: #{net_fwd.79} parent=0 // pred_check
    _
  $region15: #{net_fwd.79} parent=0 // pred_check_branch
    %18 = sbr.rel (0) target = $region17
  $region16: #{net_fwd.79} parent=0 // pred_region
    _
  $region17: #{net_fwd.79} parent=0 // pred_fallthru
    _
  // Predicated region
  $region18: #{net_fwd.79} parent=0 // pred_check
    _
  $region19: #{net_fwd.79} parent=0 // pred_check_branch
    %20 = sbr.rel (0) target = $region21
  $region20: #{net_fwd.79} parent=0 // pred_region
    _
  $region21: #{net_fwd.79} parent=0 // pred_fallthru
    _
  // Predicated region
  $region22: #{net_fwd.79} parent=0 // pred_check
    _
  $region23: #{net_fwd.79} parent=0 // pred_check_branch
    %22 = sbr.rel (0) target = $region25
  $region24: #{net_fwd.79} parent=0 // pred_region
    _
  $region25: #{net_fwd.79} parent=0 // pred_fallthru
    _
  %v24 = vld [vmem:[%s0] sm:$0xff]
  %v25 = vld [vmem:[%s0 + $0x8] sm:$0xff]
  %v26 = vld [vmem:[%s0 + $0x10] sm:$0xff]
  %v27 = vld [vmem:[%s0 + $0x18] sm:$0xff]
  %v28 = vld [vmem:[%s0 + $0x20] sm:$0xff]
  %v29 = vld [vmem:[%s0 + $0x28] sm:$0xff]
  %v30 = vld [vmem:[%s0 + $0x30] sm:$0xff]
  %v31 = vld [vmem:[%s0 + $0x38] sm:$0xff]
  %v32 = vld [vmem:[%s0 + $0x40] sm:$0xff]
  %v33 = vld [vmem:[%s0 + $0x48] sm:$0xff]
  %v34 = vld [vmem:[%s0 + $0x50] sm:$0xff]
  %v35 = vld [vmem:[%s0 + $0x58] sm:$0xff]
  %v36 = vld [vmem:[%s0 + $0x60] sm:$0xff]
  %v37 = vld [vmem:[%s0 + $0x68] sm:$0xff]
  %v38 = vld [vmem:[%s0 + $0x70] sm:$0xff]
  %v39 = vld [vmem:[%s0 + $0x78] sm:$0xff]
  %v40 = vld [vmem:[%s1] sm:$0xf]
  %v41 = vld [vmem:[%s1 + $0x4] sm:$0xf]
  %v42 = vld [vmem:[%s1 + $0x8] sm:$0xf]
  %v43 = vld [vmem:[%s1 + $0xc] sm:$0xf]
  %v44 = vld [vmem:[%s1 + $0x10] sm:$0xf]
  %v45 = vld [vmem:[%s1 + $0x14] sm:$0xf]
  %v46 = vld [vmem:[%s1 + $0x18] sm:$0xf]
  %v47 = vld [vmem:[%s1 + $0x1c] sm:$0xf]
  %v48 = vld [vmem:[%s1 + $0x20] sm:$0xf]
  %v49 = vld [vmem:[%s1 + $0x24] sm:$0xf]
  %v50 = vld [vmem:[%s1 + $0x28] sm:$0xf]
  %v51 = vld [vmem:[%s1 + $0x2c] sm:$0xf]
  %v52 = vld [vmem:[%s1 + $0x30] sm:$0xf]
  %v53 = vld [vmem:[%s1 + $0x34] sm:$0xf]
  %v54 = vld [vmem:[%s1 + $0x38] sm:$0xf]
  %v55 = vld [vmem:[%s1 + $0x3c] sm:$0xf]
  %v56 = vld [vmem:[%s1 + $0x40] sm:$0xf]
  %v57 = vld [vmem:[%s1 + $0x44] sm:$0xf]
  %v58 = vld [vmem:[%s1 + $0x48] sm:$0xf]
  %v59 = vld [vmem:[%s1 + $0x4c] sm:$0xf]
  %v60 = vld [vmem:[%s1 + $0x50] sm:$0xf]
  %v61 = vld [vmem:[%s1 + $0x54] sm:$0xf]
  %v62 = vld [vmem:[%s1 + $0x58] sm:$0xf]
  %v63 = vld [vmem:[%s1 + $0x5c] sm:$0xf]
  %v64 = vld [vmem:[%s3] sm:$0xf]
  %v65 = vld [vmem:[%s3 + $0x4] sm:$0xf]
  %v66 = vld [vmem:[%s3 + $0x8] sm:$0xf]
  %v67 = vld [vmem:[%s3 + $0xc] sm:$0xf]
  %v68 = vld [vmem:[%s3 + $0x10] sm:$0xf]
  %v69 = vld [vmem:[%s3 + $0x14] sm:$0xf]
  %v70 = vld [vmem:[%s3 + $0x18] sm:$0xf]
  %v71 = vld [vmem:[%s3 + $0x1c] sm:$0xf]
  %v72 = vld [vmem:[%s3 + $0x20] sm:$0xf]
  %v73 = vld [vmem:[%s3 + $0x24] sm:$0xf]
  %v74 = vld [vmem:[%s3 + $0x28] sm:$0xf]
  %v75 = vld [vmem:[%s3 + $0x2c] sm:$0xf]
  %v76 = vld [vmem:[%s3 + $0x30] sm:$0xf]
  %v77 = vld [vmem:[%s3 + $0x34] sm:$0xf]
  %v78 = vld [vmem:[%s3 + $0x38] sm:$0xf]
  %v79 = vld [vmem:[%s3 + $0x3c] sm:$0xf]
  %v80 = vld [vmem:[%s4] sm:$0xf]
  %v81 = vld [vmem:[%s4 + $0x4] sm:$0xf]
  %v82 = vld [vmem:[%s4 + $0x8] sm:$0xf]
  %v83 = vld [vmem:[%s4 + $0xc] sm:$0xf]
  %v84 = vld [vmem:[%s4 + $0x10] sm:$0xf]
  %v85 = vld [vmem:[%s4 + $0x14] sm:$0xf]
  %v86 = vld [vmem:[%s4 + $0x18] sm:$0xf]
  %v87 = vld [vmem:[%s4 + $0x1c] sm:$0xf]
  %v104 = vunpack.c.l.b16 %v64
  %v105 = vunpack.c.l.b16 %v65
  %v106 = vunpack.c.l.b16 %v66
  %v107 = vunpack.c.l.b16 %v67
  %v108 = vunpack.c.l.b16 %v68
  %v109 = vunpack.c.l.b16 %v69
  %v110 = vunpack.c.l.b16 %v70
  %v111 = vunpack.c.l.b16 %v71
  %v112 = vunpack.c.l.b16 %v72
  %v113 = vunpack.c.l.b16 %v73
  %v114 = vunpack.c.l.b16 %v74
  %v115 = vunpack.c.l.b16 %v75
  %v116 = vunpack.c.l.b16 %v76
  %v117 = vunpack.c.l.b16 %v77
  %v118 = vunpack.c.l.b16 %v78
  %v119 = vunpack.c.l.b16 %v79
  %v120 = vpack.c.b16 %v105, %v104
  %v121 = vpack.c.b16 %v107, %v106
  %v122 = vpack.c.b16 %v109, %v108
  %v123 = vpack.c.b16 %v111, %v110
  %v124 = vpack.c.b16 %v113, %v112
  %v125 = vpack.c.b16 %v115, %v114
  %v126 = vpack.c.b16 %v117, %v116
  %v127 = vpack.c.b16 %v119, %v118
  %v136 = vunpack.c.l.b16 %v80
  %v137 = vunpack.c.l.b16 %v81
  %v138 = vunpack.c.l.b16 %v82
  %v139 = vunpack.c.l.b16 %v83
  %v140 = vunpack.c.l.b16 %v84
  %v141 = vunpack.c.l.b16 %v85
  %v142 = vunpack.c.l.b16 %v86
  %v143 = vunpack.c.l.b16 %v87
  %v144 = vpack.c.b16 %v137, %v136
  %v145 = vpack.c.b16 %v139, %v138
  %v146 = vpack.c.b16 %v141, %v140
  %v147 = vpack.c.b16 %v143, %v142
  %vm152 = vcmask 523264
  %v154 = vsel %vm152, %v120, 0
  %v157 = vsel %vm152, %v121, 0
  %v160 = vsel %vm152, %v122, 0
  %v163 = vsel %vm152, %v123, 0
  %v166 = vsel %vm152, %v124, 0
  %v169 = vsel %vm152, %v125, 0
  %v172 = vsel %vm152, %v126, 0
  %v175 = vsel %vm152, %v127, 0
  %177 = vmatprep.subr.bf16.mxu0 0
  %178 = vmatpush1.bf16.msra.mxu0 %v144
  %179 = vmatprep.subr.bf16.mxu0 0
  %180 = vmatpush1.bf16.msra.mxu0 %v145
  %181 = vmatprep.subr.bf16.mxu0 0
  %182 = vmatpush1.bf16.msra.mxu0 %v146
  %183 = vmatprep.subr.bf16.mxu0 0
  %184 = vmatpush1.bf16.msra.mxu0 %v147
  %185 = vmatprep.subr.bf16.mxu0 0
  %186 = vmatpush1.bf16.msra.mxu0 0
  %187 = vmatprep.subr.bf16.mxu0 0
  %188 = vmatpush1.bf16.msra.mxu0 0
  %189 = vmatprep.subr.bf16.mxu0 0
  %190 = vmatpush1.bf16.msra.mxu0 0
  %191 = vmatprep.subr.bf16.mxu0 0
  %192 = vmatpush1.bf16.msra.mxu0 0
  %193 = vmatprep.subr.bf16.mxu0 0
  %194 = vmatpush1.bf16.msra.mxu0 0
  %195 = vmatprep.subr.bf16.mxu0 0
  %196 = vmatpush1.bf16.msra.mxu0 0
  %197 = vmatprep.subr.bf16.mxu0 0
  %198 = vmatpush1.bf16.msra.mxu0 0
  %199 = vmatprep.subr.bf16.mxu0 0
  %200 = vmatpush1.bf16.msra.mxu0 0
  %201 = vmatprep.subr.bf16.mxu0 0
  %202 = vmatpush1.bf16.msra.mxu0 0
  %203 = vmatprep.subr.bf16.mxu0 0
  %204 = vmatpush1.bf16.msra.mxu0 0
  %205 = vmatprep.subr.bf16.mxu0 0
  %206 = vmatpush1.bf16.msra.mxu0 0
  %207 = vmatprep.subr.bf16.mxu0 0
  %208 = vmatpush1.bf16.msra.mxu0 0
  %209 = vmatprep.mubr.bf16.mxu0 0
  %210 = vmatmul.mubr.bf16.gmra.mrb[0].mxu0 %v154
  %v211 = vpop.f32.mrb[0].mxu0
  %v212 = vadd.f32 0.0, %v211
  %v213 = vpop.f32.mrb[0].mxu0
  %v214 = vpop.f32.mrb[0].mxu0
  %v215 = vadd.f32 0.0, %v214
  %v216 = vpop.f32.mrb[0].mxu0
  %217 = vmatprep.mubr.bf16.mxu0 0
  %218 = vmatmul.mubr.bf16.gmra.mrb[0].mxu0 %v157
  %v219 = vpop.f32.mrb[0].mxu0
  %v220 = vadd.f32 0.0, %v219
  %v221 = vpop.f32.mrb[0].mxu0
  %v222 = vpop.f32.mrb[0].mxu0
  %v223 = vadd.f32 0.0, %v222
  %v224 = vpop.f32.mrb[0].mxu0
  %225 = vmatprep.mubr.bf16.mxu0 0
  %226 = vmatmul.mubr.bf16.gmra.mrb[0].mxu0 %v160
  %v227 = vpop.f32.mrb[0].mxu0
  %v228 = vadd.f32 0.0, %v227
  %v229 = vpop.f32.mrb[0].mxu0
  %v230 = vpop.f32.mrb[0].mxu0
  %v231 = vadd.f32 0.0, %v230
  %v232 = vpop.f32.mrb[0].mxu0
  %233 = vmatprep.mubr.bf16.mxu0 0
  %234 = vmatmul.mubr.bf16.gmra.mrb[0].mxu0 %v163
  %v235 = vpop.f32.mrb[0].mxu0
  %v236 = vadd.f32 0.0, %v235
  %v237 = vpop.f32.mrb[0].mxu0
  %v238 = vpop.f32.mrb[0].mxu0
  %v239 = vadd.f32 0.0, %v238
  %v240 = vpop.f32.mrb[0].mxu0
  %241 = vmatprep.mubr.bf16.mxu0 0
  %242 = vmatmul.mubr.bf16.gmra.mrb[0].mxu0 %v166
  %v243 = vpop.f32.mrb[0].mxu0
  %v244 = vadd.f32 0.0, %v243
  %v245 = vpop.f32.mrb[0].mxu0
  %v246 = vpop.f32.mrb[0].mxu0
  %v247 = vadd.f32 0.0, %v246
  %v248 = vpop.f32.mrb[0].mxu0
  %249 = vmatprep.mubr.bf16.mxu0 0
  %250 = vmatmul.mubr.bf16.gmra.mrb[0].mxu0 %v169
  %v251 = vpop.f32.mrb[0].mxu0
  %v252 = vadd.f32 0.0, %v251
  %v253 = vpop.f32.mrb[0].mxu0
  %v254 = vpop.f32.mrb[0].mxu0
  %v255 = vadd.f32 0.0, %v254
  %v256 = vpop.f32.mrb[0].mxu0
  %257 = vmatprep.mubr.bf16.mxu0 0
  %258 = vmatmul.mubr.bf16.gmra.mrb[0].mxu0 %v172
  %v259 = vpop.f32.mrb[0].mxu0
  %v260 = vadd.f32 0.0, %v259
  %v261 = vpop.f32.mrb[0].mxu0
  %v262 = vpop.f32.mrb[0].mxu0
  %v263 = vadd.f32 0.0, %v262
  %v264 = vpop.f32.mrb[0].mxu0
  %265 = vmatprep.mubr.bf16.mxu0 0
  %266 = vmatmul.mubr.bf16.gmra.mrb[0].mxu0 %v175
  %v267 = vpop.f32.mrb[0].mxu0
  %v268 = vadd.f32 0.0, %v267
  %v269 = vpop.f32.mrb[0].mxu0
  %v270 = vpop.f32.mrb[0].mxu0
  %v271 = vadd.f32 0.0, %v270
  %v272 = vpop.f32.mrb[0].mxu0
  %273 = vdwg.mxu0
  %v290 = vunpack.c.l.b16 %v24
  %v291 = vunpack.c.h.b16 %v24
  %v292 = vunpack.c.l.b16 %v25
  %v293 = vunpack.c.h.b16 %v25
  %v294 = vunpack.c.l.b16 %v26
  %v295 = vunpack.c.h.b16 %v26
  %v296 = vunpack.c.l.b16 %v27
  %v297 = vunpack.c.h.b16 %v27
  %v298 = vunpack.c.l.b16 %v28
  %v299 = vunpack.c.h.b16 %v28
  %v300 = vunpack.c.l.b16 %v29
  %v301 = vunpack.c.h.b16 %v29
  %v302 = vunpack.c.l.b16 %v30
  %v303 = vunpack.c.h.b16 %v30
  %v304 = vunpack.c.l.b16 %v31
  %v305 = vunpack.c.h.b16 %v31
  %v306 = vunpack.c.l.b16 %v32
  %v307 = vunpack.c.h.b16 %v32
  %v308 = vunpack.c.l.b16 %v33
  %v309 = vunpack.c.h.b16 %v33
  %v310 = vunpack.c.l.b16 %v34
  %v311 = vunpack.c.h.b16 %v34
  %v312 = vunpack.c.l.b16 %v35
  %v313 = vunpack.c.h.b16 %v35
  %v314 = vunpack.c.l.b16 %v36
  %v315 = vunpack.c.h.b16 %v36
  %v316 = vunpack.c.l.b16 %v37
  %v317 = vunpack.c.h.b16 %v37
  %v318 = vunpack.c.l.b16 %v38
  %v319 = vunpack.c.h.b16 %v38
  %v320 = vunpack.c.l.b16 %v39
  %v321 = vunpack.c.h.b16 %v39
  %v322 = vpack.c.b16 %v292, %v290
  %v323 = vpack.c.b16 %v293, %v291
  %v324 = vpack.c.b16 %v296, %v294
  %v325 = vpack.c.b16 %v297, %v295
  %v326 = vpack.c.b16 %v300, %v298
  %v327 = vpack.c.b16 %v301, %v299
  %v328 = vpack.c.b16 %v304, %v302
  %v329 = vpack.c.b16 %v305, %v303
  %v330 = vpack.c.b16 %v308, %v306
  %v331 = vpack.c.b16 %v309, %v307
  %v332 = vpack.c.b16 %v312, %v310
  %v333 = vpack.c.b16 %v313, %v311
  %v334 = vpack.c.b16 %v316, %v314
  %v335 = vpack.c.b16 %v317, %v315
  %v336 = vpack.c.b16 %v320, %v318
  %v337 = vpack.c.b16 %v321, %v319
  %v370 = vunpack.c.l.b16 %v40
  %v371 = vunpack.c.l.b16 %v41
  %v372 = vunpack.c.l.b16 %v42
  %v373 = vunpack.c.l.b16 %v43
  %v374 = vunpack.c.l.b16 %v44
  %v375 = vunpack.c.l.b16 %v45
  %v376 = vunpack.c.l.b16 %v46
  %v377 = vunpack.c.l.b16 %v47
  %v378 = vunpack.c.l.b16 %v48
  %v379 = vunpack.c.l.b16 %v49
  %v380 = vunpack.c.l.b16 %v50
  %v381 = vunpack.c.l.b16 %v51
  %v382 = vunpack.c.l.b16 %v52
  %v383 = vunpack.c.l.b16 %v53
  %v384 = vunpack.c.l.b16 %v54
  %v385 = vunpack.c.l.b16 %v55
  %v386 = vunpack.c.l.b16 %v56
  %v387 = vunpack.c.l.b16 %v57
  %v388 = vunpack.c.l.b16 %v58
  %v389 = vunpack.c.l.b16 %v59
  %v390 = vunpack.c.l.b16 %v60
  %v391 = vunpack.c.l.b16 %v61
  %v392 = vunpack.c.l.b16 %v62
  %v393 = vunpack.c.l.b16 %v63
  %v394 = vpack.c.b16 %v371, %v370
  %v395 = vpack.c.b16 %v373, %v372
  %v396 = vpack.c.b16 %v375, %v374
  %v397 = vpack.c.b16 %v377, %v376
  %v398 = vpack.c.b16 %v379, %v378
  %v399 = vpack.c.b16 %v381, %v380
  %v400 = vpack.c.b16 %v383, %v382
  %v401 = vpack.c.b16 %v385, %v384
  %v402 = vpack.c.b16 %v387, %v386
  %v403 = vpack.c.b16 %v389, %v388
  %v404 = vpack.c.b16 %v391, %v390
  %v405 = vpack.c.b16 %v393, %v392
  %v419 = vsel %vm152, %v323, 0
  %v422 = vsel %vm152, %v325, 0
  %v425 = vsel %vm152, %v327, 0
  %v428 = vsel %vm152, %v329, 0
  %v431 = vsel %vm152, %v331, 0
  %v434 = vsel %vm152, %v333, 0
  %v437 = vsel %vm152, %v335, 0
  %v440 = vsel %vm152, %v337, 0
  %442 = vmatprep.subr.bf16.mxu0 0
  %443 = vmatpush1.bf16.msra.mxu0 %v394
  %444 = vmatprep.subr.bf16.mxu0 0
  %445 = vmatpush1.bf16.msra.mxu0 %v395
  %446 = vmatprep.subr.bf16.mxu0 0
  %447 = vmatpush1.bf16.msra.mxu0 %v396
  %448 = vmatprep.subr.bf16.mxu0 0
  %449 = vmatpush1.bf16.msra.mxu0 %v397
  %450 = vmatprep.subr.bf16.mxu0 0
  %451 = vmatpush1.bf16.msra.mxu0 %v398
  %452 = vmatprep.subr.bf16.mxu0 0
  %453 = vmatpush1.bf16.msra.mxu0 %v399
  %454 = vmatprep.subr.bf16.mxu0 0
  %455 = vmatpush1.bf16.msra.mxu0 %v400
  %456 = vmatprep.subr.bf16.mxu0 0
  %457 = vmatpush1.bf16.msra.mxu0 %v401
  %458 = vmatprep.subr.bf16.mxu0 0
  %459 = vmatpush1.bf16.msra.mxu0 %v402
  %460 = vmatprep.subr.bf16.mxu0 0
  %461 = vmatpush1.bf16.msra.mxu0 %v403
  %462 = vmatprep.subr.bf16.mxu0 0
  %463 = vmatpush1.bf16.msra.mxu0 %v404
  %464 = vmatprep.subr.bf16.mxu0 0
  %465 = vmatpush1.bf16.msra.mxu0 %v405
  %466 = vmatprep.subr.bf16.mxu0 0
  %467 = vmatpush1.bf16.msra.mxu0 0
  %468 = vmatprep.subr.bf16.mxu0 0
  %469 = vmatpush1.bf16.msra.mxu0 0
  %470 = vmatprep.subr.bf16.mxu0 0
  %471 = vmatpush1.bf16.msra.mxu0 0
  %472 = vmatprep.subr.bf16.mxu0 0
  %473 = vmatpush1.bf16.msra.mxu0 0
  %474 = vmatprep.mubr.bf16.mxu0 %v419
  %475 = vmatmul.mubr.bf16.gmra.mrb[0].mxu0 %v322
  %v476 = vpop.f32.mrb[0].mxu0
  %v477 = vadd.f32 %v212, %v476
  %v478 = vpop.f32.mrb[0].mxu0
  %v479 = vpop.f32.mrb[0].mxu0
  %v480 = vadd.f32 %v215, %v479
  %v481 = vpop.f32.mrb[0].mxu0
  %482 = vmatprep.mubr.bf16.mxu0 %v422
  %483 = vmatmul.mubr.bf16.gmra.mrb[0].mxu0 %v324
  %v484 = vpop.f32.mrb[0].mxu0
  %v485 = vadd.f32 %v220, %v484
  %v486 = vpop.f32.mrb[0].mxu0
  %v487 = vpop.f32.mrb[0].mxu0
  %v488 = vadd.f32 %v223, %v487
  %v489 = vpop.f32.mrb[0].mxu0
  %490 = vmatprep.mubr.bf16.mxu0 %v425
  %491 = vmatmul.mubr.bf16.gmra.mrb[0].mxu0 %v326
  %v492 = vpop.f32.mrb[0].mxu0
  %v493 = vadd.f32 %v228, %v492
  %v494 = vpop.f32.mrb[0].mxu0
  %v495 = vpop.f32.mrb[0].mxu0
  %v496 = vadd.f32 %v231, %v495
  %v497 = vpop.f32.mrb[0].mxu0
  %498 = vmatprep.mubr.bf16.mxu0 %v428
  %499 = vmatmul.mubr.bf16.gmra.mrb[0].mxu0 %v328
  %v500 = vpop.f32.mrb[0].mxu0
  %v501 = vadd.f32 %v236, %v500
  %v502 = vpop.f32.mrb[0].mxu0
  %v503 = vpop.f32.mrb[0].mxu0
  %v504 = vadd.f32 %v239, %v503
  %v505 = vpop.f32.mrb[0].mxu0
  %506 = vmatprep.mubr.bf16.mxu0 %v431
  %507 = vmatmul.mubr.bf16.gmra.mrb[0].mxu0 %v330
  %v508 = vpop.f32.mrb[0].mxu0
  %v509 = vadd.f32 %v244, %v508
  %v510 = vpop.f32.mrb[0].mxu0
  %v511 = vpop.f32.mrb[0].mxu0
  %v512 = vadd.f32 %v247, %v511
  %v513 = vpop.f32.mrb[0].mxu0
  %514 = vmatprep.mubr.bf16.mxu0 %v434
  %515 = vmatmul.mubr.bf16.gmra.mrb[0].mxu0 %v332
  %v516 = vpop.f32.mrb[0].mxu0
  %v517 = vadd.f32 %v252, %v516
  %v518 = vpop.f32.mrb[0].mxu0
  %v519 = vpop.f32.mrb[0].mxu0
  %v520 = vadd.f32 %v255, %v519
  %v521 = vpop.f32.mrb[0].mxu0
  %522 = vmatprep.mubr.bf16.mxu0 %v437
  %523 = vmatmul.mubr.bf16.gmra.mrb[0].mxu0 %v334
  %v524 = vpop.f32.mrb[0].mxu0
  %v525 = vadd.f32 %v260, %v524
  %v526 = vpop.f32.mrb[0].mxu0
  %v527 = vpop.f32.mrb[0].mxu0
  %v528 = vadd.f32 %v263, %v527
  %v529 = vpop.f32.mrb[0].mxu0
  %530 = vmatprep.mubr.bf16.mxu0 %v440
  %531 = vmatmul.mubr.bf16.gmra.mrb[0].mxu0 %v336
  %v532 = vpop.f32.mrb[0].mxu0
  %v533 = vadd.f32 %v268, %v532
  %v534 = vpop.f32.mrb[0].mxu0
  %v535 = vpop.f32.mrb[0].mxu0
  %v536 = vadd.f32 %v271, %v535
  %v537 = vpop.f32.mrb[0].mxu0
  %538 = vdwg.mxu0
  %v539 = vld [vmem:[%s2] sm:$0x1]
  %v541 = vlaneseq
  %v542 = vshrl.u32 %v541, 7
  %v543 = vsub.s32 0, %v542
  %v544 = vrot.slane %v539, %v543
  %v546 = vadd.f32 %v477, %v544
  %v547 = vadd.f32 %v480, %v544
  %v548 = vadd.f32 %v485, %v544
  %v549 = vadd.f32 %v488, %v544
  %v550 = vadd.f32 %v493, %v544
  %v551 = vadd.f32 %v496, %v544
  %v552 = vadd.f32 %v501, %v544
  %v553 = vadd.f32 %v504, %v544
  %v554 = vadd.f32 %v509, %v544
  %v555 = vadd.f32 %v512, %v544
  %v556 = vadd.f32 %v517, %v544
  %v557 = vadd.f32 %v520, %v544
  %v558 = vadd.f32 %v525, %v544
  %v559 = vadd.f32 %v528, %v544
  %v560 = vadd.f32 %v533, %v544
  %v561 = vadd.f32 %v536, %v544
  %v562 = vld [vmem:[%s5] sm:$0xf]
  %v563 = vld [vmem:[%s5 + $0x4] sm:$0xf]
  %v564 = vld [vmem:[%s5 + $0x8] sm:$0xf]
  %v565 = vld [vmem:[%s5 + $0xc] sm:$0xf]
  %v566 = vld [vmem:[%s5 + $0x10] sm:$0xf]
  %v567 = vld [vmem:[%s5 + $0x14] sm:$0xf]
  %v568 = vld [vmem:[%s5 + $0x18] sm:$0xf]
  %v569 = vld [vmem:[%s5 + $0x1c] sm:$0xf]
  %v570 = vld [vmem:[%s5 + $0x20] sm:$0xf]
  %v571 = vld [vmem:[%s5 + $0x24] sm:$0xf]
  %v572 = vld [vmem:[%s5 + $0x28] sm:$0xf]
  %v573 = vld [vmem:[%s5 + $0x2c] sm:$0xf]
  %v574 = vld [vmem:[%s5 + $0x30] sm:$0xf]
  %v575 = vld [vmem:[%s5 + $0x34] sm:$0xf]
  %v576 = vld [vmem:[%s5 + $0x38] sm:$0xf]
  %v577 = vld [vmem:[%s5 + $0x3c] sm:$0xf]
  %v578 = vunpack.c.l.bf16 %v562
  %v579 = vunpack.c.l.bf16 %v563
  %v580 = vunpack.c.l.bf16 %v564
  %v581 = vunpack.c.l.bf16 %v565
  %v582 = vunpack.c.l.bf16 %v566
  %v583 = vunpack.c.l.bf16 %v567
  %v584 = vunpack.c.l.bf16 %v568
  %v585 = vunpack.c.l.bf16 %v569
  %v586 = vunpack.c.l.bf16 %v570
  %v587 = vunpack.c.l.bf16 %v571
  %v588 = vunpack.c.l.bf16 %v572
  %v589 = vunpack.c.l.bf16 %v573
  %v590 = vunpack.c.l.bf16 %v574
  %v591 = vunpack.c.l.bf16 %v575
  %v592 = vunpack.c.l.bf16 %v576
  %v593 = vunpack.c.l.bf16 %v577
  %v594 = vadd.f32 %v546, %v578
  %v595 = vadd.f32 %v547, %v579
  %v596 = vadd.f32 %v548, %v580
  %v597 = vadd.f32 %v549, %v581
  %v598 = vadd.f32 %v550, %v582
  %v599 = vadd.f32 %v551, %v583
  %v600 = vadd.f32 %v552, %v584
  %v601 = vadd.f32 %v553, %v585
  %v602 = vadd.f32 %v554, %v586
  %v603 = vadd.f32 %v555, %v587
  %v604 = vadd.f32 %v556, %v588
  %v605 = vadd.f32 %v557, %v589
  %v606 = vadd.f32 %v558, %v590
  %v607 = vadd.f32 %v559, %v591
  %v608 = vadd.f32 %v560, %v592
  %v609 = vadd.f32 %v561, %v593
  %v610 = vmax.f32 %v594, 0.0
  %v611 = vmax.f32 %v595, 0.0
  %v612 = vmax.f32 %v596, 0.0
  %v613 = vmax.f32 %v597, 0.0
  %v614 = vmax.f32 %v598, 0.0
  %v615 = vmax.f32 %v599, 0.0
  %v616 = vmax.f32 %v600, 0.0
  %v617 = vmax.f32 %v601, 0.0
  %v618 = vmax.f32 %v602, 0.0
  %v619 = vmax.f32 %v603, 0.0
  %v620 = vmax.f32 %v604, 0.0
  %v621 = vmax.f32 %v605, 0.0
  %v622 = vmax.f32 %v606, 0.0
  %v623 = vmax.f32 %v607, 0.0
  %v624 = vmax.f32 %v608, 0.0
  %v625 = vmax.f32 %v609, 0.0
  %v626 = vpack.c.bf16 %v611, %v610
  %v627 = vpack.c.bf16 %v613, %v612
  %v628 = vpack.c.bf16 %v615, %v614
  %v629 = vpack.c.bf16 %v617, %v616
  %v630 = vpack.c.bf16 %v619, %v618
  %v631 = vpack.c.bf16 %v621, %v620
  %v632 = vpack.c.bf16 %v623, %v622
  %v633 = vpack.c.bf16 %v625, %v624
  %v642 = vunpack.c.l.b16 %v626
  %v643 = vunpack.c.h.b16 %v626
  %v644 = vunpack.c.l.b16 %v627
  %v645 = vunpack.c.h.b16 %v627
  %v646 = vunpack.c.l.b16 %v628
  %v647 = vunpack.c.h.b16 %v628
  %v648 = vunpack.c.l.b16 %v629
  %v649 = vunpack.c.h.b16 %v629
  %v650 = vunpack.c.l.b16 %v630
  %v651 = vunpack.c.h.b16 %v630
  %v652 = vunpack.c.l.b16 %v631
  %v653 = vunpack.c.h.b16 %v631
  %v654 = vunpack.c.l.b16 %v632
  %v655 = vunpack.c.h.b16 %v632
  %v656 = vunpack.c.l.b16 %v633
  %v657 = vunpack.c.h.b16 %v633
  %v658 = vpack.c.b16 %v642, %v642
  %v659 = vpack.c.b16 %v643, %v643
  %v660 = vpack.c.b16 %v644, %v644
  %v661 = vpack.c.b16 %v645, %v645
  %v662 = vpack.c.b16 %v646, %v646
  %v663 = vpack.c.b16 %v647, %v647
  %v664 = vpack.c.b16 %v648, %v648
  %v665 = vpack.c.b16 %v649, %v649
  %v666 = vpack.c.b16 %v650, %v650
  %v667 = vpack.c.b16 %v651, %v651
  %v668 = vpack.c.b16 %v652, %v652
  %v669 = vpack.c.b16 %v653, %v653
  %v670 = vpack.c.b16 %v654, %v654
  %v671 = vpack.c.b16 %v655, %v655
  %v672 = vpack.c.b16 %v656, %v656
  %v673 = vpack.c.b16 %v657, %v657
  %vm690 = vcmask 519168
  %691 = vst.msk [vmem:[%s6] sm:$0xf] %vm690, %v658
  %692 = vst.msk [vmem:[%s6 + $0x4] sm:$0xf] %vm690, %v659
  %693 = vst.msk [vmem:[%s6 + $0x8] sm:$0xf] %vm690, %v660
  %694 = vst.msk [vmem:[%s6 + $0xc] sm:$0xf] %vm690, %v661
  %695 = vst.msk [vmem:[%s6 + $0x10] sm:$0xf] %vm690, %v662
  %696 = vst.msk [vmem:[%s6 + $0x14] sm:$0xf] %vm690, %v663
  %697 = vst.msk [vmem:[%s6 + $0x18] sm:$0xf] %vm690, %v664
  %698 = vst.msk [vmem:[%s6 + $0x1c] sm:$0xf] %vm690, %v665
  %699 = vst.msk [vmem:[%s6 + $0x20] sm:$0xf] %vm690, %v666
  %700 = vst.msk [vmem:[%s6 + $0x24] sm:$0xf] %vm690, %v667
  %701 = vst.msk [vmem:[%s6 + $0x28] sm:$0xf] %vm690, %v668
  %702 = vst.msk [vmem:[%s6 + $0x2c] sm:$0xf] %vm690, %v669
  %703 = vst.msk [vmem:[%s6 + $0x30] sm:$0xf] %vm690, %v670
  %704 = vst.msk [vmem:[%s6 + $0x34] sm:$0xf] %vm690, %v671
  %705 = vst.msk [vmem:[%s6 + $0x38] sm:$0xf] %vm690, %v672
  %706 = vst.msk [vmem:[%s6 + $0x3c] sm:$0xf] %vm690, %v673
  // Predicated region
  $region26: #{net_fwd.79} parent=0 // pred_check
    _
  $region27: #{net_fwd.79} parent=0 // pred_check_branch
    %708 = sbr.rel (0) target = $region29
  $region28: #{net_fwd.79} parent=0 // pred_region
    _
  $region29: #{net_fwd.79} parent=0 // pred_fallthru
    _
  // Predicated region
  $region30: #{net_fwd.79} parent=0 // pred_check
    _
  $region31: #{net_fwd.79} parent=0 // pred_check_branch
    %710 = sbr.rel (0) target = $region33
  $region32: #{net_fwd.79} parent=0 // pred_region
    _
  $region33: #{net_fwd.79} parent=0 // pred_fallthru
    _

// kernel: net_fwd.97
$region0: #{net_fwd.97}
  #allocation0 [shape = 'u32[]', space=smem, size = 0x4, offset = 0x4, fixed_abs, tag = 'smem constant byte address 0x4 - core index']
  #allocation1 [shape = 'u32[144,128]{1,0:T(1,128)}', space=vmem, size = 0x12000, scoped, tag = 'internal scratch']
  %s0 = inlined_call_operand.vmem [shape: bf16[32,384], index: 0, kind: input, shape index: {}]
  %s1 = inlined_call_operand.vmem [shape: bf16[384,128], index: 1, kind: input, shape index: {}]
  %s2 = inlined_call_operand.vmem [shape: f32[1,128], index: 2, kind: input, shape index: {}]
  %s3 = inlined_call_operand.vmem [shape: bf16[32,128], index: 3, kind: output, shape index: {}]
  %s4 = sld [smem:[#allocation0]]
  $region22: #{net_fwd.97} parent=0
    _
  %s6 = ssub.s32 1, %s4
  %s7 = scalar_select 0, %s6, %s4
  // Predicated region
  $region2: #{net_fwd.97} parent=0 // pred_check
    _
  $region3: #{net_fwd.97} parent=0 // pred_check_branch
    %9 = sbr.rel (0) target = $region5
  $region4: #{net_fwd.97} parent=0 // pred_region
    _
  $region5: #{net_fwd.97} parent=0 // pred_fallthru
    _
  // Predicated region
  $region6: #{net_fwd.97} parent=0 // pred_check
    _
  $region7: #{net_fwd.97} parent=0 // pred_check_branch
    %11 = sbr.rel (0) target = $region9
  $region8: #{net_fwd.97} parent=0 // pred_region
    _
  $region9: #{net_fwd.97} parent=0 // pred_fallthru
    _
  // Predicated region
  $region10: #{net_fwd.97} parent=0 // pred_check
    _
  $region11: #{net_fwd.97} parent=0 // pred_check_branch
    %13 = sbr.rel (0) target = $region13
  $region12: #{net_fwd.97} parent=0 // pred_region
    _
  $region13: #{net_fwd.97} parent=0 // pred_fallthru
    _
  %v15 = vld [vmem:[%s0] sm:$0xff]
  %v16 = vld [vmem:[%s0 + $0x8] sm:$0xf]
  %v17 = vld [vmem:[%s0 + $0xc] sm:$0xff]
  %v18 = vld [vmem:[%s0 + $0x14] sm:$0xf]
  %v19 = vld [vmem:[%s0 + $0x18] sm:$0xff]
  %v20 = vld [vmem:[%s0 + $0x20] sm:$0xf]
  %v21 = vld [vmem:[%s0 + $0x24] sm:$0xff]
  %v22 = vld [vmem:[%s0 + $0x2c] sm:$0xf]
  %v23 = vld [vmem:[%s1] sm:$0xf]
  %v24 = vld [vmem:[%s1 + $0x4] sm:$0xf]
  %v25 = vld [vmem:[%s1 + $0x8] sm:$0xf]
  %v26 = vld [vmem:[%s1 + $0xc] sm:$0xf]
  %v27 = vld [vmem:[%s1 + $0x10] sm:$0xf]
  %v28 = vld [vmem:[%s1 + $0x14] sm:$0xf]
  %v29 = vld [vmem:[%s1 + $0x18] sm:$0xf]
  %v30 = vld [vmem:[%s1 + $0x1c] sm:$0xf]
  %v31 = vld [vmem:[%s1 + $0x20] sm:$0xf]
  %v32 = vld [vmem:[%s1 + $0x24] sm:$0xf]
  %v33 = vld [vmem:[%s1 + $0x28] sm:$0xf]
  %v34 = vld [vmem:[%s1 + $0x2c] sm:$0xf]
  %v35 = vld [vmem:[%s1 + $0x30] sm:$0xf]
  %v36 = vld [vmem:[%s1 + $0x34] sm:$0xf]
  %v37 = vld [vmem:[%s1 + $0x38] sm:$0xf]
  %v38 = vld [vmem:[%s1 + $0x3c] sm:$0xf]
  %v39 = vld [vmem:[%s1 + $0x40] sm:$0xf]
  %v40 = vld [vmem:[%s1 + $0x44] sm:$0xf]
  %v41 = vld [vmem:[%s1 + $0x48] sm:$0xf]
  %v42 = vld [vmem:[%s1 + $0x4c] sm:$0xf]
  %v43 = vld [vmem:[%s1 + $0x50] sm:$0xf]
  %v44 = vld [vmem:[%s1 + $0x54] sm:$0xf]
  %v45 = vld [vmem:[%s1 + $0x58] sm:$0xf]
  %v46 = vld [vmem:[%s1 + $0x5c] sm:$0xf]
  %v47 = vld [vmem:[%s1 + $0x60] sm:$0xf]
  %v48 = vld [vmem:[%s1 + $0x64] sm:$0xf]
  %v49 = vld [vmem:[%s1 + $0x68] sm:$0xf]
  %v50 = vld [vmem:[%s1 + $0x6c] sm:$0xf]
  %v51 = vld [vmem:[%s1 + $0x70] sm:$0xf]
  %v52 = vld [vmem:[%s1 + $0x74] sm:$0xf]
  %v53 = vld [vmem:[%s1 + $0x78] sm:$0xf]
  %v54 = vld [vmem:[%s1 + $0x7c] sm:$0xf]
  %v55 = vld [vmem:[%s1 + $0x80] sm:$0xf]
  %v56 = vld [vmem:[%s1 + $0x84] sm:$0xf]
  %v57 = vld [vmem:[%s1 + $0x88] sm:$0xf]
  %v58 = vld [vmem:[%s1 + $0x8c] sm:$0xf]
  %v59 = vld [vmem:[%s1 + $0x90] sm:$0xf]
  %v60 = vld [vmem:[%s1 + $0x94] sm:$0xf]
  %v61 = vld [vmem:[%s1 + $0x98] sm:$0xf]
  %v62 = vld [vmem:[%s1 + $0x9c] sm:$0xf]
  %v63 = vld [vmem:[%s1 + $0xa0] sm:$0xf]
  %v64 = vld [vmem:[%s1 + $0xa4] sm:$0xf]
  %v65 = vld [vmem:[%s1 + $0xa8] sm:$0xf]
  %v66 = vld [vmem:[%s1 + $0xac] sm:$0xf]
  %v67 = vld [vmem:[%s1 + $0xb0] sm:$0xf]
  %v68 = vld [vmem:[%s1 + $0xb4] sm:$0xf]
  %v69 = vld [vmem:[%s1 + $0xb8] sm:$0xf]
  %v70 = vld [vmem:[%s1 + $0xbc] sm:$0xf]
  %v71 = vld [vmem:[%s2] sm:$0x1]
  %v73 = vlaneseq
  %v74 = vshrl.u32 %v73, 7
  %v75 = vsub.s32 0, %v74
  %v76 = vrot.slane %v71, %v75
  %v86 = vunpack.c.l.b16 %v15
  %v87 = vunpack.c.h.b16 %v15
  %v88 = vunpack.c.l.b16 %v16
  %v89 = vunpack.c.l.b16 %v17
  %v90 = vunpack.c.h.b16 %v17
  %v91 = vunpack.c.l.b16 %v18
  %v92 = vunpack.c.l.b16 %v19
  %v93 = vunpack.c.h.b16 %v19
  %v94 = vunpack.c.l.b16 %v20
  %v95 = vunpack.c.l.b16 %v21
  %v96 = vunpack.c.h.b16 %v21
  %v97 = vunpack.c.l.b16 %v22
  %v98 = vpack.c.b16 %v89, %v86
  %v99 = vpack.c.b16 %v90, %v87
  %v100 = vpack.c.b16 %v91, %v88
  %v101 = vpack.c.b16 %v95, %v92
  %v102 = vpack.c.b16 %v96, %v93
  %v103 = vpack.c.b16 %v97, %v94
  %v158 = vunpack.c.l.b16 %v23
  %v159 = vunpack.c.l.b16 %v24
  %v160 = vunpack.c.l.b16 %v25
  %v161 = vunpack.c.l.b16 %v26
  %v162 = vunpack.c.l.b16 %v27
  %v163 = vunpack.c.l.b16 %v28
  %v164 = vunpack.c.l.b16 %v29
  %v165 = vunpack.c.l.b16 %v30
  %v166 = vunpack.c.l.b16 %v31
  %v167 = vunpack.c.l.b16 %v32
  %v168 = vunpack.c.l.b16 %v33
  %v169 = vunpack.c.l.b16 %v34
  %v170 = vunpack.c.l.b16 %v35
  %v171 = vunpack.c.l.b16 %v36
  %v172 = vunpack.c.l.b16 %v37
  %v173 = vunpack.c.l.b16 %v38
  %v174 = vunpack.c.l.b16 %v39
  %v175 = vunpack.c.l.b16 %v40
  %v176 = vunpack.c.l.b16 %v41
  %v177 = vunpack.c.l.b16 %v42
  %v178 = vunpack.c.l.b16 %v43
  %v179 = vunpack.c.l.b16 %v44
  %v180 = vunpack.c.l.b16 %v45
  %v181 = vunpack.c.l.b16 %v46
  %v182 = vunpack.c.l.b16 %v47
  %v183 = vunpack.c.l.b16 %v48
  %v184 = vunpack.c.l.b16 %v49
  %v185 = vunpack.c.l.b16 %v50
  %v186 = vunpack.c.l.b16 %v51
  %v187 = vunpack.c.l.b16 %v52
  %v188 = vunpack.c.l.b16 %v53
  %v189 = vunpack.c.l.b16 %v54
  %v190 = vunpack.c.l.b16 %v55
  %v191 = vunpack.c.l.b16 %v56
  %v192 = vunpack.c.l.b16 %v57
  %v193 = vunpack.c.l.b16 %v58
  %v194 = vunpack.c.l.b16 %v59
  %v195 = vunpack.c.l.b16 %v60
  %v196 = vunpack.c.l.b16 %v61
  %v197 = vunpack.c.l.b16 %v62
  %v198 = vunpack.c.l.b16 %v63
  %v199 = vunpack.c.l.b16 %v64
  %v200 = vunpack.c.l.b16 %v65
  %v201 = vunpack.c.l.b16 %v66
  %v202 = vunpack.c.l.b16 %v67
  %v203 = vunpack.c.l.b16 %v68
  %v204 = vunpack.c.l.b16 %v69
  %v205 = vunpack.c.l.b16 %v70
  %v206 = vpack.c.b16 %v159, %v158
  %v207 = vpack.c.b16 %v161, %v160
  %v208 = vpack.c.b16 %v163, %v162
  %v209 = vpack.c.b16 %v165, %v164
  %v210 = vpack.c.b16 %v167, %v166
  %v211 = vpack.c.b16 %v169, %v168
  %v212 = vpack.c.b16 %v171, %v170
  %v213 = vpack.c.b16 %v173, %v172
  %v214 = vpack.c.b16 %v175, %v174
  %v215 = vpack.c.b16 %v177, %v176
  %v216 = vpack.c.b16 %v179, %v178
  %v217 = vpack.c.b16 %v181, %v180
  %v218 = vpack.c.b16 %v183, %v182
  %v219 = vpack.c.b16 %v185, %v184
  %v220 = vpack.c.b16 %v187, %v186
  %v221 = vpack.c.b16 %v189, %v188
  %v222 = vpack.c.b16 %v191, %v190
  %v223 = vpack.c.b16 %v193, %v192
  %v224 = vpack.c.b16 %v195, %v194
  %v225 = vpack.c.b16 %v197, %v196
  %v226 = vpack.c.b16 %v199, %v198
  %v227 = vpack.c.b16 %v201, %v200
  %v228 = vpack.c.b16 %v203, %v202
  %v229 = vpack.c.b16 %v205, %v204
  %254 = vmatprep.subr.bf16.mxu0 0
  %255 = vmatpush1.bf16.msra.mxu0 %v206
  %256 = vmatprep.subr.bf16.mxu0 0
  %257 = vmatpush1.bf16.msra.mxu0 %v207
  %258 = vmatprep.subr.bf16.mxu0 0
  %259 = vmatpush1.bf16.msra.mxu0 %v208
  %260 = vmatprep.subr.bf16.mxu0 0
  %261 = vmatpush1.bf16.msra.mxu0 %v209
  %262 = vmatprep.subr.bf16.mxu0 0
  %263 = vmatpush1.bf16.msra.mxu0 %v210
  %264 = vmatprep.subr.bf16.mxu0 0
  %265 = vmatpush1.bf16.msra.mxu0 %v211
  %266 = vmatprep.subr.bf16.mxu0 0
  %267 = vmatpush1.bf16.msra.mxu0 %v212
  %268 = vmatprep.subr.bf16.mxu0 0
  %269 = vmatpush1.bf16.msra.mxu0 %v213
  %270 = vmatprep.subr.bf16.mxu0 0
  %271 = vmatpush1.bf16.msra.mxu0 %v214
  %272 = vmatprep.subr.bf16.mxu0 0
  %273 = vmatpush1.bf16.msra.mxu0 %v215
  %274 = vmatprep.subr.bf16.mxu0 0
  %275 = vmatpush1.bf16.msra.mxu0 %v216
  %276 = vmatprep.subr.bf16.mxu0 0
  %277 = vmatpush1.bf16.msra.mxu0 %v217
  %278 = vmatprep.subr.bf16.mxu0 0
  %279 = vmatpush1.bf16.msra.mxu0 %v218
  %280 = vmatprep.subr.bf16.mxu0 0
  %281 = vmatpush1.bf16.msra.mxu0 %v219
  %282 = vmatprep.subr.bf16.mxu0 0
  %283 = vmatpush1.bf16.msra.mxu0 %v220
  %284 = vmatprep.subr.bf16.mxu0 0
  %285 = vmatpush1.bf16.msra.mxu0 %v221
  %286 = vmatprep.mubr.bf16.mxu0 %v99
  %287 = vmatmul.mubr.bf16.gmra.mrb[0].mxu0 %v98
  %v288 = vpop.f32.mrb[0].mxu0
  %v289 = vadd.f32 %v76, %v288
  %v290 = vpop.f32.mrb[0].mxu0
  %v291 = vpop.f32.mrb[0].mxu0
  %v292 = vadd.f32 %v76, %v291
  %v293 = vpop.f32.mrb[0].mxu0
  %294 = vmatprep.mubr.bf16.mxu0 %v102
  %295 = vmatmul.mubr.bf16.gmra.mrb[0].mxu0 %v101
  %v296 = vpop.f32.mrb[0].mxu0
  %v297 = vadd.f32 %v76, %v296
  %v298 = vpop.f32.mrb[0].mxu0
  %v299 = vpop.f32.mrb[0].mxu0
  %v300 = vadd.f32 %v76, %v299
  %v301 = vpop.f32.mrb[0].mxu0
  %302 = vdwg.mxu0
  %303 = vmatprep.subr.bf16.mxu0 0
  %304 = vmatpush1.bf16.msra.mxu0 %v222
  %305 = vmatprep.subr.bf16.mxu0 0
  %306 = vmatpush1.bf16.msra.mxu0 %v223
  %307 = vmatprep.subr.bf16.mxu0 0
  %308 = vmatpush1.bf16.msra.mxu0 %v224
  %309 = vmatprep.subr.bf16.mxu0 0
  %310 = vmatpush1.bf16.msra.mxu0 %v225
  %311 = vmatprep.subr.bf16.mxu0 0
  %312 = vmatpush1.bf16.msra.mxu0 %v226
  %313 = vmatprep.subr.bf16.mxu0 0
  %314 = vmatpush1.bf16.msra.mxu0 %v227
  %315 = vmatprep.subr.bf16.mxu0 0
  %316 = vmatpush1.bf16.msra.mxu0 %v228
  %317 = vmatprep.subr.bf16.mxu0 0
  %318 = vmatpush1.bf16.msra.mxu0 %v229
  %319 = vmatprep.subr.bf16.mxu0 0
  %320 = vmatpush1.bf16.msra.mxu0 0
  %321 = vmatprep.subr.bf16.mxu0 0
  %322 = vmatpush1.bf16.msra.mxu0 0
  %323 = vmatprep.subr.bf16.mxu0 0
  %324 = vmatpush1.bf16.msra.mxu0 0
  %325 = vmatprep.subr.bf16.mxu0 0
  %326 = vmatpush1.bf16.msra.mxu0 0
  %327 = vmatprep.subr.bf16.mxu0 0
  %328 = vmatpush1.bf16.msra.mxu0 0
  %329 = vmatprep.subr.bf16.mxu0 0
  %330 = vmatpush1.bf16.msra.mxu0 0
  %331 = vmatprep.subr.bf16.mxu0 0
  %332 = vmatpush1.bf16.msra.mxu0 0
  %333 = vmatprep.subr.bf16.mxu0 0
  %334 = vmatpush1.bf16.msra.mxu0 0
  %335 = vmatprep.mubr.bf16.mxu0 0
  %336 = vmatmul.mubr.bf16.gmra.mrb[0].mxu0 %v100
  %v337 = vpop.f32.mrb[0].mxu0
  %v338 = vadd.f32 %v289, %v337
  %v339 = vpop.f32.mrb[0].mxu0
  %v340 = vpop.f32.mrb[0].mxu0
  %v341 = vadd.f32 %v292, %v340
  %v342 = vpop.f32.mrb[0].mxu0
  %343 = vmatprep.mubr.bf16.mxu0 0
  %344 = vmatmul.mubr.bf16.gmra.mrb[0].mxu0 %v103
  %v345 = vpop.f32.mrb[0].mxu0
  %v346 = vadd.f32 %v297, %v345
  %v347 = vpop.f32.mrb[0].mxu0
  %v348 = vpop.f32.mrb[0].mxu0
  %v349 = vadd.f32 %v300, %v348
  %v350 = vpop.f32.mrb[0].mxu0
  %351 = vdwg.mxu0
  %v352 = vmax.f32 %v338, 0.0
  %v353 = vmax.f32 %v341, 0.0
  %v354 = vmax.f32 %v346, 0.0
  %v355 = vmax.f32 %v349, 0.0
  %v356 = vpack.c.bf16 %v353, %v352
  %v357 = vpack.c.bf16 %v355, %v354
  %v360 = vunpack.c.l.b16 %v356
  %v361 = vunpack.c.h.b16 %v356
  %v362 = vunpack.c.l.b16 %v357
  %v363 = vunpack.c.h.b16 %v357
  %v364 = vpack.c.b16 %v360, %v360
  %v365 = vpack.c.b16 %v361, %v361
  %v366 = vpack.c.b16 %v362, %v362
  %v367 = vpack.c.b16 %v363, %v363
  %372 = vst [vmem:[%s3] sm:$0xf] %v364
  %373 = vst [vmem:[%s3 + $0x4] sm:$0xf] %v365
  %374 = vst [vmem:[%s3 + $0x8] sm:$0xf] %v366
  %375 = vst [vmem:[%s3 + $0xc] sm:$0xf] %v367
  // Predicated region
  $region14: #{net_fwd.97} parent=0 // pred_check
    _
  $region15: #{net_fwd.97} parent=0 // pred_check_branch
    %377 = sbr.rel (0) target = $region17
  $region16: #{net_fwd.97} parent=0 // pred_region
    _
  $region17: #{net_fwd.97} parent=0 // pred_fallthru
    _
  // Predicated region
  $region18: #{net_fwd.97} parent=0 // pred_check
    _
  $region19: #{net_fwd.97} parent=0 // pred_check_branch
    %379 = sbr.rel (0) target = $region21
  $region20: #{net_fwd.97} parent=0 // pred_region
    _
  $region21: #{net_fwd.97} parent=0 // pred_fallthru
    _

// kernel: net_fwd.96
$region0: #{net_fwd.96}
  #allocation0 [shape = 'u32[]', space=smem, size = 0x4, offset = 0x4, fixed_abs, tag = 'smem constant byte address 0x4 - core index']
  #allocation1 [shape = 'u32[144,128]{1,0:T(1,128)}', space=vmem, size = 0x12000, scoped, tag = 'internal scratch']
  %s0 = inlined_call_operand.vmem [shape: bf16[32,576], index: 0, kind: input, shape index: {}]
  %s1 = inlined_call_operand.vmem [shape: bf16[576,128], index: 1, kind: input, shape index: {}]
  %s2 = inlined_call_operand.vmem [shape: bf16[64,128], index: 2, kind: input, shape index: {}]
  %s3 = inlined_call_operand.vmem [shape: f32[1,128], index: 3, kind: input, shape index: {}]
  %s4 = inlined_call_operand.vmem [shape: bf16[32,128], index: 4, kind: output, shape index: {}]
  %s5 = sld [smem:[#allocation0]]
  $region26: #{net_fwd.96} parent=0
    _
  %s7 = ssub.s32 1, %s5
  %s8 = scalar_select 0, %s7, %s5
  // Predicated region
  $region2: #{net_fwd.96} parent=0 // pred_check
    _
  $region3: #{net_fwd.96} parent=0 // pred_check_branch
    %10 = sbr.rel (0) target = $region5
  $region4: #{net_fwd.96} parent=0 // pred_region
    _
  $region5: #{net_fwd.96} parent=0 // pred_fallthru
    _
  // Predicated region
  $region6: #{net_fwd.96} parent=0 // pred_check
    _
  $region7: #{net_fwd.96} parent=0 // pred_check_branch
    %12 = sbr.rel (0) target = $region9
  $region8: #{net_fwd.96} parent=0 // pred_region
    _
  $region9: #{net_fwd.96} parent=0 // pred_fallthru
    _
  // Predicated region
  $region10: #{net_fwd.96} parent=0 // pred_check
    _
  $region11: #{net_fwd.96} parent=0 // pred_check_branch
    %14 = sbr.rel (0) target = $region13
  $region12: #{net_fwd.96} parent=0 // pred_region
    _
  $region13: #{net_fwd.96} parent=0 // pred_fallthru
    _
  // Predicated region
  $region14: #{net_fwd.96} parent=0 // pred_check
    _
  $region15: #{net_fwd.96} parent=0 // pred_check_branch
    %16 = sbr.rel (0) target = $region17
  $region16: #{net_fwd.96} parent=0 // pred_region
    _
  $region17: #{net_fwd.96} parent=0 // pred_fallthru
    _
  %v18 = vld [vmem:[%s0] sm:$0xff]
  %v19 = vld [vmem:[%s0 + $0x8] sm:$0xff]
  %v20 = vld [vmem:[%s0 + $0x10] sm:$0xf]
  %v21 = vld [vmem:[%s0 + $0x14] sm:$0xff]
  %v22 = vld [vmem:[%s0 + $0x1c] sm:$0xff]
  %v23 = vld [vmem:[%s0 + $0x24] sm:$0xf]
  %v24 = vld [vmem:[%s0 + $0x28] sm:$0xff]
  %v25 = vld [vmem:[%s0 + $0x30] sm:$0xff]
  %v26 = vld [vmem:[%s0 + $0x38] sm:$0xf]
  %v27 = vld [vmem:[%s0 + $0x3c] sm:$0xff]
  %v28 = vld [vmem:[%s0 + $0x44] sm:$0xff]
  %v29 = vld [vmem:[%s0 + $0x4c] sm:$0xf]
  %v30 = vld [vmem:[%s1] sm:$0xf]
  %v31 = vld [vmem:[%s1 + $0x4] sm:$0xf]
  %v32 = vld [vmem:[%s1 + $0x8] sm:$0xf]
  %v33 = vld [vmem:[%s1 + $0xc] sm:$0xf]
  %v34 = vld [vmem:[%s1 + $0x10] sm:$0xf]
  %v35 = vld [vmem:[%s1 + $0x14] sm:$0xf]
  %v36 = vld [vmem:[%s1 + $0x18] sm:$0xf]
  %v37 = vld [vmem:[%s1 + $0x1c] sm:$0xf]
  %v38 = vld [vmem:[%s1 + $0x20] sm:$0xf]
  %v39 = vld [vmem:[%s1 + $0x24] sm:$0xf]
  %v40 = vld [vmem:[%s1 + $0x28] sm:$0xf]
  %v41 = vld [vmem:[%s1 + $0x2c] sm:$0xf]
  %v42 = vld [vmem:[%s1 + $0x30] sm:$0xf]
  %v43 = vld [vmem:[%s1 + $0x34] sm:$0xf]
  %v44 = vld [vmem:[%s1 + $0x38] sm:$0xf]
  %v45 = vld [vmem:[%s1 + $0x3c] sm:$0xf]
  %v46 = vld [vmem:[%s1 + $0x40] sm:$0xf]
  %v47 = vld [vmem:[%s1 + $0x44] sm:$0xf]
  %v48 = vld [vmem:[%s1 + $0x48] sm:$0xf]
  %v49 = vld [vmem:[%s1 + $0x4c] sm:$0xf]
  %v50 = vld [vmem:[%s1 + $0x50] sm:$0xf]
  %v51 = vld [vmem:[%s1 + $0x54] sm:$0xf]
  %v52 = vld [vmem:[%s1 + $0x58] sm:$0xf]
  %v53 = vld [vmem:[%s1 + $0x5c] sm:$0xf]
  %v54 = vld [vmem:[%s1 + $0x60] sm:$0xf]
  %v55 = vld [vmem:[%s1 + $0x64] sm:$0xf]
  %v56 = vld [vmem:[%s1 + $0x68] sm:$0xf]
  %v57 = vld [vmem:[%s1 + $0x6c] sm:$0xf]
  %v58 = vld [vmem:[%s1 + $0x70] sm:$0xf]
  %v59 = vld [vmem:[%s1 + $0x74] sm:$0xf]
  %v60 = vld [vmem:[%s1 + $0x78] sm:$0xf]
  %v61 = vld [vmem:[%s1 + $0x7c] sm:$0xf]
  %v62 = vld [vmem:[%s1 + $0x80] sm:$0xf]
  %v63 = vld [vmem:[%s1 + $0x84] sm:$0xf]
  %v64 = vld [vmem:[%s1 + $0x88] sm:$0xf]
  %v65 = vld [vmem:[%s1 + $0x8c] sm:$0xf]
  %v66 = vld [vmem:[%s1 + $0x90] sm:$0xf]
  %v67 = vld [vmem:[%s1 + $0x94] sm:$0xf]
  %v68 = vld [vmem:[%s1 + $0x98] sm:$0xf]
  %v69 = vld [vmem:[%s1 + $0x9c] sm:$0xf]
  %v70 = vld [vmem:[%s1 + $0xa0] sm:$0xf]
  %v71 = vld [vmem:[%s1 + $0xa4] sm:$0xf]
  %v72 = vld [vmem:[%s1 + $0xa8] sm:$0xf]
  %v73 = vld [vmem:[%s1 + $0xac] sm:$0xf]
  %v74 = vld [vmem:[%s1 + $0xb0] sm:$0xf]
  %v75 = vld [vmem:[%s1 + $0xb4] sm:$0xf]
  %v76 = vld [vmem:[%s1 + $0xb8] sm:$0xf]
  %v77 = vld [vmem:[%s1 + $0xbc] sm:$0xf]
  %v78 = vld [vmem:[%s1 + $0xc0] sm:$0xf]
  %v79 = vld [vmem:[%s1 + $0xc4] sm:$0xf]
  %v80 = vld [vmem:[%s1 + $0xc8] sm:$0xf]
  %v81 = vld [vmem:[%s1 + $0xcc] sm:$0xf]
  %v82 = vld [vmem:[%s1 + $0xd0] sm:$0xf]
  %v83 = vld [vmem:[%s1 + $0xd4] sm:$0xf]
  %v84 = vld [vmem:[%s1 + $0xd8] sm:$0xf]
  %v85 = vld [vmem:[%s1 + $0xdc] sm:$0xf]
  %v86 = vld [vmem:[%s1 + $0xe0] sm:$0xf]
  %v87 = vld [vmem:[%s1 + $0xe4] sm:$0xf]
  %v88 = vld [vmem:[%s1 + $0xe8] sm:$0xf]
  %v89 = vld [vmem:[%s1 + $0xec] sm:$0xf]
  %v90 = vld [vmem:[%s1 + $0xf0] sm:$0xf]
  %v91 = vld [vmem:[%s1 + $0xf4] sm:$0xf]
  %v92 = vld [vmem:[%s1 + $0xf8] sm:$0xf]
  %v93 = vld [vmem:[%s1 + $0xfc] sm:$0xf]
  %v94 = vld [vmem:[%s1 + $0x100] sm:$0xf]
  %v95 = vld [vmem:[%s1 + $0x104] sm:$0xf]
  %v96 = vld [vmem:[%s1 + $0x108] sm:$0xf]
  %v97 = vld [vmem:[%s1 + $0x10c] sm:$0xf]
  %v98 = vld [vmem:[%s1 + $0x110] sm:$0xf]
  %v99 = vld [vmem:[%s1 + $0x114] sm:$0xf]
  %v100 = vld [vmem:[%s1 + $0x118] sm:$0xf]
  %v101 = vld [vmem:[%s1 + $0x11c] sm:$0xf]
  %106 = vrot.lane.b32.xlu0 %v19, 64
  %v107 = vpop.permute.xlu0 %106
  %108 = vrot.lane.b32.xlu0 %v22, 64
  %v109 = vpop.permute.xlu0 %108
  %110 = vrot.lane.b32.xlu0 %v25, 64
  %v111 = vpop.permute.xlu0 %110
  %112 = vrot.lane.b32.xlu0 %v28, 64
  %v113 = vpop.permute.xlu0 %112
  %v118 = vmax.bf16 %v19, %v107
  %v119 = vmax.bf16 %v22, %v109
  %v120 = vmax.bf16 %v25, %v111
  %v121 = vmax.bf16 %v28, %v113
  %v122 = vrot.slane %v107, 4
  %v123 = vrot.slane %v109, 4
  %v124 = vrot.slane %v111, 4
  %v125 = vrot.slane %v113, 4
  %v130 = vmax.bf16 %v122, %v20
  %v131 = vmax.bf16 %v123, %v23
  %v132 = vmax.bf16 %v124, %v26
  %v133 = vmax.bf16 %v125, %v29
  %v134 = vmax.bf16 %v118, %v130
  %v135 = vmax.bf16 %v119, %v131
  %v136 = vmax.bf16 %v120, %v132
  %v137 = vmax.bf16 %v121, %v133
  %v138 = vld [vmem:[%s2] sm:$0xf]
  %v139 = vld [vmem:[%s2 + $0x4] sm:$0xf]
  %v140 = vld [vmem:[%s2 + $0x8] sm:$0xf]
  %v141 = vld [vmem:[%s2 + $0xc] sm:$0xf]
  %v142 = vld [vmem:[%s2 + $0x10] sm:$0xf]
  %v143 = vld [vmem:[%s2 + $0x14] sm:$0xf]
  %v144 = vld [vmem:[%s2 + $0x18] sm:$0xf]
  %v145 = vld [vmem:[%s2 + $0x1c] sm:$0xf]
  %v150 = vunpack.c.l.b16 %v134
  %v151 = vunpack.c.l.b16 %v135
  %v152 = vunpack.c.l.b16 %v136
  %v153 = vunpack.c.l.b16 %v137
  %v154 = vpack.c.b16 %v151, %v150
  %v155 = vpack.c.b16 %v153, %v152
  %v164 = vunpack.c.l.b16 %v138
  %v165 = vunpack.c.l.b16 %v139
  %v166 = vunpack.c.l.b16 %v140
  %v167 = vunpack.c.l.b16 %v141
  %v168 = vunpack.c.l.b16 %v142
  %v169 = vunpack.c.l.b16 %v143
  %v170 = vunpack.c.l.b16 %v144
  %v171 = vunpack.c.l.b16 %v145
  %v172 = vpack.c.b16 %v165, %v164
  %v173 = vpack.c.b16 %v167, %v166
  %v174 = vpack.c.b16 %v169, %v168
  %v175 = vpack.c.b16 %v171, %v170
  %vm180 = vcmask 523264
  %v182 = vsel %vm180, %v154, 0
  %v185 = vsel %vm180, %v155, 0
  %187 = vmatprep.subr.bf16.mxu0 0
  %188 = vmatpush1.bf16.msra.mxu0 %v172
  %189 = vmatprep.subr.bf16.mxu0 0
  %190 = vmatpush1.bf16.msra.mxu0 %v173
  %191 = vmatprep.subr.bf16.mxu0 0
  %192 = vmatpush1.bf16.msra.mxu0 %v174
  %193 = vmatprep.subr.bf16.mxu0 0
  %194 = vmatpush1.bf16.msra.mxu0 %v175
  %195 = vmatprep.subr.bf16.mxu0 0
  %196 = vmatpush1.bf16.msra.mxu0 0
  %197 = vmatprep.subr.bf16.mxu0 0
  %198 = vmatpush1.bf16.msra.mxu0 0
  %199 = vmatprep.subr.bf16.mxu0 0
  %200 = vmatpush1.bf16.msra.mxu0 0
  %201 = vmatprep.subr.bf16.mxu0 0
  %202 = vmatpush1.bf16.msra.mxu0 0
  %203 = vmatprep.subr.bf16.mxu0 0
  %204 = vmatpush1.bf16.msra.mxu0 0
  %205 = vmatprep.subr.bf16.mxu0 0
  %206 = vmatpush1.bf16.msra.mxu0 0
  %207 = vmatprep.subr.bf16.mxu0 0
  %208 = vmatpush1.bf16.msra.mxu0 0
  %209 = vmatprep.subr.bf16.mxu0 0
  %210 = vmatpush1.bf16.msra.mxu0 0
  %211 = vmatprep.subr.bf16.mxu0 0
  %212 = vmatpush1.bf16.msra.mxu0 0
  %213 = vmatprep.subr.bf16.mxu0 0
  %214 = vmatpush1.bf16.msra.mxu0 0
  %215 = vmatprep.subr.bf16.mxu0 0
  %216 = vmatpush1.bf16.msra.mxu0 0
  %217 = vmatprep.subr.bf16.mxu0 0
  %218 = vmatpush1.bf16.msra.mxu0 0
  %219 = vmatprep.mubr.bf16.mxu0 0
  %220 = vmatmul.mubr.bf16.gmra.mrb[0].mxu0 %v182
  %v221 = vpop.f32.mrb[0].mxu0
  %v222 = vadd.f32 0.0, %v221
  %v223 = vpop.f32.mrb[0].mxu0
  %v224 = vpop.f32.mrb[0].mxu0
  %v225 = vadd.f32 0.0, %v224
  %v226 = vpop.f32.mrb[0].mxu0
  %227 = vmatprep.mubr.bf16.mxu0 0
  %228 = vmatmul.mubr.bf16.gmra.mrb[0].mxu0 %v185
  %v229 = vpop.f32.mrb[0].mxu0
  %v230 = vadd.f32 0.0, %v229
  %v231 = vpop.f32.mrb[0].mxu0
  %v232 = vpop.f32.mrb[0].mxu0
  %v233 = vadd.f32 0.0, %v232
  %v234 = vpop.f32.mrb[0].mxu0
  %235 = vdwg.mxu0
  %v244 = vunpack.c.l.b16 %v18
  %v245 = vunpack.c.h.b16 %v18
  %v246 = vunpack.c.l.b16 %v19
  %v247 = vunpack.c.h.b16 %v19
  %v248 = vunpack.c.l.b16 %v20
  %v249 = vunpack.c.l.b16 %v21
  %v250 = vunpack.c.h.b16 %v21
  %v251 = vunpack.c.l.b16 %v22
  %v252 = vunpack.c.h.b16 %v22
  %v253 = vunpack.c.l.b16 %v23
  %v254 = vunpack.c.l.b16 %v24
  %v255 = vunpack.c.h.b16 %v24
  %v256 = vunpack.c.l.b16 %v25
  %v257 = vunpack.c.h.b16 %v25
  %v258 = vunpack.c.l.b16 %v26
  %v259 = vunpack.c.l.b16 %v27
  %v260 = vunpack.c.h.b16 %v27
  %v261 = vunpack.c.l.b16 %v28
  %v262 = vunpack.c.h.b16 %v28
  %v263 = vunpack.c.l.b16 %v29
  %v264 = vpack.c.b16 %v249, %v244
  %v265 = vpack.c.b16 %v250, %v245
  %v266 = vpack.c.b16 %v251, %v246
  %v267 = vpack.c.b16 %v252, %v247
  %v268 = vpack.c.b16 %v253, %v248
  %v269 = vpack.c.b16 %v259, %v254
  %v270 = vpack.c.b16 %v260, %v255
  %v271 = vpack.c.b16 %v261, %v256
  %v272 = vpack.c.b16 %v262, %v257
  %v273 = vpack.c.b16 %v263, %v258
  %v354 = vunpack.c.l.b16 %v30
  %v355 = vunpack.c.l.b16 %v31
  %v356 = vunpack.c.l.b16 %v32
  %v357 = vunpack.c.l.b16 %v33
  %v358 = vunpack.c.l.b16 %v34
  %v359 = vunpack.c.l.b16 %v35
  %v360 = vunpack.c.l.b16 %v36
  %v361 = vunpack.c.l.b16 %v37
  %v362 = vunpack.c.l.b16 %v38
  %v363 = vunpack.c.l.b16 %v39
  %v364 = vunpack.c.l.b16 %v40
  %v365 = vunpack.c.l.b16 %v41
  %v366 = vunpack.c.l.b16 %v42
  %v367 = vunpack.c.l.b16 %v43
  %v368 = vunpack.c.l.b16 %v44
  %v369 = vunpack.c.l.b16 %v45
  %v370 = vunpack.c.l.b16 %v46
  %v371 = vunpack.c.l.b16 %v47
  %v372 = vunpack.c.l.b16 %v48
  %v373 = vunpack.c.l.b16 %v49
  %v374 = vunpack.c.l.b16 %v50
  %v375 = vunpack.c.l.b16 %v51
  %v376 = vunpack.c.l.b16 %v52
  %v377 = vunpack.c.l.b16 %v53
  %v378 = vunpack.c.l.b16 %v54
  %v379 = vunpack.c.l.b16 %v55
  %v380 = vunpack.c.l.b16 %v56
  %v381 = vunpack.c.l.b16 %v57
  %v382 = vunpack.c.l.b16 %v58
  %v383 = vunpack.c.l.b16 %v59
  %v384 = vunpack.c.l.b16 %v60
  %v385 = vunpack.c.l.b16 %v61
  %v386 = vunpack.c.l.b16 %v62
  %v387 = vunpack.c.l.b16 %v63
  %v388 = vunpack.c.l.b16 %v64
  %v389 = vunpack.c.l.b16 %v65
  %v390 = vunpack.c.l.b16 %v66
  %v391 = vunpack.c.l.b16 %v67
  %v392 = vunpack.c.l.b16 %v68
  %v393 = vunpack.c.l.b16 %v69
  %v394 = vunpack.c.l.b16 %v70
  %v395 = vunpack.c.l.b16 %v71
  %v396 = vunpack.c.l.b16 %v72
  %v397 = vunpack.c.l.b16 %v73
  %v398 = vunpack.c.l.b16 %v74
  %v399 = vunpack.c.l.b16 %v75
  %v400 = vunpack.c.l.b16 %v76
  %v401 = vunpack.c.l.b16 %v77
  %v402 = vunpack.c.l.b16 %v78
  %v403 = vunpack.c.l.b16 %v79
  %v404 = vunpack.c.l.b16 %v80
  %v405 = vunpack.c.l.b16 %v81
  %v406 = vunpack.c.l.b16 %v82
  %v407 = vunpack.c.l.b16 %v83
  %v408 = vunpack.c.l.b16 %v84
  %v409 = vunpack.c.l.b16 %v85
  %v410 = vunpack.c.l.b16 %v86
  %v411 = vunpack.c.l.b16 %v87
  %v412 = vunpack.c.l.b16 %v88
  %v413 = vunpack.c.l.b16 %v89
  %v414 = vunpack.c.l.b16 %v90
  %v415 = vunpack.c.l.b16 %v91
  %v416 = vunpack.c.l.b16 %v92
  %v417 = vunpack.c.l.b16 %v93
  %v418 = vunpack.c.l.b16 %v94
  %v419 = vunpack.c.l.b16 %v95
  %v420 = vunpack.c.l.b16 %v96
  %v421 = vunpack.c.l.b16 %v97
  %v422 = vunpack.c.l.b16 %v98
  %v423 = vunpack.c.l.b16 %v99
  %v424 = vunpack.c.l.b16 %v100
  %v425 = vunpack.c.l.b16 %v101
  %v426 = vpack.c.b16 %v355, %v354
  %v427 = vpack.c.b16 %v357, %v356
  %v428 = vpack.c.b16 %v359, %v358
  %v429 = vpack.c.b16 %v361, %v360
  %v430 = vpack.c.b16 %v363, %v362
  %v431 = vpack.c.b16 %v365, %v364
  %v432 = vpack.c.b16 %v367, %v366
  %v433 = vpack.c.b16 %v369, %v368
  %v434 = vpack.c.b16 %v371, %v370
  %v435 = vpack.c.b16 %v373, %v372
  %v436 = vpack.c.b16 %v375, %v374
  %v437 = vpack.c.b16 %v377, %v376
  %v438 = vpack.c.b16 %v379, %v378
  %v439 = vpack.c.b16 %v381, %v380
  %v440 = vpack.c.b16 %v383, %v382
  %v441 = vpack.c.b16 %v385, %v384
  %v442 = vpack.c.b16 %v387, %v386
  %v443 = vpack.c.b16 %v389, %v388
  %v444 = vpack.c.b16 %v391, %v390
  %v445 = vpack.c.b16 %v393, %v392
  %v446 = vpack.c.b16 %v395, %v394
  %v447 = vpack.c.b16 %v397, %v396
  %v448 = vpack.c.b16 %v399, %v398
  %v449 = vpack.c.b16 %v401, %v400
  %v450 = vpack.c.b16 %v403, %v402
  %v451 = vpack.c.b16 %v405, %v404
  %v452 = vpack.c.b16 %v407, %v406
  %v453 = vpack.c.b16 %v409, %v408
  %v454 = vpack.c.b16 %v411, %v410
  %v455 = vpack.c.b16 %v413, %v412
  %v456 = vpack.c.b16 %v415, %v414
  %v457 = vpack.c.b16 %v417, %v416
  %v458 = vpack.c.b16 %v419, %v418
  %v459 = vpack.c.b16 %v421, %v420
  %v460 = vpack.c.b16 %v423, %v422
  %v461 = vpack.c.b16 %v425, %v424
  %v499 = vsel %vm180, %v268, 0
  %v502 = vsel %vm180, %v273, 0
  %504 = vmatprep.subr.bf16.mxu0 0
  %505 = vmatpush1.bf16.msra.mxu0 %v426
  %506 = vmatprep.subr.bf16.mxu0 0
  %507 = vmatpush1.bf16.msra.mxu0 %v427
  %508 = vmatprep.subr.bf16.mxu0 0
  %509 = vmatpush1.bf16.msra.mxu0 %v428
  %510 = vmatprep.subr.bf16.mxu0 0
  %511 = vmatpush1.bf16.msra.mxu0 %v429
  %512 = vmatprep.subr.bf16.mxu0 0
  %513 = vmatpush1.bf16.msra.mxu0 %v430
  %514 = vmatprep.subr.bf16.mxu0 0
  %515 = vmatpush1.bf16.msra.mxu0 %v431
  %516 = vmatprep.subr.bf16.mxu0 0
  %517 = vmatpush1.bf16.msra.mxu0 %v432
  %518 = vmatprep.subr.bf16.mxu0 0
  %519 = vmatpush1.bf16.msra.mxu0 %v433
  %520 = vmatprep.subr.bf16.mxu0 0
  %521 = vmatpush1.bf16.msra.mxu0 %v434
  %522 = vmatprep.subr.bf16.mxu0 0
  %523 = vmatpush1.bf16.msra.mxu0 %v435
  %524 = vmatprep.subr.bf16.mxu0 0
  %525 = vmatpush1.bf16.msra.mxu0 %v436
  %526 = vmatprep.subr.bf16.mxu0 0
  %527 = vmatpush1.bf16.msra.mxu0 %v437
  %528 = vmatprep.subr.bf16.mxu0 0
  %529 = vmatpush1.bf16.msra.mxu0 %v438
  %530 = vmatprep.subr.bf16.mxu0 0
  %531 = vmatpush1.bf16.msra.mxu0 %v439
  %532 = vmatprep.subr.bf16.mxu0 0
  %533 = vmatpush1.bf16.msra.mxu0 %v440
  %534 = vmatprep.subr.bf16.mxu0 0
  %535 = vmatpush1.bf16.msra.mxu0 %v441
  %536 = vmatprep.mubr.bf16.mxu0 %v265
  %537 = vmatmul.mubr.bf16.gmra.mrb[0].mxu0 %v264
  %v538 = vpop.f32.mrb[0].mxu0
  %v539 = vadd.f32 %v222, %v538
  %v540 = vpop.f32.mrb[0].mxu0
  %v541 = vpop.f32.mrb[0].mxu0
  %v542 = vadd.f32 %v225, %v541
  %v543 = vpop.f32.mrb[0].mxu0
  %544 = vmatprep.mubr.bf16.mxu0 %v270
  %545 = vmatmul.mubr.bf16.gmra.mrb[0].mxu0 %v269
  %v546 = vpop.f32.mrb[0].mxu0
  %v547 = vadd.f32 %v230, %v546
  %v548 = vpop.f32.mrb[0].mxu0
  %v549 = vpop.f32.mrb[0].mxu0
  %v550 = vadd.f32 %v233, %v549
  %v551 = vpop.f32.mrb[0].mxu0
  %552 = vdwg.mxu0
  %553 = vmatprep.subr.bf16.mxu0 0
  %554 = vmatpush1.bf16.msra.mxu0 %v442
  %555 = vmatprep.subr.bf16.mxu0 0
  %556 = vmatpush1.bf16.msra.mxu0 %v443
  %557 = vmatprep.subr.bf16.mxu0 0
  %558 = vmatpush1.bf16.msra.mxu0 %v444
  %559 = vmatprep.subr.bf16.mxu0 0
  %560 = vmatpush1.bf16.msra.mxu0 %v445
  %561 = vmatprep.subr.bf16.mxu0 0
  %562 = vmatpush1.bf16.msra.mxu0 %v446
  %563 = vmatprep.subr.bf16.mxu0 0
  %564 = vmatpush1.bf16.msra.mxu0 %v447
  %565 = vmatprep.subr.bf16.mxu0 0
  %566 = vmatpush1.bf16.msra.mxu0 %v448
  %567 = vmatprep.subr.bf16.mxu0 0
  %568 = vmatpush1.bf16.msra.mxu0 %v449
  %569 = vmatprep.subr.bf16.mxu0 0
  %570 = vmatpush1.bf16.msra.mxu0 %v450
  %571 = vmatprep.subr.bf16.mxu0 0
  %572 = vmatpush1.bf16.msra.mxu0 %v451
  %573 = vmatprep.subr.bf16.mxu0 0
  %574 = vmatpush1.bf16.msra.mxu0 %v452
  %575 = vmatprep.subr.bf16.mxu0 0
  %576 = vmatpush1.bf16.msra.mxu0 %v453
  %577 = vmatprep.subr.bf16.mxu0 0
  %578 = vmatpush1.bf16.msra.mxu0 %v454
  %579 = vmatprep.subr.bf16.mxu0 0
  %580 = vmatpush1.bf16.msra.mxu0 %v455
  %581 = vmatprep.subr.bf16.mxu0 0
  %582 = vmatpush1.bf16.msra.mxu0 %v456
  %583 = vmatprep.subr.bf16.mxu0 0
  %584 = vmatpush1.bf16.msra.mxu0 %v457
  %585 = vmatprep.mubr.bf16.mxu0 %v267
  %586 = vmatmul.mubr.bf16.gmra.mrb[0].mxu0 %v266
  %v587 = vpop.f32.mrb[0].mxu0
  %v588 = vadd.f32 %v539, %v587
  %v589 = vpop.f32.mrb[0].mxu0
  %v590 = vpop.f32.mrb[0].mxu0
  %v591 = vadd.f32 %v542, %v590
  %v592 = vpop.f32.mrb[0].mxu0
  %593 = vmatprep.mubr.bf16.mxu0 %v272
  %594 = vmatmul.mubr.bf16.gmra.mrb[0].mxu0 %v271
  %v595 = vpop.f32.mrb[0].mxu0
  %v596 = vadd.f32 %v547, %v595
  %v597 = vpop.f32.mrb[0].mxu0
  %v598 = vpop.f32.mrb[0].mxu0
  %v599 = vadd.f32 %v550, %v598
  %v600 = vpop.f32.mrb[0].mxu0
  %601 = vdwg.mxu0
  %602 = vmatprep.subr.bf16.mxu0 0
  %603 = vmatpush1.bf16.msra.mxu0 %v458
  %604 = vmatprep.subr.bf16.mxu0 0
  %605 = vmatpush1.bf16.msra.mxu0 %v459
  %606 = vmatprep.subr.bf16.mxu0 0
  %607 = vmatpush1.bf16.msra.mxu0 %v460
  %608 = vmatprep.subr.bf16.mxu0 0
  %609 = vmatpush1.bf16.msra.mxu0 %v461
  %610 = vmatprep.subr.bf16.mxu0 0
  %611 = vmatpush1.bf16.msra.mxu0 0
  %612 = vmatprep.subr.bf16.mxu0 0
  %613 = vmatpush1.bf16.msra.mxu0 0
  %614 = vmatprep.subr.bf16.mxu0 0
  %615 = vmatpush1.bf16.msra.mxu0 0
  %616 = vmatprep.subr.bf16.mxu0 0
  %617 = vmatpush1.bf16.msra.mxu0 0
  %618 = vmatprep.subr.bf16.mxu0 0
  %619 = vmatpush1.bf16.msra.mxu0 0
  %620 = vmatprep.subr.bf16.mxu0 0
  %621 = vmatpush1.bf16.msra.mxu0 0
  %622 = vmatprep.subr.bf16.mxu0 0
  %623 = vmatpush1.bf16.msra.mxu0 0
  %624 = vmatprep.subr.bf16.mxu0 0
  %625 = vmatpush1.bf16.msra.mxu0 0
  %626 = vmatprep.subr.bf16.mxu0 0
  %627 = vmatpush1.bf16.msra.mxu0 0
  %628 = vmatprep.subr.bf16.mxu0 0
  %629 = vmatpush1.bf16.msra.mxu0 0
  %630 = vmatprep.subr.bf16.mxu0 0
  %631 = vmatpush1.bf16.msra.mxu0 0
  %632 = vmatprep.subr.bf16.mxu0 0
  %633 = vmatpush1.bf16.msra.mxu0 0
  %634 = vmatprep.mubr.bf16.mxu0 0
  %635 = vmatmul.mubr.bf16.gmra.mrb[0].mxu0 %v499
  %v636 = vpop.f32.mrb[0].mxu0
  %v637 = vadd.f32 %v588, %v636
  %v638 = vpop.f32.mrb[0].mxu0
  %v639 = vpop.f32.mrb[0].mxu0
  %v640 = vadd.f32 %v591, %v639
  %v641 = vpop.f32.mrb[0].mxu0
  %642 = vmatprep.mubr.bf16.mxu0 0
  %643 = vmatmul.mubr.bf16.gmra.mrb[0].mxu0 %v502
  %v644 = vpop.f32.mrb[0].mxu0
  %v645 = vadd.f32 %v596, %v644
  %v646 = vpop.f32.mrb[0].mxu0
  %v647 = vpop.f32.mrb[0].mxu0
  %v648 = vadd.f32 %v599, %v647
  %v649 = vpop.f32.mrb[0].mxu0
  %650 = vdwg.mxu0
  %v651 = vld [vmem:[%s3] sm:$0x1]
  %v653 = vlaneseq
  %v654 = vshrl.u32 %v653, 7
  %v655 = vsub.s32 0, %v654
  %v656 = vrot.slane %v651, %v655
  %v658 = vadd.f32 %v637, %v656
  %v659 = vadd.f32 %v640, %v656
  %v660 = vadd.f32 %v645, %v656
  %v661 = vadd.f32 %v648, %v656
  %v662 = vmax.f32 %v658, 0.0
  %v663 = vmax.f32 %v659, 0.0
  %v664 = vmax.f32 %v660, 0.0
  %v665 = vmax.f32 %v661, 0.0
  %v666 = vpack.c.bf16 %v663, %v662
  %v667 = vpack.c.bf16 %v665, %v664
  %v670 = vunpack.c.l.b16 %v666
  %v671 = vunpack.c.h.b16 %v666
  %v672 = vunpack.c.l.b16 %v667
  %v673 = vunpack.c.h.b16 %v667
  %v674 = vpack.c.b16 %v670, %v670
  %v675 = vpack.c.b16 %v671, %v671
  %v676 = vpack.c.b16 %v672, %v672
  %v677 = vpack.c.b16 %v673, %v673
  %682 = vst [vmem:[%s4] sm:$0xf] %v674
  %683 = vst [vmem:[%s4 + $0x4] sm:$0xf] %v675
  %684 = vst [vmem:[%s4 + $0x8] sm:$0xf] %v676
  %685 = vst [vmem:[%s4 + $0xc] sm:$0xf] %v677
  // Predicated region
  $region18: #{net_fwd.96} parent=0 // pred_check
    _
  $region19: #{net_fwd.96} parent=0 // pred_check_branch
    %687 = sbr.rel (0) target = $region21
  $region20: #{net_fwd.96} parent=0 // pred_region
    _
  $region21: #{net_fwd.96} parent=0 // pred_fallthru
    _
  // Predicated region
  $region22: #{net_fwd.96} parent=0 // pred_check
    _
  $region23: #{net_fwd.96} parent=0 // pred_check_branch
    %689 = sbr.rel (0) target = $region25
  $region24: #{net_fwd.96} parent=0 // pred_region
    _
  $region25: #{net_fwd.96} parent=0 // pred_fallthru
    _

// kernel: net_fwd.98
$region0: #{net_fwd.98}
  #allocation0 [shape = 'u32[]', space=smem, size = 0x4, offset = 0x4, fixed_abs, tag = 'smem constant byte address 0x4 - core index']
  #allocation1 [shape = 'u32[144,128]{1,0:T(1,128)}', space=vmem, size = 0x12000, scoped, tag = 'internal scratch']
  %s0 = inlined_call_operand.vmem [shape: bf16[32,384], index: 0, kind: input, shape index: {}]
  %s1 = inlined_call_operand.vmem [shape: bf16[384,128], index: 1, kind: input, shape index: {}]
  %s2 = inlined_call_operand.vmem [shape: f32[1,128], index: 2, kind: input, shape index: {}]
  %s3 = inlined_call_operand.vmem [shape: bf16[32,128], index: 3, kind: input, shape index: {}]
  %s4 = inlined_call_operand.vmem [shape: bf16[128,128], index: 4, kind: input, shape index: {}]
  %s5 = inlined_call_operand.vmem [shape: bf16[32,128], index: 5, kind: output, shape index: {}]
  %s6 = sld [smem:[#allocation0]]
  $region30: #{net_fwd.98} parent=0
    _
  %s8 = ssub.s32 1, %s6
  %s9 = scalar_select 0, %s8, %s6
  // Predicated region
  $region2: #{net_fwd.98} parent=0 // pred_check
    _
  $region3: #{net_fwd.98} parent=0 // pred_check_branch
    %11 = sbr.rel (0) target = $region5
  $region4: #{net_fwd.98} parent=0 // pred_region
    _
  $region5: #{net_fwd.98} parent=0 // pred_fallthru
    _
  // Predicated region
  $region6: #{net_fwd.98} parent=0 // pred_check
    _
  $region7: #{net_fwd.98} parent=0 // pred_check_branch
    %13 = sbr.rel (0) target = $region9
  $region8: #{net_fwd.98} parent=0 // pred_region
    _
  $region9: #{net_fwd.98} parent=0 // pred_fallthru
    _
  // Predicated region
  $region10: #{net_fwd.98} parent=0 // pred_check
    _
  $region11: #{net_fwd.98} parent=0 // pred_check_branch
    %15 = sbr.rel (0) target = $region13
  $region12: #{net_fwd.98} parent=0 // pred_region
    _
  $region13: #{net_fwd.98} parent=0 // pred_fallthru
    _
  // Predicated region
  $region14: #{net_fwd.98} parent=0 // pred_check
    _
  $region15: #{net_fwd.98} parent=0 // pred_check_branch
    %17 = sbr.rel (0) target = $region17
  $region16: #{net_fwd.98} parent=0 // pred_region
    _
  $region17: #{net_fwd.98} parent=0 // pred_fallthru
    _
  // Predicated region
  $region18: #{net_fwd.98} parent=0 // pred_check
    _
  $region19: #{net_fwd.98} parent=0 // pred_check_branch
    %19 = sbr.rel (0) target = $region21
  $region20: #{net_fwd.98} parent=0 // pred_region
    _
  $region21: #{net_fwd.98} parent=0 // pred_fallthru
    _
  %v21 = vld [vmem:[%s0] sm:$0xff]
  %v22 = vld [vmem:[%s0 + $0x8] sm:$0xf]
  %v23 = vld [vmem:[%s0 + $0xc] sm:$0xff]
  %v24 = vld [vmem:[%s0 + $0x14] sm:$0xf]
  %v25 = vld [vmem:[%s0 + $0x18] sm:$0xff]
  %v26 = vld [vmem:[%s0 + $0x20] sm:$0xf]
  %v27 = vld [vmem:[%s0 + $0x24] sm:$0xff]
  %v28 = vld [vmem:[%s0 + $0x2c] sm:$0xf]
  %v29 = vld [vmem:[%s1] sm:$0xf]
  %v30 = vld [vmem:[%s1 + $0x4] sm:$0xf]
  %v31 = vld [vmem:[%s1 + $0x8] sm:$0xf]
  %v32 = vld [vmem:[%s1 + $0xc] sm:$0xf]
  %v33 = vld [vmem:[%s1 + $0x10] sm:$0xf]
  %v34 = vld [vmem:[%s1 + $0x14] sm:$0xf]
  %v35 = vld [vmem:[%s1 + $0x18] sm:$0xf]
  %v36 = vld [vmem:[%s1 + $0x1c] sm:$0xf]
  %v37 = vld [vmem:[%s1 + $0x20] sm:$0xf]
  %v38 = vld [vmem:[%s1 + $0x24] sm:$0xf]
  %v39 = vld [vmem:[%s1 + $0x28] sm:$0xf]
  %v40 = vld [vmem:[%s1 + $0x2c] sm:$0xf]
  %v41 = vld [vmem:[%s1 + $0x30] sm:$0xf]
  %v42 = vld [vmem:[%s1 + $0x34] sm:$0xf]
  %v43 = vld [vmem:[%s1 + $0x38] sm:$0xf]
  %v44 = vld [vmem:[%s1 + $0x3c] sm:$0xf]
  %v45 = vld [vmem:[%s1 + $0x40] sm:$0xf]
  %v46 = vld [vmem:[%s1 + $0x44] sm:$0xf]
  %v47 = vld [vmem:[%s1 + $0x48] sm:$0xf]
  %v48 = vld [vmem:[%s1 + $0x4c] sm:$0xf]
  %v49 = vld [vmem:[%s1 + $0x50] sm:$0xf]
  %v50 = vld [vmem:[%s1 + $0x54] sm:$0xf]
  %v51 = vld [vmem:[%s1 + $0x58] sm:$0xf]
  %v52 = vld [vmem:[%s1 + $0x5c] sm:$0xf]
  %v53 = vld [vmem:[%s1 + $0x60] sm:$0xf]
  %v54 = vld [vmem:[%s1 + $0x64] sm:$0xf]
  %v55 = vld [vmem:[%s1 + $0x68] sm:$0xf]
  %v56 = vld [vmem:[%s1 + $0x6c] sm:$0xf]
  %v57 = vld [vmem:[%s1 + $0x70] sm:$0xf]
  %v58 = vld [vmem:[%s1 + $0x74] sm:$0xf]
  %v59 = vld [vmem:[%s1 + $0x78] sm:$0xf]
  %v60 = vld [vmem:[%s1 + $0x7c] sm:$0xf]
  %v61 = vld [vmem:[%s1 + $0x80] sm:$0xf]
  %v62 = vld [vmem:[%s1 + $0x84] sm:$0xf]
  %v63 = vld [vmem:[%s1 + $0x88] sm:$0xf]
  %v64 = vld [vmem:[%s1 + $0x8c] sm:$0xf]
  %v65 = vld [vmem:[%s1 + $0x90] sm:$0xf]
  %v66 = vld [vmem:[%s1 + $0x94] sm:$0xf]
  %v67 = vld [vmem:[%s1 + $0x98] sm:$0xf]
  %v68 = vld [vmem:[%s1 + $0x9c] sm:$0xf]
  %v69 = vld [vmem:[%s1 + $0xa0] sm:$0xf]
  %v70 = vld [vmem:[%s1 + $0xa4] sm:$0xf]
  %v71 = vld [vmem:[%s1 + $0xa8] sm:$0xf]
  %v72 = vld [vmem:[%s1 + $0xac] sm:$0xf]
  %v73 = vld [vmem:[%s1 + $0xb0] sm:$0xf]
  %v74 = vld [vmem:[%s1 + $0xb4] sm:$0xf]
  %v75 = vld [vmem:[%s1 + $0xb8] sm:$0xf]
  %v76 = vld [vmem:[%s1 + $0xbc] sm:$0xf]
  %v77 = vld [vmem:[%s3] sm:$0xf]
  %v78 = vld [vmem:[%s3 + $0x4] sm:$0xf]
  %v79 = vld [vmem:[%s3 + $0x8] sm:$0xf]
  %v80 = vld [vmem:[%s3 + $0xc] sm:$0xf]
  %v81 = vld [vmem:[%s4] sm:$0xf]
  %v82 = vld [vmem:[%s4 + $0x4] sm:$0xf]
  %v83 = vld [vmem:[%s4 + $0x8] sm:$0xf]
  %v84 = vld [vmem:[%s4 + $0xc] sm:$0xf]
  %v85 = vld [vmem:[%s4 + $0x10] sm:$0xf]
  %v86 = vld [vmem:[%s4 + $0x14] sm:$0xf]
  %v87 = vld [vmem:[%s4 + $0x18] sm:$0xf]
  %v88 = vld [vmem:[%s4 + $0x1c] sm:$0xf]
  %v89 = vld [vmem:[%s4 + $0x20] sm:$0xf]
  %v90 = vld [vmem:[%s4 + $0x24] sm:$0xf]
  %v91 = vld [vmem:[%s4 + $0x28] sm:$0xf]
  %v92 = vld [vmem:[%s4 + $0x2c] sm:$0xf]
  %v93 = vld [vmem:[%s4 + $0x30] sm:$0xf]
  %v94 = vld [vmem:[%s4 + $0x34] sm:$0xf]
  %v95 = vld [vmem:[%s4 + $0x38] sm:$0xf]
  %v96 = vld [vmem:[%s4 + $0x3c] sm:$0xf]
  %v101 = vunpack.c.l.b16 %v77
  %v102 = vunpack.c.l.b16 %v78
  %v103 = vunpack.c.l.b16 %v79
  %v104 = vunpack.c.l.b16 %v80
  %v105 = vpack.c.b16 %v102, %v101
  %v106 = vpack.c.b16 %v104, %v103
  %v125 = vunpack.c.l.b16 %v81
  %v126 = vunpack.c.l.b16 %v82
  %v127 = vunpack.c.l.b16 %v83
  %v128 = vunpack.c.l.b16 %v84
  %v129 = vunpack.c.l.b16 %v85
  %v130 = vunpack.c.l.b16 %v86
  %v131 = vunpack.c.l.b16 %v87
  %v132 = vunpack.c.l.b16 %v88
  %v133 = vunpack.c.l.b16 %v89
  %v134 = vunpack.c.l.b16 %v90
  %v135 = vunpack.c.l.b16 %v91
  %v136 = vunpack.c.l.b16 %v92
  %v137 = vunpack.c.l.b16 %v93
  %v138 = vunpack.c.l.b16 %v94
  %v139 = vunpack.c.l.b16 %v95
  %v140 = vunpack.c.l.b16 %v96
  %v141 = vpack.c.b16 %v126, %v125
  %v142 = vpack.c.b16 %v128, %v127
  %v143 = vpack.c.b16 %v130, %v129
  %v144 = vpack.c.b16 %v132, %v131
  %v145 = vpack.c.b16 %v134, %v133
  %v146 = vpack.c.b16 %v136, %v135
  %v147 = vpack.c.b16 %v138, %v137
  %v148 = vpack.c.b16 %v140, %v139
  %157 = vmatprep.subr.bf16.mxu0 0
  %158 = vmatpush1.bf16.msra.mxu0 %v141
  %159 = vmatprep.subr.bf16.mxu0 0
  %160 = vmatpush1.bf16.msra.mxu0 %v142
  %161 = vmatprep.subr.bf16.mxu0 0
  %162 = vmatpush1.bf16.msra.mxu0 %v143
  %163 = vmatprep.subr.bf16.mxu0 0
  %164 = vmatpush1.bf16.msra.mxu0 %v144
  %165 = vmatprep.subr.bf16.mxu0 0
  %166 = vmatpush1.bf16.msra.mxu0 %v145
  %167 = vmatprep.subr.bf16.mxu0 0
  %168 = vmatpush1.bf16.msra.mxu0 %v146
  %169 = vmatprep.subr.bf16.mxu0 0
  %170 = vmatpush1.bf16.msra.mxu0 %v147
  %171 = vmatprep.subr.bf16.mxu0 0
  %172 = vmatpush1.bf16.msra.mxu0 %v148
  %173 = vmatprep.subr.bf16.mxu0 0
  %174 = vmatpush1.bf16.msra.mxu0 0
  %175 = vmatprep.subr.bf16.mxu0 0
  %176 = vmatpush1.bf16.msra.mxu0 0
  %177 = vmatprep.subr.bf16.mxu0 0
  %178 = vmatpush1.bf16.msra.mxu0 0
  %179 = vmatprep.subr.bf16.mxu0 0
  %180 = vmatpush1.bf16.msra.mxu0 0
  %181 = vmatprep.subr.bf16.mxu0 0
  %182 = vmatpush1.bf16.msra.mxu0 0
  %183 = vmatprep.subr.bf16.mxu0 0
  %184 = vmatpush1.bf16.msra.mxu0 0
  %185 = vmatprep.subr.bf16.mxu0 0
  %186 = vmatpush1.bf16.msra.mxu0 0
  %187 = vmatprep.subr.bf16.mxu0 0
  %188 = vmatpush1.bf16.msra.mxu0 0
  %189 = vmatprep.mubr.bf16.mxu0 0
  %190 = vmatmul.mubr.bf16.gmra.mrb[0].mxu0 %v105
  %v191 = vpop.f32.mrb[0].mxu0
  %v192 = vadd.f32 0.0, %v191
  %v193 = vpop.f32.mrb[0].mxu0
  %v194 = vpop.f32.mrb[0].mxu0
  %v195 = vadd.f32 0.0, %v194
  %v196 = vpop.f32.mrb[0].mxu0
  %197 = vmatprep.mubr.bf16.mxu0 0
  %198 = vmatmul.mubr.bf16.gmra.mrb[0].mxu0 %v106
  %v199 = vpop.f32.mrb[0].mxu0
  %v200 = vadd.f32 0.0, %v199
  %v201 = vpop.f32.mrb[0].mxu0
  %v202 = vpop.f32.mrb[0].mxu0
  %v203 = vadd.f32 0.0, %v202
  %v204 = vpop.f32.mrb[0].mxu0
  %205 = vdwg.mxu0
  %v214 = vunpack.c.l.b16 %v21
  %v215 = vunpack.c.h.b16 %v21
  %v216 = vunpack.c.l.b16 %v22
  %v217 = vunpack.c.l.b16 %v23
  %v218 = vunpack.c.h.b16 %v23
  %v219 = vunpack.c.l.b16 %v24
  %v220 = vunpack.c.l.b16 %v25
  %v221 = vunpack.c.h.b16 %v25
  %v222 = vunpack.c.l.b16 %v26
  %v223 = vunpack.c.l.b16 %v27
  %v224 = vunpack.c.h.b16 %v27
  %v225 = vunpack.c.l.b16 %v28
  %v226 = vpack.c.b16 %v217, %v214
  %v227 = vpack.c.b16 %v218, %v215
  %v228 = vpack.c.b16 %v219, %v216
  %v229 = vpack.c.b16 %v223, %v220
  %v230 = vpack.c.b16 %v224, %v221
  %v231 = vpack.c.b16 %v225, %v222
  %v286 = vunpack.c.l.b16 %v29
  %v287 = vunpack.c.l.b16 %v30
  %v288 = vunpack.c.l.b16 %v31
  %v289 = vunpack.c.l.b16 %v32
  %v290 = vunpack.c.l.b16 %v33
  %v291 = vunpack.c.l.b16 %v34
  %v292 = vunpack.c.l.b16 %v35
  %v293 = vunpack.c.l.b16 %v36
  %v294 = vunpack.c.l.b16 %v37
  %v295 = vunpack.c.l.b16 %v38
  %v296 = vunpack.c.l.b16 %v39
  %v297 = vunpack.c.l.b16 %v40
  %v298 = vunpack.c.l.b16 %v41
  %v299 = vunpack.c.l.b16 %v42
  %v300 = vunpack.c.l.b16 %v43
  %v301 = vunpack.c.l.b16 %v44
  %v302 = vunpack.c.l.b16 %v45
  %v303 = vunpack.c.l.b16 %v46
  %v304 = vunpack.c.l.b16 %v47
  %v305 = vunpack.c.l.b16 %v48
  %v306 = vunpack.c.l.b16 %v49
  %v307 = vunpack.c.l.b16 %v50
  %v308 = vunpack.c.l.b16 %v51
  %v309 = vunpack.c.l.b16 %v52
  %v310 = vunpack.c.l.b16 %v53
  %v311 = vunpack.c.l.b16 %v54
  %v312 = vunpack.c.l.b16 %v55
  %v313 = vunpack.c.l.b16 %v56
  %v314 = vunpack.c.l.b16 %v57
  %v315 = vunpack.c.l.b16 %v58
  %v316 = vunpack.c.l.b16 %v59
  %v317 = vunpack.c.l.b16 %v60
  %v318 = vunpack.c.l.b16 %v61
  %v319 = vunpack.c.l.b16 %v62
  %v320 = vunpack.c.l.b16 %v63
  %v321 = vunpack.c.l.b16 %v64
  %v322 = vunpack.c.l.b16 %v65
  %v323 = vunpack.c.l.b16 %v66
  %v324 = vunpack.c.l.b16 %v67
  %v325 = vunpack.c.l.b16 %v68
  %v326 = vunpack.c.l.b16 %v69
  %v327 = vunpack.c.l.b16 %v70
  %v328 = vunpack.c.l.b16 %v71
  %v329 = vunpack.c.l.b16 %v72
  %v330 = vunpack.c.l.b16 %v73
  %v331 = vunpack.c.l.b16 %v74
  %v332 = vunpack.c.l.b16 %v75
  %v333 = vunpack.c.l.b16 %v76
  %v334 = vpack.c.b16 %v287, %v286
  %v335 = vpack.c.b16 %v289, %v288
  %v336 = vpack.c.b16 %v291, %v290
  %v337 = vpack.c.b16 %v293, %v292
  %v338 = vpack.c.b16 %v295, %v294
  %v339 = vpack.c.b16 %v297, %v296
  %v340 = vpack.c.b16 %v299, %v298
  %v341 = vpack.c.b16 %v301, %v300
  %v342 = vpack.c.b16 %v303, %v302
  %v343 = vpack.c.b16 %v305, %v304
  %v344 = vpack.c.b16 %v307, %v306
  %v345 = vpack.c.b16 %v309, %v308
  %v346 = vpack.c.b16 %v311, %v310
  %v347 = vpack.c.b16 %v313, %v312
  %v348 = vpack.c.b16 %v315, %v314
  %v349 = vpack.c.b16 %v317, %v316
  %v350 = vpack.c.b16 %v319, %v318
  %v351 = vpack.c.b16 %v321, %v320
  %v352 = vpack.c.b16 %v323, %v322
  %v353 = vpack.c.b16 %v325, %v324
  %v354 = vpack.c.b16 %v327, %v326
  %v355 = vpack.c.b16 %v329, %v328
  %v356 = vpack.c.b16 %v331, %v330
  %v357 = vpack.c.b16 %v333, %v332
  %382 = vmatprep.subr.bf16.mxu0 0
  %383 = vmatpush1.bf16.msra.mxu0 %v334
  %384 = vmatprep.subr.bf16.mxu0 0
  %385 = vmatpush1.bf16.msra.mxu0 %v335
  %386 = vmatprep.subr.bf16.mxu0 0
  %387 = vmatpush1.bf16.msra.mxu0 %v336
  %388 = vmatprep.subr.bf16.mxu0 0
  %389 = vmatpush1.bf16.msra.mxu0 %v337
  %390 = vmatprep.subr.bf16.mxu0 0
  %391 = vmatpush1.bf16.msra.mxu0 %v338
  %392 = vmatprep.subr.bf16.mxu0 0
  %393 = vmatpush1.bf16.msra.mxu0 %v339
  %394 = vmatprep.subr.bf16.mxu0 0
  %395 = vmatpush1.bf16.msra.mxu0 %v340
  %396 = vmatprep.subr.bf16.mxu0 0
  %397 = vmatpush1.bf16.msra.mxu0 %v341
  %398 = vmatprep.subr.bf16.mxu0 0
  %399 = vmatpush1.bf16.msra.mxu0 %v342
  %400 = vmatprep.subr.bf16.mxu0 0
  %401 = vmatpush1.bf16.msra.mxu0 %v343
  %402 = vmatprep.subr.bf16.mxu0 0
  %403 = vmatpush1.bf16.msra.mxu0 %v344
  %404 = vmatprep.subr.bf16.mxu0 0
  %405 = vmatpush1.bf16.msra.mxu0 %v345
  %406 = vmatprep.subr.bf16.mxu0 0
  %407 = vmatpush1.bf16.msra.mxu0 %v346
  %408 = vmatprep.subr.bf16.mxu0 0
  %409 = vmatpush1.bf16.msra.mxu0 %v347
  %410 = vmatprep.subr.bf16.mxu0 0
  %411 = vmatpush1.bf16.msra.mxu0 %v348
  %412 = vmatprep.subr.bf16.mxu0 0
  %413 = vmatpush1.bf16.msra.mxu0 %v349
  %414 = vmatprep.mubr.bf16.mxu0 %v227
  %415 = vmatmul.mubr.bf16.gmra.mrb[0].mxu0 %v226
  %v416 = vpop.f32.mrb[0].mxu0
  %v417 = vadd.f32 %v192, %v416
  %v418 = vpop.f32.mrb[0].mxu0
  %v419 = vpop.f32.mrb[0].mxu0
  %v420 = vadd.f32 %v195, %v419
  %v421 = vpop.f32.mrb[0].mxu0
  %422 = vmatprep.mubr.bf16.mxu0 %v230
  %423 = vmatmul.mubr.bf16.gmra.mrb[0].mxu0 %v229
  %v424 = vpop.f32.mrb[0].mxu0
  %v425 = vadd.f32 %v200, %v424
  %v426 = vpop.f32.mrb[0].mxu0
  %v427 = vpop.f32.mrb[0].mxu0
  %v428 = vadd.f32 %v203, %v427
  %v429 = vpop.f32.mrb[0].mxu0
  %430 = vdwg.mxu0
  %431 = vmatprep.subr.bf16.mxu0 0
  %432 = vmatpush1.bf16.msra.mxu0 %v350
  %433 = vmatprep.subr.bf16.mxu0 0
  %434 = vmatpush1.bf16.msra.mxu0 %v351
  %435 = vmatprep.subr.bf16.mxu0 0
  %436 = vmatpush1.bf16.msra.mxu0 %v352
  %437 = vmatprep.subr.bf16.mxu0 0
  %438 = vmatpush1.bf16.msra.mxu0 %v353
  %439 = vmatprep.subr.bf16.mxu0 0
  %440 = vmatpush1.bf16.msra.mxu0 %v354
  %441 = vmatprep.subr.bf16.mxu0 0
  %442 = vmatpush1.bf16.msra.mxu0 %v355
  %443 = vmatprep.subr.bf16.mxu0 0
  %444 = vmatpush1.bf16.msra.mxu0 %v356
  %445 = vmatprep.subr.bf16.mxu0 0
  %446 = vmatpush1.bf16.msra.mxu0 %v357
  %447 = vmatprep.subr.bf16.mxu0 0
  %448 = vmatpush1.bf16.msra.mxu0 0
  %449 = vmatprep.subr.bf16.mxu0 0
  %450 = vmatpush1.bf16.msra.mxu0 0
  %451 = vmatprep.subr.bf16.mxu0 0
  %452 = vmatpush1.bf16.msra.mxu0 0
  %453 = vmatprep.subr.bf16.mxu0 0
  %454 = vmatpush1.bf16.msra.mxu0 0
  %455 = vmatprep.subr.bf16.mxu0 0
  %456 = vmatpush1.bf16.msra.mxu0 0
  %457 = vmatprep.subr.bf16.mxu0 0
  %458 = vmatpush1.bf16.msra.mxu0 0
  %459 = vmatprep.subr.bf16.mxu0 0
  %460 = vmatpush1.bf16.msra.mxu0 0
  %461 = vmatprep.subr.bf16.mxu0 0
  %462 = vmatpush1.bf16.msra.mxu0 0
  %463 = vmatprep.mubr.bf16.mxu0 0
  %464 = vmatmul.mubr.bf16.gmra.mrb[0].mxu0 %v228
  %v465 = vpop.f32.mrb[0].mxu0
  %v466 = vadd.f32 %v417, %v465
  %v467 = vpop.f32.mrb[0].mxu0
  %v468 = vpop.f32.mrb[0].mxu0
  %v469 = vadd.f32 %v420, %v468
  %v470 = vpop.f32.mrb[0].mxu0
  %471 = vmatprep.mubr.bf16.mxu0 0
  %472 = vmatmul.mubr.bf16.gmra.mrb[0].mxu0 %v231
  %v473 = vpop.f32.mrb[0].mxu0
  %v474 = vadd.f32 %v425, %v473
  %v475 = vpop.f32.mrb[0].mxu0
  %v476 = vpop.f32.mrb[0].mxu0
  %v477 = vadd.f32 %v428, %v476
  %v478 = vpop.f32.mrb[0].mxu0
  %479 = vdwg.mxu0
  %v480 = vld [vmem:[%s2] sm:$0x1]
  %v482 = vlaneseq
  %v483 = vshrl.u32 %v482, 7
  %v484 = vsub.s32 0, %v483
  %v485 = vrot.slane %v480, %v484
  %v487 = vadd.f32 %v466, %v485
  %v488 = vadd.f32 %v469, %v485
  %v489 = vadd.f32 %v474, %v485
  %v490 = vadd.f32 %v477, %v485
  %v491 = vmax.f32 %v487, 0.0
  %v492 = vmax.f32 %v488, 0.0
  %v493 = vmax.f32 %v489, 0.0
  %v494 = vmax.f32 %v490, 0.0
  %v495 = vpack.c.bf16 %v492, %v491
  %v496 = vpack.c.bf16 %v494, %v493
  %v499 = vunpack.c.l.b16 %v495
  %v500 = vunpack.c.h.b16 %v495
  %v501 = vunpack.c.l.b16 %v496
  %v502 = vunpack.c.h.b16 %v496
  %v503 = vpack.c.b16 %v499, %v499
  %v504 = vpack.c.b16 %v500, %v500
  %v505 = vpack.c.b16 %v501, %v501
  %v506 = vpack.c.b16 %v502, %v502
  %511 = vst [vmem:[%s5] sm:$0xf] %v503
  %512 = vst [vmem:[%s5 + $0x4] sm:$0xf] %v504
  %513 = vst [vmem:[%s5 + $0x8] sm:$0xf] %v505
  %514 = vst [vmem:[%s5 + $0xc] sm:$0xf] %v506
  // Predicated region
  $region22: #{net_fwd.98} parent=0 // pred_check
    _
  $region23: #{net_fwd.98} parent=0 // pred_check_branch
    %516 = sbr.rel (0) target = $region25
  $region24: #{net_fwd.98} parent=0 // pred_region
    _
  $region25: #{net_fwd.98} parent=0 // pred_fallthru
    _
  // Predicated region
  $region26: #{net_fwd.98} parent=0 // pred_check
    _
  $region27: #{net_fwd.98} parent=0 // pred_check_branch
    %518 = sbr.rel (0) target = $region29
  $region28: #{net_fwd.98} parent=0 // pred_region
    _
  $region29: #{net_fwd.98} parent=0 // pred_fallthru
    _

// kernel: net_fwd.100
$region0: #{net_fwd.100}
  #allocation0 [shape = 'u32[]', space=smem, size = 0x4, offset = 0x4, fixed_abs, tag = 'smem constant byte address 0x4 - core index']
  #allocation1 [shape = 'u32[144,128]{1,0:T(1,128)}', space=vmem, size = 0x12000, scoped, tag = 'internal scratch']
  %s0 = inlined_call_operand.vmem [shape: bf16[32,384], index: 0, kind: input, shape index: {}]
  %s1 = inlined_call_operand.vmem [shape: bf16[384,128], index: 1, kind: input, shape index: {}]
  %s2 = inlined_call_operand.vmem [shape: f32[1,128], index: 2, kind: input, shape index: {}]
  %s3 = inlined_call_operand.vmem [shape: bf16[32,128], index: 3, kind: input, shape index: {}]
  %s4 = inlined_call_operand.vmem [shape: bf16[128,128], index: 4, kind: input, shape index: {}]
  %s5 = inlined_call_operand.vmem [shape: bf16[32,128], index: 5, kind: input, shape index: {}]
  %s6 = inlined_call_operand.vmem [shape: bf16[32,128], index: 6, kind: output, shape index: {}]
  %s7 = sld [smem:[#allocation0]]
  $region34: #{net_fwd.100} parent=0
    _
  %s9 = ssub.s32 1, %s7
  %s10 = scalar_select 0, %s9, %s7
  // Predicated region
  $region2: #{net_fwd.100} parent=0 // pred_check
    _
  $region3: #{net_fwd.100} parent=0 // pred_check_branch
    %12 = sbr.rel (0) target = $region5
  $region4: #{net_fwd.100} parent=0 // pred_region
    _
  $region5: #{net_fwd.100} parent=0 // pred_fallthru
    _
  // Predicated region
  $region6: #{net_fwd.100} parent=0 // pred_check
    _
  $region7: #{net_fwd.100} parent=0 // pred_check_branch
    %14 = sbr.rel (0) target = $region9
  $region8: #{net_fwd.100} parent=0 // pred_region
    _
  $region9: #{net_fwd.100} parent=0 // pred_fallthru
    _
  // Predicated region
  $region10: #{net_fwd.100} parent=0 // pred_check
    _
  $region11: #{net_fwd.100} parent=0 // pred_check_branch
    %16 = sbr.rel (0) target = $region13
  $region12: #{net_fwd.100} parent=0 // pred_region
    _
  $region13: #{net_fwd.100} parent=0 // pred_fallthru
    _
  // Predicated region
  $region14: #{net_fwd.100} parent=0 // pred_check
    _
  $region15: #{net_fwd.100} parent=0 // pred_check_branch
    %18 = sbr.rel (0) target = $region17
  $region16: #{net_fwd.100} parent=0 // pred_region
    _
  $region17: #{net_fwd.100} parent=0 // pred_fallthru
    _
  // Predicated region
  $region18: #{net_fwd.100} parent=0 // pred_check
    _
  $region19: #{net_fwd.100} parent=0 // pred_check_branch
    %20 = sbr.rel (0) target = $region21
  $region20: #{net_fwd.100} parent=0 // pred_region
    _
  $region21: #{net_fwd.100} parent=0 // pred_fallthru
    _
  // Predicated region
  $region22: #{net_fwd.100} parent=0 // pred_check
    _
  $region23: #{net_fwd.100} parent=0 // pred_check_branch
    %22 = sbr.rel (0) target = $region25
  $region24: #{net_fwd.100} parent=0 // pred_region
    _
  $region25: #{net_fwd.100} parent=0 // pred_fallthru
    _
  %v24 = vld [vmem:[%s0] sm:$0xff]
  %v25 = vld [vmem:[%s0 + $0x8] sm:$0xf]
  %v26 = vld [vmem:[%s0 + $0xc] sm:$0xff]
  %v27 = vld [vmem:[%s0 + $0x14] sm:$0xf]
  %v28 = vld [vmem:[%s0 + $0x18] sm:$0xff]
  %v29 = vld [vmem:[%s0 + $0x20] sm:$0xf]
  %v30 = vld [vmem:[%s0 + $0x24] sm:$0xff]
  %v31 = vld [vmem:[%s0 + $0x2c] sm:$0xf]
  %v32 = vld [vmem:[%s1] sm:$0xf]
  %v33 = vld [vmem:[%s1 + $0x4] sm:$0xf]
  %v34 = vld [vmem:[%s1 + $0x8] sm:$0xf]
  %v35 = vld [vmem:[%s1 + $0xc] sm:$0xf]
  %v36 = vld [vmem:[%s1 + $0x10] sm:$0xf]
  %v37 = vld [vmem:[%s1 + $0x14] sm:$0xf]
  %v38 = vld [vmem:[%s1 + $0x18] sm:$0xf]
  %v39 = vld [vmem:[%s1 + $0x1c] sm:$0xf]
  %v40 = vld [vmem:[%s1 + $0x20] sm:$0xf]
  %v41 = vld [vmem:[%s1 + $0x24] sm:$0xf]
  %v42 = vld [vmem:[%s1 + $0x28] sm:$0xf]
  %v43 = vld [vmem:[%s1 + $0x2c] sm:$0xf]
  %v44 = vld [vmem:[%s1 + $0x30] sm:$0xf]
  %v45 = vld [vmem:[%s1 + $0x34] sm:$0xf]
  %v46 = vld [vmem:[%s1 + $0x38] sm:$0xf]
  %v47 = vld [vmem:[%s1 + $0x3c] sm:$0xf]
  %v48 = vld [vmem:[%s1 + $0x40] sm:$0xf]
  %v49 = vld [vmem:[%s1 + $0x44] sm:$0xf]
  %v50 = vld [vmem:[%s1 + $0x48] sm:$0xf]
  %v51 = vld [vmem:[%s1 + $0x4c] sm:$0xf]
  %v52 = vld [vmem:[%s1 + $0x50] sm:$0xf]
  %v53 = vld [vmem:[%s1 + $0x54] sm:$0xf]
  %v54 = vld [vmem:[%s1 + $0x58] sm:$0xf]
  %v55 = vld [vmem:[%s1 + $0x5c] sm:$0xf]
  %v56 = vld [vmem:[%s1 + $0x60] sm:$0xf]
  %v57 = vld [vmem:[%s1 + $0x64] sm:$0xf]
  %v58 = vld [vmem:[%s1 + $0x68] sm:$0xf]
  %v59 = vld [vmem:[%s1 + $0x6c] sm:$0xf]
  %v60 = vld [vmem:[%s1 + $0x70] sm:$0xf]
  %v61 = vld [vmem:[%s1 + $0x74] sm:$0xf]
  %v62 = vld [vmem:[%s1 + $0x78] sm:$0xf]
  %v63 = vld [vmem:[%s1 + $0x7c] sm:$0xf]
  %v64 = vld [vmem:[%s1 + $0x80] sm:$0xf]
  %v65 = vld [vmem:[%s1 + $0x84] sm:$0xf]
  %v66 = vld [vmem:[%s1 + $0x88] sm:$0xf]
  %v67 = vld [vmem:[%s1 + $0x8c] sm:$0xf]
  %v68 = vld [vmem:[%s1 + $0x90] sm:$0xf]
  %v69 = vld [vmem:[%s1 + $0x94] sm:$0xf]
  %v70 = vld [vmem:[%s1 + $0x98] sm:$0xf]
  %v71 = vld [vmem:[%s1 + $0x9c] sm:$0xf]
  %v72 = vld [vmem:[%s1 + $0xa0] sm:$0xf]
  %v73 = vld [vmem:[%s1 + $0xa4] sm:$0xf]
  %v74 = vld [vmem:[%s1 + $0xa8] sm:$0xf]
  %v75 = vld [vmem:[%s1 + $0xac] sm:$0xf]
  %v76 = vld [vmem:[%s1 + $0xb0] sm:$0xf]
  %v77 = vld [vmem:[%s1 + $0xb4] sm:$0xf]
  %v78 = vld [vmem:[%s1 + $0xb8] sm:$0xf]
  %v79 = vld [vmem:[%s1 + $0xbc] sm:$0xf]
  %v80 = vld [vmem:[%s3] sm:$0xf]
  %v81 = vld [vmem:[%s3 + $0x4] sm:$0xf]
  %v82 = vld [vmem:[%s3 + $0x8] sm:$0xf]
  %v83 = vld [vmem:[%s3 + $0xc] sm:$0xf]
  %v84 = vld [vmem:[%s4] sm:$0xf]
  %v85 = vld [vmem:[%s4 + $0x4] sm:$0xf]
  %v86 = vld [vmem:[%s4 + $0x8] sm:$0xf]
  %v87 = vld [vmem:[%s4 + $0xc] sm:$0xf]
  %v88 = vld [vmem:[%s4 + $0x10] sm:$0xf]
  %v89 = vld [vmem:[%s4 + $0x14] sm:$0xf]
  %v90 = vld [vmem:[%s4 + $0x18] sm:$0xf]
  %v91 = vld [vmem:[%s4 + $0x1c] sm:$0xf]
  %v92 = vld [vmem:[%s4 + $0x20] sm:$0xf]
  %v93 = vld [vmem:[%s4 + $0x24] sm:$0xf]
  %v94 = vld [vmem:[%s4 + $0x28] sm:$0xf]
  %v95 = vld [vmem:[%s4 + $0x2c] sm:$0xf]
  %v96 = vld [vmem:[%s4 + $0x30] sm:$0xf]
  %v97 = vld [vmem:[%s4 + $0x34] sm:$0xf]
  %v98 = vld [vmem:[%s4 + $0x38] sm:$0xf]
  %v99 = vld [vmem:[%s4 + $0x3c] sm:$0xf]
  %v104 = vunpack.c.l.b16 %v80
  %v105 = vunpack.c.l.b16 %v81
  %v106 = vunpack.c.l.b16 %v82
  %v107 = vunpack.c.l.b16 %v83
  %v108 = vpack.c.b16 %v105, %v104
  %v109 = vpack.c.b16 %v107, %v106
  %v128 = vunpack.c.l.b16 %v84
  %v129 = vunpack.c.l.b16 %v85
  %v130 = vunpack.c.l.b16 %v86
  %v131 = vunpack.c.l.b16 %v87
  %v132 = vunpack.c.l.b16 %v88
  %v133 = vunpack.c.l.b16 %v89
  %v134 = vunpack.c.l.b16 %v90
  %v135 = vunpack.c.l.b16 %v91
  %v136 = vunpack.c.l.b16 %v92
  %v137 = vunpack.c.l.b16 %v93
  %v138 = vunpack.c.l.b16 %v94
  %v139 = vunpack.c.l.b16 %v95
  %v140 = vunpack.c.l.b16 %v96
  %v141 = vunpack.c.l.b16 %v97
  %v142 = vunpack.c.l.b16 %v98
  %v143 = vunpack.c.l.b16 %v99
  %v144 = vpack.c.b16 %v129, %v128
  %v145 = vpack.c.b16 %v131, %v130
  %v146 = vpack.c.b16 %v133, %v132
  %v147 = vpack.c.b16 %v135, %v134
  %v148 = vpack.c.b16 %v137, %v136
  %v149 = vpack.c.b16 %v139, %v138
  %v150 = vpack.c.b16 %v141, %v140
  %v151 = vpack.c.b16 %v143, %v142
  %160 = vmatprep.subr.bf16.mxu0 0
  %161 = vmatpush1.bf16.msra.mxu0 %v144
  %162 = vmatprep.subr.bf16.mxu0 0
  %163 = vmatpush1.bf16.msra.mxu0 %v145
  %164 = vmatprep.subr.bf16.mxu0 0
  %165 = vmatpush1.bf16.msra.mxu0 %v146
  %166 = vmatprep.subr.bf16.mxu0 0
  %167 = vmatpush1.bf16.msra.mxu0 %v147
  %168 = vmatprep.subr.bf16.mxu0 0
  %169 = vmatpush1.bf16.msra.mxu0 %v148
  %170 = vmatprep.subr.bf16.mxu0 0
  %171 = vmatpush1.bf16.msra.mxu0 %v149
  %172 = vmatprep.subr.bf16.mxu0 0
  %173 = vmatpush1.bf16.msra.mxu0 %v150
  %174 = vmatprep.subr.bf16.mxu0 0
  %175 = vmatpush1.bf16.msra.mxu0 %v151
  %176 = vmatprep.subr.bf16.mxu0 0
  %177 = vmatpush1.bf16.msra.mxu0 0
  %178 = vmatprep.subr.bf16.mxu0 0
  %179 = vmatpush1.bf16.msra.mxu0 0
  %180 = vmatprep.subr.bf16.mxu0 0
  %181 = vmatpush1.bf16.msra.mxu0 0
  %182 = vmatprep.subr.bf16.mxu0 0
  %183 = vmatpush1.bf16.msra.mxu0 0
  %184 = vmatprep.subr.bf16.mxu0 0
  %185 = vmatpush1.bf16.msra.mxu0 0
  %186 = vmatprep.subr.bf16.mxu0 0
  %187 = vmatpush1.bf16.msra.mxu0 0
  %188 = vmatprep.subr.bf16.mxu0 0
  %189 = vmatpush1.bf16.msra.mxu0 0
  %190 = vmatprep.subr.bf16.mxu0 0
  %191 = vmatpush1.bf16.msra.mxu0 0
  %192 = vmatprep.mubr.bf16.mxu0 0
  %193 = vmatmul.mubr.bf16.gmra.mrb[0].mxu0 %v108
  %v194 = vpop.f32.mrb[0].mxu0
  %v195 = vadd.f32 0.0, %v194
  %v196 = vpop.f32.mrb[0].mxu0
  %v197 = vpop.f32.mrb[0].mxu0
  %v198 = vadd.f32 0.0, %v197
  %v199 = vpop.f32.mrb[0].mxu0
  %200 = vmatprep.mubr.bf16.mxu0 0
  %201 = vmatmul.mubr.bf16.gmra.mrb[0].mxu0 %v109
  %v202 = vpop.f32.mrb[0].mxu0
  %v203 = vadd.f32 0.0, %v202
  %v204 = vpop.f32.mrb[0].mxu0
  %v205 = vpop.f32.mrb[0].mxu0
  %v206 = vadd.f32 0.0, %v205
  %v207 = vpop.f32.mrb[0].mxu0
  %208 = vdwg.mxu0
  %v217 = vunpack.c.l.b16 %v24
  %v218 = vunpack.c.h.b16 %v24
  %v219 = vunpack.c.l.b16 %v25
  %v220 = vunpack.c.l.b16 %v26
  %v221 = vunpack.c.h.b16 %v26
  %v222 = vunpack.c.l.b16 %v27
  %v223 = vunpack.c.l.b16 %v28
  %v224 = vunpack.c.h.b16 %v28
  %v225 = vunpack.c.l.b16 %v29
  %v226 = vunpack.c.l.b16 %v30
  %v227 = vunpack.c.h.b16 %v30
  %v228 = vunpack.c.l.b16 %v31
  %v229 = vpack.c.b16 %v220, %v217
  %v230 = vpack.c.b16 %v221, %v218
  %v231 = vpack.c.b16 %v222, %v219
  %v232 = vpack.c.b16 %v226, %v223
  %v233 = vpack.c.b16 %v227, %v224
  %v234 = vpack.c.b16 %v228, %v225
  %v289 = vunpack.c.l.b16 %v32
  %v290 = vunpack.c.l.b16 %v33
  %v291 = vunpack.c.l.b16 %v34
  %v292 = vunpack.c.l.b16 %v35
  %v293 = vunpack.c.l.b16 %v36
  %v294 = vunpack.c.l.b16 %v37
  %v295 = vunpack.c.l.b16 %v38
  %v296 = vunpack.c.l.b16 %v39
  %v297 = vunpack.c.l.b16 %v40
  %v298 = vunpack.c.l.b16 %v41
  %v299 = vunpack.c.l.b16 %v42
  %v300 = vunpack.c.l.b16 %v43
  %v301 = vunpack.c.l.b16 %v44
  %v302 = vunpack.c.l.b16 %v45
  %v303 = vunpack.c.l.b16 %v46
  %v304 = vunpack.c.l.b16 %v47
  %v305 = vunpack.c.l.b16 %v48
  %v306 = vunpack.c.l.b16 %v49
  %v307 = vunpack.c.l.b16 %v50
  %v308 = vunpack.c.l.b16 %v51
  %v309 = vunpack.c.l.b16 %v52
  %v310 = vunpack.c.l.b16 %v53
  %v311 = vunpack.c.l.b16 %v54
  %v312 = vunpack.c.l.b16 %v55
  %v313 = vunpack.c.l.b16 %v56
  %v314 = vunpack.c.l.b16 %v57
  %v315 = vunpack.c.l.b16 %v58
  %v316 = vunpack.c.l.b16 %v59
  %v317 = vunpack.c.l.b16 %v60
  %v318 = vunpack.c.l.b16 %v61
  %v319 = vunpack.c.l.b16 %v62
  %v320 = vunpack.c.l.b16 %v63
  %v321 = vunpack.c.l.b16 %v64
  %v322 = vunpack.c.l.b16 %v65
  %v323 = vunpack.c.l.b16 %v66
  %v324 = vunpack.c.l.b16 %v67
  %v325 = vunpack.c.l.b16 %v68
  %v326 = vunpack.c.l.b16 %v69
  %v327 = vunpack.c.l.b16 %v70
  %v328 = vunpack.c.l.b16 %v71
  %v329 = vunpack.c.l.b16 %v72
  %v330 = vunpack.c.l.b16 %v73
  %v331 = vunpack.c.l.b16 %v74
  %v332 = vunpack.c.l.b16 %v75
  %v333 = vunpack.c.l.b16 %v76
  %v334 = vunpack.c.l.b16 %v77
  %v335 = vunpack.c.l.b16 %v78
  %v336 = vunpack.c.l.b16 %v79
  %v337 = vpack.c.b16 %v290, %v289
  %v338 = vpack.c.b16 %v292, %v291
  %v339 = vpack.c.b16 %v294, %v293
  %v340 = vpack.c.b16 %v296, %v295
  %v341 = vpack.c.b16 %v298, %v297
  %v342 = vpack.c.b16 %v300, %v299
  %v343 = vpack.c.b16 %v302, %v301
  %v344 = vpack.c.b16 %v304, %v303
  %v345 = vpack.c.b16 %v306, %v305
  %v346 = vpack.c.b16 %v308, %v307
  %v347 = vpack.c.b16 %v310, %v309
  %v348 = vpack.c.b16 %v312, %v311
  %v349 = vpack.c.b16 %v314, %v313
  %v350 = vpack.c.b16 %v316, %v315
  %v351 = vpack.c.b16 %v318, %v317
  %v352 = vpack.c.b16 %v320, %v319
  %v353 = vpack.c.b16 %v322, %v321
  %v354 = vpack.c.b16 %v324, %v323
  %v355 = vpack.c.b16 %v326, %v325
  %v356 = vpack.c.b16 %v328, %v327
  %v357 = vpack.c.b16 %v330, %v329
  %v358 = vpack.c.b16 %v332, %v331
  %v359 = vpack.c.b16 %v334, %v333
  %v360 = vpack.c.b16 %v336, %v335
  %385 = vmatprep.subr.bf16.mxu0 0
  %386 = vmatpush1.bf16.msra.mxu0 %v337
  %387 = vmatprep.subr.bf16.mxu0 0
  %388 = vmatpush1.bf16.msra.mxu0 %v338
  %389 = vmatprep.subr.bf16.mxu0 0
  %390 = vmatpush1.bf16.msra.mxu0 %v339
  %391 = vmatprep.subr.bf16.mxu0 0
  %392 = vmatpush1.bf16.msra.mxu0 %v340
  %393 = vmatprep.subr.bf16.mxu0 0
  %394 = vmatpush1.bf16.msra.mxu0 %v341
  %395 = vmatprep.subr.bf16.mxu0 0
  %396 = vmatpush1.bf16.msra.mxu0 %v342
  %397 = vmatprep.subr.bf16.mxu0 0
  %398 = vmatpush1.bf16.msra.mxu0 %v343
  %399 = vmatprep.subr.bf16.mxu0 0
  %400 = vmatpush1.bf16.msra.mxu0 %v344
  %401 = vmatprep.subr.bf16.mxu0 0
  %402 = vmatpush1.bf16.msra.mxu0 %v345
  %403 = vmatprep.subr.bf16.mxu0 0
  %404 = vmatpush1.bf16.msra.mxu0 %v346
  %405 = vmatprep.subr.bf16.mxu0 0
  %406 = vmatpush1.bf16.msra.mxu0 %v347
  %407 = vmatprep.subr.bf16.mxu0 0
  %408 = vmatpush1.bf16.msra.mxu0 %v348
  %409 = vmatprep.subr.bf16.mxu0 0
  %410 = vmatpush1.bf16.msra.mxu0 %v349
  %411 = vmatprep.subr.bf16.mxu0 0
  %412 = vmatpush1.bf16.msra.mxu0 %v350
  %413 = vmatprep.subr.bf16.mxu0 0
  %414 = vmatpush1.bf16.msra.mxu0 %v351
  %415 = vmatprep.subr.bf16.mxu0 0
  %416 = vmatpush1.bf16.msra.mxu0 %v352
  %417 = vmatprep.mubr.bf16.mxu0 %v230
  %418 = vmatmul.mubr.bf16.gmra.mrb[0].mxu0 %v229
  %v419 = vpop.f32.mrb[0].mxu0
  %v420 = vadd.f32 %v195, %v419
  %v421 = vpop.f32.mrb[0].mxu0
  %v422 = vpop.f32.mrb[0].mxu0
  %v423 = vadd.f32 %v198, %v422
  %v424 = vpop.f32.mrb[0].mxu0
  %425 = vmatprep.mubr.bf16.mxu0 %v233
  %426 = vmatmul.mubr.bf16.gmra.mrb[0].mxu0 %v232
  %v427 = vpop.f32.mrb[0].mxu0
  %v428 = vadd.f32 %v203, %v427
  %v429 = vpop.f32.mrb[0].mxu0
  %v430 = vpop.f32.mrb[0].mxu0
  %v431 = vadd.f32 %v206, %v430
  %v432 = vpop.f32.mrb[0].mxu0
  %433 = vdwg.mxu0
  %434 = vmatprep.subr.bf16.mxu0 0
  %435 = vmatpush1.bf16.msra.mxu0 %v353
  %436 = vmatprep.subr.bf16.mxu0 0
  %437 = vmatpush1.bf16.msra.mxu0 %v354
  %438 = vmatprep.subr.bf16.mxu0 0
  %439 = vmatpush1.bf16.msra.mxu0 %v355
  %440 = vmatprep.subr.bf16.mxu0 0
  %441 = vmatpush1.bf16.msra.mxu0 %v356
  %442 = vmatprep.subr.bf16.mxu0 0
  %443 = vmatpush1.bf16.msra.mxu0 %v357
  %444 = vmatprep.subr.bf16.mxu0 0
  %445 = vmatpush1.bf16.msra.mxu0 %v358
  %446 = vmatprep.subr.bf16.mxu0 0
  %447 = vmatpush1.bf16.msra.mxu0 %v359
  %448 = vmatprep.subr.bf16.mxu0 0
  %449 = vmatpush1.bf16.msra.mxu0 %v360
  %450 = vmatprep.subr.bf16.mxu0 0
  %451 = vmatpush1.bf16.msra.mxu0 0
  %452 = vmatprep.subr.bf16.mxu0 0
  %453 = vmatpush1.bf16.msra.mxu0 0
  %454 = vmatprep.subr.bf16.mxu0 0
  %455 = vmatpush1.bf16.msra.mxu0 0
  %456 = vmatprep.subr.bf16.mxu0 0
  %457 = vmatpush1.bf16.msra.mxu0 0
  %458 = vmatprep.subr.bf16.mxu0 0
  %459 = vmatpush1.bf16.msra.mxu0 0
  %460 = vmatprep.subr.bf16.mxu0 0
  %461 = vmatpush1.bf16.msra.mxu0 0
  %462 = vmatprep.subr.bf16.mxu0 0
  %463 = vmatpush1.bf16.msra.mxu0 0
  %464 = vmatprep.subr.bf16.mxu0 0
  %465 = vmatpush1.bf16.msra.mxu0 0
  %466 = vmatprep.mubr.bf16.mxu0 0
  %467 = vmatmul.mubr.bf16.gmra.mrb[0].mxu0 %v231
  %v468 = vpop.f32.mrb[0].mxu0
  %v469 = vadd.f32 %v420, %v468
  %v470 = vpop.f32.mrb[0].mxu0
  %v471 = vpop.f32.mrb[0].mxu0
  %v472 = vadd.f32 %v423, %v471
  %v473 = vpop.f32.mrb[0].mxu0
  %474 = vmatprep.mubr.bf16.mxu0 0
  %475 = vmatmul.mubr.bf16.gmra.mrb[0].mxu0 %v234
  %v476 = vpop.f32.mrb[0].mxu0
  %v477 = vadd.f32 %v428, %v476
  %v478 = vpop.f32.mrb[0].mxu0
  %v479 = vpop.f32.mrb[0].mxu0
  %v480 = vadd.f32 %v431, %v479
  %v481 = vpop.f32.mrb[0].mxu0
  %482 = vdwg.mxu0
  %v483 = vld [vmem:[%s2] sm:$0x1]
  %v485 = vlaneseq
  %v486 = vshrl.u32 %v485, 7
  %v487 = vsub.s32 0, %v486
  %v488 = vrot.slane %v483, %v487
  %v490 = vadd.f32 %v469, %v488
  %v491 = vadd.f32 %v472, %v488
  %v492 = vadd.f32 %v477, %v488
  %v493 = vadd.f32 %v480, %v488
  %v494 = vld [vmem:[%s5] sm:$0xf]
  %v495 = vld [vmem:[%s5 + $0x4] sm:$0xf]
  %v496 = vld [vmem:[%s5 + $0x8] sm:$0xf]
  %v497 = vld [vmem:[%s5 + $0xc] sm:$0xf]
  %v498 = vunpack.c.l.bf16 %v494
  %v499 = vunpack.c.l.bf16 %v495
  %v500 = vunpack.c.l.bf16 %v496
  %v501 = vunpack.c.l.bf16 %v497
  %v502 = vadd.f32 %v490, %v498
  %v503 = vadd.f32 %v491, %v499
  %v504 = vadd.f32 %v492, %v500
  %v505 = vadd.f32 %v493, %v501
  %v506 = vmax.f32 %v502, 0.0
  %v507 = vmax.f32 %v503, 0.0
  %v508 = vmax.f32 %v504, 0.0
  %v509 = vmax.f32 %v505, 0.0
  %v510 = vpack.c.bf16 %v507, %v506
  %v511 = vpack.c.bf16 %v509, %v508
  %v514 = vunpack.c.l.b16 %v510
  %v515 = vunpack.c.h.b16 %v510
  %v516 = vunpack.c.l.b16 %v511
  %v517 = vunpack.c.h.b16 %v511
  %v518 = vpack.c.b16 %v514, %v514
  %v519 = vpack.c.b16 %v515, %v515
  %v520 = vpack.c.b16 %v516, %v516
  %v521 = vpack.c.b16 %v517, %v517
  %526 = vst [vmem:[%s6] sm:$0xf] %v518
  %527 = vst [vmem:[%s6 + $0x4] sm:$0xf] %v519
  %528 = vst [vmem:[%s6 + $0x8] sm:$0xf] %v520
  %529 = vst [vmem:[%s6 + $0xc] sm:$0xf] %v521
  // Predicated region
  $region26: #{net_fwd.100} parent=0 // pred_check
    _
  $region27: #{net_fwd.100} parent=0 // pred_check_branch
    %531 = sbr.rel (0) target = $region29
  $region28: #{net_fwd.100} parent=0 // pred_region
    _
  $region29: #{net_fwd.100} parent=0 // pred_fallthru
    _
  // Predicated region
  $region30: #{net_fwd.100} parent=0 // pred_check
    _
  $region31: #{net_fwd.100} parent=0 // pred_check_branch
    %533 = sbr.rel (0) target = $region33
  $region32: #{net_fwd.100} parent=0 // pred_region
    _
  $region33: #{net_fwd.100} parent=0 // pred_fallthru
    _

// kernel: net_fwd.129
$region0: #{net_fwd.129}
  #allocation0 [shape = 'u32[]', space=smem, size = 0x4, offset = 0x4, fixed_abs, tag = 'smem constant byte address 0x4 - core index']
  #allocation1 [shape = 'u32[144,128]{1,0:T(1,128)}', space=vmem, size = 0x12000, scoped, tag = 'internal scratch']
  %s0 = inlined_call_operand.vmem [shape: bf16[32,512], index: 0, kind: input, shape index: {}]
  %s1 = inlined_call_operand.vmem [shape: bf16[512,256], index: 1, kind: input, shape index: {}]
  %s2 = inlined_call_operand.vmem [shape: f32[1,256], index: 2, kind: input, shape index: {}]
  %s3 = inlined_call_operand.vmem [shape: bf16[32,256], index: 3, kind: output, shape index: {}]
  %s4 = sld [smem:[#allocation0]]
  $region22: #{net_fwd.129} parent=0
    _
  %s6 = ssub.s32 1, %s4
  %s7 = scalar_select 0, %s6, %s4
  // Predicated region
  $region2: #{net_fwd.129} parent=0 // pred_check
    _
  $region3: #{net_fwd.129} parent=0 // pred_check_branch
    %9 = sbr.rel (0) target = $region5
  $region4: #{net_fwd.129} parent=0 // pred_region
    _
  $region5: #{net_fwd.129} parent=0 // pred_fallthru
    _
  // Predicated region
  $region6: #{net_fwd.129} parent=0 // pred_check
    _
  $region7: #{net_fwd.129} parent=0 // pred_check_branch
    %11 = sbr.rel (0) target = $region9
  $region8: #{net_fwd.129} parent=0 // pred_region
    _
  $region9: #{net_fwd.129} parent=0 // pred_fallthru
    _
  // Predicated region
  $region10: #{net_fwd.129} parent=0 // pred_check
    _
  $region11: #{net_fwd.129} parent=0 // pred_check_branch
    %13 = sbr.rel (0) target = $region13
  $region12: #{net_fwd.129} parent=0 // pred_region
    _
  $region13: #{net_fwd.129} parent=0 // pred_fallthru
    _
  %v14 = vld [vmem:[%s0] sm:$0xff]
  %v15 = vld [vmem:[%s0 + $0x8] sm:$0xff]
  %v16 = vld [vmem:[%s0 + $0x10] sm:$0xff]
  %v17 = vld [vmem:[%s0 + $0x18] sm:$0xff]
  %v18 = vld [vmem:[%s0 + $0x20] sm:$0xff]
  %v19 = vld [vmem:[%s0 + $0x28] sm:$0xff]
  %v20 = vld [vmem:[%s0 + $0x30] sm:$0xff]
  %v21 = vld [vmem:[%s0 + $0x38] sm:$0xff]
  %v22 = vld [vmem:[%s1] sm:$0xff]
  %v23 = vld [vmem:[%s1 + $0x8] sm:$0xff]
  %v24 = vld [vmem:[%s1 + $0x10] sm:$0xff]
  %v25 = vld [vmem:[%s1 + $0x18] sm:$0xff]
  %v26 = vld [vmem:[%s1 + $0x20] sm:$0xff]
  %v27 = vld [vmem:[%s1 + $0x28] sm:$0xff]
  %v28 = vld [vmem:[%s1 + $0x30] sm:$0xff]
  %v29 = vld [vmem:[%s1 + $0x38] sm:$0xff]
  %v30 = vld [vmem:[%s1 + $0x40] sm:$0xff]
  %v31 = vld [vmem:[%s1 + $0x48] sm:$0xff]
  %v32 = vld [vmem:[%s1 + $0x50] sm:$0xff]
  %v33 = vld [vmem:[%s1 + $0x58] sm:$0xff]
  %v34 = vld [vmem:[%s1 + $0x60] sm:$0xff]
  %v35 = vld [vmem:[%s1 + $0x68] sm:$0xff]
  %v36 = vld [vmem:[%s1 + $0x70] sm:$0xff]
  %v37 = vld [vmem:[%s1 + $0x78] sm:$0xff]
  %v38 = vld [vmem:[%s1 + $0x80] sm:$0xff]
  %v39 = vld [vmem:[%s1 + $0x88] sm:$0xff]
  %v40 = vld [vmem:[%s1 + $0x90] sm:$0xff]
  %v41 = vld [vmem:[%s1 + $0x98] sm:$0xff]
  %v42 = vld [vmem:[%s1 + $0xa0] sm:$0xff]
  %v43 = vld [vmem:[%s1 + $0xa8] sm:$0xff]
  %v44 = vld [vmem:[%s1 + $0xb0] sm:$0xff]
  %v45 = vld [vmem:[%s1 + $0xb8] sm:$0xff]
  %v46 = vld [vmem:[%s1 + $0xc0] sm:$0xff]
  %v47 = vld [vmem:[%s1 + $0xc8] sm:$0xff]
  %v48 = vld [vmem:[%s1 + $0xd0] sm:$0xff]
  %v49 = vld [vmem:[%s1 + $0xd8] sm:$0xff]
  %v50 = vld [vmem:[%s1 + $0xe0] sm:$0xff]
  %v51 = vld [vmem:[%s1 + $0xe8] sm:$0xff]
  %v52 = vld [vmem:[%s1 + $0xf0] sm:$0xff]
  %v53 = vld [vmem:[%s1 + $0xf8] sm:$0xff]
  %v54 = vld [vmem:[%s1 + $0x100] sm:$0xff]
  %v55 = vld [vmem:[%s1 + $0x108] sm:$0xff]
  %v56 = vld [vmem:[%s1 + $0x110] sm:$0xff]
  %v57 = vld [vmem:[%s1 + $0x118] sm:$0xff]
  %v58 = vld [vmem:[%s1 + $0x120] sm:$0xff]
  %v59 = vld [vmem:[%s1 + $0x128] sm:$0xff]
  %v60 = vld [vmem:[%s1 + $0x130] sm:$0xff]
  %v61 = vld [vmem:[%s1 + $0x138] sm:$0xff]
  %v62 = vld [vmem:[%s1 + $0x140] sm:$0xff]
  %v63 = vld [vmem:[%s1 + $0x148] sm:$0xff]
  %v64 = vld [vmem:[%s1 + $0x150] sm:$0xff]
  %v65 = vld [vmem:[%s1 + $0x158] sm:$0xff]
  %v66 = vld [vmem:[%s1 + $0x160] sm:$0xff]
  %v67 = vld [vmem:[%s1 + $0x168] sm:$0xff]
  %v68 = vld [vmem:[%s1 + $0x170] sm:$0xff]
  %v69 = vld [vmem:[%s1 + $0x178] sm:$0xff]
  %v70 = vld [vmem:[%s1 + $0x180] sm:$0xff]
  %v71 = vld [vmem:[%s1 + $0x188] sm:$0xff]
  %v72 = vld [vmem:[%s1 + $0x190] sm:$0xff]
  %v73 = vld [vmem:[%s1 + $0x198] sm:$0xff]
  %v74 = vld [vmem:[%s1 + $0x1a0] sm:$0xff]
  %v75 = vld [vmem:[%s1 + $0x1a8] sm:$0xff]
  %v76 = vld [vmem:[%s1 + $0x1b0] sm:$0xff]
  %v77 = vld [vmem:[%s1 + $0x1b8] sm:$0xff]
  %v78 = vld [vmem:[%s1 + $0x1c0] sm:$0xff]
  %v79 = vld [vmem:[%s1 + $0x1c8] sm:$0xff]
  %v80 = vld [vmem:[%s1 + $0x1d0] sm:$0xff]
  %v81 = vld [vmem:[%s1 + $0x1d8] sm:$0xff]
  %v82 = vld [vmem:[%s1 + $0x1e0] sm:$0xff]
  %v83 = vld [vmem:[%s1 + $0x1e8] sm:$0xff]
  %v84 = vld [vmem:[%s1 + $0x1f0] sm:$0xff]
  %v85 = vld [vmem:[%s1 + $0x1f8] sm:$0xff]
  %v86 = vld [vmem:[%s2] sm:$0x3]
  %v88 = vlaneseq
  %v89 = vshrl.u32 %v88, 7
  %v90 = vsub.s32 0, %v89
  %v91 = vrot.slane %v86, %v90
  %v92 = vlaneseq
  %v93 = vshrl.u32 %v92, 7
  %v94 = vsub.s32 1, %v93
  %v95 = vrot.slane %v86, %v94
  %v106 = vunpack.c.l.b16 %v14
  %v107 = vunpack.c.h.b16 %v14
  %v108 = vunpack.c.l.b16 %v15
  %v109 = vunpack.c.h.b16 %v15
  %v110 = vunpack.c.l.b16 %v16
  %v111 = vunpack.c.h.b16 %v16
  %v112 = vunpack.c.l.b16 %v17
  %v113 = vunpack.c.h.b16 %v17
  %v114 = vunpack.c.l.b16 %v18
  %v115 = vunpack.c.h.b16 %v18
  %v116 = vunpack.c.l.b16 %v19
  %v117 = vunpack.c.h.b16 %v19
  %v118 = vunpack.c.l.b16 %v20
  %v119 = vunpack.c.h.b16 %v20
  %v120 = vunpack.c.l.b16 %v21
  %v121 = vunpack.c.h.b16 %v21
  %v122 = vpack.c.b16 %v110, %v106
  %v123 = vpack.c.b16 %v111, %v107
  %v124 = vpack.c.b16 %v112, %v108
  %v125 = vpack.c.b16 %v113, %v109
  %v126 = vpack.c.b16 %v118, %v114
  %v127 = vpack.c.b16 %v119, %v115
  %v128 = vpack.c.b16 %v120, %v116
  %v129 = vpack.c.b16 %v121, %v117
  %v202 = vunpack.c.l.b16 %v22
  %v203 = vunpack.c.h.b16 %v22
  %v204 = vunpack.c.l.b16 %v23
  %v205 = vunpack.c.h.b16 %v23
  %v206 = vunpack.c.l.b16 %v24
  %v207 = vunpack.c.h.b16 %v24
  %v208 = vunpack.c.l.b16 %v25
  %v209 = vunpack.c.h.b16 %v25
  %v210 = vunpack.c.l.b16 %v26
  %v211 = vunpack.c.h.b16 %v26
  %v212 = vunpack.c.l.b16 %v27
  %v213 = vunpack.c.h.b16 %v27
  %v214 = vunpack.c.l.b16 %v28
  %v215 = vunpack.c.h.b16 %v28
  %v216 = vunpack.c.l.b16 %v29
  %v217 = vunpack.c.h.b16 %v29
  %v218 = vunpack.c.l.b16 %v30
  %v219 = vunpack.c.h.b16 %v30
  %v220 = vunpack.c.l.b16 %v31
  %v221 = vunpack.c.h.b16 %v31
  %v222 = vunpack.c.l.b16 %v32
  %v223 = vunpack.c.h.b16 %v32
  %v224 = vunpack.c.l.b16 %v33
  %v225 = vunpack.c.h.b16 %v33
  %v226 = vunpack.c.l.b16 %v34
  %v227 = vunpack.c.h.b16 %v34
  %v228 = vunpack.c.l.b16 %v35
  %v229 = vunpack.c.h.b16 %v35
  %v230 = vunpack.c.l.b16 %v36
  %v231 = vunpack.c.h.b16 %v36
  %v232 = vunpack.c.l.b16 %v37
  %v233 = vunpack.c.h.b16 %v37
  %v234 = vunpack.c.l.b16 %v38
  %v235 = vunpack.c.h.b16 %v38
  %v236 = vunpack.c.l.b16 %v39
  %v237 = vunpack.c.h.b16 %v39
  %v238 = vunpack.c.l.b16 %v40
  %v239 = vunpack.c.h.b16 %v40
  %v240 = vunpack.c.l.b16 %v41
  %v241 = vunpack.c.h.b16 %v41
  %v242 = vunpack.c.l.b16 %v42
  %v243 = vunpack.c.h.b16 %v42
  %v244 = vunpack.c.l.b16 %v43
  %v245 = vunpack.c.h.b16 %v43
  %v246 = vunpack.c.l.b16 %v44
  %v247 = vunpack.c.h.b16 %v44
  %v248 = vunpack.c.l.b16 %v45
  %v249 = vunpack.c.h.b16 %v45
  %v250 = vunpack.c.l.b16 %v46
  %v251 = vunpack.c.h.b16 %v46
  %v252 = vunpack.c.l.b16 %v47
  %v253 = vunpack.c.h.b16 %v47
  %v254 = vunpack.c.l.b16 %v48
  %v255 = vunpack.c.h.b16 %v48
  %v256 = vunpack.c.l.b16 %v49
  %v257 = vunpack.c.h.b16 %v49
  %v258 = vunpack.c.l.b16 %v50
  %v259 = vunpack.c.h.b16 %v50
  %v260 = vunpack.c.l.b16 %v51
  %v261 = vunpack.c.h.b16 %v51
  %v262 = vunpack.c.l.b16 %v52
  %v263 = vunpack.c.h.b16 %v52
  %v264 = vunpack.c.l.b16 %v53
  %v265 = vunpack.c.h.b16 %v53
  %v266 = vunpack.c.l.b16 %v54
  %v267 = vunpack.c.h.b16 %v54
  %v268 = vunpack.c.l.b16 %v55
  %v269 = vunpack.c.h.b16 %v55
  %v270 = vunpack.c.l.b16 %v56
  %v271 = vunpack.c.h.b16 %v56
  %v272 = vunpack.c.l.b16 %v57
  %v273 = vunpack.c.h.b16 %v57
  %v274 = vunpack.c.l.b16 %v58
  %v275 = vunpack.c.h.b16 %v58
  %v276 = vunpack.c.l.b16 %v59
  %v277 = vunpack.c.h.b16 %v59
  %v278 = vunpack.c.l.b16 %v60
  %v279 = vunpack.c.h.b16 %v60
  %v280 = vunpack.c.l.b16 %v61
  %v281 = vunpack.c.h.b16 %v61
  %v282 = vunpack.c.l.b16 %v62
  %v283 = vunpack.c.h.b16 %v62
  %v284 = vunpack.c.l.b16 %v63
  %v285 = vunpack.c.h.b16 %v63
  %v286 = vunpack.c.l.b16 %v64
  %v287 = vunpack.c.h.b16 %v64
  %v288 = vunpack.c.l.b16 %v65
  %v289 = vunpack.c.h.b16 %v65
  %v290 = vunpack.c.l.b16 %v66
  %v291 = vunpack.c.h.b16 %v66
  %v292 = vunpack.c.l.b16 %v67
  %v293 = vunpack.c.h.b16 %v67
  %v294 = vunpack.c.l.b16 %v68
  %v295 = vunpack.c.h.b16 %v68
  %v296 = vunpack.c.l.b16 %v69
  %v297 = vunpack.c.h.b16 %v69
  %v298 = vunpack.c.l.b16 %v70
  %v299 = vunpack.c.h.b16 %v70
  %v300 = vunpack.c.l.b16 %v71
  %v301 = vunpack.c.h.b16 %v71
  %v302 = vunpack.c.l.b16 %v72
  %v303 = vunpack.c.h.b16 %v72
  %v304 = vunpack.c.l.b16 %v73
  %v305 = vunpack.c.h.b16 %v73
  %v306 = vunpack.c.l.b16 %v74
  %v307 = vunpack.c.h.b16 %v74
  %v308 = vunpack.c.l.b16 %v75
  %v309 = vunpack.c.h.b16 %v75
  %v310 = vunpack.c.l.b16 %v76
  %v311 = vunpack.c.h.b16 %v76
  %v312 = vunpack.c.l.b16 %v77
  %v313 = vunpack.c.h.b16 %v77
  %v314 = vunpack.c.l.b16 %v78
  %v315 = vunpack.c.h.b16 %v78
  %v316 = vunpack.c.l.b16 %v79
  %v317 = vunpack.c.h.b16 %v79
  %v318 = vunpack.c.l.b16 %v80
  %v319 = vunpack.c.h.b16 %v80
  %v320 = vunpack.c.l.b16 %v81
  %v321 = vunpack.c.h.b16 %v81
  %v322 = vunpack.c.l.b16 %v82
  %v323 = vunpack.c.h.b16 %v82
  %v324 = vunpack.c.l.b16 %v83
  %v325 = vunpack.c.h.b16 %v83
  %v326 = vunpack.c.l.b16 %v84
  %v327 = vunpack.c.h.b16 %v84
  %v328 = vunpack.c.l.b16 %v85
  %v329 = vunpack.c.h.b16 %v85
  %v330 = vpack.c.b16 %v204, %v202
  %v331 = vpack.c.b16 %v205, %v203
  %v332 = vpack.c.b16 %v208, %v206
  %v333 = vpack.c.b16 %v209, %v207
  %v334 = vpack.c.b16 %v212, %v210
  %v335 = vpack.c.b16 %v213, %v211
  %v336 = vpack.c.b16 %v216, %v214
  %v337 = vpack.c.b16 %v217, %v215
  %v338 = vpack.c.b16 %v220, %v218
  %v339 = vpack.c.b16 %v221, %v219
  %v340 = vpack.c.b16 %v224, %v222
  %v341 = vpack.c.b16 %v225, %v223
  %v342 = vpack.c.b16 %v228, %v226
  %v343 = vpack.c.b16 %v229, %v227
  %v344 = vpack.c.b16 %v232, %v230
  %v345 = vpack.c.b16 %v233, %v231
  %v346 = vpack.c.b16 %v236, %v234
  %v347 = vpack.c.b16 %v237, %v235
  %v348 = vpack.c.b16 %v240, %v238
  %v349 = vpack.c.b16 %v241, %v239
  %v350 = vpack.c.b16 %v244, %v242
  %v351 = vpack.c.b16 %v245, %v243
  %v352 = vpack.c.b16 %v248, %v246
  %v353 = vpack.c.b16 %v249, %v247
  %v354 = vpack.c.b16 %v252, %v250
  %v355 = vpack.c.b16 %v253, %v251
  %v356 = vpack.c.b16 %v256, %v254
  %v357 = vpack.c.b16 %v257, %v255
  %v358 = vpack.c.b16 %v260, %v258
  %v359 = vpack.c.b16 %v261, %v259
  %v360 = vpack.c.b16 %v264, %v262
  %v361 = vpack.c.b16 %v265, %v263
  %v362 = vpack.c.b16 %v268, %v266
  %v363 = vpack.c.b16 %v269, %v267
  %v364 = vpack.c.b16 %v272, %v270
  %v365 = vpack.c.b16 %v273, %v271
  %v366 = vpack.c.b16 %v276, %v274
  %v367 = vpack.c.b16 %v277, %v275
  %v368 = vpack.c.b16 %v280, %v278
  %v369 = vpack.c.b16 %v281, %v279
  %v370 = vpack.c.b16 %v284, %v282
  %v371 = vpack.c.b16 %v285, %v283
  %v372 = vpack.c.b16 %v288, %v286
  %v373 = vpack.c.b16 %v289, %v287
  %v374 = vpack.c.b16 %v292, %v290
  %v375 = vpack.c.b16 %v293, %v291
  %v376 = vpack.c.b16 %v296, %v294
  %v377 = vpack.c.b16 %v297, %v295
  %v378 = vpack.c.b16 %v300, %v298
  %v379 = vpack.c.b16 %v301, %v299
  %v380 = vpack.c.b16 %v304, %v302
  %v381 = vpack.c.b16 %v305, %v303
  %v382 = vpack.c.b16 %v308, %v306
  %v383 = vpack.c.b16 %v309, %v307
  %v384 = vpack.c.b16 %v312, %v310
  %v385 = vpack.c.b16 %v313, %v311
  %v386 = vpack.c.b16 %v316, %v314
  %v387 = vpack.c.b16 %v317, %v315
  %v388 = vpack.c.b16 %v320, %v318
  %v389 = vpack.c.b16 %v321, %v319
  %v390 = vpack.c.b16 %v324, %v322
  %v391 = vpack.c.b16 %v325, %v323
  %v392 = vpack.c.b16 %v328, %v326
  %v393 = vpack.c.b16 %v329, %v327
  %458 = vmatprep.subr.bf16.mxu0 %v331
  %459 = vmatpush1.bf16.msra.mxu0 %v330
  %460 = vmatprep.subr.bf16.mxu0 %v333
  %461 = vmatpush1.bf16.msra.mxu0 %v332
  %462 = vmatprep.subr.bf16.mxu0 %v335
  %463 = vmatpush1.bf16.msra.mxu0 %v334
  %464 = vmatprep.subr.bf16.mxu0 %v337
  %465 = vmatpush1.bf16.msra.mxu0 %v336
  %466 = vmatprep.subr.bf16.mxu0 %v339
  %467 = vmatpush1.bf16.msra.mxu0 %v338
  %468 = vmatprep.subr.bf16.mxu0 %v341
  %469 = vmatpush1.bf16.msra.mxu0 %v340
  %470 = vmatprep.subr.bf16.mxu0 %v343
  %471 = vmatpush1.bf16.msra.mxu0 %v342
  %472 = vmatprep.subr.bf16.mxu0 %v345
  %473 = vmatpush1.bf16.msra.mxu0 %v344
  %474 = vmatprep.subr.bf16.mxu0 %v347
  %475 = vmatpush1.bf16.msra.mxu0 %v346
  %476 = vmatprep.subr.bf16.mxu0 %v349
  %477 = vmatpush1.bf16.msra.mxu0 %v348
  %478 = vmatprep.subr.bf16.mxu0 %v351
  %479 = vmatpush1.bf16.msra.mxu0 %v350
  %480 = vmatprep.subr.bf16.mxu0 %v353
  %481 = vmatpush1.bf16.msra.mxu0 %v352
  %482 = vmatprep.subr.bf16.mxu0 %v355
  %483 = vmatpush1.bf16.msra.mxu0 %v354
  %484 = vmatprep.subr.bf16.mxu0 %v357
  %485 = vmatpush1.bf16.msra.mxu0 %v356
  %486 = vmatprep.subr.bf16.mxu0 %v359
  %487 = vmatpush1.bf16.msra.mxu0 %v358
  %488 = vmatprep.subr.bf16.mxu0 %v361
  %489 = vmatpush1.bf16.msra.mxu0 %v360
  %490 = vmatprep.mubr.bf16.mxu0 %v123
  %491 = vmatmul.mubr.bf16.gmra.mrb[0].mxu0 %v122
  %v492 = vpop.f32.mrb[0].mxu0
  %v493 = vadd.f32 %v91, %v492
  %v494 = vpop.f32.mrb[0].mxu0
  %v495 = vadd.f32 %v95, %v494
  %v496 = vpop.f32.mrb[0].mxu0
  %v497 = vadd.f32 %v91, %v496
  %v498 = vpop.f32.mrb[0].mxu0
  %v499 = vadd.f32 %v95, %v498
  %500 = vmatprep.mubr.bf16.mxu0 %v127
  %501 = vmatmul.mubr.bf16.gmra.mrb[0].mxu0 %v126
  %v502 = vpop.f32.mrb[0].mxu0
  %v503 = vadd.f32 %v91, %v502
  %v504 = vpop.f32.mrb[0].mxu0
  %v505 = vadd.f32 %v95, %v504
  %v506 = vpop.f32.mrb[0].mxu0
  %v507 = vadd.f32 %v91, %v506
  %v508 = vpop.f32.mrb[0].mxu0
  %v509 = vadd.f32 %v95, %v508
  %510 = vdwg.mxu0
  %511 = vmatprep.subr.bf16.mxu0 %v363
  %512 = vmatpush1.bf16.msra.mxu0 %v362
  %513 = vmatprep.subr.bf16.mxu0 %v365
  %514 = vmatpush1.bf16.msra.mxu0 %v364
  %515 = vmatprep.subr.bf16.mxu0 %v367
  %516 = vmatpush1.bf16.msra.mxu0 %v366
  %517 = vmatprep.subr.bf16.mxu0 %v369
  %518 = vmatpush1.bf16.msra.mxu0 %v368
  %519 = vmatprep.subr.bf16.mxu0 %v371
  %520 = vmatpush1.bf16.msra.mxu0 %v370
  %521 = vmatprep.subr.bf16.mxu0 %v373
  %522 = vmatpush1.bf16.msra.mxu0 %v372
  %523 = vmatprep.subr.bf16.mxu0 %v375
  %524 = vmatpush1.bf16.msra.mxu0 %v374
  %525 = vmatprep.subr.bf16.mxu0 %v377
  %526 = vmatpush1.bf16.msra.mxu0 %v376
  %527 = vmatprep.subr.bf16.mxu0 %v379
  %528 = vmatpush1.bf16.msra.mxu0 %v378
  %529 = vmatprep.subr.bf16.mxu0 %v381
  %530 = vmatpush1.bf16.msra.mxu0 %v380
  %531 = vmatprep.subr.bf16.mxu0 %v383
  %532 = vmatpush1.bf16.msra.mxu0 %v382
  %533 = vmatprep.subr.bf16.mxu0 %v385
  %534 = vmatpush1.bf16.msra.mxu0 %v384
  %535 = vmatprep.subr.bf16.mxu0 %v387
  %536 = vmatpush1.bf16.msra.mxu0 %v386
  %537 = vmatprep.subr.bf16.mxu0 %v389
  %538 = vmatpush1.bf16.msra.mxu0 %v388
  %539 = vmatprep.subr.bf16.mxu0 %v391
  %540 = vmatpush1.bf16.msra.mxu0 %v390
  %541 = vmatprep.subr.bf16.mxu0 %v393
  %542 = vmatpush1.bf16.msra.mxu0 %v392
  %543 = vmatprep.mubr.bf16.mxu0 %v125
  %544 = vmatmul.mubr.bf16.gmra.mrb[0].mxu0 %v124
  %v545 = vpop.f32.mrb[0].mxu0
  %v546 = vadd.f32 %v493, %v545
  %v547 = vpop.f32.mrb[0].mxu0
  %v548 = vadd.f32 %v495, %v547
  %v549 = vpop.f32.mrb[0].mxu0
  %v550 = vadd.f32 %v497, %v549
  %v551 = vpop.f32.mrb[0].mxu0
  %v552 = vadd.f32 %v499, %v551
  %553 = vmatprep.mubr.bf16.mxu0 %v129
  %554 = vmatmul.mubr.bf16.gmra.mrb[0].mxu0 %v128
  %v555 = vpop.f32.mrb[0].mxu0
  %v556 = vadd.f32 %v503, %v555
  %v557 = vpop.f32.mrb[0].mxu0
  %v558 = vadd.f32 %v505, %v557
  %v559 = vpop.f32.mrb[0].mxu0
  %v560 = vadd.f32 %v507, %v559
  %v561 = vpop.f32.mrb[0].mxu0
  %v562 = vadd.f32 %v509, %v561
  %563 = vdwg.mxu0
  %v564 = vmax.f32 %v546, 0.0
  %v565 = vmax.f32 %v548, 0.0
  %v566 = vmax.f32 %v550, 0.0
  %v567 = vmax.f32 %v552, 0.0
  %v568 = vmax.f32 %v556, 0.0
  %v569 = vmax.f32 %v558, 0.0
  %v570 = vmax.f32 %v560, 0.0
  %v571 = vmax.f32 %v562, 0.0
  %v572 = vpack.c.bf16 %v566, %v564
  %v573 = vpack.c.bf16 %v567, %v565
  %v574 = vpack.c.bf16 %v570, %v568
  %v575 = vpack.c.bf16 %v571, %v569
  %v580 = vunpack.c.l.b16 %v572
  %v581 = vunpack.c.l.b16 %v573
  %v582 = vunpack.c.h.b16 %v572
  %v583 = vunpack.c.h.b16 %v573
  %v584 = vunpack.c.l.b16 %v574
  %v585 = vunpack.c.l.b16 %v575
  %v586 = vunpack.c.h.b16 %v574
  %v587 = vunpack.c.h.b16 %v575
  %v588 = vpack.c.b16 %v581, %v580
  %v589 = vpack.c.b16 %v583, %v582
  %v590 = vpack.c.b16 %v585, %v584
  %v591 = vpack.c.b16 %v587, %v586
  %596 = vst [vmem:[%s3] sm:$0xff] %v588
  %597 = vst [vmem:[%s3 + $0x8] sm:$0xff] %v589
  %598 = vst [vmem:[%s3 + $0x10] sm:$0xff] %v590
  %599 = vst [vmem:[%s3 + $0x18] sm:$0xff] %v591
  // Predicated region
  $region14: #{net_fwd.129} parent=0 // pred_check
    _
  $region15: #{net_fwd.129} parent=0 // pred_check_branch
    %601 = sbr.rel (0) target = $region17
  $region16: #{net_fwd.129} parent=0 // pred_region
    _
  $region17: #{net_fwd.129} parent=0 // pred_fallthru
    _
  // Predicated region
  $region18: #{net_fwd.129} parent=0 // pred_check
    _
  $region19: #{net_fwd.129} parent=0 // pred_check_branch
    %603 = sbr.rel (0) target = $region21
  $region20: #{net_fwd.129} parent=0 // pred_region
    _
  $region21: #{net_fwd.129} parent=0 // pred_fallthru
    _

// kernel: net_fwd.133
$region0: #{net_fwd.133}
  #allocation0 [shape = 'u32[]', space=smem, size = 0x4, offset = 0x4, fixed_abs, tag = 'smem constant byte address 0x4 - core index']
  #allocation1 [shape = 'u32[144,128]{1,0:T(1,128)}', space=vmem, size = 0x12000, scoped, tag = 'internal scratch']
  %s0 = inlined_call_operand.vmem [shape: bf16[128,192], index: 0, kind: input, shape index: {}]
  %s1 = inlined_call_operand.vmem [shape: bf16[192,64], index: 1, kind: input, shape index: {}]
  %s2 = inlined_call_operand.vmem [shape: f32[1,64], index: 2, kind: input, shape index: {}]
  %s3 = inlined_call_operand.vmem [shape: bf16[128,64], index: 3, kind: input, shape index: {}]
  %s4 = inlined_call_operand.vmem [shape: bf16[128,64], index: 4, kind: output, shape index: {}]
  %s5 = sld [smem:[#allocation0]]
  $region26: #{net_fwd.133} parent=0
    _
  %s7 = ssub.s32 1, %s5
  %s8 = scalar_select 0, %s7, %s5
  // Predicated region
  $region2: #{net_fwd.133} parent=0 // pred_check
    _
  $region3: #{net_fwd.133} parent=0 // pred_check_branch
    %10 = sbr.rel (0) target = $region5
  $region4: #{net_fwd.133} parent=0 // pred_region
    _
  $region5: #{net_fwd.133} parent=0 // pred_fallthru
    _
  // Predicated region
  $region6: #{net_fwd.133} parent=0 // pred_check
    _
  $region7: #{net_fwd.133} parent=0 // pred_check_branch
    %12 = sbr.rel (0) target = $region9
  $region8: #{net_fwd.133} parent=0 // pred_region
    _
  $region9: #{net_fwd.133} parent=0 // pred_fallthru
    _
  // Predicated region
  $region10: #{net_fwd.133} parent=0 // pred_check
    _
  $region11: #{net_fwd.133} parent=0 // pred_check_branch
    %14 = sbr.rel (0) target = $region13
  $region12: #{net_fwd.133} parent=0 // pred_region
    _
  $region13: #{net_fwd.133} parent=0 // pred_fallthru
    _
  // Predicated region
  $region14: #{net_fwd.133} parent=0 // pred_check
    _
  $region15: #{net_fwd.133} parent=0 // pred_check_branch
    %16 = sbr.rel (0) target = $region17
  $region16: #{net_fwd.133} parent=0 // pred_region
    _
  $region17: #{net_fwd.133} parent=0 // pred_fallthru
    _
  %v18 = vld [vmem:[%s0] sm:$0xff]
  %v19 = vld [vmem:[%s0 + $0x8] sm:$0xff]
  %v20 = vld [vmem:[%s0 + $0x10] sm:$0xff]
  %v21 = vld [vmem:[%s0 + $0x18] sm:$0xff]
  %v22 = vld [vmem:[%s0 + $0x20] sm:$0xff]
  %v23 = vld [vmem:[%s0 + $0x28] sm:$0xff]
  %v24 = vld [vmem:[%s0 + $0x30] sm:$0xff]
  %v25 = vld [vmem:[%s0 + $0x38] sm:$0xff]
  %v26 = vld [vmem:[%s0 + $0x40] sm:$0xff]
  %v27 = vld [vmem:[%s0 + $0x48] sm:$0xff]
  %v28 = vld [vmem:[%s0 + $0x50] sm:$0xff]
  %v29 = vld [vmem:[%s0 + $0x58] sm:$0xff]
  %v30 = vld [vmem:[%s0 + $0x60] sm:$0xff]
  %v31 = vld [vmem:[%s0 + $0x68] sm:$0xff]
  %v32 = vld [vmem:[%s0 + $0x70] sm:$0xff]
  %v33 = vld [vmem:[%s0 + $0x78] sm:$0xff]
  %v34 = vld [vmem:[%s1] sm:$0xf]
  %v35 = vld [vmem:[%s1 + $0x4] sm:$0xf]
  %v36 = vld [vmem:[%s1 + $0x8] sm:$0xf]
  %v37 = vld [vmem:[%s1 + $0xc] sm:$0xf]
  %v38 = vld [vmem:[%s1 + $0x10] sm:$0xf]
  %v39 = vld [vmem:[%s1 + $0x14] sm:$0xf]
  %v40 = vld [vmem:[%s1 + $0x18] sm:$0xf]
  %v41 = vld [vmem:[%s1 + $0x1c] sm:$0xf]
  %v42 = vld [vmem:[%s1 + $0x20] sm:$0xf]
  %v43 = vld [vmem:[%s1 + $0x24] sm:$0xf]
  %v44 = vld [vmem:[%s1 + $0x28] sm:$0xf]
  %v45 = vld [vmem:[%s1 + $0x2c] sm:$0xf]
  %v46 = vld [vmem:[%s1 + $0x30] sm:$0xf]
  %v47 = vld [vmem:[%s1 + $0x34] sm:$0xf]
  %v48 = vld [vmem:[%s1 + $0x38] sm:$0xf]
  %v49 = vld [vmem:[%s1 + $0x3c] sm:$0xf]
  %v50 = vld [vmem:[%s1 + $0x40] sm:$0xf]
  %v51 = vld [vmem:[%s1 + $0x44] sm:$0xf]
  %v52 = vld [vmem:[%s1 + $0x48] sm:$0xf]
  %v53 = vld [vmem:[%s1 + $0x4c] sm:$0xf]
  %v54 = vld [vmem:[%s1 + $0x50] sm:$0xf]
  %v55 = vld [vmem:[%s1 + $0x54] sm:$0xf]
  %v56 = vld [vmem:[%s1 + $0x58] sm:$0xf]
  %v57 = vld [vmem:[%s1 + $0x5c] sm:$0xf]
  %v58 = vld [vmem:[%s2] sm:$0x1]
  %v60 = vlaneseq
  %v61 = vshrl.u32 %v60, 7
  %v62 = vsub.s32 0, %v61
  %v63 = vrot.slane %v58, %v62
  %v81 = vunpack.c.l.b16 %v18
  %v82 = vunpack.c.h.b16 %v18
  %v83 = vunpack.c.l.b16 %v19
  %v84 = vunpack.c.h.b16 %v19
  %v85 = vunpack.c.l.b16 %v20
  %v86 = vunpack.c.h.b16 %v20
  %v87 = vunpack.c.l.b16 %v21
  %v88 = vunpack.c.h.b16 %v21
  %v89 = vunpack.c.l.b16 %v22
  %v90 = vunpack.c.h.b16 %v22
  %v91 = vunpack.c.l.b16 %v23
  %v92 = vunpack.c.h.b16 %v23
  %v93 = vunpack.c.l.b16 %v24
  %v94 = vunpack.c.h.b16 %v24
  %v95 = vunpack.c.l.b16 %v25
  %v96 = vunpack.c.h.b16 %v25
  %v97 = vunpack.c.l.b16 %v26
  %v98 = vunpack.c.h.b16 %v26
  %v99 = vunpack.c.l.b16 %v27
  %v100 = vunpack.c.h.b16 %v27
  %v101 = vunpack.c.l.b16 %v28
  %v102 = vunpack.c.h.b16 %v28
  %v103 = vunpack.c.l.b16 %v29
  %v104 = vunpack.c.h.b16 %v29
  %v105 = vunpack.c.l.b16 %v30
  %v106 = vunpack.c.h.b16 %v30
  %v107 = vunpack.c.l.b16 %v31
  %v108 = vunpack.c.h.b16 %v31
  %v109 = vunpack.c.l.b16 %v32
  %v110 = vunpack.c.h.b16 %v32
  %v111 = vunpack.c.l.b16 %v33
  %v112 = vunpack.c.h.b16 %v33
  %v113 = vpack.c.b16 %v83, %v81
  %v114 = vpack.c.b16 %v84, %v82
  %v115 = vpack.c.b16 %v87, %v85
  %v116 = vpack.c.b16 %v88, %v86
  %v117 = vpack.c.b16 %v91, %v89
  %v118 = vpack.c.b16 %v92, %v90
  %v119 = vpack.c.b16 %v95, %v93
  %v120 = vpack.c.b16 %v96, %v94
  %v121 = vpack.c.b16 %v99, %v97
  %v122 = vpack.c.b16 %v100, %v98
  %v123 = vpack.c.b16 %v103, %v101
  %v124 = vpack.c.b16 %v104, %v102
  %v125 = vpack.c.b16 %v107, %v105
  %v126 = vpack.c.b16 %v108, %v106
  %v127 = vpack.c.b16 %v111, %v109
  %v128 = vpack.c.b16 %v112, %v110
  %v161 = vunpack.c.l.b16 %v34
  %v162 = vunpack.c.l.b16 %v35
  %v163 = vunpack.c.l.b16 %v36
  %v164 = vunpack.c.l.b16 %v37
  %v165 = vunpack.c.l.b16 %v38
  %v166 = vunpack.c.l.b16 %v39
  %v167 = vunpack.c.l.b16 %v40
  %v168 = vunpack.c.l.b16 %v41
  %v169 = vunpack.c.l.b16 %v42
  %v170 = vunpack.c.l.b16 %v43
  %v171 = vunpack.c.l.b16 %v44
  %v172 = vunpack.c.l.b16 %v45
  %v173 = vunpack.c.l.b16 %v46
  %v174 = vunpack.c.l.b16 %v47
  %v175 = vunpack.c.l.b16 %v48
  %v176 = vunpack.c.l.b16 %v49
  %v177 = vunpack.c.l.b16 %v50
  %v178 = vunpack.c.l.b16 %v51
  %v179 = vunpack.c.l.b16 %v52
  %v180 = vunpack.c.l.b16 %v53
  %v181 = vunpack.c.l.b16 %v54
  %v182 = vunpack.c.l.b16 %v55
  %v183 = vunpack.c.l.b16 %v56
  %v184 = vunpack.c.l.b16 %v57
  %v185 = vpack.c.b16 %v162, %v161
  %v186 = vpack.c.b16 %v164, %v163
  %v187 = vpack.c.b16 %v166, %v165
  %v188 = vpack.c.b16 %v168, %v167
  %v189 = vpack.c.b16 %v170, %v169
  %v190 = vpack.c.b16 %v172, %v171
  %v191 = vpack.c.b16 %v174, %v173
  %v192 = vpack.c.b16 %v176, %v175
  %v193 = vpack.c.b16 %v178, %v177
  %v194 = vpack.c.b16 %v180, %v179
  %v195 = vpack.c.b16 %v182, %v181
  %v196 = vpack.c.b16 %v184, %v183
  %vm209 = vcmask 523264
  %v211 = vsel %vm209, %v114, 0
  %v214 = vsel %vm209, %v116, 0
  %v217 = vsel %vm209, %v118, 0
  %v220 = vsel %vm209, %v120, 0
  %v223 = vsel %vm209, %v122, 0
  %v226 = vsel %vm209, %v124, 0
  %v229 = vsel %vm209, %v126, 0
  %v232 = vsel %vm209, %v128, 0
  %234 = vmatprep.subr.bf16.mxu0 0
  %235 = vmatpush1.bf16.msra.mxu0 %v185
  %236 = vmatprep.subr.bf16.mxu0 0
  %237 = vmatpush1.bf16.msra.mxu0 %v186
  %238 = vmatprep.subr.bf16.mxu0 0
  %239 = vmatpush1.bf16.msra.mxu0 %v187
  %240 = vmatprep.subr.bf16.mxu0 0
  %241 = vmatpush1.bf16.msra.mxu0 %v188
  %242 = vmatprep.subr.bf16.mxu0 0
  %243 = vmatpush1.bf16.msra.mxu0 %v189
  %244 = vmatprep.subr.bf16.mxu0 0
  %245 = vmatpush1.bf16.msra.mxu0 %v190
  %246 = vmatprep.subr.bf16.mxu0 0
  %247 = vmatpush1.bf16.msra.mxu0 %v191
  %248 = vmatprep.subr.bf16.mxu0 0
  %249 = vmatpush1.bf16.msra.mxu0 %v192
  %250 = vmatprep.subr.bf16.mxu0 0
  %251 = vmatpush1.bf16.msra.mxu0 %v193
  %252 = vmatprep.subr.bf16.mxu0 0
  %253 = vmatpush1.bf16.msra.mxu0 %v194
  %254 = vmatprep.subr.bf16.mxu0 0
  %255 = vmatpush1.bf16.msra.mxu0 %v195
  %256 = vmatprep.subr.bf16.mxu0 0
  %257 = vmatpush1.bf16.msra.mxu0 %v196
  %258 = vmatprep.subr.bf16.mxu0 0
  %259 = vmatpush1.bf16.msra.mxu0 0
  %260 = vmatprep.subr.bf16.mxu0 0
  %261 = vmatpush1.bf16.msra.mxu0 0
  %262 = vmatprep.subr.bf16.mxu0 0
  %263 = vmatpush1.bf16.msra.mxu0 0
  %264 = vmatprep.subr.bf16.mxu0 0
  %265 = vmatpush1.bf16.msra.mxu0 0
  %266 = vmatprep.mubr.bf16.mxu0 %v211
  %267 = vmatmul.mubr.bf16.gmra.mrb[0].mxu0 %v113
  %v268 = vpop.f32.mrb[0].mxu0
  %v269 = vadd.f32 %v63, %v268
  %v270 = vpop.f32.mrb[0].mxu0
  %v271 = vpop.f32.mrb[0].mxu0
  %v272 = vadd.f32 %v63, %v271
  %v273 = vpop.f32.mrb[0].mxu0
  %274 = vmatprep.mubr.bf16.mxu0 %v214
  %275 = vmatmul.mubr.bf16.gmra.mrb[0].mxu0 %v115
  %v276 = vpop.f32.mrb[0].mxu0
  %v277 = vadd.f32 %v63, %v276
  %v278 = vpop.f32.mrb[0].mxu0
  %v279 = vpop.f32.mrb[0].mxu0
  %v280 = vadd.f32 %v63, %v279
  %v281 = vpop.f32.mrb[0].mxu0
  %282 = vmatprep.mubr.bf16.mxu0 %v217
  %283 = vmatmul.mubr.bf16.gmra.mrb[0].mxu0 %v117
  %v284 = vpop.f32.mrb[0].mxu0
  %v285 = vadd.f32 %v63, %v284
  %v286 = vpop.f32.mrb[0].mxu0
  %v287 = vpop.f32.mrb[0].mxu0
  %v288 = vadd.f32 %v63, %v287
  %v289 = vpop.f32.mrb[0].mxu0
  %290 = vmatprep.mubr.bf16.mxu0 %v220
  %291 = vmatmul.mubr.bf16.gmra.mrb[0].mxu0 %v119
  %v292 = vpop.f32.mrb[0].mxu0
  %v293 = vadd.f32 %v63, %v292
  %v294 = vpop.f32.mrb[0].mxu0
  %v295 = vpop.f32.mrb[0].mxu0
  %v296 = vadd.f32 %v63, %v295
  %v297 = vpop.f32.mrb[0].mxu0
  %298 = vmatprep.mubr.bf16.mxu0 %v223
  %299 = vmatmul.mubr.bf16.gmra.mrb[0].mxu0 %v121
  %v300 = vpop.f32.mrb[0].mxu0
  %v301 = vadd.f32 %v63, %v300
  %v302 = vpop.f32.mrb[0].mxu0
  %v303 = vpop.f32.mrb[0].mxu0
  %v304 = vadd.f32 %v63, %v303
  %v305 = vpop.f32.mrb[0].mxu0
  %306 = vmatprep.mubr.bf16.mxu0 %v226
  %307 = vmatmul.mubr.bf16.gmra.mrb[0].mxu0 %v123
  %v308 = vpop.f32.mrb[0].mxu0
  %v309 = vadd.f32 %v63, %v308
  %v310 = vpop.f32.mrb[0].mxu0
  %v311 = vpop.f32.mrb[0].mxu0
  %v312 = vadd.f32 %v63, %v311
  %v313 = vpop.f32.mrb[0].mxu0
  %314 = vmatprep.mubr.bf16.mxu0 %v229
  %315 = vmatmul.mubr.bf16.gmra.mrb[0].mxu0 %v125
  %v316 = vpop.f32.mrb[0].mxu0
  %v317 = vadd.f32 %v63, %v316
  %v318 = vpop.f32.mrb[0].mxu0
  %v319 = vpop.f32.mrb[0].mxu0
  %v320 = vadd.f32 %v63, %v319
  %v321 = vpop.f32.mrb[0].mxu0
  %322 = vmatprep.mubr.bf16.mxu0 %v232
  %323 = vmatmul.mubr.bf16.gmra.mrb[0].mxu0 %v127
  %v324 = vpop.f32.mrb[0].mxu0
  %v325 = vadd.f32 %v63, %v324
  %v326 = vpop.f32.mrb[0].mxu0
  %v327 = vpop.f32.mrb[0].mxu0
  %v328 = vadd.f32 %v63, %v327
  %v329 = vpop.f32.mrb[0].mxu0
  %330 = vdwg.mxu0
  %v331 = vld [vmem:[%s3] sm:$0xf]
  %v332 = vld [vmem:[%s3 + $0x4] sm:$0xf]
  %v333 = vld [vmem:[%s3 + $0x8] sm:$0xf]
  %v334 = vld [vmem:[%s3 + $0xc] sm:$0xf]
  %v335 = vld [vmem:[%s3 + $0x10] sm:$0xf]
  %v336 = vld [vmem:[%s3 + $0x14] sm:$0xf]
  %v337 = vld [vmem:[%s3 + $0x18] sm:$0xf]
  %v338 = vld [vmem:[%s3 + $0x1c] sm:$0xf]
  %v339 = vld [vmem:[%s3 + $0x20] sm:$0xf]
  %v340 = vld [vmem:[%s3 + $0x24] sm:$0xf]
  %v341 = vld [vmem:[%s3 + $0x28] sm:$0xf]
  %v342 = vld [vmem:[%s3 + $0x2c] sm:$0xf]
  %v343 = vld [vmem:[%s3 + $0x30] sm:$0xf]
  %v344 = vld [vmem:[%s3 + $0x34] sm:$0xf]
  %v345 = vld [vmem:[%s3 + $0x38] sm:$0xf]
  %v346 = vld [vmem:[%s3 + $0x3c] sm:$0xf]
  %v347 = vunpack.c.l.bf16 %v331
  %v348 = vunpack.c.l.bf16 %v332
  %v349 = vunpack.c.l.bf16 %v333
  %v350 = vunpack.c.l.bf16 %v334
  %v351 = vunpack.c.l.bf16 %v335
  %v352 = vunpack.c.l.bf16 %v336
  %v353 = vunpack.c.l.bf16 %v337
  %v354 = vunpack.c.l.bf16 %v338
  %v355 = vunpack.c.l.bf16 %v339
  %v356 = vunpack.c.l.bf16 %v340
  %v357 = vunpack.c.l.bf16 %v341
  %v358 = vunpack.c.l.bf16 %v342
  %v359 = vunpack.c.l.bf16 %v343
  %v360 = vunpack.c.l.bf16 %v344
  %v361 = vunpack.c.l.bf16 %v345
  %v362 = vunpack.c.l.bf16 %v346
  %v363 = vadd.f32 %v269, %v347
  %v364 = vadd.f32 %v272, %v348
  %v365 = vadd.f32 %v277, %v349
  %v366 = vadd.f32 %v280, %v350
  %v367 = vadd.f32 %v285, %v351
  %v368 = vadd.f32 %v288, %v352
  %v369 = vadd.f32 %v293, %v353
  %v370 = vadd.f32 %v296, %v354
  %v371 = vadd.f32 %v301, %v355
  %v372 = vadd.f32 %v304, %v356
  %v373 = vadd.f32 %v309, %v357
  %v374 = vadd.f32 %v312, %v358
  %v375 = vadd.f32 %v317, %v359
  %v376 = vadd.f32 %v320, %v360
  %v377 = vadd.f32 %v325, %v361
  %v378 = vadd.f32 %v328, %v362
  %v379 = vmax.f32 %v363, 0.0
  %v380 = vmax.f32 %v364, 0.0
  %v381 = vmax.f32 %v365, 0.0
  %v382 = vmax.f32 %v366, 0.0
  %v383 = vmax.f32 %v367, 0.0
  %v384 = vmax.f32 %v368, 0.0
  %v385 = vmax.f32 %v369, 0.0
  %v386 = vmax.f32 %v370, 0.0
  %v387 = vmax.f32 %v371, 0.0
  %v388 = vmax.f32 %v372, 0.0
  %v389 = vmax.f32 %v373, 0.0
  %v390 = vmax.f32 %v374, 0.0
  %v391 = vmax.f32 %v375, 0.0
  %v392 = vmax.f32 %v376, 0.0
  %v393 = vmax.f32 %v377, 0.0
  %v394 = vmax.f32 %v378, 0.0
  %v395 = vpack.c.bf16 %v380, %v379
  %v396 = vpack.c.bf16 %v382, %v381
  %v397 = vpack.c.bf16 %v384, %v383
  %v398 = vpack.c.bf16 %v386, %v385
  %v399 = vpack.c.bf16 %v388, %v387
  %v400 = vpack.c.bf16 %v390, %v389
  %v401 = vpack.c.bf16 %v392, %v391
  %v402 = vpack.c.bf16 %v394, %v393
  %v411 = vunpack.c.l.b16 %v395
  %v412 = vunpack.c.h.b16 %v395
  %v413 = vunpack.c.l.b16 %v396
  %v414 = vunpack.c.h.b16 %v396
  %v415 = vunpack.c.l.b16 %v397
  %v416 = vunpack.c.h.b16 %v397
  %v417 = vunpack.c.l.b16 %v398
  %v418 = vunpack.c.h.b16 %v398
  %v419 = vunpack.c.l.b16 %v399
  %v420 = vunpack.c.h.b16 %v399
  %v421 = vunpack.c.l.b16 %v400
  %v422 = vunpack.c.h.b16 %v400
  %v423 = vunpack.c.l.b16 %v401
  %v424 = vunpack.c.h.b16 %v401
  %v425 = vunpack.c.l.b16 %v402
  %v426 = vunpack.c.h.b16 %v402
  %v427 = vpack.c.b16 %v411, %v411
  %v428 = vpack.c.b16 %v412, %v412
  %v429 = vpack.c.b16 %v413, %v413
  %v430 = vpack.c.b16 %v414, %v414
  %v431 = vpack.c.b16 %v415, %v415
  %v432 = vpack.c.b16 %v416, %v416
  %v433 = vpack.c.b16 %v417, %v417
  %v434 = vpack.c.b16 %v418, %v418
  %v435 = vpack.c.b16 %v419, %v419
  %v436 = vpack.c.b16 %v420, %v420
  %v437 = vpack.c.b16 %v421, %v421
  %v438 = vpack.c.b16 %v422, %v422
  %v439 = vpack.c.b16 %v423, %v423
  %v440 = vpack.c.b16 %v424, %v424
  %v441 = vpack.c.b16 %v425, %v425
  %v442 = vpack.c.b16 %v426, %v426
  %vm459 = vcmask 519168
  %460 = vst.msk [vmem:[%s4] sm:$0xf] %vm459, %v427
  %461 = vst.msk [vmem:[%s4 + $0x4] sm:$0xf] %vm459, %v428
  %462 = vst.msk [vmem:[%s4 + $0x8] sm:$0xf] %vm459, %v429
  %463 = vst.msk [vmem:[%s4 + $0xc] sm:$0xf] %vm459, %v430
  %464 = vst.msk [vmem:[%s4 + $0x10] sm:$0xf] %vm459, %v431
  %465 = vst.msk [vmem:[%s4 + $0x14] sm:$0xf] %vm459, %v432
  %466 = vst.msk [vmem:[%s4 + $0x18] sm:$0xf] %vm459, %v433
  %467 = vst.msk [vmem:[%s4 + $0x1c] sm:$0xf] %vm459, %v434
  %468 = vst.msk [vmem:[%s4 + $0x20] sm:$0xf] %vm459, %v435
  %469 = vst.msk [vmem:[%s4 + $0x24] sm:$0xf] %vm459, %v436
  %470 = vst.msk [vmem:[%s4 + $0x28] sm:$0xf] %vm459, %v437
  %471 = vst.msk [vmem:[%s4 + $0x2c] sm:$0xf] %vm459, %v438
  %472 = vst.msk [vmem:[%s4 + $0x30] sm:$0xf] %vm459, %v439
  %473 = vst.msk [vmem:[%s4 + $0x34] sm:$0xf] %vm459, %v440
  %474 = vst.msk [vmem:[%s4 + $0x38] sm:$0xf] %vm459, %v441
  %475 = vst.msk [vmem:[%s4 + $0x3c] sm:$0xf] %vm459, %v442
  // Predicated region
  $region18: #{net_fwd.133} parent=0 // pred_check
    _
  $region19: #{net_fwd.133} parent=0 // pred_check_branch
    %477 = sbr.rel (0) target = $region21
  $region20: #{net_fwd.133} parent=0 // pred_region
    _
  $region21: #{net_fwd.133} parent=0 // pred_fallthru
    _
  // Predicated region
  $region22: #{net_fwd.133} parent=0 // pred_check
    _
  $region23: #{net_fwd.133} parent=0 // pred_check_branch
    %479 = sbr.rel (0) target = $region25
  $region24: #{net_fwd.133} parent=0 // pred_region
    _
  $region25: #{net_fwd.133} parent=0 // pred_fallthru
    _

// kernel: net_fwd.138
$region0: #{net_fwd.138}
  #allocation0 [shape = 'u32[]', space=smem, size = 0x4, offset = 0x4, fixed_abs, tag = 'smem constant byte address 0x4 - core index']
  #allocation1 [shape = 'u32[144,128]{1,0:T(1,128)}', space=vmem, size = 0x12000, scoped, tag = 'internal scratch']
  %s0 = inlined_call_operand.vmem [shape: bf16[128,256], index: 0, kind: input, shape index: {}]
  %s1 = inlined_call_operand.vmem [shape: bf16[256,64], index: 1, kind: input, shape index: {}]
  %s2 = inlined_call_operand.vmem [shape: f32[1,64], index: 2, kind: input, shape index: {}]
  %s3 = inlined_call_operand.vmem [shape: bf16[128,64], index: 3, kind: output, shape index: {}]
  %s4 = sld [smem:[#allocation0]]
  $region22: #{net_fwd.138} parent=0
    _
  %s6 = ssub.s32 1, %s4
  %s7 = scalar_select 0, %s6, %s4
  // Predicated region
  $region2: #{net_fwd.138} parent=0 // pred_check
    _
  $region3: #{net_fwd.138} parent=0 // pred_check_branch
    %9 = sbr.rel (0) target = $region5
  $region4: #{net_fwd.138} parent=0 // pred_region
    _
  $region5: #{net_fwd.138} parent=0 // pred_fallthru
    _
  // Predicated region
  $region6: #{net_fwd.138} parent=0 // pred_check
    _
  $region7: #{net_fwd.138} parent=0 // pred_check_branch
    %11 = sbr.rel (0) target = $region9
  $region8: #{net_fwd.138} parent=0 // pred_region
    _
  $region9: #{net_fwd.138} parent=0 // pred_fallthru
    _
  // Predicated region
  $region10: #{net_fwd.138} parent=0 // pred_check
    _
  $region11: #{net_fwd.138} parent=0 // pred_check_branch
    %13 = sbr.rel (0) target = $region13
  $region12: #{net_fwd.138} parent=0 // pred_region
    _
  $region13: #{net_fwd.138} parent=0 // pred_fallthru
    _
  %v15 = vld [vmem:[%s0] sm:$0xff]
  %v16 = vld [vmem:[%s0 + $0x8] sm:$0xff]
  %v17 = vld [vmem:[%s0 + $0x10] sm:$0xff]
  %v18 = vld [vmem:[%s0 + $0x18] sm:$0xff]
  %v19 = vld [vmem:[%s0 + $0x20] sm:$0xff]
  %v20 = vld [vmem:[%s0 + $0x28] sm:$0xff]
  %v21 = vld [vmem:[%s0 + $0x30] sm:$0xff]
  %v22 = vld [vmem:[%s0 + $0x38] sm:$0xff]
  %v23 = vld [vmem:[%s0 + $0x40] sm:$0xff]
  %v24 = vld [vmem:[%s0 + $0x48] sm:$0xff]
  %v25 = vld [vmem:[%s0 + $0x50] sm:$0xff]
  %v26 = vld [vmem:[%s0 + $0x58] sm:$0xff]
  %v27 = vld [vmem:[%s0 + $0x60] sm:$0xff]
  %v28 = vld [vmem:[%s0 + $0x68] sm:$0xff]
  %v29 = vld [vmem:[%s0 + $0x70] sm:$0xff]
  %v30 = vld [vmem:[%s0 + $0x78] sm:$0xff]
  %v31 = vld [vmem:[%s1] sm:$0xf]
  %v32 = vld [vmem:[%s1 + $0x4] sm:$0xf]
  %v33 = vld [vmem:[%s1 + $0x8] sm:$0xf]
  %v34 = vld [vmem:[%s1 + $0xc] sm:$0xf]
  %v35 = vld [vmem:[%s1 + $0x10] sm:$0xf]
  %v36 = vld [vmem:[%s1 + $0x14] sm:$0xf]
  %v37 = vld [vmem:[%s1 + $0x18] sm:$0xf]
  %v38 = vld [vmem:[%s1 + $0x1c] sm:$0xf]
  %v39 = vld [vmem:[%s1 + $0x20] sm:$0xf]
  %v40 = vld [vmem:[%s1 + $0x24] sm:$0xf]
  %v41 = vld [vmem:[%s1 + $0x28] sm:$0xf]
  %v42 = vld [vmem:[%s1 + $0x2c] sm:$0xf]
  %v43 = vld [vmem:[%s1 + $0x30] sm:$0xf]
  %v44 = vld [vmem:[%s1 + $0x34] sm:$0xf]
  %v45 = vld [vmem:[%s1 + $0x38] sm:$0xf]
  %v46 = vld [vmem:[%s1 + $0x3c] sm:$0xf]
  %v47 = vld [vmem:[%s1 + $0x40] sm:$0xf]
  %v48 = vld [vmem:[%s1 + $0x44] sm:$0xf]
  %v49 = vld [vmem:[%s1 + $0x48] sm:$0xf]
  %v50 = vld [vmem:[%s1 + $0x4c] sm:$0xf]
  %v51 = vld [vmem:[%s1 + $0x50] sm:$0xf]
  %v52 = vld [vmem:[%s1 + $0x54] sm:$0xf]
  %v53 = vld [vmem:[%s1 + $0x58] sm:$0xf]
  %v54 = vld [vmem:[%s1 + $0x5c] sm:$0xf]
  %v55 = vld [vmem:[%s1 + $0x60] sm:$0xf]
  %v56 = vld [vmem:[%s1 + $0x64] sm:$0xf]
  %v57 = vld [vmem:[%s1 + $0x68] sm:$0xf]
  %v58 = vld [vmem:[%s1 + $0x6c] sm:$0xf]
  %v59 = vld [vmem:[%s1 + $0x70] sm:$0xf]
  %v60 = vld [vmem:[%s1 + $0x74] sm:$0xf]
  %v61 = vld [vmem:[%s1 + $0x78] sm:$0xf]
  %v62 = vld [vmem:[%s1 + $0x7c] sm:$0xf]
  %v63 = vld [vmem:[%s2] sm:$0x1]
  %v65 = vlaneseq
  %v66 = vshrl.u32 %v65, 7
  %v67 = vsub.s32 0, %v66
  %v68 = vrot.slane %v63, %v67
  %v86 = vunpack.c.l.b16 %v15
  %v87 = vunpack.c.h.b16 %v15
  %v88 = vunpack.c.l.b16 %v16
  %v89 = vunpack.c.h.b16 %v16
  %v90 = vunpack.c.l.b16 %v17
  %v91 = vunpack.c.h.b16 %v17
  %v92 = vunpack.c.l.b16 %v18
  %v93 = vunpack.c.h.b16 %v18
  %v94 = vunpack.c.l.b16 %v19
  %v95 = vunpack.c.h.b16 %v19
  %v96 = vunpack.c.l.b16 %v20
  %v97 = vunpack.c.h.b16 %v20
  %v98 = vunpack.c.l.b16 %v21
  %v99 = vunpack.c.h.b16 %v21
  %v100 = vunpack.c.l.b16 %v22
  %v101 = vunpack.c.h.b16 %v22
  %v102 = vunpack.c.l.b16 %v23
  %v103 = vunpack.c.h.b16 %v23
  %v104 = vunpack.c.l.b16 %v24
  %v105 = vunpack.c.h.b16 %v24
  %v106 = vunpack.c.l.b16 %v25
  %v107 = vunpack.c.h.b16 %v25
  %v108 = vunpack.c.l.b16 %v26
  %v109 = vunpack.c.h.b16 %v26
  %v110 = vunpack.c.l.b16 %v27
  %v111 = vunpack.c.h.b16 %v27
  %v112 = vunpack.c.l.b16 %v28
  %v113 = vunpack.c.h.b16 %v28
  %v114 = vunpack.c.l.b16 %v29
  %v115 = vunpack.c.h.b16 %v29
  %v116 = vunpack.c.l.b16 %v30
  %v117 = vunpack.c.h.b16 %v30
  %v118 = vpack.c.b16 %v88, %v86
  %v119 = vpack.c.b16 %v89, %v87
  %v120 = vpack.c.b16 %v92, %v90
  %v121 = vpack.c.b16 %v93, %v91
  %v122 = vpack.c.b16 %v96, %v94
  %v123 = vpack.c.b16 %v97, %v95
  %v124 = vpack.c.b16 %v100, %v98
  %v125 = vpack.c.b16 %v101, %v99
  %v126 = vpack.c.b16 %v104, %v102
  %v127 = vpack.c.b16 %v105, %v103
  %v128 = vpack.c.b16 %v108, %v106
  %v129 = vpack.c.b16 %v109, %v107
  %v130 = vpack.c.b16 %v112, %v110
  %v131 = vpack.c.b16 %v113, %v111
  %v132 = vpack.c.b16 %v116, %v114
  %v133 = vpack.c.b16 %v117, %v115
  %v182 = vunpack.c.l.b16 %v31
  %v183 = vunpack.c.l.b16 %v32
  %v184 = vunpack.c.l.b16 %v33
  %v185 = vunpack.c.l.b16 %v34
  %v186 = vunpack.c.l.b16 %v35
  %v187 = vunpack.c.l.b16 %v36
  %v188 = vunpack.c.l.b16 %v37
  %v189 = vunpack.c.l.b16 %v38
  %v190 = vunpack.c.l.b16 %v39
  %v191 = vunpack.c.l.b16 %v40
  %v192 = vunpack.c.l.b16 %v41
  %v193 = vunpack.c.l.b16 %v42
  %v194 = vunpack.c.l.b16 %v43
  %v195 = vunpack.c.l.b16 %v44
  %v196 = vunpack.c.l.b16 %v45
  %v197 = vunpack.c.l.b16 %v46
  %v198 = vunpack.c.l.b16 %v47
  %v199 = vunpack.c.l.b16 %v48
  %v200 = vunpack.c.l.b16 %v49
  %v201 = vunpack.c.l.b16 %v50
  %v202 = vunpack.c.l.b16 %v51
  %v203 = vunpack.c.l.b16 %v52
  %v204 = vunpack.c.l.b16 %v53
  %v205 = vunpack.c.l.b16 %v54
  %v206 = vunpack.c.l.b16 %v55
  %v207 = vunpack.c.l.b16 %v56
  %v208 = vunpack.c.l.b16 %v57
  %v209 = vunpack.c.l.b16 %v58
  %v210 = vunpack.c.l.b16 %v59
  %v211 = vunpack.c.l.b16 %v60
  %v212 = vunpack.c.l.b16 %v61
  %v213 = vunpack.c.l.b16 %v62
  %v214 = vpack.c.b16 %v183, %v182
  %v215 = vpack.c.b16 %v185, %v184
  %v216 = vpack.c.b16 %v187, %v186
  %v217 = vpack.c.b16 %v189, %v188
  %v218 = vpack.c.b16 %v191, %v190
  %v219 = vpack.c.b16 %v193, %v192
  %v220 = vpack.c.b16 %v195, %v194
  %v221 = vpack.c.b16 %v197, %v196
  %v222 = vpack.c.b16 %v199, %v198
  %v223 = vpack.c.b16 %v201, %v200
  %v224 = vpack.c.b16 %v203, %v202
  %v225 = vpack.c.b16 %v205, %v204
  %v226 = vpack.c.b16 %v207, %v206
  %v227 = vpack.c.b16 %v209, %v208
  %v228 = vpack.c.b16 %v211, %v210
  %v229 = vpack.c.b16 %v213, %v212
  %246 = vmatprep.subr.bf16.mxu0 0
  %247 = vmatpush1.bf16.msra.mxu0 %v214
  %248 = vmatprep.subr.bf16.mxu0 0
  %249 = vmatpush1.bf16.msra.mxu0 %v215
  %250 = vmatprep.subr.bf16.mxu0 0
  %251 = vmatpush1.bf16.msra.mxu0 %v216
  %252 = vmatprep.subr.bf16.mxu0 0
  %253 = vmatpush1.bf16.msra.mxu0 %v217
  %254 = vmatprep.subr.bf16.mxu0 0
  %255 = vmatpush1.bf16.msra.mxu0 %v218
  %256 = vmatprep.subr.bf16.mxu0 0
  %257 = vmatpush1.bf16.msra.mxu0 %v219
  %258 = vmatprep.subr.bf16.mxu0 0
  %259 = vmatpush1.bf16.msra.mxu0 %v220
  %260 = vmatprep.subr.bf16.mxu0 0
  %261 = vmatpush1.bf16.msra.mxu0 %v221
  %262 = vmatprep.subr.bf16.mxu0 0
  %263 = vmatpush1.bf16.msra.mxu0 %v222
  %264 = vmatprep.subr.bf16.mxu0 0
  %265 = vmatpush1.bf16.msra.mxu0 %v223
  %266 = vmatprep.subr.bf16.mxu0 0
  %267 = vmatpush1.bf16.msra.mxu0 %v224
  %268 = vmatprep.subr.bf16.mxu0 0
  %269 = vmatpush1.bf16.msra.mxu0 %v225
  %270 = vmatprep.subr.bf16.mxu0 0
  %271 = vmatpush1.bf16.msra.mxu0 %v226
  %272 = vmatprep.subr.bf16.mxu0 0
  %273 = vmatpush1.bf16.msra.mxu0 %v227
  %274 = vmatprep.subr.bf16.mxu0 0
  %275 = vmatpush1.bf16.msra.mxu0 %v228
  %276 = vmatprep.subr.bf16.mxu0 0
  %277 = vmatpush1.bf16.msra.mxu0 %v229
  %278 = vmatprep.mubr.bf16.mxu0 %v119
  %279 = vmatmul.mubr.bf16.gmra.mrb[0].mxu0 %v118
  %v280 = vpop.f32.mrb[0].mxu0
  %v281 = vadd.f32 %v68, %v280
  %v282 = vpop.f32.mrb[0].mxu0
  %v283 = vpop.f32.mrb[0].mxu0
  %v284 = vadd.f32 %v68, %v283
  %v285 = vpop.f32.mrb[0].mxu0
  %286 = vmatprep.mubr.bf16.mxu0 %v121
  %287 = vmatmul.mubr.bf16.gmra.mrb[0].mxu0 %v120
  %v288 = vpop.f32.mrb[0].mxu0
  %v289 = vadd.f32 %v68, %v288
  %v290 = vpop.f32.mrb[0].mxu0
  %v291 = vpop.f32.mrb[0].mxu0
  %v292 = vadd.f32 %v68, %v291
  %v293 = vpop.f32.mrb[0].mxu0
  %294 = vmatprep.mubr.bf16.mxu0 %v123
  %295 = vmatmul.mubr.bf16.gmra.mrb[0].mxu0 %v122
  %v296 = vpop.f32.mrb[0].mxu0
  %v297 = vadd.f32 %v68, %v296
  %v298 = vpop.f32.mrb[0].mxu0
  %v299 = vpop.f32.mrb[0].mxu0
  %v300 = vadd.f32 %v68, %v299
  %v301 = vpop.f32.mrb[0].mxu0
  %302 = vmatprep.mubr.bf16.mxu0 %v125
  %303 = vmatmul.mubr.bf16.gmra.mrb[0].mxu0 %v124
  %v304 = vpop.f32.mrb[0].mxu0
  %v305 = vadd.f32 %v68, %v304
  %v306 = vpop.f32.mrb[0].mxu0
  %v307 = vpop.f32.mrb[0].mxu0
  %v308 = vadd.f32 %v68, %v307
  %v309 = vpop.f32.mrb[0].mxu0
  %310 = vmatprep.mubr.bf16.mxu0 %v127
  %311 = vmatmul.mubr.bf16.gmra.mrb[0].mxu0 %v126
  %v312 = vpop.f32.mrb[0].mxu0
  %v313 = vadd.f32 %v68, %v312
  %v314 = vpop.f32.mrb[0].mxu0
  %v315 = vpop.f32.mrb[0].mxu0
  %v316 = vadd.f32 %v68, %v315
  %v317 = vpop.f32.mrb[0].mxu0
  %318 = vmatprep.mubr.bf16.mxu0 %v129
  %319 = vmatmul.mubr.bf16.gmra.mrb[0].mxu0 %v128
  %v320 = vpop.f32.mrb[0].mxu0
  %v321 = vadd.f32 %v68, %v320
  %v322 = vpop.f32.mrb[0].mxu0
  %v323 = vpop.f32.mrb[0].mxu0
  %v324 = vadd.f32 %v68, %v323
  %v325 = vpop.f32.mrb[0].mxu0
  %326 = vmatprep.mubr.bf16.mxu0 %v131
  %327 = vmatmul.mubr.bf16.gmra.mrb[0].mxu0 %v130
  %v328 = vpop.f32.mrb[0].mxu0
  %v329 = vadd.f32 %v68, %v328
  %v330 = vpop.f32.mrb[0].mxu0
  %v331 = vpop.f32.mrb[0].mxu0
  %v332 = vadd.f32 %v68, %v331
  %v333 = vpop.f32.mrb[0].mxu0
  %334 = vmatprep.mubr.bf16.mxu0 %v133
  %335 = vmatmul.mubr.bf16.gmra.mrb[0].mxu0 %v132
  %v336 = vpop.f32.mrb[0].mxu0
  %v337 = vadd.f32 %v68, %v336
  %v338 = vpop.f32.mrb[0].mxu0
  %v339 = vpop.f32.mrb[0].mxu0
  %v340 = vadd.f32 %v68, %v339
  %v341 = vpop.f32.mrb[0].mxu0
  %342 = vdwg.mxu0
  %v343 = vmax.f32 %v281, 0.0
  %v344 = vmax.f32 %v284, 0.0
  %v345 = vmax.f32 %v289, 0.0
  %v346 = vmax.f32 %v292, 0.0
  %v347 = vmax.f32 %v297, 0.0
  %v348 = vmax.f32 %v300, 0.0
  %v349 = vmax.f32 %v305, 0.0
  %v350 = vmax.f32 %v308, 0.0
  %v351 = vmax.f32 %v313, 0.0
  %v352 = vmax.f32 %v316, 0.0
  %v353 = vmax.f32 %v321, 0.0
  %v354 = vmax.f32 %v324, 0.0
  %v355 = vmax.f32 %v329, 0.0
  %v356 = vmax.f32 %v332, 0.0
  %v357 = vmax.f32 %v337, 0.0
  %v358 = vmax.f32 %v340, 0.0
  %v359 = vpack.c.bf16 %v344, %v343
  %v360 = vpack.c.bf16 %v346, %v345
  %v361 = vpack.c.bf16 %v348, %v347
  %v362 = vpack.c.bf16 %v350, %v349
  %v363 = vpack.c.bf16 %v352, %v351
  %v364 = vpack.c.bf16 %v354, %v353
  %v365 = vpack.c.bf16 %v356, %v355
  %v366 = vpack.c.bf16 %v358, %v357
  %v375 = vunpack.c.l.b16 %v359
  %v376 = vunpack.c.h.b16 %v359
  %v377 = vunpack.c.l.b16 %v360
  %v378 = vunpack.c.h.b16 %v360
  %v379 = vunpack.c.l.b16 %v361
  %v380 = vunpack.c.h.b16 %v361
  %v381 = vunpack.c.l.b16 %v362
  %v382 = vunpack.c.h.b16 %v362
  %v383 = vunpack.c.l.b16 %v363
  %v384 = vunpack.c.h.b16 %v363
  %v385 = vunpack.c.l.b16 %v364
  %v386 = vunpack.c.h.b16 %v364
  %v387 = vunpack.c.l.b16 %v365
  %v388 = vunpack.c.h.b16 %v365
  %v389 = vunpack.c.l.b16 %v366
  %v390 = vunpack.c.h.b16 %v366
  %v391 = vpack.c.b16 %v375, %v375
  %v392 = vpack.c.b16 %v376, %v376
  %v393 = vpack.c.b16 %v377, %v377
  %v394 = vpack.c.b16 %v378, %v378
  %v395 = vpack.c.b16 %v379, %v379
  %v396 = vpack.c.b16 %v380, %v380
  %v397 = vpack.c.b16 %v381, %v381
  %v398 = vpack.c.b16 %v382, %v382
  %v399 = vpack.c.b16 %v383, %v383
  %v400 = vpack.c.b16 %v384, %v384
  %v401 = vpack.c.b16 %v385, %v385
  %v402 = vpack.c.b16 %v386, %v386
  %v403 = vpack.c.b16 %v387, %v387
  %v404 = vpack.c.b16 %v388, %v388
  %v405 = vpack.c.b16 %v389, %v389
  %v406 = vpack.c.b16 %v390, %v390
  %vm423 = vcmask 519168
  %424 = vst.msk [vmem:[%s3] sm:$0xf] %vm423, %v391
  %425 = vst.msk [vmem:[%s3 + $0x4] sm:$0xf] %vm423, %v392
  %426 = vst.msk [vmem:[%s3 + $0x8] sm:$0xf] %vm423, %v393
  %427 = vst.msk [vmem:[%s3 + $0xc] sm:$0xf] %vm423, %v394
  %428 = vst.msk [vmem:[%s3 + $0x10] sm:$0xf] %vm423, %v395
  %429 = vst.msk [vmem:[%s3 + $0x14] sm:$0xf] %vm423, %v396
  %430 = vst.msk [vmem:[%s3 + $0x18] sm:$0xf] %vm423, %v397
  %431 = vst.msk [vmem:[%s3 + $0x1c] sm:$0xf] %vm423, %v398
  %432 = vst.msk [vmem:[%s3 + $0x20] sm:$0xf] %vm423, %v399
  %433 = vst.msk [vmem:[%s3 + $0x24] sm:$0xf] %vm423, %v400
  %434 = vst.msk [vmem:[%s3 + $0x28] sm:$0xf] %vm423, %v401
  %435 = vst.msk [vmem:[%s3 + $0x2c] sm:$0xf] %vm423, %v402
  %436 = vst.msk [vmem:[%s3 + $0x30] sm:$0xf] %vm423, %v403
  %437 = vst.msk [vmem:[%s3 + $0x34] sm:$0xf] %vm423, %v404
  %438 = vst.msk [vmem:[%s3 + $0x38] sm:$0xf] %vm423, %v405
  %439 = vst.msk [vmem:[%s3 + $0x3c] sm:$0xf] %vm423, %v406
  // Predicated region
  $region14: #{net_fwd.138} parent=0 // pred_check
    _
  $region15: #{net_fwd.138} parent=0 // pred_check_branch
    %441 = sbr.rel (0) target = $region17
  $region16: #{net_fwd.138} parent=0 // pred_region
    _
  $region17: #{net_fwd.138} parent=0 // pred_fallthru
    _
  // Predicated region
  $region18: #{net_fwd.138} parent=0 // pred_check
    _
  $region19: #{net_fwd.138} parent=0 // pred_check_branch
    %443 = sbr.rel (0) target = $region21
  $region20: #{net_fwd.138} parent=0 // pred_region
    _
  $region21: #{net_fwd.138} parent=0 // pred_fallthru
    _

// kernel: net_fwd.139
$region0: #{net_fwd.139}
  #allocation0 [shape = 'u32[]', space=smem, size = 0x4, offset = 0x4, fixed_abs, tag = 'smem constant byte address 0x4 - core index']
  #allocation1 [shape = 'u32[144,128]{1,0:T(1,128)}', space=vmem, size = 0x12000, scoped, tag = 'internal scratch']
  %s0 = inlined_call_operand.vmem [shape: bf16[512,48], index: 0, kind: input, shape index: {}]
  %s1 = inlined_call_operand.vmem [shape: bf16[48,16], index: 1, kind: input, shape index: {}]
  %s2 = inlined_call_operand.vmem [shape: f32[1,16], index: 2, kind: input, shape index: {}]
  %s3 = inlined_call_operand.vmem [shape: bf16[512,16], index: 3, kind: output, shape index: {}]
  %s4 = sld [smem:[#allocation0]]
  $region22: #{net_fwd.139} parent=0
    _
  %s6 = ssub.s32 1, %s4
  %s7 = scalar_select 0, %s6, %s4
  // Predicated region
  $region2: #{net_fwd.139} parent=0 // pred_check
    _
  $region3: #{net_fwd.139} parent=0 // pred_check_branch
    %9 = sbr.rel (0) target = $region5
  $region4: #{net_fwd.139} parent=0 // pred_region
    _
  $region5: #{net_fwd.139} parent=0 // pred_fallthru
    _
  // Predicated region
  $region6: #{net_fwd.139} parent=0 // pred_check
    _
  $region7: #{net_fwd.139} parent=0 // pred_check_branch
    %11 = sbr.rel (0) target = $region9
  $region8: #{net_fwd.139} parent=0 // pred_region
    _
  $region9: #{net_fwd.139} parent=0 // pred_fallthru
    _
  // Predicated region
  $region10: #{net_fwd.139} parent=0 // pred_check
    _
  $region11: #{net_fwd.139} parent=0 // pred_check_branch
    %13 = sbr.rel (0) target = $region13
  $region12: #{net_fwd.139} parent=0 // pred_region
    _
  $region13: #{net_fwd.139} parent=0 // pred_fallthru
    _
  %v15 = vld [vmem:[%s0] sm:$0xf]
  %v16 = vld [vmem:[%s0 + $0x4] sm:$0xf]
  %v17 = vld [vmem:[%s0 + $0x8] sm:$0xf]
  %v18 = vld [vmem:[%s0 + $0xc] sm:$0xf]
  %v19 = vld [vmem:[%s0 + $0x10] sm:$0xf]
  %v20 = vld [vmem:[%s0 + $0x14] sm:$0xf]
  %v21 = vld [vmem:[%s0 + $0x18] sm:$0xf]
  %v22 = vld [vmem:[%s0 + $0x1c] sm:$0xf]
  %v23 = vld [vmem:[%s0 + $0x20] sm:$0xf]
  %v24 = vld [vmem:[%s0 + $0x24] sm:$0xf]
  %v25 = vld [vmem:[%s0 + $0x28] sm:$0xf]
  %v26 = vld [vmem:[%s0 + $0x2c] sm:$0xf]
  %v27 = vld [vmem:[%s0 + $0x30] sm:$0xf]
  %v28 = vld [vmem:[%s0 + $0x34] sm:$0xf]
  %v29 = vld [vmem:[%s0 + $0x38] sm:$0xf]
  %v30 = vld [vmem:[%s0 + $0x3c] sm:$0xf]
  %v31 = vld [vmem:[%s0 + $0x40] sm:$0xf]
  %v32 = vld [vmem:[%s0 + $0x44] sm:$0xf]
  %v33 = vld [vmem:[%s0 + $0x48] sm:$0xf]
  %v34 = vld [vmem:[%s0 + $0x4c] sm:$0xf]
  %v35 = vld [vmem:[%s0 + $0x50] sm:$0xf]
  %v36 = vld [vmem:[%s0 + $0x54] sm:$0xf]
  %v37 = vld [vmem:[%s0 + $0x58] sm:$0xf]
  %v38 = vld [vmem:[%s0 + $0x5c] sm:$0xf]
  %v39 = vld [vmem:[%s0 + $0x60] sm:$0xf]
  %v40 = vld [vmem:[%s0 + $0x64] sm:$0xf]
  %v41 = vld [vmem:[%s0 + $0x68] sm:$0xf]
  %v42 = vld [vmem:[%s0 + $0x6c] sm:$0xf]
  %v43 = vld [vmem:[%s0 + $0x70] sm:$0xf]
  %v44 = vld [vmem:[%s0 + $0x74] sm:$0xf]
  %v45 = vld [vmem:[%s0 + $0x78] sm:$0xf]
  %v46 = vld [vmem:[%s0 + $0x7c] sm:$0xf]
  %v47 = vld [vmem:[%s0 + $0x80] sm:$0xf]
  %v48 = vld [vmem:[%s0 + $0x84] sm:$0xf]
  %v49 = vld [vmem:[%s0 + $0x88] sm:$0xf]
  %v50 = vld [vmem:[%s0 + $0x8c] sm:$0xf]
  %v51 = vld [vmem:[%s0 + $0x90] sm:$0xf]
  %v52 = vld [vmem:[%s0 + $0x94] sm:$0xf]
  %v53 = vld [vmem:[%s0 + $0x98] sm:$0xf]
  %v54 = vld [vmem:[%s0 + $0x9c] sm:$0xf]
  %v55 = vld [vmem:[%s0 + $0xa0] sm:$0xf]
  %v56 = vld [vmem:[%s0 + $0xa4] sm:$0xf]
  %v57 = vld [vmem:[%s0 + $0xa8] sm:$0xf]
  %v58 = vld [vmem:[%s0 + $0xac] sm:$0xf]
  %v59 = vld [vmem:[%s0 + $0xb0] sm:$0xf]
  %v60 = vld [vmem:[%s0 + $0xb4] sm:$0xf]
  %v61 = vld [vmem:[%s0 + $0xb8] sm:$0xf]
  %v62 = vld [vmem:[%s0 + $0xbc] sm:$0xf]
  %v63 = vld [vmem:[%s0 + $0xc0] sm:$0xf]
  %v64 = vld [vmem:[%s0 + $0xc4] sm:$0xf]
  %v65 = vld [vmem:[%s0 + $0xc8] sm:$0xf]
  %v66 = vld [vmem:[%s0 + $0xcc] sm:$0xf]
  %v67 = vld [vmem:[%s0 + $0xd0] sm:$0xf]
  %v68 = vld [vmem:[%s0 + $0xd4] sm:$0xf]
  %v69 = vld [vmem:[%s0 + $0xd8] sm:$0xf]
  %v70 = vld [vmem:[%s0 + $0xdc] sm:$0xf]
  %v71 = vld [vmem:[%s0 + $0xe0] sm:$0xf]
  %v72 = vld [vmem:[%s0 + $0xe4] sm:$0xf]
  %v73 = vld [vmem:[%s0 + $0xe8] sm:$0xf]
  %v74 = vld [vmem:[%s0 + $0xec] sm:$0xf]
  %v75 = vld [vmem:[%s0 + $0xf0] sm:$0xf]
  %v76 = vld [vmem:[%s0 + $0xf4] sm:$0xf]
  %v77 = vld [vmem:[%s0 + $0xf8] sm:$0xf]
  %v78 = vld [vmem:[%s0 + $0xfc] sm:$0xf]
  %v79 = vld [vmem:[%s1] sm:$0xf]
  %v80 = vld [vmem:[%s1 + $0x4] sm:$0xf]
  %v81 = vld [vmem:[%s1 + $0x8] sm:$0xf]
  %v82 = vld [vmem:[%s1 + $0xc] sm:$0xf]
  %v83 = vld [vmem:[%s1 + $0x10] sm:$0xf]
  %v84 = vld [vmem:[%s1 + $0x14] sm:$0xf]
  %v85 = vld [vmem:[%s2] sm:$0x1]
  %v87 = vlaneseq
  %v88 = vshrl.u32 %v87, 7
  %v89 = vsub.s32 0, %v88
  %v90 = vrot.slane %v85, %v89
  %v156 = vunpack.c.l.b16 %v15
  %v157 = vunpack.c.l.b16 %v16
  %v158 = vunpack.c.l.b16 %v17
  %v159 = vunpack.c.l.b16 %v18
  %v160 = vunpack.c.l.b16 %v19
  %v161 = vunpack.c.l.b16 %v20
  %v162 = vunpack.c.l.b16 %v21
  %v163 = vunpack.c.l.b16 %v22
  %v164 = vunpack.c.l.b16 %v23
  %v165 = vunpack.c.l.b16 %v24
  %v166 = vunpack.c.l.b16 %v25
  %v167 = vunpack.c.l.b16 %v26
  %v168 = vunpack.c.l.b16 %v27
  %v169 = vunpack.c.l.b16 %v28
  %v170 = vunpack.c.l.b16 %v29
  %v171 = vunpack.c.l.b16 %v30
  %v172 = vunpack.c.l.b16 %v31
  %v173 = vunpack.c.l.b16 %v32
  %v174 = vunpack.c.l.b16 %v33
  %v175 = vunpack.c.l.b16 %v34
  %v176 = vunpack.c.l.b16 %v35
  %v177 = vunpack.c.l.b16 %v36
  %v178 = vunpack.c.l.b16 %v37
  %v179 = vunpack.c.l.b16 %v38
  %v180 = vunpack.c.l.b16 %v39
  %v181 = vunpack.c.l.b16 %v40
  %v182 = vunpack.c.l.b16 %v41
  %v183 = vunpack.c.l.b16 %v42
  %v184 = vunpack.c.l.b16 %v43
  %v185 = vunpack.c.l.b16 %v44
  %v186 = vunpack.c.l.b16 %v45
  %v187 = vunpack.c.l.b16 %v46
  %v188 = vunpack.c.l.b16 %v47
  %v189 = vunpack.c.l.b16 %v48
  %v190 = vunpack.c.l.b16 %v49
  %v191 = vunpack.c.l.b16 %v50
  %v192 = vunpack.c.l.b16 %v51
  %v193 = vunpack.c.l.b16 %v52
  %v194 = vunpack.c.l.b16 %v53
  %v195 = vunpack.c.l.b16 %v54
  %v196 = vunpack.c.l.b16 %v55
  %v197 = vunpack.c.l.b16 %v56
  %v198 = vunpack.c.l.b16 %v57
  %v199 = vunpack.c.l.b16 %v58
  %v200 = vunpack.c.l.b16 %v59
  %v201 = vunpack.c.l.b16 %v60
  %v202 = vunpack.c.l.b16 %v61
  %v203 = vunpack.c.l.b16 %v62
  %v204 = vunpack.c.l.b16 %v63
  %v205 = vunpack.c.l.b16 %v64
  %v206 = vunpack.c.l.b16 %v65
  %v207 = vunpack.c.l.b16 %v66
  %v208 = vunpack.c.l.b16 %v67
  %v209 = vunpack.c.l.b16 %v68
  %v210 = vunpack.c.l.b16 %v69
  %v211 = vunpack.c.l.b16 %v70
  %v212 = vunpack.c.l.b16 %v71
  %v213 = vunpack.c.l.b16 %v72
  %v214 = vunpack.c.l.b16 %v73
  %v215 = vunpack.c.l.b16 %v74
  %v216 = vunpack.c.l.b16 %v75
  %v217 = vunpack.c.l.b16 %v76
  %v218 = vunpack.c.l.b16 %v77
  %v219 = vunpack.c.l.b16 %v78
  %v220 = vpack.c.b16 %v157, %v156
  %v221 = vpack.c.b16 %v159, %v158
  %v222 = vpack.c.b16 %v161, %v160
  %v223 = vpack.c.b16 %v163, %v162
  %v224 = vpack.c.b16 %v165, %v164
  %v225 = vpack.c.b16 %v167, %v166
  %v226 = vpack.c.b16 %v169, %v168
  %v227 = vpack.c.b16 %v171, %v170
  %v228 = vpack.c.b16 %v173, %v172
  %v229 = vpack.c.b16 %v175, %v174
  %v230 = vpack.c.b16 %v177, %v176
  %v231 = vpack.c.b16 %v179, %v178
  %v232 = vpack.c.b16 %v181, %v180
  %v233 = vpack.c.b16 %v183, %v182
  %v234 = vpack.c.b16 %v185, %v184
  %v235 = vpack.c.b16 %v187, %v186
  %v236 = vpack.c.b16 %v189, %v188
  %v237 = vpack.c.b16 %v191, %v190
  %v238 = vpack.c.b16 %v193, %v192
  %v239 = vpack.c.b16 %v195, %v194
  %v240 = vpack.c.b16 %v197, %v196
  %v241 = vpack.c.b16 %v199, %v198
  %v242 = vpack.c.b16 %v201, %v200
  %v243 = vpack.c.b16 %v203, %v202
  %v244 = vpack.c.b16 %v205, %v204
  %v245 = vpack.c.b16 %v207, %v206
  %v246 = vpack.c.b16 %v209, %v208
  %v247 = vpack.c.b16 %v211, %v210
  %v248 = vpack.c.b16 %v213, %v212
  %v249 = vpack.c.b16 %v215, %v214
  %v250 = vpack.c.b16 %v217, %v216
  %v251 = vpack.c.b16 %v219, %v218
  %v258 = vunpack.c.l.b16 %v79
  %v259 = vunpack.c.l.b16 %v80
  %v260 = vunpack.c.l.b16 %v81
  %v261 = vunpack.c.l.b16 %v82
  %v262 = vunpack.c.l.b16 %v83
  %v263 = vunpack.c.l.b16 %v84
  %v264 = vpack.c.b16 %v259, %v258
  %v265 = vpack.c.b16 %v261, %v260
  %v266 = vpack.c.b16 %v263, %v262
  %vm270 = vcmask 392192
  %v272 = vsel %vm270, %v220, 0
  %v275 = vsel %vm270, %v221, 0
  %v278 = vsel %vm270, %v222, 0
  %v281 = vsel %vm270, %v223, 0
  %v284 = vsel %vm270, %v224, 0
  %v287 = vsel %vm270, %v225, 0
  %v290 = vsel %vm270, %v226, 0
  %v293 = vsel %vm270, %v227, 0
  %v296 = vsel %vm270, %v228, 0
  %v299 = vsel %vm270, %v229, 0
  %v302 = vsel %vm270, %v230, 0
  %v305 = vsel %vm270, %v231, 0
  %v308 = vsel %vm270, %v232, 0
  %v311 = vsel %vm270, %v233, 0
  %v314 = vsel %vm270, %v234, 0
  %v317 = vsel %vm270, %v235, 0
  %v320 = vsel %vm270, %v236, 0
  %v323 = vsel %vm270, %v237, 0
  %v326 = vsel %vm270, %v238, 0
  %v329 = vsel %vm270, %v239, 0
  %v332 = vsel %vm270, %v240, 0
  %v335 = vsel %vm270, %v241, 0
  %v338 = vsel %vm270, %v242, 0
  %v341 = vsel %vm270, %v243, 0
  %v344 = vsel %vm270, %v244, 0
  %v347 = vsel %vm270, %v245, 0
  %v350 = vsel %vm270, %v246, 0
  %v353 = vsel %vm270, %v247, 0
  %v356 = vsel %vm270, %v248, 0
  %v359 = vsel %vm270, %v249, 0
  %v362 = vsel %vm270, %v250, 0
  %v365 = vsel %vm270, %v251, 0
  %367 = vmatprep.subr.bf16.mxu0 0
  %368 = vmatpush1.bf16.msra.mxu0 %v264
  %369 = vmatprep.subr.bf16.mxu0 0
  %370 = vmatpush1.bf16.msra.mxu0 %v265
  %371 = vmatprep.subr.bf16.mxu0 0
  %372 = vmatpush1.bf16.msra.mxu0 %v266
  %373 = vmatprep.subr.bf16.mxu0 0
  %374 = vmatpush1.bf16.msra.mxu0 0
  %375 = vmatprep.subr.bf16.mxu0 0
  %376 = vmatpush1.bf16.msra.mxu0 0
  %377 = vmatprep.subr.bf16.mxu0 0
  %378 = vmatpush1.bf16.msra.mxu0 0
  %379 = vmatprep.subr.bf16.mxu0 0
  %380 = vmatpush1.bf16.msra.mxu0 0
  %381 = vmatprep.subr.bf16.mxu0 0
  %382 = vmatpush1.bf16.msra.mxu0 0
  %383 = vmatprep.subr.bf16.mxu0 0
  %384 = vmatpush1.bf16.msra.mxu0 0
  %385 = vmatprep.subr.bf16.mxu0 0
  %386 = vmatpush1.bf16.msra.mxu0 0
  %387 = vmatprep.subr.bf16.mxu0 0
  %388 = vmatpush1.bf16.msra.mxu0 0
  %389 = vmatprep.subr.bf16.mxu0 0
  %390 = vmatpush1.bf16.msra.mxu0 0
  %391 = vmatprep.subr.bf16.mxu0 0
  %392 = vmatpush1.bf16.msra.mxu0 0
  %393 = vmatprep.subr.bf16.mxu0 0
  %394 = vmatpush1.bf16.msra.mxu0 0
  %395 = vmatprep.subr.bf16.mxu0 0
  %396 = vmatpush1.bf16.msra.mxu0 0
  %397 = vmatprep.subr.bf16.mxu0 0
  %398 = vmatpush1.bf16.msra.mxu0 0
  %399 = vmatprep.mubr.bf16.mxu0 0
  %400 = vmatmul.mubr.bf16.gmra.mrb[0].mxu0 %v272
  %v401 = vpop.f32.mrb[0].mxu0
  %v402 = vadd.f32 %v90, %v401
  %v403 = vpop.f32.mrb[0].mxu0
  %v404 = vpop.f32.mrb[0].mxu0
  %v405 = vadd.f32 %v90, %v404
  %v406 = vpop.f32.mrb[0].mxu0
  %407 = vmatprep.mubr.bf16.mxu0 0
  %408 = vmatmul.mubr.bf16.gmra.mrb[0].mxu0 %v275
  %v409 = vpop.f32.mrb[0].mxu0
  %v410 = vadd.f32 %v90, %v409
  %v411 = vpop.f32.mrb[0].mxu0
  %v412 = vpop.f32.mrb[0].mxu0
  %v413 = vadd.f32 %v90, %v412
  %v414 = vpop.f32.mrb[0].mxu0
  %415 = vmatprep.mubr.bf16.mxu0 0
  %416 = vmatmul.mubr.bf16.gmra.mrb[0].mxu0 %v278
  %v417 = vpop.f32.mrb[0].mxu0
  %v418 = vadd.f32 %v90, %v417
  %v419 = vpop.f32.mrb[0].mxu0
  %v420 = vpop.f32.mrb[0].mxu0
  %v421 = vadd.f32 %v90, %v420
  %v422 = vpop.f32.mrb[0].mxu0
  %423 = vmatprep.mubr.bf16.mxu0 0
  %424 = vmatmul.mubr.bf16.gmra.mrb[0].mxu0 %v281
  %v425 = vpop.f32.mrb[0].mxu0
  %v426 = vadd.f32 %v90, %v425
  %v427 = vpop.f32.mrb[0].mxu0
  %v428 = vpop.f32.mrb[0].mxu0
  %v429 = vadd.f32 %v90, %v428
  %v430 = vpop.f32.mrb[0].mxu0
  %431 = vmatprep.mubr.bf16.mxu0 0
  %432 = vmatmul.mubr.bf16.gmra.mrb[0].mxu0 %v284
  %v433 = vpop.f32.mrb[0].mxu0
  %v434 = vadd.f32 %v90, %v433
  %v435 = vpop.f32.mrb[0].mxu0
  %v436 = vpop.f32.mrb[0].mxu0
  %v437 = vadd.f32 %v90, %v436
  %v438 = vpop.f32.mrb[0].mxu0
  %439 = vmatprep.mubr.bf16.mxu0 0
  %440 = vmatmul.mubr.bf16.gmra.mrb[0].mxu0 %v287
  %v441 = vpop.f32.mrb[0].mxu0
  %v442 = vadd.f32 %v90, %v441
  %v443 = vpop.f32.mrb[0].mxu0
  %v444 = vpop.f32.mrb[0].mxu0
  %v445 = vadd.f32 %v90, %v444
  %v446 = vpop.f32.mrb[0].mxu0
  %447 = vmatprep.mubr.bf16.mxu0 0
  %448 = vmatmul.mubr.bf16.gmra.mrb[0].mxu0 %v290
  %v449 = vpop.f32.mrb[0].mxu0
  %v450 = vadd.f32 %v90, %v449
  %v451 = vpop.f32.mrb[0].mxu0
  %v452 = vpop.f32.mrb[0].mxu0
  %v453 = vadd.f32 %v90, %v452
  %v454 = vpop.f32.mrb[0].mxu0
  %455 = vmatprep.mubr.bf16.mxu0 0
  %456 = vmatmul.mubr.bf16.gmra.mrb[0].mxu0 %v293
  %v457 = vpop.f32.mrb[0].mxu0
  %v458 = vadd.f32 %v90, %v457
  %v459 = vpop.f32.mrb[0].mxu0
  %v460 = vpop.f32.mrb[0].mxu0
  %v461 = vadd.f32 %v90, %v460
  %v462 = vpop.f32.mrb[0].mxu0
  %463 = vmatprep.mubr.bf16.mxu0 0
  %464 = vmatmul.mubr.bf16.gmra.mrb[0].mxu0 %v296
  %v465 = vpop.f32.mrb[0].mxu0
  %v466 = vadd.f32 %v90, %v465
  %v467 = vpop.f32.mrb[0].mxu0
  %v468 = vpop.f32.mrb[0].mxu0
  %v469 = vadd.f32 %v90, %v468
  %v470 = vpop.f32.mrb[0].mxu0
  %471 = vmatprep.mubr.bf16.mxu0 0
  %472 = vmatmul.mubr.bf16.gmra.mrb[0].mxu0 %v299
  %v473 = vpop.f32.mrb[0].mxu0
  %v474 = vadd.f32 %v90, %v473
  %v475 = vpop.f32.mrb[0].mxu0
  %v476 = vpop.f32.mrb[0].mxu0
  %v477 = vadd.f32 %v90, %v476
  %v478 = vpop.f32.mrb[0].mxu0
  %479 = vmatprep.mubr.bf16.mxu0 0
  %480 = vmatmul.mubr.bf16.gmra.mrb[0].mxu0 %v302
  %v481 = vpop.f32.mrb[0].mxu0
  %v482 = vadd.f32 %v90, %v481
  %v483 = vpop.f32.mrb[0].mxu0
  %v484 = vpop.f32.mrb[0].mxu0
  %v485 = vadd.f32 %v90, %v484
  %v486 = vpop.f32.mrb[0].mxu0
  %487 = vmatprep.mubr.bf16.mxu0 0
  %488 = vmatmul.mubr.bf16.gmra.mrb[0].mxu0 %v305
  %v489 = vpop.f32.mrb[0].mxu0
  %v490 = vadd.f32 %v90, %v489
  %v491 = vpop.f32.mrb[0].mxu0
  %v492 = vpop.f32.mrb[0].mxu0
  %v493 = vadd.f32 %v90, %v492
  %v494 = vpop.f32.mrb[0].mxu0
  %495 = vmatprep.mubr.bf16.mxu0 0
  %496 = vmatmul.mubr.bf16.gmra.mrb[0].mxu0 %v308
  %v497 = vpop.f32.mrb[0].mxu0
  %v498 = vadd.f32 %v90, %v497
  %v499 = vpop.f32.mrb[0].mxu0
  %v500 = vpop.f32.mrb[0].mxu0
  %v501 = vadd.f32 %v90, %v500
  %v502 = vpop.f32.mrb[0].mxu0
  %503 = vmatprep.mubr.bf16.mxu0 0
  %504 = vmatmul.mubr.bf16.gmra.mrb[0].mxu0 %v311
  %v505 = vpop.f32.mrb[0].mxu0
  %v506 = vadd.f32 %v90, %v505
  %v507 = vpop.f32.mrb[0].mxu0
  %v508 = vpop.f32.mrb[0].mxu0
  %v509 = vadd.f32 %v90, %v508
  %v510 = vpop.f32.mrb[0].mxu0
  %511 = vmatprep.mubr.bf16.mxu0 0
  %512 = vmatmul.mubr.bf16.gmra.mrb[0].mxu0 %v314
  %v513 = vpop.f32.mrb[0].mxu0
  %v514 = vadd.f32 %v90, %v513
  %v515 = vpop.f32.mrb[0].mxu0
  %v516 = vpop.f32.mrb[0].mxu0
  %v517 = vadd.f32 %v90, %v516
  %v518 = vpop.f32.mrb[0].mxu0
  %519 = vmatprep.mubr.bf16.mxu0 0
  %520 = vmatmul.mubr.bf16.gmra.mrb[0].mxu0 %v317
  %v521 = vpop.f32.mrb[0].mxu0
  %v522 = vadd.f32 %v90, %v521
  %v523 = vpop.f32.mrb[0].mxu0
  %v524 = vpop.f32.mrb[0].mxu0
  %v525 = vadd.f32 %v90, %v524
  %v526 = vpop.f32.mrb[0].mxu0
  %527 = vmatprep.mubr.bf16.mxu0 0
  %528 = vmatmul.mubr.bf16.gmra.mrb[0].mxu0 %v320
  %v529 = vpop.f32.mrb[0].mxu0
  %v530 = vadd.f32 %v90, %v529
  %v531 = vpop.f32.mrb[0].mxu0
  %v532 = vpop.f32.mrb[0].mxu0
  %v533 = vadd.f32 %v90, %v532
  %v534 = vpop.f32.mrb[0].mxu0
  %535 = vmatprep.mubr.bf16.mxu0 0
  %536 = vmatmul.mubr.bf16.gmra.mrb[0].mxu0 %v323
  %v537 = vpop.f32.mrb[0].mxu0
  %v538 = vadd.f32 %v90, %v537
  %v539 = vpop.f32.mrb[0].mxu0
  %v540 = vpop.f32.mrb[0].mxu0
  %v541 = vadd.f32 %v90, %v540
  %v542 = vpop.f32.mrb[0].mxu0
  %543 = vmatprep.mubr.bf16.mxu0 0
  %544 = vmatmul.mubr.bf16.gmra.mrb[0].mxu0 %v326
  %v545 = vpop.f32.mrb[0].mxu0
  %v546 = vadd.f32 %v90, %v545
  %v547 = vpop.f32.mrb[0].mxu0
  %v548 = vpop.f32.mrb[0].mxu0
  %v549 = vadd.f32 %v90, %v548
  %v550 = vpop.f32.mrb[0].mxu0
  %551 = vmatprep.mubr.bf16.mxu0 0
  %552 = vmatmul.mubr.bf16.gmra.mrb[0].mxu0 %v329
  %v553 = vpop.f32.mrb[0].mxu0
  %v554 = vadd.f32 %v90, %v553
  %v555 = vpop.f32.mrb[0].mxu0
  %v556 = vpop.f32.mrb[0].mxu0
  %v557 = vadd.f32 %v90, %v556
  %v558 = vpop.f32.mrb[0].mxu0
  %559 = vmatprep.mubr.bf16.mxu0 0
  %560 = vmatmul.mubr.bf16.gmra.mrb[0].mxu0 %v332
  %v561 = vpop.f32.mrb[0].mxu0
  %v562 = vadd.f32 %v90, %v561
  %v563 = vpop.f32.mrb[0].mxu0
  %v564 = vpop.f32.mrb[0].mxu0
  %v565 = vadd.f32 %v90, %v564
  %v566 = vpop.f32.mrb[0].mxu0
  %567 = vmatprep.mubr.bf16.mxu0 0
  %568 = vmatmul.mubr.bf16.gmra.mrb[0].mxu0 %v335
  %v569 = vpop.f32.mrb[0].mxu0
  %v570 = vadd.f32 %v90, %v569
  %v571 = vpop.f32.mrb[0].mxu0
  %v572 = vpop.f32.mrb[0].mxu0
  %v573 = vadd.f32 %v90, %v572
  %v574 = vpop.f32.mrb[0].mxu0
  %575 = vmatprep.mubr.bf16.mxu0 0
  %576 = vmatmul.mubr.bf16.gmra.mrb[0].mxu0 %v338
  %v577 = vpop.f32.mrb[0].mxu0
  %v578 = vadd.f32 %v90, %v577
  %v579 = vpop.f32.mrb[0].mxu0
  %v580 = vpop.f32.mrb[0].mxu0
  %v581 = vadd.f32 %v90, %v580
  %v582 = vpop.f32.mrb[0].mxu0
  %583 = vmatprep.mubr.bf16.mxu0 0
  %584 = vmatmul.mubr.bf16.gmra.mrb[0].mxu0 %v341
  %v585 = vpop.f32.mrb[0].mxu0
  %v586 = vadd.f32 %v90, %v585
  %v587 = vpop.f32.mrb[0].mxu0
  %v588 = vpop.f32.mrb[0].mxu0
  %v589 = vadd.f32 %v90, %v588
  %v590 = vpop.f32.mrb[0].mxu0
  %591 = vmatprep.mubr.bf16.mxu0 0
  %592 = vmatmul.mubr.bf16.gmra.mrb[0].mxu0 %v344
  %v593 = vpop.f32.mrb[0].mxu0
  %v594 = vadd.f32 %v90, %v593
  %v595 = vpop.f32.mrb[0].mxu0
  %v596 = vpop.f32.mrb[0].mxu0
  %v597 = vadd.f32 %v90, %v596
  %v598 = vpop.f32.mrb[0].mxu0
  %599 = vmatprep.mubr.bf16.mxu0 0
  %600 = vmatmul.mubr.bf16.gmra.mrb[0].mxu0 %v347
  %v601 = vpop.f32.mrb[0].mxu0
  %v602 = vadd.f32 %v90, %v601
  %v603 = vpop.f32.mrb[0].mxu0
  %v604 = vpop.f32.mrb[0].mxu0
  %v605 = vadd.f32 %v90, %v604
  %v606 = vpop.f32.mrb[0].mxu0
  %607 = vmatprep.mubr.bf16.mxu0 0
  %608 = vmatmul.mubr.bf16.gmra.mrb[0].mxu0 %v350
  %v609 = vpop.f32.mrb[0].mxu0
  %v610 = vadd.f32 %v90, %v609
  %v611 = vpop.f32.mrb[0].mxu0
  %v612 = vpop.f32.mrb[0].mxu0
  %v613 = vadd.f32 %v90, %v612
  %v614 = vpop.f32.mrb[0].mxu0
  %615 = vmatprep.mubr.bf16.mxu0 0
  %616 = vmatmul.mubr.bf16.gmra.mrb[0].mxu0 %v353
  %v617 = vpop.f32.mrb[0].mxu0
  %v618 = vadd.f32 %v90, %v617
  %v619 = vpop.f32.mrb[0].mxu0
  %v620 = vpop.f32.mrb[0].mxu0
  %v621 = vadd.f32 %v90, %v620
  %v622 = vpop.f32.mrb[0].mxu0
  %623 = vmatprep.mubr.bf16.mxu0 0
  %624 = vmatmul.mubr.bf16.gmra.mrb[0].mxu0 %v356
  %v625 = vpop.f32.mrb[0].mxu0
  %v626 = vadd.f32 %v90, %v625
  %v627 = vpop.f32.mrb[0].mxu0
  %v628 = vpop.f32.mrb[0].mxu0
  %v629 = vadd.f32 %v90, %v628
  %v630 = vpop.f32.mrb[0].mxu0
  %631 = vmatprep.mubr.bf16.mxu0 0
  %632 = vmatmul.mubr.bf16.gmra.mrb[0].mxu0 %v359
  %v633 = vpop.f32.mrb[0].mxu0
  %v634 = vadd.f32 %v90, %v633
  %v635 = vpop.f32.mrb[0].mxu0
  %v636 = vpop.f32.mrb[0].mxu0
  %v637 = vadd.f32 %v90, %v636
  %v638 = vpop.f32.mrb[0].mxu0
  %639 = vmatprep.mubr.bf16.mxu0 0
  %640 = vmatmul.mubr.bf16.gmra.mrb[0].mxu0 %v362
  %v641 = vpop.f32.mrb[0].mxu0
  %v642 = vadd.f32 %v90, %v641
  %v643 = vpop.f32.mrb[0].mxu0
  %v644 = vpop.f32.mrb[0].mxu0
  %v645 = vadd.f32 %v90, %v644
  %v646 = vpop.f32.mrb[0].mxu0
  %647 = vmatprep.mubr.bf16.mxu0 0
  %648 = vmatmul.mubr.bf16.gmra.mrb[0].mxu0 %v365
  %v649 = vpop.f32.mrb[0].mxu0
  %v650 = vadd.f32 %v90, %v649
  %v651 = vpop.f32.mrb[0].mxu0
  %v652 = vpop.f32.mrb[0].mxu0
  %v653 = vadd.f32 %v90, %v652
  %v654 = vpop.f32.mrb[0].mxu0
  %655 = vdwg.mxu0
  %v656 = vmax.f32 %v402, 0.0
  %v657 = vmax.f32 %v405, 0.0
  %v658 = vmax.f32 %v410, 0.0
  %v659 = vmax.f32 %v413, 0.0
  %v660 = vmax.f32 %v418, 0.0
  %v661 = vmax.f32 %v421, 0.0
  %v662 = vmax.f32 %v426, 0.0
  %v663 = vmax.f32 %v429, 0.0
  %v664 = vmax.f32 %v434, 0.0
  %v665 = vmax.f32 %v437, 0.0
  %v666 = vmax.f32 %v442, 0.0
  %v667 = vmax.f32 %v445, 0.0
  %v668 = vmax.f32 %v450, 0.0
  %v669 = vmax.f32 %v453, 0.0
  %v670 = vmax.f32 %v458, 0.0
  %v671 = vmax.f32 %v461, 0.0
  %v672 = vmax.f32 %v466, 0.0
  %v673 = vmax.f32 %v469, 0.0
  %v674 = vmax.f32 %v474, 0.0
  %v675 = vmax.f32 %v477, 0.0
  %v676 = vmax.f32 %v482, 0.0
  %v677 = vmax.f32 %v485, 0.0
  %v678 = vmax.f32 %v490, 0.0
  %v679 = vmax.f32 %v493, 0.0
  %v680 = vmax.f32 %v498, 0.0
  %v681 = vmax.f32 %v501, 0.0
  %v682 = vmax.f32 %v506, 0.0
  %v683 = vmax.f32 %v509, 0.0
  %v684 = vmax.f32 %v514, 0.0
  %v685 = vmax.f32 %v517, 0.0
  %v686 = vmax.f32 %v522, 0.0
  %v687 = vmax.f32 %v525, 0.0
  %v688 = vmax.f32 %v530, 0.0
  %v689 = vmax.f32 %v533, 0.0
  %v690 = vmax.f32 %v538, 0.0
  %v691 = vmax.f32 %v541, 0.0
  %v692 = vmax.f32 %v546, 0.0
  %v693 = vmax.f32 %v549, 0.0
  %v694 = vmax.f32 %v554, 0.0
  %v695 = vmax.f32 %v557, 0.0
  %v696 = vmax.f32 %v562, 0.0
  %v697 = vmax.f32 %v565, 0.0
  %v698 = vmax.f32 %v570, 0.0
  %v699 = vmax.f32 %v573, 0.0
  %v700 = vmax.f32 %v578, 0.0
  %v701 = vmax.f32 %v581, 0.0
  %v702 = vmax.f32 %v586, 0.0
  %v703 = vmax.f32 %v589, 0.0
  %v704 = vmax.f32 %v594, 0.0
  %v705 = vmax.f32 %v597, 0.0
  %v706 = vmax.f32 %v602, 0.0
  %v707 = vmax.f32 %v605, 0.0
  %v708 = vmax.f32 %v610, 0.0
  %v709 = vmax.f32 %v613, 0.0
  %v710 = vmax.f32 %v618, 0.0
  %v711 = vmax.f32 %v621, 0.0
  %v712 = vmax.f32 %v626, 0.0
  %v713 = vmax.f32 %v629, 0.0
  %v714 = vmax.f32 %v634, 0.0
  %v715 = vmax.f32 %v637, 0.0
  %v716 = vmax.f32 %v642, 0.0
  %v717 = vmax.f32 %v645, 0.0
  %v718 = vmax.f32 %v650, 0.0
  %v719 = vmax.f32 %v653, 0.0
  %v720 = vpack.c.bf16 %v657, %v656
  %v721 = vpack.c.bf16 %v659, %v658
  %v722 = vpack.c.bf16 %v661, %v660
  %v723 = vpack.c.bf16 %v663, %v662
  %v724 = vpack.c.bf16 %v665, %v664
  %v725 = vpack.c.bf16 %v667, %v666
  %v726 = vpack.c.bf16 %v669, %v668
  %v727 = vpack.c.bf16 %v671, %v670
  %v728 = vpack.c.bf16 %v673, %v672
  %v729 = vpack.c.bf16 %v675, %v674
  %v730 = vpack.c.bf16 %v677, %v676
  %v731 = vpack.c.bf16 %v679, %v678
  %v732 = vpack.c.bf16 %v681, %v680
  %v733 = vpack.c.bf16 %v683, %v682
  %v734 = vpack.c.bf16 %v685, %v684
  %v735 = vpack.c.bf16 %v687, %v686
  %v736 = vpack.c.bf16 %v689, %v688
  %v737 = vpack.c.bf16 %v691, %v690
  %v738 = vpack.c.bf16 %v693, %v692
  %v739 = vpack.c.bf16 %v695, %v694
  %v740 = vpack.c.bf16 %v697, %v696
  %v741 = vpack.c.bf16 %v699, %v698
  %v742 = vpack.c.bf16 %v701, %v700
  %v743 = vpack.c.bf16 %v703, %v702
  %v744 = vpack.c.bf16 %v705, %v704
  %v745 = vpack.c.bf16 %v707, %v706
  %v746 = vpack.c.bf16 %v709, %v708
  %v747 = vpack.c.bf16 %v711, %v710
  %v748 = vpack.c.bf16 %v713, %v712
  %v749 = vpack.c.bf16 %v715, %v714
  %v750 = vpack.c.bf16 %v717, %v716
  %v751 = vpack.c.bf16 %v719, %v718
  %v784 = vunpack.c.l.b16 %v720
  %v785 = vunpack.c.h.b16 %v720
  %v786 = vunpack.c.l.b16 %v721
  %v787 = vunpack.c.h.b16 %v721
  %v788 = vunpack.c.l.b16 %v722
  %v789 = vunpack.c.h.b16 %v722
  %v790 = vunpack.c.l.b16 %v723
  %v791 = vunpack.c.h.b16 %v723
  %v792 = vunpack.c.l.b16 %v724
  %v793 = vunpack.c.h.b16 %v724
  %v794 = vunpack.c.l.b16 %v725
  %v795 = vunpack.c.h.b16 %v725
  %v796 = vunpack.c.l.b16 %v726
  %v797 = vunpack.c.h.b16 %v726
  %v798 = vunpack.c.l.b16 %v727
  %v799 = vunpack.c.h.b16 %v727
  %v800 = vunpack.c.l.b16 %v728
  %v801 = vunpack.c.h.b16 %v728
  %v802 = vunpack.c.l.b16 %v729
  %v803 = vunpack.c.h.b16 %v729
  %v804 = vunpack.c.l.b16 %v730
  %v805 = vunpack.c.h.b16 %v730
  %v806 = vunpack.c.l.b16 %v731
  %v807 = vunpack.c.h.b16 %v731
  %v808 = vunpack.c.l.b16 %v732
  %v809 = vunpack.c.h.b16 %v732
  %v810 = vunpack.c.l.b16 %v733
  %v811 = vunpack.c.h.b16 %v733
  %v812 = vunpack.c.l.b16 %v734
  %v813 = vunpack.c.h.b16 %v734
  %v814 = vunpack.c.l.b16 %v735
  %v815 = vunpack.c.h.b16 %v735
  %v816 = vunpack.c.l.b16 %v736
  %v817 = vunpack.c.h.b16 %v736
  %v818 = vunpack.c.l.b16 %v737
  %v819 = vunpack.c.h.b16 %v737
  %v820 = vunpack.c.l.b16 %v738
  %v821 = vunpack.c.h.b16 %v738
  %v822 = vunpack.c.l.b16 %v739
  %v823 = vunpack.c.h.b16 %v739
  %v824 = vunpack.c.l.b16 %v740
  %v825 = vunpack.c.h.b16 %v740
  %v826 = vunpack.c.l.b16 %v741
  %v827 = vunpack.c.h.b16 %v741
  %v828 = vunpack.c.l.b16 %v742
  %v829 = vunpack.c.h.b16 %v742
  %v830 = vunpack.c.l.b16 %v743
  %v831 = vunpack.c.h.b16 %v743
  %v832 = vunpack.c.l.b16 %v744
  %v833 = vunpack.c.h.b16 %v744
  %v834 = vunpack.c.l.b16 %v745
  %v835 = vunpack.c.h.b16 %v745
  %v836 = vunpack.c.l.b16 %v746
  %v837 = vunpack.c.h.b16 %v746
  %v838 = vunpack.c.l.b16 %v747
  %v839 = vunpack.c.h.b16 %v747
  %v840 = vunpack.c.l.b16 %v748
  %v841 = vunpack.c.h.b16 %v748
  %v842 = vunpack.c.l.b16 %v749
  %v843 = vunpack.c.h.b16 %v749
  %v844 = vunpack.c.l.b16 %v750
  %v845 = vunpack.c.h.b16 %v750
  %v846 = vunpack.c.l.b16 %v751
  %v847 = vunpack.c.h.b16 %v751
  %v848 = vpack.c.b16 %v784, %v784
  %v849 = vpack.c.b16 %v785, %v785
  %v850 = vpack.c.b16 %v786, %v786
  %v851 = vpack.c.b16 %v787, %v787
  %v852 = vpack.c.b16 %v788, %v788
  %v853 = vpack.c.b16 %v789, %v789
  %v854 = vpack.c.b16 %v790, %v790
  %v855 = vpack.c.b16 %v791, %v791
  %v856 = vpack.c.b16 %v792, %v792
  %v857 = vpack.c.b16 %v793, %v793
  %v858 = vpack.c.b16 %v794, %v794
  %v859 = vpack.c.b16 %v795, %v795
  %v860 = vpack.c.b16 %v796, %v796
  %v861 = vpack.c.b16 %v797, %v797
  %v862 = vpack.c.b16 %v798, %v798
  %v863 = vpack.c.b16 %v799, %v799
  %v864 = vpack.c.b16 %v800, %v800
  %v865 = vpack.c.b16 %v801, %v801
  %v866 = vpack.c.b16 %v802, %v802
  %v867 = vpack.c.b16 %v803, %v803
  %v868 = vpack.c.b16 %v804, %v804
  %v869 = vpack.c.b16 %v805, %v805
  %v870 = vpack.c.b16 %v806, %v806
  %v871 = vpack.c.b16 %v807, %v807
  %v872 = vpack.c.b16 %v808, %v808
  %v873 = vpack.c.b16 %v809, %v809
  %v874 = vpack.c.b16 %v810, %v810
  %v875 = vpack.c.b16 %v811, %v811
  %v876 = vpack.c.b16 %v812, %v812
  %v877 = vpack.c.b16 %v813, %v813
  %v878 = vpack.c.b16 %v814, %v814
  %v879 = vpack.c.b16 %v815, %v815
  %v880 = vpack.c.b16 %v816, %v816
  %v881 = vpack.c.b16 %v817, %v817
  %v882 = vpack.c.b16 %v818, %v818
  %v883 = vpack.c.b16 %v819, %v819
  %v884 = vpack.c.b16 %v820, %v820
  %v885 = vpack.c.b16 %v821, %v821
  %v886 = vpack.c.b16 %v822, %v822
  %v887 = vpack.c.b16 %v823, %v823
  %v888 = vpack.c.b16 %v824, %v824
  %v889 = vpack.c.b16 %v825, %v825
  %v890 = vpack.c.b16 %v826, %v826
  %v891 = vpack.c.b16 %v827, %v827
  %v892 = vpack.c.b16 %v828, %v828
  %v893 = vpack.c.b16 %v829, %v829
  %v894 = vpack.c.b16 %v830, %v830
  %v895 = vpack.c.b16 %v831, %v831
  %v896 = vpack.c.b16 %v832, %v832
  %v897 = vpack.c.b16 %v833, %v833
  %v898 = vpack.c.b16 %v834, %v834
  %v899 = vpack.c.b16 %v835, %v835
  %v900 = vpack.c.b16 %v836, %v836
  %v901 = vpack.c.b16 %v837, %v837
  %v902 = vpack.c.b16 %v838, %v838
  %v903 = vpack.c.b16 %v839, %v839
  %v904 = vpack.c.b16 %v840, %v840
  %v905 = vpack.c.b16 %v841, %v841
  %v906 = vpack.c.b16 %v842, %v842
  %v907 = vpack.c.b16 %v843, %v843
  %v908 = vpack.c.b16 %v844, %v844
  %v909 = vpack.c.b16 %v845, %v845
  %v910 = vpack.c.b16 %v846, %v846
  %v911 = vpack.c.b16 %v847, %v847
  %vm976 = vcmask 125952
  %977 = vst.msk [vmem:[%s3] sm:$0xf] %vm976, %v848
  %978 = vst.msk [vmem:[%s3 + $0x4] sm:$0xf] %vm976, %v849
  %979 = vst.msk [vmem:[%s3 + $0x8] sm:$0xf] %vm976, %v850
  %980 = vst.msk [vmem:[%s3 + $0xc] sm:$0xf] %vm976, %v851
  %981 = vst.msk [vmem:[%s3 + $0x10] sm:$0xf] %vm976, %v852
  %982 = vst.msk [vmem:[%s3 + $0x14] sm:$0xf] %vm976, %v853
  %983 = vst.msk [vmem:[%s3 + $0x18] sm:$0xf] %vm976, %v854
  %984 = vst.msk [vmem:[%s3 + $0x1c] sm:$0xf] %vm976, %v855
  %985 = vst.msk [vmem:[%s3 + $0x20] sm:$0xf] %vm976, %v856
  %986 = vst.msk [vmem:[%s3 + $0x24] sm:$0xf] %vm976, %v857
  %987 = vst.msk [vmem:[%s3 + $0x28] sm:$0xf] %vm976, %v858
  %988 = vst.msk [vmem:[%s3 + $0x2c] sm:$0xf] %vm976, %v859
  %989 = vst.msk [vmem:[%s3 + $0x30] sm:$0xf] %vm976, %v860
  %990 = vst.msk [vmem:[%s3 + $0x34] sm:$0xf] %vm976, %v861
  %991 = vst.msk [vmem:[%s3 + $0x38] sm:$0xf] %vm976, %v862
  %992 = vst.msk [vmem:[%s3 + $0x3c] sm:$0xf] %vm976, %v863
  %993 = vst.msk [vmem:[%s3 + $0x40] sm:$0xf] %vm976, %v864
  %994 = vst.msk [vmem:[%s3 + $0x44] sm:$0xf] %vm976, %v865
  %995 = vst.msk [vmem:[%s3 + $0x48] sm:$0xf] %vm976, %v866
  %996 = vst.msk [vmem:[%s3 + $0x4c] sm:$0xf] %vm976, %v867
  %997 = vst.msk [vmem:[%s3 + $0x50] sm:$0xf] %vm976, %v868
  %998 = vst.msk [vmem:[%s3 + $0x54] sm:$0xf] %vm976, %v869
  %999 = vst.msk [vmem:[%s3 + $0x58] sm:$0xf] %vm976, %v870
  %1000 = vst.msk [vmem:[%s3 + $0x5c] sm:$0xf] %vm976, %v871
  %1001 = vst.msk [vmem:[%s3 + $0x60] sm:$0xf] %vm976, %v872
  %1002 = vst.msk [vmem:[%s3 + $0x64] sm:$0xf] %vm976, %v873
  %1003 = vst.msk [vmem:[%s3 + $0x68] sm:$0xf] %vm976, %v874
  %1004 = vst.msk [vmem:[%s3 + $0x6c] sm:$0xf] %vm976, %v875
  %1005 = vst.msk [vmem:[%s3 + $0x70] sm:$0xf] %vm976, %v876
  %1006 = vst.msk [vmem:[%s3 + $0x74] sm:$0xf] %vm976, %v877
  %1007 = vst.msk [vmem:[%s3 + $0x78] sm:$0xf] %vm976, %v878
  %1008 = vst.msk [vmem:[%s3 + $0x7c] sm:$0xf] %vm976, %v879
  %1009 = vst.msk [vmem:[%s3 + $0x80] sm:$0xf] %vm976, %v880
  %1010 = vst.msk [vmem:[%s3 + $0x84] sm:$0xf] %vm976, %v881
  %1011 = vst.msk [vmem:[%s3 + $0x88] sm:$0xf] %vm976, %v882
  %1012 = vst.msk [vmem:[%s3 + $0x8c] sm:$0xf] %vm976, %v883
  %1013 = vst.msk [vmem:[%s3 + $0x90] sm:$0xf] %vm976, %v884
  %1014 = vst.msk [vmem:[%s3 + $0x94] sm:$0xf] %vm976, %v885
  %1015 = vst.msk [vmem:[%s3 + $0x98] sm:$0xf] %vm976, %v886
  %1016 = vst.msk [vmem:[%s3 + $0x9c] sm:$0xf] %vm976, %v887
  %1017 = vst.msk [vmem:[%s3 + $0xa0] sm:$0xf] %vm976, %v888
  %1018 = vst.msk [vmem:[%s3 + $0xa4] sm:$0xf] %vm976, %v889
  %1019 = vst.msk [vmem:[%s3 + $0xa8] sm:$0xf] %vm976, %v890
  %1020 = vst.msk [vmem:[%s3 + $0xac] sm:$0xf] %vm976, %v891
  %1021 = vst.msk [vmem:[%s3 + $0xb0] sm:$0xf] %vm976, %v892
  %1022 = vst.msk [vmem:[%s3 + $0xb4] sm:$0xf] %vm976, %v893
  %1023 = vst.msk [vmem:[%s3 + $0xb8] sm:$0xf] %vm976, %v894
  %1024 = vst.msk [vmem:[%s3 + $0xbc] sm:$0xf] %vm976, %v895
  %1025 = vst.msk [vmem:[%s3 + $0xc0] sm:$0xf] %vm976, %v896
  %1026 = vst.msk [vmem:[%s3 + $0xc4] sm:$0xf] %vm976, %v897
  %1027 = vst.msk [vmem:[%s3 + $0xc8] sm:$0xf] %vm976, %v898
  %1028 = vst.msk [vmem:[%s3 + $0xcc] sm:$0xf] %vm976, %v899
  %1029 = vst.msk [vmem:[%s3 + $0xd0] sm:$0xf] %vm976, %v900
  %1030 = vst.msk [vmem:[%s3 + $0xd4] sm:$0xf] %vm976, %v901
  %1031 = vst.msk [vmem:[%s3 + $0xd8] sm:$0xf] %vm976, %v902
  %1032 = vst.msk [vmem:[%s3 + $0xdc] sm:$0xf] %vm976, %v903
  %1033 = vst.msk [vmem:[%s3 + $0xe0] sm:$0xf] %vm976, %v904
  %1034 = vst.msk [vmem:[%s3 + $0xe4] sm:$0xf] %vm976, %v905
  %1035 = vst.msk [vmem:[%s3 + $0xe8] sm:$0xf] %vm976, %v906
  %1036 = vst.msk [vmem:[%s3 + $0xec] sm:$0xf] %vm976, %v907
  %1037 = vst.msk [vmem:[%s3 + $0xf0] sm:$0xf] %vm976, %v908
  %1038 = vst.msk [vmem:[%s3 + $0xf4] sm:$0xf] %vm976, %v909
  %1039 = vst.msk [vmem:[%s3 + $0xf8] sm:$0xf] %vm976, %v910
  %1040 = vst.msk [vmem:[%s3 + $0xfc] sm:$0xf] %vm976, %v911
  // Predicated region
  $region14: #{net_fwd.139} parent=0 // pred_check
    _
  $region15: #{net_fwd.139} parent=0 // pred_check_branch
    %1042 = sbr.rel (0) target = $region17
  $region16: #{net_fwd.139} parent=0 // pred_region
    _
  $region17: #{net_fwd.139} parent=0 // pred_fallthru
    _
  // Predicated region
  $region18: #{net_fwd.139} parent=0 // pred_check
    _
  $region19: #{net_fwd.139} parent=0 // pred_check_branch
    %1044 = sbr.rel (0) target = $region21
  $region20: #{net_fwd.139} parent=0 // pred_region
    _
  $region21: #{net_fwd.139} parent=0 // pred_fallthru
    _

// kernel: net_fwd.142
$region0: #{net_fwd.142}
  #allocation0 [shape = 'u32[]', space=smem, size = 0x4, offset = 0x4, fixed_abs, tag = 'smem constant byte address 0x4 - core index']
  #allocation1 [shape = 'u32[144,128]{1,0:T(1,128)}', space=vmem, size = 0x12000, scoped, tag = 'internal scratch']
  %s0 = inlined_call_operand.vmem [shape: bf16[512,48], index: 0, kind: input, shape index: {}]
  %s1 = inlined_call_operand.vmem [shape: bf16[48,16], index: 1, kind: input, shape index: {}]
  %s2 = inlined_call_operand.vmem [shape: f32[1,16], index: 2, kind: input, shape index: {}]
  %s3 = inlined_call_operand.vmem [shape: bf16[512,16], index: 3, kind: input, shape index: {}]
  %s4 = inlined_call_operand.vmem [shape: bf16[512,16], index: 4, kind: output, shape index: {}]
  %s5 = sld [smem:[#allocation0]]
  $region26: #{net_fwd.142} parent=0
    _
  %s7 = ssub.s32 1, %s5
  %s8 = scalar_select 0, %s7, %s5
  // Predicated region
  $region2: #{net_fwd.142} parent=0 // pred_check
    _
  $region3: #{net_fwd.142} parent=0 // pred_check_branch
    %10 = sbr.rel (0) target = $region5
  $region4: #{net_fwd.142} parent=0 // pred_region
    _
  $region5: #{net_fwd.142} parent=0 // pred_fallthru
    _
  // Predicated region
  $region6: #{net_fwd.142} parent=0 // pred_check
    _
  $region7: #{net_fwd.142} parent=0 // pred_check_branch
    %12 = sbr.rel (0) target = $region9
  $region8: #{net_fwd.142} parent=0 // pred_region
    _
  $region9: #{net_fwd.142} parent=0 // pred_fallthru
    _
  // Predicated region
  $region10: #{net_fwd.142} parent=0 // pred_check
    _
  $region11: #{net_fwd.142} parent=0 // pred_check_branch
    %14 = sbr.rel (0) target = $region13
  $region12: #{net_fwd.142} parent=0 // pred_region
    _
  $region13: #{net_fwd.142} parent=0 // pred_fallthru
    _
  // Predicated region
  $region14: #{net_fwd.142} parent=0 // pred_check
    _
  $region15: #{net_fwd.142} parent=0 // pred_check_branch
    %16 = sbr.rel (0) target = $region17
  $region16: #{net_fwd.142} parent=0 // pred_region
    _
  $region17: #{net_fwd.142} parent=0 // pred_fallthru
    _
  %v18 = vld [vmem:[%s0] sm:$0xf]
  %v19 = vld [vmem:[%s0 + $0x4] sm:$0xf]
  %v20 = vld [vmem:[%s0 + $0x8] sm:$0xf]
  %v21 = vld [vmem:[%s0 + $0xc] sm:$0xf]
  %v22 = vld [vmem:[%s0 + $0x10] sm:$0xf]
  %v23 = vld [vmem:[%s0 + $0x14] sm:$0xf]
  %v24 = vld [vmem:[%s0 + $0x18] sm:$0xf]
  %v25 = vld [vmem:[%s0 + $0x1c] sm:$0xf]
  %v26 = vld [vmem:[%s0 + $0x20] sm:$0xf]
  %v27 = vld [vmem:[%s0 + $0x24] sm:$0xf]
  %v28 = vld [vmem:[%s0 + $0x28] sm:$0xf]
  %v29 = vld [vmem:[%s0 + $0x2c] sm:$0xf]
  %v30 = vld [vmem:[%s0 + $0x30] sm:$0xf]
  %v31 = vld [vmem:[%s0 + $0x34] sm:$0xf]
  %v32 = vld [vmem:[%s0 + $0x38] sm:$0xf]
  %v33 = vld [vmem:[%s0 + $0x3c] sm:$0xf]
  %v34 = vld [vmem:[%s0 + $0x40] sm:$0xf]
  %v35 = vld [vmem:[%s0 + $0x44] sm:$0xf]
  %v36 = vld [vmem:[%s0 + $0x48] sm:$0xf]
  %v37 = vld [vmem:[%s0 + $0x4c] sm:$0xf]
  %v38 = vld [vmem:[%s0 + $0x50] sm:$0xf]
  %v39 = vld [vmem:[%s0 + $0x54] sm:$0xf]
  %v40 = vld [vmem:[%s0 + $0x58] sm:$0xf]
  %v41 = vld [vmem:[%s0 + $0x5c] sm:$0xf]
  %v42 = vld [vmem:[%s0 + $0x60] sm:$0xf]
  %v43 = vld [vmem:[%s0 + $0x64] sm:$0xf]
  %v44 = vld [vmem:[%s0 + $0x68] sm:$0xf]
  %v45 = vld [vmem:[%s0 + $0x6c] sm:$0xf]
  %v46 = vld [vmem:[%s0 + $0x70] sm:$0xf]
  %v47 = vld [vmem:[%s0 + $0x74] sm:$0xf]
  %v48 = vld [vmem:[%s0 + $0x78] sm:$0xf]
  %v49 = vld [vmem:[%s0 + $0x7c] sm:$0xf]
  %v50 = vld [vmem:[%s0 + $0x80] sm:$0xf]
  %v51 = vld [vmem:[%s0 + $0x84] sm:$0xf]
  %v52 = vld [vmem:[%s0 + $0x88] sm:$0xf]
  %v53 = vld [vmem:[%s0 + $0x8c] sm:$0xf]
  %v54 = vld [vmem:[%s0 + $0x90] sm:$0xf]
  %v55 = vld [vmem:[%s0 + $0x94] sm:$0xf]
  %v56 = vld [vmem:[%s0 + $0x98] sm:$0xf]
  %v57 = vld [vmem:[%s0 + $0x9c] sm:$0xf]
  %v58 = vld [vmem:[%s0 + $0xa0] sm:$0xf]
  %v59 = vld [vmem:[%s0 + $0xa4] sm:$0xf]
  %v60 = vld [vmem:[%s0 + $0xa8] sm:$0xf]
  %v61 = vld [vmem:[%s0 + $0xac] sm:$0xf]
  %v62 = vld [vmem:[%s0 + $0xb0] sm:$0xf]
  %v63 = vld [vmem:[%s0 + $0xb4] sm:$0xf]
  %v64 = vld [vmem:[%s0 + $0xb8] sm:$0xf]
  %v65 = vld [vmem:[%s0 + $0xbc] sm:$0xf]
  %v66 = vld [vmem:[%s0 + $0xc0] sm:$0xf]
  %v67 = vld [vmem:[%s0 + $0xc4] sm:$0xf]
  %v68 = vld [vmem:[%s0 + $0xc8] sm:$0xf]
  %v69 = vld [vmem:[%s0 + $0xcc] sm:$0xf]
  %v70 = vld [vmem:[%s0 + $0xd0] sm:$0xf]
  %v71 = vld [vmem:[%s0 + $0xd4] sm:$0xf]
  %v72 = vld [vmem:[%s0 + $0xd8] sm:$0xf]
  %v73 = vld [vmem:[%s0 + $0xdc] sm:$0xf]
  %v74 = vld [vmem:[%s0 + $0xe0] sm:$0xf]
  %v75 = vld [vmem:[%s0 + $0xe4] sm:$0xf]
  %v76 = vld [vmem:[%s0 + $0xe8] sm:$0xf]
  %v77 = vld [vmem:[%s0 + $0xec] sm:$0xf]
  %v78 = vld [vmem:[%s0 + $0xf0] sm:$0xf]
  %v79 = vld [vmem:[%s0 + $0xf4] sm:$0xf]
  %v80 = vld [vmem:[%s0 + $0xf8] sm:$0xf]
  %v81 = vld [vmem:[%s0 + $0xfc] sm:$0xf]
  %v82 = vld [vmem:[%s1] sm:$0xf]
  %v83 = vld [vmem:[%s1 + $0x4] sm:$0xf]
  %v84 = vld [vmem:[%s1 + $0x8] sm:$0xf]
  %v85 = vld [vmem:[%s1 + $0xc] sm:$0xf]
  %v86 = vld [vmem:[%s1 + $0x10] sm:$0xf]
  %v87 = vld [vmem:[%s1 + $0x14] sm:$0xf]
  %v88 = vld [vmem:[%s2] sm:$0x1]
  %v90 = vlaneseq
  %v91 = vshrl.u32 %v90, 7
  %v92 = vsub.s32 0, %v91
  %v93 = vrot.slane %v88, %v92
  %v159 = vunpack.c.l.b16 %v18
  %v160 = vunpack.c.l.b16 %v19
  %v161 = vunpack.c.l.b16 %v20
  %v162 = vunpack.c.l.b16 %v21
  %v163 = vunpack.c.l.b16 %v22
  %v164 = vunpack.c.l.b16 %v23
  %v165 = vunpack.c.l.b16 %v24
  %v166 = vunpack.c.l.b16 %v25
  %v167 = vunpack.c.l.b16 %v26
  %v168 = vunpack.c.l.b16 %v27
  %v169 = vunpack.c.l.b16 %v28
  %v170 = vunpack.c.l.b16 %v29
  %v171 = vunpack.c.l.b16 %v30
  %v172 = vunpack.c.l.b16 %v31
  %v173 = vunpack.c.l.b16 %v32
  %v174 = vunpack.c.l.b16 %v33
  %v175 = vunpack.c.l.b16 %v34
  %v176 = vunpack.c.l.b16 %v35
  %v177 = vunpack.c.l.b16 %v36
  %v178 = vunpack.c.l.b16 %v37
  %v179 = vunpack.c.l.b16 %v38
  %v180 = vunpack.c.l.b16 %v39
  %v181 = vunpack.c.l.b16 %v40
  %v182 = vunpack.c.l.b16 %v41
  %v183 = vunpack.c.l.b16 %v42
  %v184 = vunpack.c.l.b16 %v43
  %v185 = vunpack.c.l.b16 %v44
  %v186 = vunpack.c.l.b16 %v45
  %v187 = vunpack.c.l.b16 %v46
  %v188 = vunpack.c.l.b16 %v47
  %v189 = vunpack.c.l.b16 %v48
  %v190 = vunpack.c.l.b16 %v49
  %v191 = vunpack.c.l.b16 %v50
  %v192 = vunpack.c.l.b16 %v51
  %v193 = vunpack.c.l.b16 %v52
  %v194 = vunpack.c.l.b16 %v53
  %v195 = vunpack.c.l.b16 %v54
  %v196 = vunpack.c.l.b16 %v55
  %v197 = vunpack.c.l.b16 %v56
  %v198 = vunpack.c.l.b16 %v57
  %v199 = vunpack.c.l.b16 %v58
  %v200 = vunpack.c.l.b16 %v59
  %v201 = vunpack.c.l.b16 %v60
  %v202 = vunpack.c.l.b16 %v61
  %v203 = vunpack.c.l.b16 %v62
  %v204 = vunpack.c.l.b16 %v63
  %v205 = vunpack.c.l.b16 %v64
  %v206 = vunpack.c.l.b16 %v65
  %v207 = vunpack.c.l.b16 %v66
  %v208 = vunpack.c.l.b16 %v67
  %v209 = vunpack.c.l.b16 %v68
  %v210 = vunpack.c.l.b16 %v69
  %v211 = vunpack.c.l.b16 %v70
  %v212 = vunpack.c.l.b16 %v71
  %v213 = vunpack.c.l.b16 %v72
  %v214 = vunpack.c.l.b16 %v73
  %v215 = vunpack.c.l.b16 %v74
  %v216 = vunpack.c.l.b16 %v75
  %v217 = vunpack.c.l.b16 %v76
  %v218 = vunpack.c.l.b16 %v77
  %v219 = vunpack.c.l.b16 %v78
  %v220 = vunpack.c.l.b16 %v79
  %v221 = vunpack.c.l.b16 %v80
  %v222 = vunpack.c.l.b16 %v81
  %v223 = vpack.c.b16 %v160, %v159
  %v224 = vpack.c.b16 %v162, %v161
  %v225 = vpack.c.b16 %v164, %v163
  %v226 = vpack.c.b16 %v166, %v165
  %v227 = vpack.c.b16 %v168, %v167
  %v228 = vpack.c.b16 %v170, %v169
  %v229 = vpack.c.b16 %v172, %v171
  %v230 = vpack.c.b16 %v174, %v173
  %v231 = vpack.c.b16 %v176, %v175
  %v232 = vpack.c.b16 %v178, %v177
  %v233 = vpack.c.b16 %v180, %v179
  %v234 = vpack.c.b16 %v182, %v181
  %v235 = vpack.c.b16 %v184, %v183
  %v236 = vpack.c.b16 %v186, %v185
  %v237 = vpack.c.b16 %v188, %v187
  %v238 = vpack.c.b16 %v190, %v189
  %v239 = vpack.c.b16 %v192, %v191
  %v240 = vpack.c.b16 %v194, %v193
  %v241 = vpack.c.b16 %v196, %v195
  %v242 = vpack.c.b16 %v198, %v197
  %v243 = vpack.c.b16 %v200, %v199
  %v244 = vpack.c.b16 %v202, %v201
  %v245 = vpack.c.b16 %v204, %v203
  %v246 = vpack.c.b16 %v206, %v205
  %v247 = vpack.c.b16 %v208, %v207
  %v248 = vpack.c.b16 %v210, %v209
  %v249 = vpack.c.b16 %v212, %v211
  %v250 = vpack.c.b16 %v214, %v213
  %v251 = vpack.c.b16 %v216, %v215
  %v252 = vpack.c.b16 %v218, %v217
  %v253 = vpack.c.b16 %v220, %v219
  %v254 = vpack.c.b16 %v222, %v221
  %v261 = vunpack.c.l.b16 %v82
  %v262 = vunpack.c.l.b16 %v83
  %v263 = vunpack.c.l.b16 %v84
  %v264 = vunpack.c.l.b16 %v85
  %v265 = vunpack.c.l.b16 %v86
  %v266 = vunpack.c.l.b16 %v87
  %v267 = vpack.c.b16 %v262, %v261
  %v268 = vpack.c.b16 %v264, %v263
  %v269 = vpack.c.b16 %v266, %v265
  %vm273 = vcmask 392192
  %v275 = vsel %vm273, %v223, 0
  %v278 = vsel %vm273, %v224, 0
  %v281 = vsel %vm273, %v225, 0
  %v284 = vsel %vm273, %v226, 0
  %v287 = vsel %vm273, %v227, 0
  %v290 = vsel %vm273, %v228, 0
  %v293 = vsel %vm273, %v229, 0
  %v296 = vsel %vm273, %v230, 0
  %v299 = vsel %vm273, %v231, 0
  %v302 = vsel %vm273, %v232, 0
  %v305 = vsel %vm273, %v233, 0
  %v308 = vsel %vm273, %v234, 0
  %v311 = vsel %vm273, %v235, 0
  %v314 = vsel %vm273, %v236, 0
  %v317 = vsel %vm273, %v237, 0
  %v320 = vsel %vm273, %v238, 0
  %v323 = vsel %vm273, %v239, 0
  %v326 = vsel %vm273, %v240, 0
  %v329 = vsel %vm273, %v241, 0
  %v332 = vsel %vm273, %v242, 0
  %v335 = vsel %vm273, %v243, 0
  %v338 = vsel %vm273, %v244, 0
  %v341 = vsel %vm273, %v245, 0
  %v344 = vsel %vm273, %v246, 0
  %v347 = vsel %vm273, %v247, 0
  %v350 = vsel %vm273, %v248, 0
  %v353 = vsel %vm273, %v249, 0
  %v356 = vsel %vm273, %v250, 0
  %v359 = vsel %vm273, %v251, 0
  %v362 = vsel %vm273, %v252, 0
  %v365 = vsel %vm273, %v253, 0
  %v368 = vsel %vm273, %v254, 0
  %370 = vmatprep.subr.bf16.mxu0 0
  %371 = vmatpush1.bf16.msra.mxu0 %v267
  %372 = vmatprep.subr.bf16.mxu0 0
  %373 = vmatpush1.bf16.msra.mxu0 %v268
  %374 = vmatprep.subr.bf16.mxu0 0
  %375 = vmatpush1.bf16.msra.mxu0 %v269
  %376 = vmatprep.subr.bf16.mxu0 0
  %377 = vmatpush1.bf16.msra.mxu0 0
  %378 = vmatprep.subr.bf16.mxu0 0
  %379 = vmatpush1.bf16.msra.mxu0 0
  %380 = vmatprep.subr.bf16.mxu0 0
  %381 = vmatpush1.bf16.msra.mxu0 0
  %382 = vmatprep.subr.bf16.mxu0 0
  %383 = vmatpush1.bf16.msra.mxu0 0
  %384 = vmatprep.subr.bf16.mxu0 0
  %385 = vmatpush1.bf16.msra.mxu0 0
  %386 = vmatprep.subr.bf16.mxu0 0
  %387 = vmatpush1.bf16.msra.mxu0 0
  %388 = vmatprep.subr.bf16.mxu0 0
  %389 = vmatpush1.bf16.msra.mxu0 0
  %390 = vmatprep.subr.bf16.mxu0 0
  %391 = vmatpush1.bf16.msra.mxu0 0
  %392 = vmatprep.subr.bf16.mxu0 0
  %393 = vmatpush1.bf16.msra.mxu0 0
  %394 = vmatprep.subr.bf16.mxu0 0
  %395 = vmatpush1.bf16.msra.mxu0 0
  %396 = vmatprep.subr.bf16.mxu0 0
  %397 = vmatpush1.bf16.msra.mxu0 0
  %398 = vmatprep.subr.bf16.mxu0 0
  %399 = vmatpush1.bf16.msra.mxu0 0
  %400 = vmatprep.subr.bf16.mxu0 0
  %401 = vmatpush1.bf16.msra.mxu0 0
  %402 = vmatprep.mubr.bf16.mxu0 0
  %403 = vmatmul.mubr.bf16.gmra.mrb[0].mxu0 %v275
  %v404 = vpop.f32.mrb[0].mxu0
  %v405 = vadd.f32 %v93, %v404
  %v406 = vpop.f32.mrb[0].mxu0
  %v407 = vpop.f32.mrb[0].mxu0
  %v408 = vadd.f32 %v93, %v407
  %v409 = vpop.f32.mrb[0].mxu0
  %410 = vmatprep.mubr.bf16.mxu0 0
  %411 = vmatmul.mubr.bf16.gmra.mrb[0].mxu0 %v278
  %v412 = vpop.f32.mrb[0].mxu0
  %v413 = vadd.f32 %v93, %v412
  %v414 = vpop.f32.mrb[0].mxu0
  %v415 = vpop.f32.mrb[0].mxu0
  %v416 = vadd.f32 %v93, %v415
  %v417 = vpop.f32.mrb[0].mxu0
  %418 = vmatprep.mubr.bf16.mxu0 0
  %419 = vmatmul.mubr.bf16.gmra.mrb[0].mxu0 %v281
  %v420 = vpop.f32.mrb[0].mxu0
  %v421 = vadd.f32 %v93, %v420
  %v422 = vpop.f32.mrb[0].mxu0
  %v423 = vpop.f32.mrb[0].mxu0
  %v424 = vadd.f32 %v93, %v423
  %v425 = vpop.f32.mrb[0].mxu0
  %426 = vmatprep.mubr.bf16.mxu0 0
  %427 = vmatmul.mubr.bf16.gmra.mrb[0].mxu0 %v284
  %v428 = vpop.f32.mrb[0].mxu0
  %v429 = vadd.f32 %v93, %v428
  %v430 = vpop.f32.mrb[0].mxu0
  %v431 = vpop.f32.mrb[0].mxu0
  %v432 = vadd.f32 %v93, %v431
  %v433 = vpop.f32.mrb[0].mxu0
  %434 = vmatprep.mubr.bf16.mxu0 0
  %435 = vmatmul.mubr.bf16.gmra.mrb[0].mxu0 %v287
  %v436 = vpop.f32.mrb[0].mxu0
  %v437 = vadd.f32 %v93, %v436
  %v438 = vpop.f32.mrb[0].mxu0
  %v439 = vpop.f32.mrb[0].mxu0
  %v440 = vadd.f32 %v93, %v439
  %v441 = vpop.f32.mrb[0].mxu0
  %442 = vmatprep.mubr.bf16.mxu0 0
  %443 = vmatmul.mubr.bf16.gmra.mrb[0].mxu0 %v290
  %v444 = vpop.f32.mrb[0].mxu0
  %v445 = vadd.f32 %v93, %v444
  %v446 = vpop.f32.mrb[0].mxu0
  %v447 = vpop.f32.mrb[0].mxu0
  %v448 = vadd.f32 %v93, %v447
  %v449 = vpop.f32.mrb[0].mxu0
  %450 = vmatprep.mubr.bf16.mxu0 0
  %451 = vmatmul.mubr.bf16.gmra.mrb[0].mxu0 %v293
  %v452 = vpop.f32.mrb[0].mxu0
  %v453 = vadd.f32 %v93, %v452
  %v454 = vpop.f32.mrb[0].mxu0
  %v455 = vpop.f32.mrb[0].mxu0
  %v456 = vadd.f32 %v93, %v455
  %v457 = vpop.f32.mrb[0].mxu0
  %458 = vmatprep.mubr.bf16.mxu0 0
  %459 = vmatmul.mubr.bf16.gmra.mrb[0].mxu0 %v296
  %v460 = vpop.f32.mrb[0].mxu0
  %v461 = vadd.f32 %v93, %v460
  %v462 = vpop.f32.mrb[0].mxu0
  %v463 = vpop.f32.mrb[0].mxu0
  %v464 = vadd.f32 %v93, %v463
  %v465 = vpop.f32.mrb[0].mxu0
  %466 = vmatprep.mubr.bf16.mxu0 0
  %467 = vmatmul.mubr.bf16.gmra.mrb[0].mxu0 %v299
  %v468 = vpop.f32.mrb[0].mxu0
  %v469 = vadd.f32 %v93, %v468
  %v470 = vpop.f32.mrb[0].mxu0
  %v471 = vpop.f32.mrb[0].mxu0
  %v472 = vadd.f32 %v93, %v471
  %v473 = vpop.f32.mrb[0].mxu0
  %474 = vmatprep.mubr.bf16.mxu0 0
  %475 = vmatmul.mubr.bf16.gmra.mrb[0].mxu0 %v302
  %v476 = vpop.f32.mrb[0].mxu0
  %v477 = vadd.f32 %v93, %v476
  %v478 = vpop.f32.mrb[0].mxu0
  %v479 = vpop.f32.mrb[0].mxu0
  %v480 = vadd.f32 %v93, %v479
  %v481 = vpop.f32.mrb[0].mxu0
  %482 = vmatprep.mubr.bf16.mxu0 0
  %483 = vmatmul.mubr.bf16.gmra.mrb[0].mxu0 %v305
  %v484 = vpop.f32.mrb[0].mxu0
  %v485 = vadd.f32 %v93, %v484
  %v486 = vpop.f32.mrb[0].mxu0
  %v487 = vpop.f32.mrb[0].mxu0
  %v488 = vadd.f32 %v93, %v487
  %v489 = vpop.f32.mrb[0].mxu0
  %490 = vmatprep.mubr.bf16.mxu0 0
  %491 = vmatmul.mubr.bf16.gmra.mrb[0].mxu0 %v308
  %v492 = vpop.f32.mrb[0].mxu0
  %v493 = vadd.f32 %v93, %v492
  %v494 = vpop.f32.mrb[0].mxu0
  %v495 = vpop.f32.mrb[0].mxu0
  %v496 = vadd.f32 %v93, %v495
  %v497 = vpop.f32.mrb[0].mxu0
  %498 = vmatprep.mubr.bf16.mxu0 0
  %499 = vmatmul.mubr.bf16.gmra.mrb[0].mxu0 %v311
  %v500 = vpop.f32.mrb[0].mxu0
  %v501 = vadd.f32 %v93, %v500
  %v502 = vpop.f32.mrb[0].mxu0
  %v503 = vpop.f32.mrb[0].mxu0
  %v504 = vadd.f32 %v93, %v503
  %v505 = vpop.f32.mrb[0].mxu0
  %506 = vmatprep.mubr.bf16.mxu0 0
  %507 = vmatmul.mubr.bf16.gmra.mrb[0].mxu0 %v314
  %v508 = vpop.f32.mrb[0].mxu0
  %v509 = vadd.f32 %v93, %v508
  %v510 = vpop.f32.mrb[0].mxu0
  %v511 = vpop.f32.mrb[0].mxu0
  %v512 = vadd.f32 %v93, %v511
  %v513 = vpop.f32.mrb[0].mxu0
  %514 = vmatprep.mubr.bf16.mxu0 0
  %515 = vmatmul.mubr.bf16.gmra.mrb[0].mxu0 %v317
  %v516 = vpop.f32.mrb[0].mxu0
  %v517 = vadd.f32 %v93, %v516
  %v518 = vpop.f32.mrb[0].mxu0
  %v519 = vpop.f32.mrb[0].mxu0
  %v520 = vadd.f32 %v93, %v519
  %v521 = vpop.f32.mrb[0].mxu0
  %522 = vmatprep.mubr.bf16.mxu0 0
  %523 = vmatmul.mubr.bf16.gmra.mrb[0].mxu0 %v320
  %v524 = vpop.f32.mrb[0].mxu0
  %v525 = vadd.f32 %v93, %v524
  %v526 = vpop.f32.mrb[0].mxu0
  %v527 = vpop.f32.mrb[0].mxu0
  %v528 = vadd.f32 %v93, %v527
  %v529 = vpop.f32.mrb[0].mxu0
  %530 = vmatprep.mubr.bf16.mxu0 0
  %531 = vmatmul.mubr.bf16.gmra.mrb[0].mxu0 %v323
  %v532 = vpop.f32.mrb[0].mxu0
  %v533 = vadd.f32 %v93, %v532
  %v534 = vpop.f32.mrb[0].mxu0
  %v535 = vpop.f32.mrb[0].mxu0
  %v536 = vadd.f32 %v93, %v535
  %v537 = vpop.f32.mrb[0].mxu0
  %538 = vmatprep.mubr.bf16.mxu0 0
  %539 = vmatmul.mubr.bf16.gmra.mrb[0].mxu0 %v326
  %v540 = vpop.f32.mrb[0].mxu0
  %v541 = vadd.f32 %v93, %v540
  %v542 = vpop.f32.mrb[0].mxu0
  %v543 = vpop.f32.mrb[0].mxu0
  %v544 = vadd.f32 %v93, %v543
  %v545 = vpop.f32.mrb[0].mxu0
  %546 = vmatprep.mubr.bf16.mxu0 0
  %547 = vmatmul.mubr.bf16.gmra.mrb[0].mxu0 %v329
  %v548 = vpop.f32.mrb[0].mxu0
  %v549 = vadd.f32 %v93, %v548
  %v550 = vpop.f32.mrb[0].mxu0
  %v551 = vpop.f32.mrb[0].mxu0
  %v552 = vadd.f32 %v93, %v551
  %v553 = vpop.f32.mrb[0].mxu0
  %554 = vmatprep.mubr.bf16.mxu0 0
  %555 = vmatmul.mubr.bf16.gmra.mrb[0].mxu0 %v332
  %v556 = vpop.f32.mrb[0].mxu0
  %v557 = vadd.f32 %v93, %v556
  %v558 = vpop.f32.mrb[0].mxu0
  %v559 = vpop.f32.mrb[0].mxu0
  %v560 = vadd.f32 %v93, %v559
  %v561 = vpop.f32.mrb[0].mxu0
  %562 = vmatprep.mubr.bf16.mxu0 0
  %563 = vmatmul.mubr.bf16.gmra.mrb[0].mxu0 %v335
  %v564 = vpop.f32.mrb[0].mxu0
  %v565 = vadd.f32 %v93, %v564
  %v566 = vpop.f32.mrb[0].mxu0
  %v567 = vpop.f32.mrb[0].mxu0
  %v568 = vadd.f32 %v93, %v567
  %v569 = vpop.f32.mrb[0].mxu0
  %570 = vmatprep.mubr.bf16.mxu0 0
  %571 = vmatmul.mubr.bf16.gmra.mrb[0].mxu0 %v338
  %v572 = vpop.f32.mrb[0].mxu0
  %v573 = vadd.f32 %v93, %v572
  %v574 = vpop.f32.mrb[0].mxu0
  %v575 = vpop.f32.mrb[0].mxu0
  %v576 = vadd.f32 %v93, %v575
  %v577 = vpop.f32.mrb[0].mxu0
  %578 = vmatprep.mubr.bf16.mxu0 0
  %579 = vmatmul.mubr.bf16.gmra.mrb[0].mxu0 %v341
  %v580 = vpop.f32.mrb[0].mxu0
  %v581 = vadd.f32 %v93, %v580
  %v582 = vpop.f32.mrb[0].mxu0
  %v583 = vpop.f32.mrb[0].mxu0
  %v584 = vadd.f32 %v93, %v583
  %v585 = vpop.f32.mrb[0].mxu0
  %586 = vmatprep.mubr.bf16.mxu0 0
  %587 = vmatmul.mubr.bf16.gmra.mrb[0].mxu0 %v344
  %v588 = vpop.f32.mrb[0].mxu0
  %v589 = vadd.f32 %v93, %v588
  %v590 = vpop.f32.mrb[0].mxu0
  %v591 = vpop.f32.mrb[0].mxu0
  %v592 = vadd.f32 %v93, %v591
  %v593 = vpop.f32.mrb[0].mxu0
  %594 = vmatprep.mubr.bf16.mxu0 0
  %595 = vmatmul.mubr.bf16.gmra.mrb[0].mxu0 %v347
  %v596 = vpop.f32.mrb[0].mxu0
  %v597 = vadd.f32 %v93, %v596
  %v598 = vpop.f32.mrb[0].mxu0
  %v599 = vpop.f32.mrb[0].mxu0
  %v600 = vadd.f32 %v93, %v599
  %v601 = vpop.f32.mrb[0].mxu0
  %602 = vmatprep.mubr.bf16.mxu0 0
  %603 = vmatmul.mubr.bf16.gmra.mrb[0].mxu0 %v350
  %v604 = vpop.f32.mrb[0].mxu0
  %v605 = vadd.f32 %v93, %v604
  %v606 = vpop.f32.mrb[0].mxu0
  %v607 = vpop.f32.mrb[0].mxu0
  %v608 = vadd.f32 %v93, %v607
  %v609 = vpop.f32.mrb[0].mxu0
  %610 = vmatprep.mubr.bf16.mxu0 0
  %611 = vmatmul.mubr.bf16.gmra.mrb[0].mxu0 %v353
  %v612 = vpop.f32.mrb[0].mxu0
  %v613 = vadd.f32 %v93, %v612
  %v614 = vpop.f32.mrb[0].mxu0
  %v615 = vpop.f32.mrb[0].mxu0
  %v616 = vadd.f32 %v93, %v615
  %v617 = vpop.f32.mrb[0].mxu0
  %618 = vmatprep.mubr.bf16.mxu0 0
  %619 = vmatmul.mubr.bf16.gmra.mrb[0].mxu0 %v356
  %v620 = vpop.f32.mrb[0].mxu0
  %v621 = vadd.f32 %v93, %v620
  %v622 = vpop.f32.mrb[0].mxu0
  %v623 = vpop.f32.mrb[0].mxu0
  %v624 = vadd.f32 %v93, %v623
  %v625 = vpop.f32.mrb[0].mxu0
  %626 = vmatprep.mubr.bf16.mxu0 0
  %627 = vmatmul.mubr.bf16.gmra.mrb[0].mxu0 %v359
  %v628 = vpop.f32.mrb[0].mxu0
  %v629 = vadd.f32 %v93, %v628
  %v630 = vpop.f32.mrb[0].mxu0
  %v631 = vpop.f32.mrb[0].mxu0
  %v632 = vadd.f32 %v93, %v631
  %v633 = vpop.f32.mrb[0].mxu0
  %634 = vmatprep.mubr.bf16.mxu0 0
  %635 = vmatmul.mubr.bf16.gmra.mrb[0].mxu0 %v362
  %v636 = vpop.f32.mrb[0].mxu0
  %v637 = vadd.f32 %v93, %v636
  %v638 = vpop.f32.mrb[0].mxu0
  %v639 = vpop.f32.mrb[0].mxu0
  %v640 = vadd.f32 %v93, %v639
  %v641 = vpop.f32.mrb[0].mxu0
  %642 = vmatprep.mubr.bf16.mxu0 0
  %643 = vmatmul.mubr.bf16.gmra.mrb[0].mxu0 %v365
  %v644 = vpop.f32.mrb[0].mxu0
  %v645 = vadd.f32 %v93, %v644
  %v646 = vpop.f32.mrb[0].mxu0
  %v647 = vpop.f32.mrb[0].mxu0
  %v648 = vadd.f32 %v93, %v647
  %v649 = vpop.f32.mrb[0].mxu0
  %650 = vmatprep.mubr.bf16.mxu0 0
  %651 = vmatmul.mubr.bf16.gmra.mrb[0].mxu0 %v368
  %v652 = vpop.f32.mrb[0].mxu0
  %v653 = vadd.f32 %v93, %v652
  %v654 = vpop.f32.mrb[0].mxu0
  %v655 = vpop.f32.mrb[0].mxu0
  %v656 = vadd.f32 %v93, %v655
  %v657 = vpop.f32.mrb[0].mxu0
  %658 = vdwg.mxu0
  %v659 = vld [vmem:[%s3] sm:$0xf]
  %v660 = vld [vmem:[%s3 + $0x4] sm:$0xf]
  %v661 = vld [vmem:[%s3 + $0x8] sm:$0xf]
  %v662 = vld [vmem:[%s3 + $0xc] sm:$0xf]
  %v663 = vld [vmem:[%s3 + $0x10] sm:$0xf]
  %v664 = vld [vmem:[%s3 + $0x14] sm:$0xf]
  %v665 = vld [vmem:[%s3 + $0x18] sm:$0xf]
  %v666 = vld [vmem:[%s3 + $0x1c] sm:$0xf]
  %v667 = vld [vmem:[%s3 + $0x20] sm:$0xf]
  %v668 = vld [vmem:[%s3 + $0x24] sm:$0xf]
  %v669 = vld [vmem:[%s3 + $0x28] sm:$0xf]
  %v670 = vld [vmem:[%s3 + $0x2c] sm:$0xf]
  %v671 = vld [vmem:[%s3 + $0x30] sm:$0xf]
  %v672 = vld [vmem:[%s3 + $0x34] sm:$0xf]
  %v673 = vld [vmem:[%s3 + $0x38] sm:$0xf]
  %v674 = vld [vmem:[%s3 + $0x3c] sm:$0xf]
  %v675 = vld [vmem:[%s3 + $0x40] sm:$0xf]
  %v676 = vld [vmem:[%s3 + $0x44] sm:$0xf]
  %v677 = vld [vmem:[%s3 + $0x48] sm:$0xf]
  %v678 = vld [vmem:[%s3 + $0x4c] sm:$0xf]
  %v679 = vld [vmem:[%s3 + $0x50] sm:$0xf]
  %v680 = vld [vmem:[%s3 + $0x54] sm:$0xf]
  %v681 = vld [vmem:[%s3 + $0x58] sm:$0xf]
  %v682 = vld [vmem:[%s3 + $0x5c] sm:$0xf]
  %v683 = vld [vmem:[%s3 + $0x60] sm:$0xf]
  %v684 = vld [vmem:[%s3 + $0x64] sm:$0xf]
  %v685 = vld [vmem:[%s3 + $0x68] sm:$0xf]
  %v686 = vld [vmem:[%s3 + $0x6c] sm:$0xf]
  %v687 = vld [vmem:[%s3 + $0x70] sm:$0xf]
  %v688 = vld [vmem:[%s3 + $0x74] sm:$0xf]
  %v689 = vld [vmem:[%s3 + $0x78] sm:$0xf]
  %v690 = vld [vmem:[%s3 + $0x7c] sm:$0xf]
  %v691 = vld [vmem:[%s3 + $0x80] sm:$0xf]
  %v692 = vld [vmem:[%s3 + $0x84] sm:$0xf]
  %v693 = vld [vmem:[%s3 + $0x88] sm:$0xf]
  %v694 = vld [vmem:[%s3 + $0x8c] sm:$0xf]
  %v695 = vld [vmem:[%s3 + $0x90] sm:$0xf]
  %v696 = vld [vmem:[%s3 + $0x94] sm:$0xf]
  %v697 = vld [vmem:[%s3 + $0x98] sm:$0xf]
  %v698 = vld [vmem:[%s3 + $0x9c] sm:$0xf]
  %v699 = vld [vmem:[%s3 + $0xa0] sm:$0xf]
  %v700 = vld [vmem:[%s3 + $0xa4] sm:$0xf]
  %v701 = vld [vmem:[%s3 + $0xa8] sm:$0xf]
  %v702 = vld [vmem:[%s3 + $0xac] sm:$0xf]
  %v703 = vld [vmem:[%s3 + $0xb0] sm:$0xf]
  %v704 = vld [vmem:[%s3 + $0xb4] sm:$0xf]
  %v705 = vld [vmem:[%s3 + $0xb8] sm:$0xf]
  %v706 = vld [vmem:[%s3 + $0xbc] sm:$0xf]
  %v707 = vld [vmem:[%s3 + $0xc0] sm:$0xf]
  %v708 = vld [vmem:[%s3 + $0xc4] sm:$0xf]
  %v709 = vld [vmem:[%s3 + $0xc8] sm:$0xf]
  %v710 = vld [vmem:[%s3 + $0xcc] sm:$0xf]
  %v711 = vld [vmem:[%s3 + $0xd0] sm:$0xf]
  %v712 = vld [vmem:[%s3 + $0xd4] sm:$0xf]
  %v713 = vld [vmem:[%s3 + $0xd8] sm:$0xf]
  %v714 = vld [vmem:[%s3 + $0xdc] sm:$0xf]
  %v715 = vld [vmem:[%s3 + $0xe0] sm:$0xf]
  %v716 = vld [vmem:[%s3 + $0xe4] sm:$0xf]
  %v717 = vld [vmem:[%s3 + $0xe8] sm:$0xf]
  %v718 = vld [vmem:[%s3 + $0xec] sm:$0xf]
  %v719 = vld [vmem:[%s3 + $0xf0] sm:$0xf]
  %v720 = vld [vmem:[%s3 + $0xf4] sm:$0xf]
  %v721 = vld [vmem:[%s3 + $0xf8] sm:$0xf]
  %v722 = vld [vmem:[%s3 + $0xfc] sm:$0xf]
  %v723 = vunpack.c.l.bf16 %v659
  %v724 = vunpack.c.l.bf16 %v660
  %v725 = vunpack.c.l.bf16 %v661
  %v726 = vunpack.c.l.bf16 %v662
  %v727 = vunpack.c.l.bf16 %v663
  %v728 = vunpack.c.l.bf16 %v664
  %v729 = vunpack.c.l.bf16 %v665
  %v730 = vunpack.c.l.bf16 %v666
  %v731 = vunpack.c.l.bf16 %v667
  %v732 = vunpack.c.l.bf16 %v668
  %v733 = vunpack.c.l.bf16 %v669
  %v734 = vunpack.c.l.bf16 %v670
  %v735 = vunpack.c.l.bf16 %v671
  %v736 = vunpack.c.l.bf16 %v672
  %v737 = vunpack.c.l.bf16 %v673
  %v738 = vunpack.c.l.bf16 %v674
  %v739 = vunpack.c.l.bf16 %v675
  %v740 = vunpack.c.l.bf16 %v676
  %v741 = vunpack.c.l.bf16 %v677
  %v742 = vunpack.c.l.bf16 %v678
  %v743 = vunpack.c.l.bf16 %v679
  %v744 = vunpack.c.l.bf16 %v680
  %v745 = vunpack.c.l.bf16 %v681
  %v746 = vunpack.c.l.bf16 %v682
  %v747 = vunpack.c.l.bf16 %v683
  %v748 = vunpack.c.l.bf16 %v684
  %v749 = vunpack.c.l.bf16 %v685
  %v750 = vunpack.c.l.bf16 %v686
  %v751 = vunpack.c.l.bf16 %v687
  %v752 = vunpack.c.l.bf16 %v688
  %v753 = vunpack.c.l.bf16 %v689
  %v754 = vunpack.c.l.bf16 %v690
  %v755 = vunpack.c.l.bf16 %v691
  %v756 = vunpack.c.l.bf16 %v692
  %v757 = vunpack.c.l.bf16 %v693
  %v758 = vunpack.c.l.bf16 %v694
  %v759 = vunpack.c.l.bf16 %v695
  %v760 = vunpack.c.l.bf16 %v696
  %v761 = vunpack.c.l.bf16 %v697
  %v762 = vunpack.c.l.bf16 %v698
  %v763 = vunpack.c.l.bf16 %v699
  %v764 = vunpack.c.l.bf16 %v700
  %v765 = vunpack.c.l.bf16 %v701
  %v766 = vunpack.c.l.bf16 %v702
  %v767 = vunpack.c.l.bf16 %v703
  %v768 = vunpack.c.l.bf16 %v704
  %v769 = vunpack.c.l.bf16 %v705
  %v770 = vunpack.c.l.bf16 %v706
  %v771 = vunpack.c.l.bf16 %v707
  %v772 = vunpack.c.l.bf16 %v708
  %v773 = vunpack.c.l.bf16 %v709
  %v774 = vunpack.c.l.bf16 %v710
  %v775 = vunpack.c.l.bf16 %v711
  %v776 = vunpack.c.l.bf16 %v712
  %v777 = vunpack.c.l.bf16 %v713
  %v778 = vunpack.c.l.bf16 %v714
  %v779 = vunpack.c.l.bf16 %v715
  %v780 = vunpack.c.l.bf16 %v716
  %v781 = vunpack.c.l.bf16 %v717
  %v782 = vunpack.c.l.bf16 %v718
  %v783 = vunpack.c.l.bf16 %v719
  %v784 = vunpack.c.l.bf16 %v720
  %v785 = vunpack.c.l.bf16 %v721
  %v786 = vunpack.c.l.bf16 %v722
  %v787 = vadd.f32 %v405, %v723
  %v788 = vadd.f32 %v408, %v724
  %v789 = vadd.f32 %v413, %v725
  %v790 = vadd.f32 %v416, %v726
  %v791 = vadd.f32 %v421, %v727
  %v792 = vadd.f32 %v424, %v728
  %v793 = vadd.f32 %v429, %v729
  %v794 = vadd.f32 %v432, %v730
  %v795 = vadd.f32 %v437, %v731
  %v796 = vadd.f32 %v440, %v732
  %v797 = vadd.f32 %v445, %v733
  %v798 = vadd.f32 %v448, %v734
  %v799 = vadd.f32 %v453, %v735
  %v800 = vadd.f32 %v456, %v736
  %v801 = vadd.f32 %v461, %v737
  %v802 = vadd.f32 %v464, %v738
  %v803 = vadd.f32 %v469, %v739
  %v804 = vadd.f32 %v472, %v740
  %v805 = vadd.f32 %v477, %v741
  %v806 = vadd.f32 %v480, %v742
  %v807 = vadd.f32 %v485, %v743
  %v808 = vadd.f32 %v488, %v744
  %v809 = vadd.f32 %v493, %v745
  %v810 = vadd.f32 %v496, %v746
  %v811 = vadd.f32 %v501, %v747
  %v812 = vadd.f32 %v504, %v748
  %v813 = vadd.f32 %v509, %v749
  %v814 = vadd.f32 %v512, %v750
  %v815 = vadd.f32 %v517, %v751
  %v816 = vadd.f32 %v520, %v752
  %v817 = vadd.f32 %v525, %v753
  %v818 = vadd.f32 %v528, %v754
  %v819 = vadd.f32 %v533, %v755
  %v820 = vadd.f32 %v536, %v756
  %v821 = vadd.f32 %v541, %v757
  %v822 = vadd.f32 %v544, %v758
  %v823 = vadd.f32 %v549, %v759
  %v824 = vadd.f32 %v552, %v760
  %v825 = vadd.f32 %v557, %v761
  %v826 = vadd.f32 %v560, %v762
  %v827 = vadd.f32 %v565, %v763
  %v828 = vadd.f32 %v568, %v764
  %v829 = vadd.f32 %v573, %v765
  %v830 = vadd.f32 %v576, %v766
  %v831 = vadd.f32 %v581, %v767
  %v832 = vadd.f32 %v584, %v768
  %v833 = vadd.f32 %v589, %v769
  %v834 = vadd.f32 %v592, %v770
  %v835 = vadd.f32 %v597, %v771
  %v836 = vadd.f32 %v600, %v772
  %v837 = vadd.f32 %v605, %v773
  %v838 = vadd.f32 %v608, %v774
  %v839 = vadd.f32 %v613, %v775
  %v840 = vadd.f32 %v616, %v776
  %v841 = vadd.f32 %v621, %v777
  %v842 = vadd.f32 %v624, %v778
  %v843 = vadd.f32 %v629, %v779
  %v844 = vadd.f32 %v632, %v780
  %v845 = vadd.f32 %v637, %v781
  %v846 = vadd.f32 %v640, %v782
  %v847 = vadd.f32 %v645, %v783
  %v848 = vadd.f32 %v648, %v784
  %v849 = vadd.f32 %v653, %v785
  %v850 = vadd.f32 %v656, %v786
  %v851 = vmax.f32 %v787, 0.0
  %v852 = vmax.f32 %v788, 0.0
  %v853 = vmax.f32 %v789, 0.0
  %v854 = vmax.f32 %v790, 0.0
  %v855 = vmax.f32 %v791, 0.0
  %v856 = vmax.f32 %v792, 0.0
  %v857 = vmax.f32 %v793, 0.0
  %v858 = vmax.f32 %v794, 0.0
  %v859 = vmax.f32 %v795, 0.0
  %v860 = vmax.f32 %v796, 0.0
  %v861 = vmax.f32 %v797, 0.0
  %v862 = vmax.f32 %v798, 0.0
  %v863 = vmax.f32 %v799, 0.0
  %v864 = vmax.f32 %v800, 0.0
  %v865 = vmax.f32 %v801, 0.0
  %v866 = vmax.f32 %v802, 0.0
  %v867 = vmax.f32 %v803, 0.0
  %v868 = vmax.f32 %v804, 0.0
  %v869 = vmax.f32 %v805, 0.0
  %v870 = vmax.f32 %v806, 0.0
  %v871 = vmax.f32 %v807, 0.0
  %v872 = vmax.f32 %v808, 0.0
  %v873 = vmax.f32 %v809, 0.0
  %v874 = vmax.f32 %v810, 0.0
  %v875 = vmax.f32 %v811, 0.0
  %v876 = vmax.f32 %v812, 0.0
  %v877 = vmax.f32 %v813, 0.0
  %v878 = vmax.f32 %v814, 0.0
  %v879 = vmax.f32 %v815, 0.0
  %v880 = vmax.f32 %v816, 0.0
  %v881 = vmax.f32 %v817, 0.0
  %v882 = vmax.f32 %v818, 0.0
  %v883 = vmax.f32 %v819, 0.0
  %v884 = vmax.f32 %v820, 0.0
  %v885 = vmax.f32 %v821, 0.0
  %v886 = vmax.f32 %v822, 0.0
  %v887 = vmax.f32 %v823, 0.0
  %v888 = vmax.f32 %v824, 0.0
  %v889 = vmax.f32 %v825, 0.0
  %v890 = vmax.f32 %v826, 0.0
  %v891 = vmax.f32 %v827, 0.0
  %v892 = vmax.f32 %v828, 0.0
  %v893 = vmax.f32 %v829, 0.0
  %v894 = vmax.f32 %v830, 0.0
  %v895 = vmax.f32 %v831, 0.0
  %v896 = vmax.f32 %v832, 0.0
  %v897 = vmax.f32 %v833, 0.0
  %v898 = vmax.f32 %v834, 0.0
  %v899 = vmax.f32 %v835, 0.0
  %v900 = vmax.f32 %v836, 0.0
  %v901 = vmax.f32 %v837, 0.0
  %v902 = vmax.f32 %v838, 0.0
  %v903 = vmax.f32 %v839, 0.0
  %v904 = vmax.f32 %v840, 0.0
  %v905 = vmax.f32 %v841, 0.0
  %v906 = vmax.f32 %v842, 0.0
  %v907 = vmax.f32 %v843, 0.0
  %v908 = vmax.f32 %v844, 0.0
  %v909 = vmax.f32 %v845, 0.0
  %v910 = vmax.f32 %v846, 0.0
  %v911 = vmax.f32 %v847, 0.0
  %v912 = vmax.f32 %v848, 0.0
  %v913 = vmax.f32 %v849, 0.0
  %v914 = vmax.f32 %v850, 0.0
  %v915 = vpack.c.bf16 %v852, %v851
  %v916 = vpack.c.bf16 %v854, %v853
  %v917 = vpack.c.bf16 %v856, %v855
  %v918 = vpack.c.bf16 %v858, %v857
  %v919 = vpack.c.bf16 %v860, %v859
  %v920 = vpack.c.bf16 %v862, %v861
  %v921 = vpack.c.bf16 %v864, %v863
  %v922 = vpack.c.bf16 %v866, %v865
  %v923 = vpack.c.bf16 %v868, %v867
  %v924 = vpack.c.bf16 %v870, %v869
  %v925 = vpack.c.bf16 %v872, %v871
  %v926 = vpack.c.bf16 %v874, %v873
  %v927 = vpack.c.bf16 %v876, %v875
  %v928 = vpack.c.bf16 %v878, %v877
  %v929 = vpack.c.bf16 %v880, %v879
  %v930 = vpack.c.bf16 %v882, %v881
  %v931 = vpack.c.bf16 %v884, %v883
  %v932 = vpack.c.bf16 %v886, %v885
  %v933 = vpack.c.bf16 %v888, %v887
  %v934 = vpack.c.bf16 %v890, %v889
  %v935 = vpack.c.bf16 %v892, %v891
  %v936 = vpack.c.bf16 %v894, %v893
  %v937 = vpack.c.bf16 %v896, %v895
  %v938 = vpack.c.bf16 %v898, %v897
  %v939 = vpack.c.bf16 %v900, %v899
  %v940 = vpack.c.bf16 %v902, %v901
  %v941 = vpack.c.bf16 %v904, %v903
  %v942 = vpack.c.bf16 %v906, %v905
  %v943 = vpack.c.bf16 %v908, %v907
  %v944 = vpack.c.bf16 %v910, %v909
  %v945 = vpack.c.bf16 %v912, %v911
  %v946 = vpack.c.bf16 %v914, %v913
  %v979 = vunpack.c.l.b16 %v915
  %v980 = vunpack.c.h.b16 %v915
  %v981 = vunpack.c.l.b16 %v916
  %v982 = vunpack.c.h.b16 %v916
  %v983 = vunpack.c.l.b16 %v917
  %v984 = vunpack.c.h.b16 %v917
  %v985 = vunpack.c.l.b16 %v918
  %v986 = vunpack.c.h.b16 %v918
  %v987 = vunpack.c.l.b16 %v919
  %v988 = vunpack.c.h.b16 %v919
  %v989 = vunpack.c.l.b16 %v920
  %v990 = vunpack.c.h.b16 %v920
  %v991 = vunpack.c.l.b16 %v921
  %v992 = vunpack.c.h.b16 %v921
  %v993 = vunpack.c.l.b16 %v922
  %v994 = vunpack.c.h.b16 %v922
  %v995 = vunpack.c.l.b16 %v923
  %v996 = vunpack.c.h.b16 %v923
  %v997 = vunpack.c.l.b16 %v924
  %v998 = vunpack.c.h.b16 %v924
  %v999 = vunpack.c.l.b16 %v925
  %v1000 = vunpack.c.h.b16 %v925
  %v1001 = vunpack.c.l.b16 %v926
  %v1002 = vunpack.c.h.b16 %v926
  %v1003 = vunpack.c.l.b16 %v927
  %v1004 = vunpack.c.h.b16 %v927
  %v1005 = vunpack.c.l.b16 %v928
  %v1006 = vunpack.c.h.b16 %v928
  %v1007 = vunpack.c.l.b16 %v929
  %v1008 = vunpack.c.h.b16 %v929
  %v1009 = vunpack.c.l.b16 %v930
  %v1010 = vunpack.c.h.b16 %v930
  %v1011 = vunpack.c.l.b16 %v931
  %v1012 = vunpack.c.h.b16 %v931
  %v1013 = vunpack.c.l.b16 %v932
  %v1014 = vunpack.c.h.b16 %v932
  %v1015 = vunpack.c.l.b16 %v933
  %v1016 = vunpack.c.h.b16 %v933
  %v1017 = vunpack.c.l.b16 %v934
  %v1018 = vunpack.c.h.b16 %v934
  %v1019 = vunpack.c.l.b16 %v935
  %v1020 = vunpack.c.h.b16 %v935
  %v1021 = vunpack.c.l.b16 %v936
  %v1022 = vunpack.c.h.b16 %v936
  %v1023 = vunpack.c.l.b16 %v937
  %v1024 = vunpack.c.h.b16 %v937
  %v1025 = vunpack.c.l.b16 %v938
  %v1026 = vunpack.c.h.b16 %v938
  %v1027 = vunpack.c.l.b16 %v939
  %v1028 = vunpack.c.h.b16 %v939
  %v1029 = vunpack.c.l.b16 %v940
  %v1030 = vunpack.c.h.b16 %v940
  %v1031 = vunpack.c.l.b16 %v941
  %v1032 = vunpack.c.h.b16 %v941
  %v1033 = vunpack.c.l.b16 %v942
  %v1034 = vunpack.c.h.b16 %v942
  %v1035 = vunpack.c.l.b16 %v943
  %v1036 = vunpack.c.h.b16 %v943
  %v1037 = vunpack.c.l.b16 %v944
  %v1038 = vunpack.c.h.b16 %v944
  %v1039 = vunpack.c.l.b16 %v945
  %v1040 = vunpack.c.h.b16 %v945
  %v1041 = vunpack.c.l.b16 %v946
  %v1042 = vunpack.c.h.b16 %v946
  %v1043 = vpack.c.b16 %v979, %v979
  %v1044 = vpack.c.b16 %v980, %v980
  %v1045 = vpack.c.b16 %v981, %v981
  %v1046 = vpack.c.b16 %v982, %v982
  %v1047 = vpack.c.b16 %v983, %v983
  %v1048 = vpack.c.b16 %v984, %v984
  %v1049 = vpack.c.b16 %v985, %v985
  %v1050 = vpack.c.b16 %v986, %v986
  %v1051 = vpack.c.b16 %v987, %v987
  %v1052 = vpack.c.b16 %v988, %v988
  %v1053 = vpack.c.b16 %v989, %v989
  %v1054 = vpack.c.b16 %v990, %v990
  %v1055 = vpack.c.b16 %v991, %v991
  %v1056 = vpack.c.b16 %v992, %v992
  %v1057 = vpack.c.b16 %v993, %v993
  %v1058 = vpack.c.b16 %v994, %v994
  %v1059 = vpack.c.b16 %v995, %v995
  %v1060 = vpack.c.b16 %v996, %v996
  %v1061 = vpack.c.b16 %v997, %v997
  %v1062 = vpack.c.b16 %v998, %v998
  %v1063 = vpack.c.b16 %v999, %v999
  %v1064 = vpack.c.b16 %v1000, %v1000
  %v1065 = vpack.c.b16 %v1001, %v1001
  %v1066 = vpack.c.b16 %v1002, %v1002
  %v1067 = vpack.c.b16 %v1003, %v1003
  %v1068 = vpack.c.b16 %v1004, %v1004
  %v1069 = vpack.c.b16 %v1005, %v1005
  %v1070 = vpack.c.b16 %v1006, %v1006
  %v1071 = vpack.c.b16 %v1007, %v1007
  %v1072 = vpack.c.b16 %v1008, %v1008
  %v1073 = vpack.c.b16 %v1009, %v1009
  %v1074 = vpack.c.b16 %v1010, %v1010
  %v1075 = vpack.c.b16 %v1011, %v1011
  %v1076 = vpack.c.b16 %v1012, %v1012
  %v1077 = vpack.c.b16 %v1013, %v1013
  %v1078 = vpack.c.b16 %v1014, %v1014
  %v1079 = vpack.c.b16 %v1015, %v1015
  %v1080 = vpack.c.b16 %v1016, %v1016
  %v1081 = vpack.c.b16 %v1017, %v1017
  %v1082 = vpack.c.b16 %v1018, %v1018
  %v1083 = vpack.c.b16 %v1019, %v1019
  %v1084 = vpack.c.b16 %v1020, %v1020
  %v1085 = vpack.c.b16 %v1021, %v1021
  %v1086 = vpack.c.b16 %v1022, %v1022
  %v1087 = vpack.c.b16 %v1023, %v1023
  %v1088 = vpack.c.b16 %v1024, %v1024
  %v1089 = vpack.c.b16 %v1025, %v1025
  %v1090 = vpack.c.b16 %v1026, %v1026
  %v1091 = vpack.c.b16 %v1027, %v1027
  %v1092 = vpack.c.b16 %v1028, %v1028
  %v1093 = vpack.c.b16 %v1029, %v1029
  %v1094 = vpack.c.b16 %v1030, %v1030
  %v1095 = vpack.c.b16 %v1031, %v1031
  %v1096 = vpack.c.b16 %v1032, %v1032
  %v1097 = vpack.c.b16 %v1033, %v1033
  %v1098 = vpack.c.b16 %v1034, %v1034
  %v1099 = vpack.c.b16 %v1035, %v1035
  %v1100 = vpack.c.b16 %v1036, %v1036
  %v1101 = vpack.c.b16 %v1037, %v1037
  %v1102 = vpack.c.b16 %v1038, %v1038
  %v1103 = vpack.c.b16 %v1039, %v1039
  %v1104 = vpack.c.b16 %v1040, %v1040
  %v1105 = vpack.c.b16 %v1041, %v1041
  %v1106 = vpack.c.b16 %v1042, %v1042
  %vm1171 = vcmask 125952
  %1172 = vst.msk [vmem:[%s4] sm:$0xf] %vm1171, %v1043
  %1173 = vst.msk [vmem:[%s4 + $0x4] sm:$0xf] %vm1171, %v1044
  %1174 = vst.msk [vmem:[%s4 + $0x8] sm:$0xf] %vm1171, %v1045
  %1175 = vst.msk [vmem:[%s4 + $0xc] sm:$0xf] %vm1171, %v1046
  %1176 = vst.msk [vmem:[%s4 + $0x10] sm:$0xf] %vm1171, %v1047
  %1177 = vst.msk [vmem:[%s4 + $0x14] sm:$0xf] %vm1171, %v1048
  %1178 = vst.msk [vmem:[%s4 + $0x18] sm:$0xf] %vm1171, %v1049
  %1179 = vst.msk [vmem:[%s4 + $0x1c] sm:$0xf] %vm1171, %v1050
  %1180 = vst.msk [vmem:[%s4 + $0x20] sm:$0xf] %vm1171, %v1051
  %1181 = vst.msk [vmem:[%s4 + $0x24] sm:$0xf] %vm1171, %v1052
  %1182 = vst.msk [vmem:[%s4 + $0x28] sm:$0xf] %vm1171, %v1053
  %1183 = vst.msk [vmem:[%s4 + $0x2c] sm:$0xf] %vm1171, %v1054
  %1184 = vst.msk [vmem:[%s4 + $0x30] sm:$0xf] %vm1171, %v1055
  %1185 = vst.msk [vmem:[%s4 + $0x34] sm:$0xf] %vm1171, %v1056
  %1186 = vst.msk [vmem:[%s4 + $0x38] sm:$0xf] %vm1171, %v1057
  %1187 = vst.msk [vmem:[%s4 + $0x3c] sm:$0xf] %vm1171, %v1058
  %1188 = vst.msk [vmem:[%s4 + $0x40] sm:$0xf] %vm1171, %v1059
  %1189 = vst.msk [vmem:[%s4 + $0x44] sm:$0xf] %vm1171, %v1060
  %1190 = vst.msk [vmem:[%s4 + $0x48] sm:$0xf] %vm1171, %v1061
  %1191 = vst.msk [vmem:[%s4 + $0x4c] sm:$0xf] %vm1171, %v1062
  %1192 = vst.msk [vmem:[%s4 + $0x50] sm:$0xf] %vm1171, %v1063
  %1193 = vst.msk [vmem:[%s4 + $0x54] sm:$0xf] %vm1171, %v1064
  %1194 = vst.msk [vmem:[%s4 + $0x58] sm:$0xf] %vm1171, %v1065
  %1195 = vst.msk [vmem:[%s4 + $0x5c] sm:$0xf] %vm1171, %v1066
  %1196 = vst.msk [vmem:[%s4 + $0x60] sm:$0xf] %vm1171, %v1067
  %1197 = vst.msk [vmem:[%s4 + $0x64] sm:$0xf] %vm1171, %v1068
  %1198 = vst.msk [vmem:[%s4 + $0x68] sm:$0xf] %vm1171, %v1069
  %1199 = vst.msk [vmem:[%s4 + $0x6c] sm:$0xf] %vm1171, %v1070
  %1200 = vst.msk [vmem:[%s4 + $0x70] sm:$0xf] %vm1171, %v1071
  %1201 = vst.msk [vmem:[%s4 + $0x74] sm:$0xf] %vm1171, %v1072
  %1202 = vst.msk [vmem:[%s4 + $0x78] sm:$0xf] %vm1171, %v1073
  %1203 = vst.msk [vmem:[%s4 + $0x7c] sm:$0xf] %vm1171, %v1074
  %1204 = vst.msk [vmem:[%s4 + $0x80] sm:$0xf] %vm1171, %v1075
  %1205 = vst.msk [vmem:[%s4 + $0x84] sm:$0xf] %vm1171, %v1076
  %1206 = vst.msk [vmem:[%s4 + $0x88] sm:$0xf] %vm1171, %v1077
  %1207 = vst.msk [vmem:[%s4 + $0x8c] sm:$0xf] %vm1171, %v1078
  %1208 = vst.msk [vmem:[%s4 + $0x90] sm:$0xf] %vm1171, %v1079
  %1209 = vst.msk [vmem:[%s4 + $0x94] sm:$0xf] %vm1171, %v1080
  %1210 = vst.msk [vmem:[%s4 + $0x98] sm:$0xf] %vm1171, %v1081
  %1211 = vst.msk [vmem:[%s4 + $0x9c] sm:$0xf] %vm1171, %v1082
  %1212 = vst.msk [vmem:[%s4 + $0xa0] sm:$0xf] %vm1171, %v1083
  %1213 = vst.msk [vmem:[%s4 + $0xa4] sm:$0xf] %vm1171, %v1084
  %1214 = vst.msk [vmem:[%s4 + $0xa8] sm:$0xf] %vm1171, %v1085
  %1215 = vst.msk [vmem:[%s4 + $0xac] sm:$0xf] %vm1171, %v1086
  %1216 = vst.msk [vmem:[%s4 + $0xb0] sm:$0xf] %vm1171, %v1087
  %1217 = vst.msk [vmem:[%s4 + $0xb4] sm:$0xf] %vm1171, %v1088
  %1218 = vst.msk [vmem:[%s4 + $0xb8] sm:$0xf] %vm1171, %v1089
  %1219 = vst.msk [vmem:[%s4 + $0xbc] sm:$0xf] %vm1171, %v1090
  %1220 = vst.msk [vmem:[%s4 + $0xc0] sm:$0xf] %vm1171, %v1091
  %1221 = vst.msk [vmem:[%s4 + $0xc4] sm:$0xf] %vm1171, %v1092
  %1222 = vst.msk [vmem:[%s4 + $0xc8] sm:$0xf] %vm1171, %v1093
  %1223 = vst.msk [vmem:[%s4 + $0xcc] sm:$0xf] %vm1171, %v1094
  %1224 = vst.msk [vmem:[%s4 + $0xd0] sm:$0xf] %vm1171, %v1095
  %1225 = vst.msk [vmem:[%s4 + $0xd4] sm:$0xf] %vm1171, %v1096
  %1226 = vst.msk [vmem:[%s4 + $0xd8] sm:$0xf] %vm1171, %v1097
  %1227 = vst.msk [vmem:[%s4 + $0xdc] sm:$0xf] %vm1171, %v1098
  %1228 = vst.msk [vmem:[%s4 + $0xe0] sm:$0xf] %vm1171, %v1099
  %1229 = vst.msk [vmem:[%s4 + $0xe4] sm:$0xf] %vm1171, %v1100
  %1230 = vst.msk [vmem:[%s4 + $0xe8] sm:$0xf] %vm1171, %v1101
  %1231 = vst.msk [vmem:[%s4 + $0xec] sm:$0xf] %vm1171, %v1102
  %1232 = vst.msk [vmem:[%s4 + $0xf0] sm:$0xf] %vm1171, %v1103
  %1233 = vst.msk [vmem:[%s4 + $0xf4] sm:$0xf] %vm1171, %v1104
  %1234 = vst.msk [vmem:[%s4 + $0xf8] sm:$0xf] %vm1171, %v1105
  %1235 = vst.msk [vmem:[%s4 + $0xfc] sm:$0xf] %vm1171, %v1106
  // Predicated region
  $region18: #{net_fwd.142} parent=0 // pred_check
    _
  $region19: #{net_fwd.142} parent=0 // pred_check_branch
    %1237 = sbr.rel (0) target = $region21
  $region20: #{net_fwd.142} parent=0 // pred_region
    _
  $region21: #{net_fwd.142} parent=0 // pred_fallthru
    _
  // Predicated region
  $region22: #{net_fwd.142} parent=0 // pred_check
    _
  $region23: #{net_fwd.142} parent=0 // pred_check_branch
    %1239 = sbr.rel (0) target = $region25
  $region24: #{net_fwd.142} parent=0 // pred_region
    _
  $region25: #{net_fwd.142} parent=0 // pred_fallthru
    _

// kernel: net_fwd.147
$region0: #{net_fwd.147}
  #allocation0 [shape = 'u32[]', space=smem, size = 0x4, offset = 0x4, fixed_abs, tag = 'smem constant byte address 0x4 - core index']
  #allocation1 [shape = 'u32[144,128]{1,0:T(1,128)}', space=vmem, size = 0x12000, scoped, tag = 'internal scratch']
  %s0 = inlined_call_operand.vmem [shape: bf16[512,16], index: 0, kind: input, shape index: {}]
  %s1 = inlined_call_operand.vmem [shape: bf16[16,52], index: 1, kind: input, shape index: {}]
  %s2 = inlined_call_operand.vmem [shape: f32[1,52], index: 2, kind: input, shape index: {}]
  %s3 = inlined_call_operand.vmem [shape: f32[512,52], index: 3, kind: output, shape index: {}]
  %s4 = sld [smem:[#allocation0]]
  $region22: #{net_fwd.147} parent=0
    _
  %s6 = ssub.s32 1, %s4
  %s7 = scalar_select 0, %s6, %s4
  // Predicated region
  $region2: #{net_fwd.147} parent=0 // pred_check
    _
  $region3: #{net_fwd.147} parent=0 // pred_check_branch
    %9 = sbr.rel (0) target = $region5
  $region4: #{net_fwd.147} parent=0 // pred_region
    _
  $region5: #{net_fwd.147} parent=0 // pred_fallthru
    _
  // Predicated region
  $region6: #{net_fwd.147} parent=0 // pred_check
    _
  $region7: #{net_fwd.147} parent=0 // pred_check_branch
    %11 = sbr.rel (0) target = $region9
  $region8: #{net_fwd.147} parent=0 // pred_region
    _
  $region9: #{net_fwd.147} parent=0 // pred_fallthru
    _
  // Predicated region
  $region10: #{net_fwd.147} parent=0 // pred_check
    _
  $region11: #{net_fwd.147} parent=0 // pred_check_branch
    %13 = sbr.rel (0) target = $region13
  $region12: #{net_fwd.147} parent=0 // pred_region
    _
  $region13: #{net_fwd.147} parent=0 // pred_fallthru
    _
  %v15 = vld [vmem:[%s0] sm:$0xf]
  %v16 = vld [vmem:[%s0 + $0x4] sm:$0xf]
  %v17 = vld [vmem:[%s0 + $0x8] sm:$0xf]
  %v18 = vld [vmem:[%s0 + $0xc] sm:$0xf]
  %v19 = vld [vmem:[%s0 + $0x10] sm:$0xf]
  %v20 = vld [vmem:[%s0 + $0x14] sm:$0xf]
  %v21 = vld [vmem:[%s0 + $0x18] sm:$0xf]
  %v22 = vld [vmem:[%s0 + $0x1c] sm:$0xf]
  %v23 = vld [vmem:[%s0 + $0x20] sm:$0xf]
  %v24 = vld [vmem:[%s0 + $0x24] sm:$0xf]
  %v25 = vld [vmem:[%s0 + $0x28] sm:$0xf]
  %v26 = vld [vmem:[%s0 + $0x2c] sm:$0xf]
  %v27 = vld [vmem:[%s0 + $0x30] sm:$0xf]
  %v28 = vld [vmem:[%s0 + $0x34] sm:$0xf]
  %v29 = vld [vmem:[%s0 + $0x38] sm:$0xf]
  %v30 = vld [vmem:[%s0 + $0x3c] sm:$0xf]
  %v31 = vld [vmem:[%s0 + $0x40] sm:$0xf]
  %v32 = vld [vmem:[%s0 + $0x44] sm:$0xf]
  %v33 = vld [vmem:[%s0 + $0x48] sm:$0xf]
  %v34 = vld [vmem:[%s0 + $0x4c] sm:$0xf]
  %v35 = vld [vmem:[%s0 + $0x50] sm:$0xf]
  %v36 = vld [vmem:[%s0 + $0x54] sm:$0xf]
  %v37 = vld [vmem:[%s0 + $0x58] sm:$0xf]
  %v38 = vld [vmem:[%s0 + $0x5c] sm:$0xf]
  %v39 = vld [vmem:[%s0 + $0x60] sm:$0xf]
  %v40 = vld [vmem:[%s0 + $0x64] sm:$0xf]
  %v41 = vld [vmem:[%s0 + $0x68] sm:$0xf]
  %v42 = vld [vmem:[%s0 + $0x6c] sm:$0xf]
  %v43 = vld [vmem:[%s0 + $0x70] sm:$0xf]
  %v44 = vld [vmem:[%s0 + $0x74] sm:$0xf]
  %v45 = vld [vmem:[%s0 + $0x78] sm:$0xf]
  %v46 = vld [vmem:[%s0 + $0x7c] sm:$0xf]
  %v47 = vld [vmem:[%s0 + $0x80] sm:$0xf]
  %v48 = vld [vmem:[%s0 + $0x84] sm:$0xf]
  %v49 = vld [vmem:[%s0 + $0x88] sm:$0xf]
  %v50 = vld [vmem:[%s0 + $0x8c] sm:$0xf]
  %v51 = vld [vmem:[%s0 + $0x90] sm:$0xf]
  %v52 = vld [vmem:[%s0 + $0x94] sm:$0xf]
  %v53 = vld [vmem:[%s0 + $0x98] sm:$0xf]
  %v54 = vld [vmem:[%s0 + $0x9c] sm:$0xf]
  %v55 = vld [vmem:[%s0 + $0xa0] sm:$0xf]
  %v56 = vld [vmem:[%s0 + $0xa4] sm:$0xf]
  %v57 = vld [vmem:[%s0 + $0xa8] sm:$0xf]
  %v58 = vld [vmem:[%s0 + $0xac] sm:$0xf]
  %v59 = vld [vmem:[%s0 + $0xb0] sm:$0xf]
  %v60 = vld [vmem:[%s0 + $0xb4] sm:$0xf]
  %v61 = vld [vmem:[%s0 + $0xb8] sm:$0xf]
  %v62 = vld [vmem:[%s0 + $0xbc] sm:$0xf]
  %v63 = vld [vmem:[%s0 + $0xc0] sm:$0xf]
  %v64 = vld [vmem:[%s0 + $0xc4] sm:$0xf]
  %v65 = vld [vmem:[%s0 + $0xc8] sm:$0xf]
  %v66 = vld [vmem:[%s0 + $0xcc] sm:$0xf]
  %v67 = vld [vmem:[%s0 + $0xd0] sm:$0xf]
  %v68 = vld [vmem:[%s0 + $0xd4] sm:$0xf]
  %v69 = vld [vmem:[%s0 + $0xd8] sm:$0xf]
  %v70 = vld [vmem:[%s0 + $0xdc] sm:$0xf]
  %v71 = vld [vmem:[%s0 + $0xe0] sm:$0xf]
  %v72 = vld [vmem:[%s0 + $0xe4] sm:$0xf]
  %v73 = vld [vmem:[%s0 + $0xe8] sm:$0xf]
  %v74 = vld [vmem:[%s0 + $0xec] sm:$0xf]
  %v75 = vld [vmem:[%s0 + $0xf0] sm:$0xf]
  %v76 = vld [vmem:[%s0 + $0xf4] sm:$0xf]
  %v77 = vld [vmem:[%s0 + $0xf8] sm:$0xf]
  %v78 = vld [vmem:[%s0 + $0xfc] sm:$0xf]
  %v79 = vld [vmem:[%s1] sm:$0xf]
  %v80 = vld [vmem:[%s1 + $0x4] sm:$0xf]
  %v81 = vld [vmem:[%s2] sm:$0x1]
  %v83 = vlaneseq
  %v84 = vshrl.u32 %v83, 7
  %v85 = vsub.s32 0, %v84
  %v86 = vrot.slane %v81, %v85
  %v152 = vunpack.c.l.b16 %v15
  %v153 = vunpack.c.l.b16 %v16
  %v154 = vunpack.c.l.b16 %v17
  %v155 = vunpack.c.l.b16 %v18
  %v156 = vunpack.c.l.b16 %v19
  %v157 = vunpack.c.l.b16 %v20
  %v158 = vunpack.c.l.b16 %v21
  %v159 = vunpack.c.l.b16 %v22
  %v160 = vunpack.c.l.b16 %v23
  %v161 = vunpack.c.l.b16 %v24
  %v162 = vunpack.c.l.b16 %v25
  %v163 = vunpack.c.l.b16 %v26
  %v164 = vunpack.c.l.b16 %v27
  %v165 = vunpack.c.l.b16 %v28
  %v166 = vunpack.c.l.b16 %v29
  %v167 = vunpack.c.l.b16 %v30
  %v168 = vunpack.c.l.b16 %v31
  %v169 = vunpack.c.l.b16 %v32
  %v170 = vunpack.c.l.b16 %v33
  %v171 = vunpack.c.l.b16 %v34
  %v172 = vunpack.c.l.b16 %v35
  %v173 = vunpack.c.l.b16 %v36
  %v174 = vunpack.c.l.b16 %v37
  %v175 = vunpack.c.l.b16 %v38
  %v176 = vunpack.c.l.b16 %v39
  %v177 = vunpack.c.l.b16 %v40
  %v178 = vunpack.c.l.b16 %v41
  %v179 = vunpack.c.l.b16 %v42
  %v180 = vunpack.c.l.b16 %v43
  %v181 = vunpack.c.l.b16 %v44
  %v182 = vunpack.c.l.b16 %v45
  %v183 = vunpack.c.l.b16 %v46
  %v184 = vunpack.c.l.b16 %v47
  %v185 = vunpack.c.l.b16 %v48
  %v186 = vunpack.c.l.b16 %v49
  %v187 = vunpack.c.l.b16 %v50
  %v188 = vunpack.c.l.b16 %v51
  %v189 = vunpack.c.l.b16 %v52
  %v190 = vunpack.c.l.b16 %v53
  %v191 = vunpack.c.l.b16 %v54
  %v192 = vunpack.c.l.b16 %v55
  %v193 = vunpack.c.l.b16 %v56
  %v194 = vunpack.c.l.b16 %v57
  %v195 = vunpack.c.l.b16 %v58
  %v196 = vunpack.c.l.b16 %v59
  %v197 = vunpack.c.l.b16 %v60
  %v198 = vunpack.c.l.b16 %v61
  %v199 = vunpack.c.l.b16 %v62
  %v200 = vunpack.c.l.b16 %v63
  %v201 = vunpack.c.l.b16 %v64
  %v202 = vunpack.c.l.b16 %v65
  %v203 = vunpack.c.l.b16 %v66
  %v204 = vunpack.c.l.b16 %v67
  %v205 = vunpack.c.l.b16 %v68
  %v206 = vunpack.c.l.b16 %v69
  %v207 = vunpack.c.l.b16 %v70
  %v208 = vunpack.c.l.b16 %v71
  %v209 = vunpack.c.l.b16 %v72
  %v210 = vunpack.c.l.b16 %v73
  %v211 = vunpack.c.l.b16 %v74
  %v212 = vunpack.c.l.b16 %v75
  %v213 = vunpack.c.l.b16 %v76
  %v214 = vunpack.c.l.b16 %v77
  %v215 = vunpack.c.l.b16 %v78
  %v216 = vpack.c.b16 %v153, %v152
  %v217 = vpack.c.b16 %v155, %v154
  %v218 = vpack.c.b16 %v157, %v156
  %v219 = vpack.c.b16 %v159, %v158
  %v220 = vpack.c.b16 %v161, %v160
  %v221 = vpack.c.b16 %v163, %v162
  %v222 = vpack.c.b16 %v165, %v164
  %v223 = vpack.c.b16 %v167, %v166
  %v224 = vpack.c.b16 %v169, %v168
  %v225 = vpack.c.b16 %v171, %v170
  %v226 = vpack.c.b16 %v173, %v172
  %v227 = vpack.c.b16 %v175, %v174
  %v228 = vpack.c.b16 %v177, %v176
  %v229 = vpack.c.b16 %v179, %v178
  %v230 = vpack.c.b16 %v181, %v180
  %v231 = vpack.c.b16 %v183, %v182
  %v232 = vpack.c.b16 %v185, %v184
  %v233 = vpack.c.b16 %v187, %v186
  %v234 = vpack.c.b16 %v189, %v188
  %v235 = vpack.c.b16 %v191, %v190
  %v236 = vpack.c.b16 %v193, %v192
  %v237 = vpack.c.b16 %v195, %v194
  %v238 = vpack.c.b16 %v197, %v196
  %v239 = vpack.c.b16 %v199, %v198
  %v240 = vpack.c.b16 %v201, %v200
  %v241 = vpack.c.b16 %v203, %v202
  %v242 = vpack.c.b16 %v205, %v204
  %v243 = vpack.c.b16 %v207, %v206
  %v244 = vpack.c.b16 %v209, %v208
  %v245 = vpack.c.b16 %v211, %v210
  %v246 = vpack.c.b16 %v213, %v212
  %v247 = vpack.c.b16 %v215, %v214
  %v250 = vunpack.c.l.b16 %v79
  %v251 = vunpack.c.l.b16 %v80
  %v252 = vpack.c.b16 %v251, %v250
  %vm254 = vcmask 130048
  %v256 = vsel %vm254, %v216, 0
  %v259 = vsel %vm254, %v217, 0
  %v262 = vsel %vm254, %v218, 0
  %v265 = vsel %vm254, %v219, 0
  %v268 = vsel %vm254, %v220, 0
  %v271 = vsel %vm254, %v221, 0
  %v274 = vsel %vm254, %v222, 0
  %v277 = vsel %vm254, %v223, 0
  %v280 = vsel %vm254, %v224, 0
  %v283 = vsel %vm254, %v225, 0
  %v286 = vsel %vm254, %v226, 0
  %v289 = vsel %vm254, %v227, 0
  %v292 = vsel %vm254, %v228, 0
  %v295 = vsel %vm254, %v229, 0
  %v298 = vsel %vm254, %v230, 0
  %v301 = vsel %vm254, %v231, 0
  %v304 = vsel %vm254, %v232, 0
  %v307 = vsel %vm254, %v233, 0
  %v310 = vsel %vm254, %v234, 0
  %v313 = vsel %vm254, %v235, 0
  %v316 = vsel %vm254, %v236, 0
  %v319 = vsel %vm254, %v237, 0
  %v322 = vsel %vm254, %v238, 0
  %v325 = vsel %vm254, %v239, 0
  %v328 = vsel %vm254, %v240, 0
  %v331 = vsel %vm254, %v241, 0
  %v334 = vsel %vm254, %v242, 0
  %v337 = vsel %vm254, %v243, 0
  %v340 = vsel %vm254, %v244, 0
  %v343 = vsel %vm254, %v245, 0
  %v346 = vsel %vm254, %v246, 0
  %v349 = vsel %vm254, %v247, 0
  %351 = vmatprep.subr.bf16.mxu0 0
  %352 = vmatpush1.bf16.msra.mxu0 %v252
  %353 = vmatprep.subr.bf16.mxu0 0
  %354 = vmatpush1.bf16.msra.mxu0 0
  %355 = vmatprep.subr.bf16.mxu0 0
  %356 = vmatpush1.bf16.msra.mxu0 0
  %357 = vmatprep.subr.bf16.mxu0 0
  %358 = vmatpush1.bf16.msra.mxu0 0
  %359 = vmatprep.subr.bf16.mxu0 0
  %360 = vmatpush1.bf16.msra.mxu0 0
  %361 = vmatprep.subr.bf16.mxu0 0
  %362 = vmatpush1.bf16.msra.mxu0 0
  %363 = vmatprep.subr.bf16.mxu0 0
  %364 = vmatpush1.bf16.msra.mxu0 0
  %365 = vmatprep.subr.bf16.mxu0 0
  %366 = vmatpush1.bf16.msra.mxu0 0
  %367 = vmatprep.subr.bf16.mxu0 0
  %368 = vmatpush1.bf16.msra.mxu0 0
  %369 = vmatprep.subr.bf16.mxu0 0
  %370 = vmatpush1.bf16.msra.mxu0 0
  %371 = vmatprep.subr.bf16.mxu0 0
  %372 = vmatpush1.bf16.msra.mxu0 0
  %373 = vmatprep.subr.bf16.mxu0 0
  %374 = vmatpush1.bf16.msra.mxu0 0
  %375 = vmatprep.subr.bf16.mxu0 0
  %376 = vmatpush1.bf16.msra.mxu0 0
  %377 = vmatprep.subr.bf16.mxu0 0
  %378 = vmatpush1.bf16.msra.mxu0 0
  %379 = vmatprep.subr.bf16.mxu0 0
  %380 = vmatpush1.bf16.msra.mxu0 0
  %381 = vmatprep.subr.bf16.mxu0 0
  %382 = vmatpush1.bf16.msra.mxu0 0
  %383 = vmatprep.mubr.bf16.mxu0 0
  %384 = vmatmul.mubr.bf16.gmra.mrb[0].mxu0 %v256
  %v385 = vpop.f32.mrb[0].mxu0
  %v386 = vadd.f32 %v86, %v385
  %v387 = vpop.f32.mrb[0].mxu0
  %v388 = vpop.f32.mrb[0].mxu0
  %v389 = vadd.f32 %v86, %v388
  %v390 = vpop.f32.mrb[0].mxu0
  %391 = vmatprep.mubr.bf16.mxu0 0
  %392 = vmatmul.mubr.bf16.gmra.mrb[0].mxu0 %v259
  %v393 = vpop.f32.mrb[0].mxu0
  %v394 = vadd.f32 %v86, %v393
  %v395 = vpop.f32.mrb[0].mxu0
  %v396 = vpop.f32.mrb[0].mxu0
  %v397 = vadd.f32 %v86, %v396
  %v398 = vpop.f32.mrb[0].mxu0
  %399 = vmatprep.mubr.bf16.mxu0 0
  %400 = vmatmul.mubr.bf16.gmra.mrb[0].mxu0 %v262
  %v401 = vpop.f32.mrb[0].mxu0
  %v402 = vadd.f32 %v86, %v401
  %v403 = vpop.f32.mrb[0].mxu0
  %v404 = vpop.f32.mrb[0].mxu0
  %v405 = vadd.f32 %v86, %v404
  %v406 = vpop.f32.mrb[0].mxu0
  %407 = vmatprep.mubr.bf16.mxu0 0
  %408 = vmatmul.mubr.bf16.gmra.mrb[0].mxu0 %v265
  %v409 = vpop.f32.mrb[0].mxu0
  %v410 = vadd.f32 %v86, %v409
  %v411 = vpop.f32.mrb[0].mxu0
  %v412 = vpop.f32.mrb[0].mxu0
  %v413 = vadd.f32 %v86, %v412
  %v414 = vpop.f32.mrb[0].mxu0
  %415 = vmatprep.mubr.bf16.mxu0 0
  %416 = vmatmul.mubr.bf16.gmra.mrb[0].mxu0 %v268
  %v417 = vpop.f32.mrb[0].mxu0
  %v418 = vadd.f32 %v86, %v417
  %v419 = vpop.f32.mrb[0].mxu0
  %v420 = vpop.f32.mrb[0].mxu0
  %v421 = vadd.f32 %v86, %v420
  %v422 = vpop.f32.mrb[0].mxu0
  %423 = vmatprep.mubr.bf16.mxu0 0
  %424 = vmatmul.mubr.bf16.gmra.mrb[0].mxu0 %v271
  %v425 = vpop.f32.mrb[0].mxu0
  %v426 = vadd.f32 %v86, %v425
  %v427 = vpop.f32.mrb[0].mxu0
  %v428 = vpop.f32.mrb[0].mxu0
  %v429 = vadd.f32 %v86, %v428
  %v430 = vpop.f32.mrb[0].mxu0
  %431 = vmatprep.mubr.bf16.mxu0 0
  %432 = vmatmul.mubr.bf16.gmra.mrb[0].mxu0 %v274
  %v433 = vpop.f32.mrb[0].mxu0
  %v434 = vadd.f32 %v86, %v433
  %v435 = vpop.f32.mrb[0].mxu0
  %v436 = vpop.f32.mrb[0].mxu0
  %v437 = vadd.f32 %v86, %v436
  %v438 = vpop.f32.mrb[0].mxu0
  %439 = vmatprep.mubr.bf16.mxu0 0
  %440 = vmatmul.mubr.bf16.gmra.mrb[0].mxu0 %v277
  %v441 = vpop.f32.mrb[0].mxu0
  %v442 = vadd.f32 %v86, %v441
  %v443 = vpop.f32.mrb[0].mxu0
  %v444 = vpop.f32.mrb[0].mxu0
  %v445 = vadd.f32 %v86, %v444
  %v446 = vpop.f32.mrb[0].mxu0
  %447 = vmatprep.mubr.bf16.mxu0 0
  %448 = vmatmul.mubr.bf16.gmra.mrb[0].mxu0 %v280
  %v449 = vpop.f32.mrb[0].mxu0
  %v450 = vadd.f32 %v86, %v449
  %v451 = vpop.f32.mrb[0].mxu0
  %v452 = vpop.f32.mrb[0].mxu0
  %v453 = vadd.f32 %v86, %v452
  %v454 = vpop.f32.mrb[0].mxu0
  %455 = vmatprep.mubr.bf16.mxu0 0
  %456 = vmatmul.mubr.bf16.gmra.mrb[0].mxu0 %v283
  %v457 = vpop.f32.mrb[0].mxu0
  %v458 = vadd.f32 %v86, %v457
  %v459 = vpop.f32.mrb[0].mxu0
  %v460 = vpop.f32.mrb[0].mxu0
  %v461 = vadd.f32 %v86, %v460
  %v462 = vpop.f32.mrb[0].mxu0
  %463 = vmatprep.mubr.bf16.mxu0 0
  %464 = vmatmul.mubr.bf16.gmra.mrb[0].mxu0 %v286
  %v465 = vpop.f32.mrb[0].mxu0
  %v466 = vadd.f32 %v86, %v465
  %v467 = vpop.f32.mrb[0].mxu0
  %v468 = vpop.f32.mrb[0].mxu0
  %v469 = vadd.f32 %v86, %v468
  %v470 = vpop.f32.mrb[0].mxu0
  %471 = vmatprep.mubr.bf16.mxu0 0
  %472 = vmatmul.mubr.bf16.gmra.mrb[0].mxu0 %v289
  %v473 = vpop.f32.mrb[0].mxu0
  %v474 = vadd.f32 %v86, %v473
  %v475 = vpop.f32.mrb[0].mxu0
  %v476 = vpop.f32.mrb[0].mxu0
  %v477 = vadd.f32 %v86, %v476
  %v478 = vpop.f32.mrb[0].mxu0
  %479 = vmatprep.mubr.bf16.mxu0 0
  %480 = vmatmul.mubr.bf16.gmra.mrb[0].mxu0 %v292
  %v481 = vpop.f32.mrb[0].mxu0
  %v482 = vadd.f32 %v86, %v481
  %v483 = vpop.f32.mrb[0].mxu0
  %v484 = vpop.f32.mrb[0].mxu0
  %v485 = vadd.f32 %v86, %v484
  %v486 = vpop.f32.mrb[0].mxu0
  %487 = vmatprep.mubr.bf16.mxu0 0
  %488 = vmatmul.mubr.bf16.gmra.mrb[0].mxu0 %v295
  %v489 = vpop.f32.mrb[0].mxu0
  %v490 = vadd.f32 %v86, %v489
  %v491 = vpop.f32.mrb[0].mxu0
  %v492 = vpop.f32.mrb[0].mxu0
  %v493 = vadd.f32 %v86, %v492
  %v494 = vpop.f32.mrb[0].mxu0
  %495 = vmatprep.mubr.bf16.mxu0 0
  %496 = vmatmul.mubr.bf16.gmra.mrb[0].mxu0 %v298
  %v497 = vpop.f32.mrb[0].mxu0
  %v498 = vadd.f32 %v86, %v497
  %v499 = vpop.f32.mrb[0].mxu0
  %v500 = vpop.f32.mrb[0].mxu0
  %v501 = vadd.f32 %v86, %v500
  %v502 = vpop.f32.mrb[0].mxu0
  %503 = vmatprep.mubr.bf16.mxu0 0
  %504 = vmatmul.mubr.bf16.gmra.mrb[0].mxu0 %v301
  %v505 = vpop.f32.mrb[0].mxu0
  %v506 = vadd.f32 %v86, %v505
  %v507 = vpop.f32.mrb[0].mxu0
  %v508 = vpop.f32.mrb[0].mxu0
  %v509 = vadd.f32 %v86, %v508
  %v510 = vpop.f32.mrb[0].mxu0
  %511 = vmatprep.mubr.bf16.mxu0 0
  %512 = vmatmul.mubr.bf16.gmra.mrb[0].mxu0 %v304
  %v513 = vpop.f32.mrb[0].mxu0
  %v514 = vadd.f32 %v86, %v513
  %v515 = vpop.f32.mrb[0].mxu0
  %v516 = vpop.f32.mrb[0].mxu0
  %v517 = vadd.f32 %v86, %v516
  %v518 = vpop.f32.mrb[0].mxu0
  %519 = vmatprep.mubr.bf16.mxu0 0
  %520 = vmatmul.mubr.bf16.gmra.mrb[0].mxu0 %v307
  %v521 = vpop.f32.mrb[0].mxu0
  %v522 = vadd.f32 %v86, %v521
  %v523 = vpop.f32.mrb[0].mxu0
  %v524 = vpop.f32.mrb[0].mxu0
  %v525 = vadd.f32 %v86, %v524
  %v526 = vpop.f32.mrb[0].mxu0
  %527 = vmatprep.mubr.bf16.mxu0 0
  %528 = vmatmul.mubr.bf16.gmra.mrb[0].mxu0 %v310
  %v529 = vpop.f32.mrb[0].mxu0
  %v530 = vadd.f32 %v86, %v529
  %v531 = vpop.f32.mrb[0].mxu0
  %v532 = vpop.f32.mrb[0].mxu0
  %v533 = vadd.f32 %v86, %v532
  %v534 = vpop.f32.mrb[0].mxu0
  %535 = vmatprep.mubr.bf16.mxu0 0
  %536 = vmatmul.mubr.bf16.gmra.mrb[0].mxu0 %v313
  %v537 = vpop.f32.mrb[0].mxu0
  %v538 = vadd.f32 %v86, %v537
  %v539 = vpop.f32.mrb[0].mxu0
  %v540 = vpop.f32.mrb[0].mxu0
  %v541 = vadd.f32 %v86, %v540
  %v542 = vpop.f32.mrb[0].mxu0
  %543 = vmatprep.mubr.bf16.mxu0 0
  %544 = vmatmul.mubr.bf16.gmra.mrb[0].mxu0 %v316
  %v545 = vpop.f32.mrb[0].mxu0
  %v546 = vadd.f32 %v86, %v545
  %v547 = vpop.f32.mrb[0].mxu0
  %v548 = vpop.f32.mrb[0].mxu0
  %v549 = vadd.f32 %v86, %v548
  %v550 = vpop.f32.mrb[0].mxu0
  %551 = vmatprep.mubr.bf16.mxu0 0
  %552 = vmatmul.mubr.bf16.gmra.mrb[0].mxu0 %v319
  %v553 = vpop.f32.mrb[0].mxu0
  %v554 = vadd.f32 %v86, %v553
  %v555 = vpop.f32.mrb[0].mxu0
  %v556 = vpop.f32.mrb[0].mxu0
  %v557 = vadd.f32 %v86, %v556
  %v558 = vpop.f32.mrb[0].mxu0
  %559 = vmatprep.mubr.bf16.mxu0 0
  %560 = vmatmul.mubr.bf16.gmra.mrb[0].mxu0 %v322
  %v561 = vpop.f32.mrb[0].mxu0
  %v562 = vadd.f32 %v86, %v561
  %v563 = vpop.f32.mrb[0].mxu0
  %v564 = vpop.f32.mrb[0].mxu0
  %v565 = vadd.f32 %v86, %v564
  %v566 = vpop.f32.mrb[0].mxu0
  %567 = vmatprep.mubr.bf16.mxu0 0
  %568 = vmatmul.mubr.bf16.gmra.mrb[0].mxu0 %v325
  %v569 = vpop.f32.mrb[0].mxu0
  %v570 = vadd.f32 %v86, %v569
  %v571 = vpop.f32.mrb[0].mxu0
  %v572 = vpop.f32.mrb[0].mxu0
  %v573 = vadd.f32 %v86, %v572
  %v574 = vpop.f32.mrb[0].mxu0
  %575 = vmatprep.mubr.bf16.mxu0 0
  %576 = vmatmul.mubr.bf16.gmra.mrb[0].mxu0 %v328
  %v577 = vpop.f32.mrb[0].mxu0
  %v578 = vadd.f32 %v86, %v577
  %v579 = vpop.f32.mrb[0].mxu0
  %v580 = vpop.f32.mrb[0].mxu0
  %v581 = vadd.f32 %v86, %v580
  %v582 = vpop.f32.mrb[0].mxu0
  %583 = vmatprep.mubr.bf16.mxu0 0
  %584 = vmatmul.mubr.bf16.gmra.mrb[0].mxu0 %v331
  %v585 = vpop.f32.mrb[0].mxu0
  %v586 = vadd.f32 %v86, %v585
  %v587 = vpop.f32.mrb[0].mxu0
  %v588 = vpop.f32.mrb[0].mxu0
  %v589 = vadd.f32 %v86, %v588
  %v590 = vpop.f32.mrb[0].mxu0
  %591 = vmatprep.mubr.bf16.mxu0 0
  %592 = vmatmul.mubr.bf16.gmra.mrb[0].mxu0 %v334
  %v593 = vpop.f32.mrb[0].mxu0
  %v594 = vadd.f32 %v86, %v593
  %v595 = vpop.f32.mrb[0].mxu0
  %v596 = vpop.f32.mrb[0].mxu0
  %v597 = vadd.f32 %v86, %v596
  %v598 = vpop.f32.mrb[0].mxu0
  %599 = vmatprep.mubr.bf16.mxu0 0
  %600 = vmatmul.mubr.bf16.gmra.mrb[0].mxu0 %v337
  %v601 = vpop.f32.mrb[0].mxu0
  %v602 = vadd.f32 %v86, %v601
  %v603 = vpop.f32.mrb[0].mxu0
  %v604 = vpop.f32.mrb[0].mxu0
  %v605 = vadd.f32 %v86, %v604
  %v606 = vpop.f32.mrb[0].mxu0
  %607 = vmatprep.mubr.bf16.mxu0 0
  %608 = vmatmul.mubr.bf16.gmra.mrb[0].mxu0 %v340
  %v609 = vpop.f32.mrb[0].mxu0
  %v610 = vadd.f32 %v86, %v609
  %v611 = vpop.f32.mrb[0].mxu0
  %v612 = vpop.f32.mrb[0].mxu0
  %v613 = vadd.f32 %v86, %v612
  %v614 = vpop.f32.mrb[0].mxu0
  %615 = vmatprep.mubr.bf16.mxu0 0
  %616 = vmatmul.mubr.bf16.gmra.mrb[0].mxu0 %v343
  %v617 = vpop.f32.mrb[0].mxu0
  %v618 = vadd.f32 %v86, %v617
  %v619 = vpop.f32.mrb[0].mxu0
  %v620 = vpop.f32.mrb[0].mxu0
  %v621 = vadd.f32 %v86, %v620
  %v622 = vpop.f32.mrb[0].mxu0
  %623 = vmatprep.mubr.bf16.mxu0 0
  %624 = vmatmul.mubr.bf16.gmra.mrb[0].mxu0 %v346
  %v625 = vpop.f32.mrb[0].mxu0
  %v626 = vadd.f32 %v86, %v625
  %v627 = vpop.f32.mrb[0].mxu0
  %v628 = vpop.f32.mrb[0].mxu0
  %v629 = vadd.f32 %v86, %v628
  %v630 = vpop.f32.mrb[0].mxu0
  %631 = vmatprep.mubr.bf16.mxu0 0
  %632 = vmatmul.mubr.bf16.gmra.mrb[0].mxu0 %v349
  %v633 = vpop.f32.mrb[0].mxu0
  %v634 = vadd.f32 %v86, %v633
  %v635 = vpop.f32.mrb[0].mxu0
  %v636 = vpop.f32.mrb[0].mxu0
  %v637 = vadd.f32 %v86, %v636
  %v638 = vpop.f32.mrb[0].mxu0
  %639 = vdwg.mxu0
  %vm640 = vcmask 424960
  %641 = vst.msk [vmem:[%s3] sm:$0xff] %vm640, %v386
  %642 = vst.msk [vmem:[%s3 + $0x8] sm:$0xff] %vm640, %v389
  %643 = vst.msk [vmem:[%s3 + $0x10] sm:$0xff] %vm640, %v394
  %644 = vst.msk [vmem:[%s3 + $0x18] sm:$0xff] %vm640, %v397
  %645 = vst.msk [vmem:[%s3 + $0x20] sm:$0xff] %vm640, %v402
  %646 = vst.msk [vmem:[%s3 + $0x28] sm:$0xff] %vm640, %v405
  %647 = vst.msk [vmem:[%s3 + $0x30] sm:$0xff] %vm640, %v410
  %648 = vst.msk [vmem:[%s3 + $0x38] sm:$0xff] %vm640, %v413
  %649 = vst.msk [vmem:[%s3 + $0x40] sm:$0xff] %vm640, %v418
  %650 = vst.msk [vmem:[%s3 + $0x48] sm:$0xff] %vm640, %v421
  %651 = vst.msk [vmem:[%s3 + $0x50] sm:$0xff] %vm640, %v426
  %652 = vst.msk [vmem:[%s3 + $0x58] sm:$0xff] %vm640, %v429
  %653 = vst.msk [vmem:[%s3 + $0x60] sm:$0xff] %vm640, %v434
  %654 = vst.msk [vmem:[%s3 + $0x68] sm:$0xff] %vm640, %v437
  %655 = vst.msk [vmem:[%s3 + $0x70] sm:$0xff] %vm640, %v442
  %656 = vst.msk [vmem:[%s3 + $0x78] sm:$0xff] %vm640, %v445
  %657 = vst.msk [vmem:[%s3 + $0x80] sm:$0xff] %vm640, %v450
  %658 = vst.msk [vmem:[%s3 + $0x88] sm:$0xff] %vm640, %v453
  %659 = vst.msk [vmem:[%s3 + $0x90] sm:$0xff] %vm640, %v458
  %660 = vst.msk [vmem:[%s3 + $0x98] sm:$0xff] %vm640, %v461
  %661 = vst.msk [vmem:[%s3 + $0xa0] sm:$0xff] %vm640, %v466
  %662 = vst.msk [vmem:[%s3 + $0xa8] sm:$0xff] %vm640, %v469
  %663 = vst.msk [vmem:[%s3 + $0xb0] sm:$0xff] %vm640, %v474
  %664 = vst.msk [vmem:[%s3 + $0xb8] sm:$0xff] %vm640, %v477
  %665 = vst.msk [vmem:[%s3 + $0xc0] sm:$0xff] %vm640, %v482
  %666 = vst.msk [vmem:[%s3 + $0xc8] sm:$0xff] %vm640, %v485
  %667 = vst.msk [vmem:[%s3 + $0xd0] sm:$0xff] %vm640, %v490
  %668 = vst.msk [vmem:[%s3 + $0xd8] sm:$0xff] %vm640, %v493
  %669 = vst.msk [vmem:[%s3 + $0xe0] sm:$0xff] %vm640, %v498
  %670 = vst.msk [vmem:[%s3 + $0xe8] sm:$0xff] %vm640, %v501
  %671 = vst.msk [vmem:[%s3 + $0xf0] sm:$0xff] %vm640, %v506
  %672 = vst.msk [vmem:[%s3 + $0xf8] sm:$0xff] %vm640, %v509
  %673 = vst.msk [vmem:[%s3 + $0x100] sm:$0xff] %vm640, %v514
  %674 = vst.msk [vmem:[%s3 + $0x108] sm:$0xff] %vm640, %v517
  %675 = vst.msk [vmem:[%s3 + $0x110] sm:$0xff] %vm640, %v522
  %676 = vst.msk [vmem:[%s3 + $0x118] sm:$0xff] %vm640, %v525
  %677 = vst.msk [vmem:[%s3 + $0x120] sm:$0xff] %vm640, %v530
  %678 = vst.msk [vmem:[%s3 + $0x128] sm:$0xff] %vm640, %v533
  %679 = vst.msk [vmem:[%s3 + $0x130] sm:$0xff] %vm640, %v538
  %680 = vst.msk [vmem:[%s3 + $0x138] sm:$0xff] %vm640, %v541
  %681 = vst.msk [vmem:[%s3 + $0x140] sm:$0xff] %vm640, %v546
  %682 = vst.msk [vmem:[%s3 + $0x148] sm:$0xff] %vm640, %v549
  %683 = vst.msk [vmem:[%s3 + $0x150] sm:$0xff] %vm640, %v554
  %684 = vst.msk [vmem:[%s3 + $0x158] sm:$0xff] %vm640, %v557
  %685 = vst.msk [vmem:[%s3 + $0x160] sm:$0xff] %vm640, %v562
  %686 = vst.msk [vmem:[%s3 + $0x168] sm:$0xff] %vm640, %v565
  %687 = vst.msk [vmem:[%s3 + $0x170] sm:$0xff] %vm640, %v570
  %688 = vst.msk [vmem:[%s3 + $0x178] sm:$0xff] %vm640, %v573
  %689 = vst.msk [vmem:[%s3 + $0x180] sm:$0xff] %vm640, %v578
  %690 = vst.msk [vmem:[%s3 + $0x188] sm:$0xff] %vm640, %v581
  %691 = vst.msk [vmem:[%s3 + $0x190] sm:$0xff] %vm640, %v586
  %692 = vst.msk [vmem:[%s3 + $0x198] sm:$0xff] %vm640, %v589
  %693 = vst.msk [vmem:[%s3 + $0x1a0] sm:$0xff] %vm640, %v594
  %694 = vst.msk [vmem:[%s3 + $0x1a8] sm:$0xff] %vm640, %v597
  %695 = vst.msk [vmem:[%s3 + $0x1b0] sm:$0xff] %vm640, %v602
  %696 = vst.msk [vmem:[%s3 + $0x1b8] sm:$0xff] %vm640, %v605
  %697 = vst.msk [vmem:[%s3 + $0x1c0] sm:$0xff] %vm640, %v610
  %698 = vst.msk [vmem:[%s3 + $0x1c8] sm:$0xff] %vm640, %v613
  %699 = vst.msk [vmem:[%s3 + $0x1d0] sm:$0xff] %vm640, %v618
  %700 = vst.msk [vmem:[%s3 + $0x1d8] sm:$0xff] %vm640, %v621
  %701 = vst.msk [vmem:[%s3 + $0x1e0] sm:$0xff] %vm640, %v626
  %702 = vst.msk [vmem:[%s3 + $0x1e8] sm:$0xff] %vm640, %v629
  %703 = vst.msk [vmem:[%s3 + $0x1f0] sm:$0xff] %vm640, %v634
  %704 = vst.msk [vmem:[%s3 + $0x1f8] sm:$0xff] %vm640, %v637
  // Predicated region
  $region14: #{net_fwd.147} parent=0 // pred_check
    _
  $region15: #{net_fwd.147} parent=0 // pred_check_branch
    %706 = sbr.rel (0) target = $region17
  $region16: #{net_fwd.147} parent=0 // pred_region
    _
  $region17: #{net_fwd.147} parent=0 // pred_fallthru
    _
  // Predicated region
  $region18: #{net_fwd.147} parent=0 // pred_check
    _
  $region19: #{net_fwd.147} parent=0 // pred_check_branch
    %708 = sbr.rel (0) target = $region21
  $region20: #{net_fwd.147} parent=0 // pred_region
    _
  $region21: #{net_fwd.147} parent=0 // pred_fallthru
    _

</llo_original>
